<compile_context>
chip_gen: v7x
topology: tpu7x:2x2x1
jax: 0.10.0
libtpu: 0.0.40
codegen_flags: <defaults>
</compile_context>

<pallas_src>
import jax
import jax.numpy as jnp
from jax.experimental import pallas as pl
from jax.experimental.pallas import tpu as pltpu

# ----------------------------- configuration -------------------------------
IMAGE_SIZE = 32        # small, consistent with the module (divisible by patch)
PATCH_SIZE = 8
CHANNELS = 1           # fixed by the module
DIM = 32
DEPTH = 2
HEADS = 2
DIM_HEAD = 16
MLP_DIM = 64
NUM_CLASSES = 8        # fixed by the module
BBOX_COORDS = 4        # fixed by the module
HEAD_OUT = NUM_CLASSES + BBOX_COORDS   # 12
N_TOKENS = 2           # cls + reg
SCALE = 1.0
TEMPERATURE = 10000.0

PATCH_DIM = CHANNELS * PATCH_SIZE * PATCH_SIZE   # 64
N_PATCHES = (IMAGE_SIZE // PATCH_SIZE) ** 2      # 16
SEQ = N_PATCHES + N_TOKENS                       # 18 real tokens per image
SEQ_PAD = 24                                     # sublane-aligned per-image length
B_TILE = 8                                       # images per grid step
TOTAL = B_TILE * SEQ_PAD                         # 192 stacked rows per step
EPS = 1e-5                                       # PyTorch nn.LayerNorm default eps
ATTN_SCALE = DIM_HEAD ** -0.5
MXU_DTYPE = jnp.bfloat16                         # MXU-native operand dtype
OUT_LANES = 128                                  # lane-dense output width

# column offsets inside the fused per-layer (DIM, 128) QKVO weight slab
Q_OFF = 0
K_OFF = HEADS * DIM_HEAD                         # 32
VO_OFF = 2 * HEADS * DIM_HEAD                    # 64
QKVO_COLS = VO_OFF + HEADS * DIM                 # 128

# rows of the packed f32 vector table (all gammas / betas / biases), 128 lanes wide
V_PE_LN1_G = 0
V_PE_LN1_B = 1
V_PE_B = 2
V_PE_LN2_G = 3
V_PE_LN2_B = 4
V_LAYER0 = 5
VL_LN1_G, VL_LN1_B, VL_BO, VL_LN2_G, VL_LN2_B, VL_B1, VL_B2 = range(7)
V_PER_LAYER = 7
V_H_LN_G = V_LAYER0 + V_PER_LAYER * DEPTH        # 19
V_H_LN_B = V_H_LN_G + 1                          # 20
V_H_B = V_H_LN_G + 2                             # 21
V_ROWS = ((V_H_B + 1 + 7) // 8) * 8              # 24 (sublane-aligned)


# ----------------------------- kernel helpers ------------------------------
def _layernorm(x, gamma, beta):
    # gamma/beta arrive as (1, D) tiles and broadcast against (N, D). f32 math.
    mean = jnp.mean(x, axis=-1, keepdims=True)
    var = jnp.mean((x - mean) ** 2, axis=-1, keepdims=True)
    return (x - mean) * jax.lax.rsqrt(var + EPS) * gamma + beta


def _mm(a, b):
    """MXU matmul: bf16 operands, f32 accumulation."""
    return jnp.dot(a.astype(MXU_DTYPE), b.astype(MXU_DTYPE),
                   preferred_element_type=jnp.float32)


def _mm_nt(a, b):
    """a @ b.T on the MXU: bf16 operands, f32 accumulation."""
    return jax.lax.dot_general(a.astype(MXU_DTYPE), b.astype(MXU_DTYPE),
                               (((1,), (1,)), ((), ())),
                               preferred_element_type=jnp.float32)


def _erf(x):
    # Abramowitz & Stegun 7.1.26 (|err| < 1.5e-7), built only from ops that
    # lower cleanly in Mosaic (abs/exp/div/where).  Matches exact-erf GELU.
    a1, a2, a3, a4, a5 = (0.254829592, -0.284496736, 1.421413741,
                          -1.453152027, 1.061405429)
    p = 0.3275911
    ax = jnp.abs(x)
    t = 1.0 / (1.0 + p * ax)
    poly = ((((a5 * t + a4) * t + a3) * t + a2) * t + a1) * t
    y = 1.0 - poly * jnp.exp(-ax * ax)
    return jnp.where(x >= 0, y, -y)


def _gelu_exact(x):
    # PyTorch nn.GELU default (erf form), not the tanh approximation.
    return 0.5 * x * (1.0 + _erf(x * 0.7071067811865476))


def _sigmoid(x):
    # Exact, numerically stable sigmoid (correctness feedback: no approx rcp here).
    ex = jnp.exp(-jnp.abs(x))
    return jnp.where(x >= 0, 1.0 / (1.0 + ex), ex / (1.0 + ex))


# --------------------------- fused forward kernel ---------------------------
def _vit_detection_kernel(patches_ref, tok_ref, bias_ref, vec_ref,
                          wpe_ref, wqkvo_ref, w1_ref, w2_ref, whead_ref,
                          out_ref):
    f32 = jnp.float32

    def vrow(r, n):
        return vec_ref[r:r + 1, 0:n]          # (1, n) row of the packed vector table

    # ---- patch embedding on the whole stacked slab: LN -> Linear -> LN ----
    p = patches_ref[...]                                                  # (TOTAL, 64)
    p = _layernorm(p, vrow(V_PE_LN1_G, PATCH_DIM), vrow(V_PE_LN1_B, PATCH_DIM))
    pe = _mm(p, wpe_ref[...]) + vrow(V_PE_B, DIM)
    pe = _layernorm(pe, vrow(V_PE_LN2_G, DIM), vrow(V_PE_LN2_B, DIM))     # (TOTAL, DIM)

    # zero cls/reg/pad rows of the patch embedding; add cls/reg tokens + pos embedding
    x = pe * tok_ref[1] + tok_ref[0]                                      # (TOTAL, DIM)
    # emb_dropout / dropout: identity at inference.

    attn_bias = bias_ref[...]      # (TOTAL, TOTAL): 0 (same image, real key) / -1e30

    for l in range(DEPTH):
        base = V_LAYER0 + l * V_PER_LAYER

        # ---- pre-LN multi-head self-attention (qkv bias-free, out-proj bias) ----
        xn = _layernorm(x, vrow(base + VL_LN1_G, DIM), vrow(base + VL_LN1_B, DIM))
        qkvo = _mm(xn, wqkvo_ref[l])                                      # (TOTAL, 128)
        attn = jnp.zeros((TOTAL, DIM), f32)
        for h in range(HEADS):
            q = qkvo[:, Q_OFF + h * DIM_HEAD: Q_OFF + (h + 1) * DIM_HEAD]   # scale folded
            k = qkvo[:, K_OFF + h * DIM_HEAD: K_OFF + (h + 1) * DIM_HEAD]
            vo = qkvo[:, VO_OFF + h * DIM: VO_OFF + (h + 1) * DIM]          # xn @ (wv@wo)
            s = _mm_nt(q, k) + attn_bias                                    # (TOTAL, TOTAL)
            m = jnp.max(s, axis=-1, keepdims=True)
            e = jnp.exp(s - m)
            denom = jnp.sum(e, axis=-1, keepdims=True)
            prob = e * pl.reciprocal(denom, approx=True)
            attn = attn + _mm(prob, vo)                                     # (TOTAL, DIM)
        x = x + attn + vrow(base + VL_BO, DIM)

        # ---- pre-LN MLP: Linear -> GELU(exact erf) -> Linear ----
        xn2 = _layernorm(x, vrow(base + VL_LN2_G, DIM), vrow(base + VL_LN2_B, DIM))
        hdn = _gelu_exact(_mm(xn2, w1_ref[l]) + vrow(base + VL_B1, MLP_DIM))
        x = x + _mm(hdn, w2_ref[l]) + vrow(base + VL_B2, DIM)

    # ---- final transformer LN + detection heads ----
    # cls token of image b is row b*SEQ_PAD, reg token is row b*SEQ_PAD + 1.
    cls_rows = [x[b * SEQ_PAD: b * SEQ_PAD + 1, :] for b in range(B_TILE)]
    reg_rows = [x[b * SEQ_PAD + 1: b * SEQ_PAD + 2, :] for b in range(B_TILE)]
    t = jnp.concatenate(cls_rows + reg_rows, axis=0)                      # (2*B_TILE, DIM)
    t = _layernorm(t, vrow(V_H_LN_G, DIM), vrow(V_H_LN_B, DIM))
    ho = _mm(t, whead_ref[...]) + vec_ref[V_H_B:V_H_B + 1, :]             # (2*B_TILE, 128)

    cls_part = ho[0:B_TILE, :]                        # lanes 0:8 meaningful
    reg_part = _sigmoid(ho[B_TILE:2 * B_TILE, :])     # lanes 8:12 meaningful
    # TODO(synk): BoxConstraintLayer definition not provided; identity after Sigmoid.
    lane = jax.lax.broadcasted_iota(jnp.int32, (B_TILE, OUT_LANES), 1)
    out = (jnp.where(lane < NUM_CLASSES, cls_part, 0.0)
           + jnp.where(jnp.logical_and(lane >= NUM_CLASSES, lane < HEAD_OUT),
                       reg_part, 0.0))
    out_ref[...] = out.astype(out_ref.dtype)          # one unmasked (8,128) store / step


# --------------------------- parameters & glue ------------------------------
def sincos_pos_embedding(seq_len, dim, temperature=TEMPERATURE, scale=SCALE):
    # TODO(synk): PositionalEmbedding class not provided; approximated with a fixed
    # 1-D sin/cos embedding over the full token sequence (incl. cls/reg), scaled by `scale`.
    pos = jnp.arange(seq_len, dtype=jnp.float32)[:, None]
    i = jnp.arange(dim // 2, dtype=jnp.float32)[None, :]
    inv_freq = 1.0 / (temperature ** (2.0 * i / dim))
    ang = pos * inv_freq
    return scale * jnp.concatenate([jnp.sin(ang), jnp.cos(ang)], axis=-1)


PARAM_ORDER = ("tok_tbl", "attn_bias", "vecs", "wpe", "wqkvo", "w1", "w2", "whead")


def init_params(key):
    keys = iter(jax.random.split(key, 16))
    f32 = jnp.float32

    def rnd(shape, std=0.02):
        return jax.random.normal(next(keys), shape, f32) * std

    # ---- packed f32 vector table (LN gammas = 1, betas / biases = 0) ----
    vecs = jnp.zeros((V_ROWS, 128), f32)
    vecs = vecs.at[V_PE_LN1_G, :PATCH_DIM].set(1.0)
    vecs = vecs.at[V_PE_LN2_G, :DIM].set(1.0)
    for l in range(DEPTH):
        base = V_LAYER0 + l * V_PER_LAYER
        vecs = vecs.at[base + VL_LN1_G, :DIM].set(1.0)
        vecs = vecs.at[base + VL_LN2_G, :DIM].set(1.0)
    vecs = vecs.at[V_H_LN_G, :DIM].set(1.0)

    # ---- bf16 matmul weight slabs ----
    wpe = rnd((PATCH_DIM, DIM)).astype(MXU_DTYPE)

    wq = rnd((DEPTH, HEADS, DIM, DIM_HEAD))
    wk = rnd((DEPTH, HEADS, DIM, DIM_HEAD))
    wv = rnd((DEPTH, HEADS, DIM, DIM_HEAD))
    wo = rnd((DEPTH, HEADS, DIM_HEAD, DIM))
    wvo = jnp.einsum('lhdk,lhkD->lhdD', wq * 0 + wv, wo)     # fold V and O (f32 precompute)
    q_cols = (wq * ATTN_SCALE).transpose(0, 2, 1, 3).reshape(DEPTH, DIM, HEADS * DIM_HEAD)
    k_cols = wk.transpose(0, 2, 1, 3).reshape(DEPTH, DIM, HEADS * DIM_HEAD)
    vo_cols = wvo.transpose(0, 2, 1, 3).reshape(DEPTH, DIM, HEADS * DIM)
    wqkvo = jnp.concatenate([q_cols, k_cols, vo_cols], axis=-1).astype(MXU_DTYPE)

    w1 = rnd((DEPTH, DIM, MLP_DIM)).astype(MXU_DTYPE)
    w2 = rnd((DEPTH, MLP_DIM, DIM)).astype(MXU_DTYPE)

    whead = jnp.zeros((DIM, OUT_LANES), f32)
    whead = whead.at[:, :NUM_CLASSES].set(rnd((DIM, NUM_CLASSES)))
    whead = whead.at[:, NUM_CLASSES:HEAD_OUT].set(rnd((DIM, BBOX_COORDS)))
    whead = whead.astype(MXU_DTYPE)

    # ---- cls/reg tokens + positional embedding + patch-row mask, tiled per batch tile ----
    cls_tok = jax.random.normal(next(keys), (DIM,), f32)
    reg_tok = jax.random.normal(next(keys), (DIM,), f32)
    pos = sincos_pos_embedding(SEQ, DIM)                                   # (18, DIM)
    tokpos = jnp.zeros((SEQ_PAD, DIM), f32)
    tokpos = tokpos.at[0].set(cls_tok + pos[0])
    tokpos = tokpos.at[1].set(reg_tok + pos[1])
    tokpos = tokpos.at[N_TOKENS:SEQ].set(pos[N_TOKENS:])
    patch_mask = jnp.zeros((SEQ_PAD, DIM), f32).at[N_TOKENS:SEQ, :].set(1.0)
    tok_tbl = jnp.stack([jnp.tile(tokpos, (B_TILE, 1)),
                         jnp.tile(patch_mask, (B_TILE, 1))], axis=0)       # (2, TOTAL, DIM)

    # ---- block-diagonal additive attention mask (same image AND real key column) ----
    img = jnp.arange(TOTAL) // SEQ_PAD
    key_ok = (jnp.arange(TOTAL) % SEQ_PAD) < SEQ
    ok = (img[:, None] == img[None, :]) & key_ok[None, :]
    attn_bias = jnp.where(ok, 0.0, -1e30).astype(f32)                      # (TOTAL, TOTAL)

    return dict(tok_tbl=tok_tbl, attn_bias=attn_bias, vecs=vecs, wpe=wpe,
                wqkvo=wqkvo, w1=w1, w2=w2, whead=whead)


def _rep_spec(arr):
    zeros = (0,) * arr.ndim
    return pl.BlockSpec(arr.shape, lambda i, _z=zeros: _z)


@jax.jit
def vit_detection_forward(img, params):
    """img: (B, C, H, W) float32, NCHW like the PyTorch module."""
    B, C, H, W = img.shape
    p = PATCH_SIZE
    h, w = H // p, W // p
    # einops Rearrange 'b c (h p1) (w p2) -> b (h w) (p1 p2 c)'  (pure layout glue)
    patches = img.reshape(B, C, h, p, w, p).transpose(0, 2, 4, 3, 5, 1)
    patches = patches.reshape(B, h * w, p * p * C)

    # pad the batch to a multiple of B_TILE and lay every image out as SEQ_PAD rows
    # ([cls, reg, 16 patch rows, 6 pad] -- cls/reg/pad rows zero here, filled in-kernel).
    B_pad = ((B + B_TILE - 1) // B_TILE) * B_TILE
    slab = jnp.zeros((B_pad, SEQ_PAD, PATCH_DIM), jnp.float32)
    slab = slab.at[:B, N_TOKENS:SEQ, :].set(patches)
    slab = slab.reshape(B_pad * SEQ_PAD, PATCH_DIM)

    weights = [params[k] for k in PARAM_ORDER]
    out = pl.pallas_call(
        _vit_detection_kernel,
        out_shape=jax.ShapeDtypeStruct((B_pad, OUT_LANES), jnp.float32),
        grid=(B_pad // B_TILE,),
        in_specs=[pl.BlockSpec((TOTAL, PATCH_DIM), lambda i: (i, 0))]
                 + [_rep_spec(wt) for wt in weights],
        out_specs=pl.BlockSpec((B_TILE, OUT_LANES), lambda i: (i, 0)),
        compiler_params=pltpu.CompilerParams(
            dimension_semantics=("parallel",)),   # v7x: one batch tile per TensorCore
    )(slab, *weights)

    out = out[:B]
    return out[:, :NUM_CLASSES], out[:, NUM_CLASSES:HEAD_OUT]


if __name__ == "__main__":
    key = jax.random.PRNGKey(0)
    k_img, k_par = jax.random.split(key)
    B = 16   # 2 grid steps of B_TILE=8 images -> both v7x TensorCores stay busy
    img = jax.random.normal(k_img, (B, CHANNELS, IMAGE_SIZE, IMAGE_SIZE), jnp.float32)
    params = init_params(k_par)

    cls_out, reg_out = vit_detection_forward(img, params)
    cls_out = jax.block_until_ready(cls_out)
    reg_out = jax.block_until_ready(reg_out)

    assert cls_out.shape == (B, NUM_CLASSES)
    assert reg_out.shape == (B, BBOX_COORDS)
    assert bool(jnp.all(jnp.isfinite(cls_out)))
    assert bool(jnp.all(jnp.isfinite(reg_out)))
    assert bool(jnp.all((reg_out >= 0.0) & (reg_out <= 1.0)))
    print("KERNEL_OK")
</pallas_src>

<mosaic_0001>
module attributes {stable_mosaic.version = 11 : i64} {
  func.func @_vit_detection_kernel(%arg0: i32, %arg1: memref<192x64xf32, #tpu.memory_space<vmem>>, %arg2: memref<2x192x32xf32, #tpu.memory_space<vmem>>, %arg3: memref<192x192xf32, #tpu.memory_space<vmem>>, %arg4: memref<24x128xf32, #tpu.memory_space<vmem>>, %arg5: memref<64x32xbf16, #tpu.memory_space<vmem>>, %arg6: memref<2x32x128xbf16, #tpu.memory_space<vmem>>, %arg7: memref<2x32x64xbf16, #tpu.memory_space<vmem>>, %arg8: memref<2x64x32xbf16, #tpu.memory_space<vmem>>, %arg9: memref<32x128xbf16, #tpu.memory_space<vmem>>, %arg10: memref<8x128xf32, #tpu.memory_space<vmem>>) attributes {dimension_semantics = [#tpu.dimension_semantics<parallel>], iteration_bounds = array<i64: 2>, scalar_prefetch = 0 : i64, scratch_operands = 0 : i64, tpu.core_type = #tpu.core_type<tc>, window_params = [{transform_indices = @transform_0, window_bounds = array<i64: 192, 64>}, {pipeline_mode = #tpu.pipeline_mode<synchronous>, transform_indices = @transform_1, window_bounds = array<i64: 2, 192, 32>}, {pipeline_mode = #tpu.pipeline_mode<synchronous>, transform_indices = @transform_2, window_bounds = array<i64: 192, 192>}, {pipeline_mode = #tpu.pipeline_mode<synchronous>, transform_indices = @transform_3, window_bounds = array<i64: 24, 128>}, {pipeline_mode = #tpu.pipeline_mode<synchronous>, transform_indices = @transform_4, window_bounds = array<i64: 64, 32>}, {pipeline_mode = #tpu.pipeline_mode<synchronous>, transform_indices = @transform_5, window_bounds = array<i64: 2, 32, 128>}, {pipeline_mode = #tpu.pipeline_mode<synchronous>, transform_indices = @transform_6, window_bounds = array<i64: 2, 32, 64>}, {pipeline_mode = #tpu.pipeline_mode<synchronous>, transform_indices = @transform_7, window_bounds = array<i64: 2, 64, 32>}, {pipeline_mode = #tpu.pipeline_mode<synchronous>, transform_indices = @transform_8, window_bounds = array<i64: 32, 128>}, {transform_indices = @transform_9, window_bounds = array<i64: 8, 128>}]} {
    %c0 = arith.constant 0 : index
    %c0_0 = arith.constant 0 : index
    %0 = vector.load %arg1[%c0, %c0_0] : memref<192x64xf32, #tpu.memory_space<vmem>>, vector<192x64xf32>
    %c0_1 = arith.constant 0 : index
    %c0_2 = arith.constant 0 : index
    %1 = vector.load %arg4[%c0_1, %c0_2] : memref<24x128xf32, #tpu.memory_space<vmem>>, vector<1x64xf32>
    %c1 = arith.constant 1 : index
    %c0_3 = arith.constant 0 : index
    %2 = vector.load %arg4[%c1, %c0_3] : memref<24x128xf32, #tpu.memory_space<vmem>>, vector<1x64xf32>
    %cst = arith.constant dense<0.000000e+00> : vector<192xf32>
    %3 = vector.multi_reduction <add>, %0, %cst [1] : vector<192x64xf32> to vector<192xf32>
    %4 = vector.shape_cast %3 : vector<192xf32> to vector<192x1xf32>
    %cst_4 = arith.constant 6.400000e+01 : f32
    %5 = vector.broadcast %cst_4 : f32 to vector<192x1xf32>
    %6 = arith.divf %4, %5 : vector<192x1xf32>
    %7 = vector.broadcast %6 : vector<192x1xf32> to vector<192x64xf32>
    %8 = arith.subf %0, %7 : vector<192x64xf32>
    %9 = arith.mulf %8, %8 : vector<192x64xf32>
    %cst_5 = arith.constant dense<0.000000e+00> : vector<192xf32>
    %10 = vector.multi_reduction <add>, %9, %cst_5 [1] : vector<192x64xf32> to vector<192xf32>
    %11 = vector.shape_cast %10 : vector<192xf32> to vector<192x1xf32>
    %cst_6 = arith.constant 6.400000e+01 : f32
    %12 = vector.broadcast %cst_6 : f32 to vector<192x1xf32>
    %13 = arith.divf %11, %12 : vector<192x1xf32>
    %14 = vector.broadcast %6 : vector<192x1xf32> to vector<192x64xf32>
    %15 = arith.subf %0, %14 : vector<192x64xf32>
    %cst_7 = arith.constant 9.99999974E-6 : f32
    %16 = vector.broadcast %cst_7 : f32 to vector<192x1xf32>
    %17 = arith.addf %13, %16 : vector<192x1xf32>
    %18 = math.rsqrt %17 : vector<192x1xf32>
    %19 = vector.broadcast %18 : vector<192x1xf32> to vector<192x64xf32>
    %20 = arith.mulf %15, %19 : vector<192x64xf32>
    %21 = vector.broadcast %1 : vector<1x64xf32> to vector<192x64xf32>
    %22 = arith.mulf %20, %21 : vector<192x64xf32>
    %23 = vector.broadcast %2 : vector<1x64xf32> to vector<192x64xf32>
    %24 = arith.addf %22, %23 : vector<192x64xf32>
    %c0_8 = arith.constant 0 : index
    %c0_9 = arith.constant 0 : index
    %25 = vector.load %arg5[%c0_8, %c0_9] : memref<64x32xbf16, #tpu.memory_space<vmem>>, vector<64x32xbf16>
    %26 = arith.truncf %24 : vector<192x64xf32> to vector<192x64xbf16>
    %cst_10 = arith.constant dense<0.000000e+00> : vector<192x32xf32>
    %27 = tpu.matmul %26, %25, %cst_10 {dimension_numbers = #tpu.dot_dimension_numbers<[1], [0], [0], [1], [0, 0, 1, 1], [], []>} : vector<192x64xbf16>, vector<64x32xbf16>, vector<192x32xf32> -> vector<192x32xf32>
    %c2 = arith.constant 2 : index
    %c0_11 = arith.constant 0 : index
    %28 = vector.load %arg4[%c2, %c0_11] : memref<24x128xf32, #tpu.memory_space<vmem>>, vector<1x32xf32>
    %29 = vector.broadcast %28 : vector<1x32xf32> to vector<192x32xf32>
    %30 = arith.addf %27, %29 : vector<192x32xf32>
    %c3 = arith.constant 3 : index
    %c0_12 = arith.constant 0 : index
    %31 = vector.load %arg4[%c3, %c0_12] : memref<24x128xf32, #tpu.memory_space<vmem>>, vector<1x32xf32>
    %c4 = arith.constant 4 : index
    %c0_13 = arith.constant 0 : index
    %32 = vector.load %arg4[%c4, %c0_13] : memref<24x128xf32, #tpu.memory_space<vmem>>, vector<1x32xf32>
    %cst_14 = arith.constant dense<0.000000e+00> : vector<192xf32>
    %33 = vector.multi_reduction <add>, %30, %cst_14 [1] : vector<192x32xf32> to vector<192xf32>
    %34 = vector.shape_cast %33 : vector<192xf32> to vector<192x1xf32>
    %cst_15 = arith.constant 3.200000e+01 : f32
    %35 = vector.broadcast %cst_15 : f32 to vector<192x1xf32>
    %36 = arith.divf %34, %35 : vector<192x1xf32>
    %37 = vector.broadcast %36 : vector<192x1xf32> to vector<192x32xf32>
    %38 = arith.subf %30, %37 : vector<192x32xf32>
    %39 = arith.mulf %38, %38 : vector<192x32xf32>
    %cst_16 = arith.constant dense<0.000000e+00> : vector<192xf32>
    %40 = vector.multi_reduction <add>, %39, %cst_16 [1] : vector<192x32xf32> to vector<192xf32>
    %41 = vector.shape_cast %40 : vector<192xf32> to vector<192x1xf32>
    %cst_17 = arith.constant 3.200000e+01 : f32
    %42 = vector.broadcast %cst_17 : f32 to vector<192x1xf32>
    %43 = arith.divf %41, %42 : vector<192x1xf32>
    %44 = vector.broadcast %36 : vector<192x1xf32> to vector<192x32xf32>
    %45 = arith.subf %30, %44 : vector<192x32xf32>
    %cst_18 = arith.constant 9.99999974E-6 : f32
    %46 = vector.broadcast %cst_18 : f32 to vector<192x1xf32>
    %47 = arith.addf %43, %46 : vector<192x1xf32>
    %48 = math.rsqrt %47 : vector<192x1xf32>
    %49 = vector.broadcast %48 : vector<192x1xf32> to vector<192x32xf32>
    %50 = arith.mulf %45, %49 : vector<192x32xf32>
    %51 = vector.broadcast %31 : vector<1x32xf32> to vector<192x32xf32>
    %52 = arith.mulf %50, %51 : vector<192x32xf32>
    %53 = vector.broadcast %32 : vector<1x32xf32> to vector<192x32xf32>
    %54 = arith.addf %52, %53 : vector<192x32xf32>
    %c1_19 = arith.constant 1 : index
    %c0_20 = arith.constant 0 : index
    %c0_21 = arith.constant 0 : index
    %55 = vector.load %arg2[%c1_19, %c0_20, %c0_21] : memref<2x192x32xf32, #tpu.memory_space<vmem>>, vector<1x192x32xf32>
    %56 = vector.shape_cast %55 : vector<1x192x32xf32> to vector<192x32xf32>
    %57 = arith.mulf %54, %56 : vector<192x32xf32>
    %c0_22 = arith.constant 0 : index
    %c0_23 = arith.constant 0 : index
    %c0_24 = arith.constant 0 : index
    %58 = vector.load %arg2[%c0_22, %c0_23, %c0_24] : memref<2x192x32xf32, #tpu.memory_space<vmem>>, vector<1x192x32xf32>
    %59 = vector.shape_cast %58 : vector<1x192x32xf32> to vector<192x32xf32>
    %60 = arith.addf %57, %59 : vector<192x32xf32>
    %c0_25 = arith.constant 0 : index
    %c0_26 = arith.constant 0 : index
    %61 = vector.load %arg3[%c0_25, %c0_26] : memref<192x192xf32, #tpu.memory_space<vmem>>, vector<192x192xf32>
    %c5 = arith.constant 5 : index
    %c0_27 = arith.constant 0 : index
    %62 = vector.load %arg4[%c5, %c0_27] : memref<24x128xf32, #tpu.memory_space<vmem>>, vector<1x32xf32>
    %c6 = arith.constant 6 : index
    %c0_28 = arith.constant 0 : index
    %63 = vector.load %arg4[%c6, %c0_28] : memref<24x128xf32, #tpu.memory_space<vmem>>, vector<1x32xf32>
    %cst_29 = arith.constant dense<0.000000e+00> : vector<192xf32>
    %64 = vector.multi_reduction <add>, %60, %cst_29 [1] : vector<192x32xf32> to vector<192xf32>
    %65 = vector.shape_cast %64 : vector<192xf32> to vector<192x1xf32>
    %cst_30 = arith.constant 3.200000e+01 : f32
    %66 = vector.broadcast %cst_30 : f32 to vector<192x1xf32>
    %67 = arith.divf %65, %66 : vector<192x1xf32>
    %68 = vector.broadcast %67 : vector<192x1xf32> to vector<192x32xf32>
    %69 = arith.subf %60, %68 : vector<192x32xf32>
    %70 = arith.mulf %69, %69 : vector<192x32xf32>
    %cst_31 = arith.constant dense<0.000000e+00> : vector<192xf32>
    %71 = vector.multi_reduction <add>, %70, %cst_31 [1] : vector<192x32xf32> to vector<192xf32>
    %72 = vector.shape_cast %71 : vector<192xf32> to vector<192x1xf32>
    %cst_32 = arith.constant 3.200000e+01 : f32
    %73 = vector.broadcast %cst_32 : f32 to vector<192x1xf32>
    %74 = arith.divf %72, %73 : vector<192x1xf32>
    %75 = vector.broadcast %67 : vector<192x1xf32> to vector<192x32xf32>
    %76 = arith.subf %60, %75 : vector<192x32xf32>
    %cst_33 = arith.constant 9.99999974E-6 : f32
    %77 = vector.broadcast %cst_33 : f32 to vector<192x1xf32>
    %78 = arith.addf %74, %77 : vector<192x1xf32>
    %79 = math.rsqrt %78 : vector<192x1xf32>
    %80 = vector.broadcast %79 : vector<192x1xf32> to vector<192x32xf32>
    %81 = arith.mulf %76, %80 : vector<192x32xf32>
    %82 = vector.broadcast %62 : vector<1x32xf32> to vector<192x32xf32>
    %83 = arith.mulf %81, %82 : vector<192x32xf32>
    %84 = vector.broadcast %63 : vector<1x32xf32> to vector<192x32xf32>
    %85 = arith.addf %83, %84 : vector<192x32xf32>
    %c0_34 = arith.constant 0 : index
    %c0_35 = arith.constant 0 : index
    %c0_36 = arith.constant 0 : index
    %86 = vector.load %arg6[%c0_34, %c0_35, %c0_36] : memref<2x32x128xbf16, #tpu.memory_space<vmem>>, vector<1x32x128xbf16>
    %87 = vector.shape_cast %86 : vector<1x32x128xbf16> to vector<32x128xbf16>
    %88 = arith.truncf %85 : vector<192x32xf32> to vector<192x32xbf16>
    %cst_37 = arith.constant dense<0.000000e+00> : vector<192x128xf32>
    %89 = tpu.matmul %88, %87, %cst_37 {dimension_numbers = #tpu.dot_dimension_numbers<[1], [0], [0], [1], [0, 0, 1, 1], [], []>} : vector<192x32xbf16>, vector<32x128xbf16>, vector<192x128xf32> -> vector<192x128xf32>
    %cst_38 = arith.constant 0.000000e+00 : f32
    %90 = vector.broadcast %cst_38 : f32 to vector<192x32xf32>
    %91 = vector.extract_strided_slice %89 {offsets = [0, 0], sizes = [192, 16], strides = [1, 1]} : vector<192x128xf32> to vector<192x16xf32>
    %92 = vector.extract_strided_slice %89 {offsets = [0, 32], sizes = [192, 16], strides = [1, 1]} : vector<192x128xf32> to vector<192x16xf32>
    %93 = vector.extract_strided_slice %89 {offsets = [0, 64], sizes = [192, 32], strides = [1, 1]} : vector<192x128xf32> to vector<192x32xf32>
    %94 = arith.truncf %91 : vector<192x16xf32> to vector<192x16xbf16>
    %95 = arith.truncf %92 : vector<192x16xf32> to vector<192x16xbf16>
    %cst_39 = arith.constant dense<0.000000e+00> : vector<192x192xf32>
    %96 = tpu.matmul %94, %95, %cst_39 {dimension_numbers = #tpu.dot_dimension_numbers<[1], [1], [0], [0], [0, 0, 1, 0], [], []>} : vector<192x16xbf16>, vector<192x16xbf16>, vector<192x192xf32> -> vector<192x192xf32>
    %97 = arith.addf %96, %61 : vector<192x192xf32>
    %cst_40 = arith.constant dense<0xFF800000> : vector<192xf32>
    %98 = vector.multi_reduction <maximumf>, %97, %cst_40 [1] : vector<192x192xf32> to vector<192xf32>
    %99 = vector.shape_cast %98 : vector<192xf32> to vector<192x1xf32>
    %100 = vector.broadcast %99 : vector<192x1xf32> to vector<192x192xf32>
    %101 = arith.subf %97, %100 : vector<192x192xf32>
    %102 = math.exp %101 : vector<192x192xf32>
    %cst_41 = arith.constant dense<0.000000e+00> : vector<192xf32>
    %103 = vector.multi_reduction <add>, %102, %cst_41 [1] : vector<192x192xf32> to vector<192xf32>
    %104 = vector.shape_cast %103 : vector<192xf32> to vector<192x1xf32>
    %105 = tpu.reciprocal %104 {approx = true} : vector<192x1xf32> -> vector<192x1xf32>
    %106 = vector.broadcast %105 : vector<192x1xf32> to vector<192x192xf32>
    %107 = arith.mulf %102, %106 : vector<192x192xf32>
    %108 = arith.truncf %107 : vector<192x192xf32> to vector<192x192xbf16>
    %109 = arith.truncf %93 : vector<192x32xf32> to vector<192x32xbf16>
    %cst_42 = arith.constant dense<0.000000e+00> : vector<192x32xf32>
    %110 = tpu.matmul %108, %109, %cst_42 {dimension_numbers = #tpu.dot_dimension_numbers<[1], [0], [0], [1], [0, 0, 1, 1], [], []>} : vector<192x192xbf16>, vector<192x32xbf16>, vector<192x32xf32> -> vector<192x32xf32>
    %111 = arith.addf %90, %110 : vector<192x32xf32>
    %112 = vector.extract_strided_slice %89 {offsets = [0, 16], sizes = [192, 16], strides = [1, 1]} : vector<192x128xf32> to vector<192x16xf32>
    %113 = vector.extract_strided_slice %89 {offsets = [0, 48], sizes = [192, 16], strides = [1, 1]} : vector<192x128xf32> to vector<192x16xf32>
    %114 = vector.extract_strided_slice %89 {offsets = [0, 96], sizes = [192, 32], strides = [1, 1]} : vector<192x128xf32> to vector<192x32xf32>
    %115 = arith.truncf %112 : vector<192x16xf32> to vector<192x16xbf16>
    %116 = arith.truncf %113 : vector<192x16xf32> to vector<192x16xbf16>
    %cst_43 = arith.constant dense<0.000000e+00> : vector<192x192xf32>
    %117 = tpu.matmul %115, %116, %cst_43 {dimension_numbers = #tpu.dot_dimension_numbers<[1], [1], [0], [0], [0, 0, 1, 0], [], []>} : vector<192x16xbf16>, vector<192x16xbf16>, vector<192x192xf32> -> vector<192x192xf32>
    %118 = arith.addf %117, %61 : vector<192x192xf32>
    %cst_44 = arith.constant dense<0xFF800000> : vector<192xf32>
    %119 = vector.multi_reduction <maximumf>, %118, %cst_44 [1] : vector<192x192xf32> to vector<192xf32>
    %120 = vector.shape_cast %119 : vector<192xf32> to vector<192x1xf32>
    %121 = vector.broadcast %120 : vector<192x1xf32> to vector<192x192xf32>
    %122 = arith.subf %118, %121 : vector<192x192xf32>
    %123 = math.exp %122 : vector<192x192xf32>
    %cst_45 = arith.constant dense<0.000000e+00> : vector<192xf32>
    %124 = vector.multi_reduction <add>, %123, %cst_45 [1] : vector<192x192xf32> to vector<192xf32>
    %125 = vector.shape_cast %124 : vector<192xf32> to vector<192x1xf32>
    %126 = tpu.reciprocal %125 {approx = true} : vector<192x1xf32> -> vector<192x1xf32>
    %127 = vector.broadcast %126 : vector<192x1xf32> to vector<192x192xf32>
    %128 = arith.mulf %123, %127 : vector<192x192xf32>
    %129 = arith.truncf %128 : vector<192x192xf32> to vector<192x192xbf16>
    %130 = arith.truncf %114 : vector<192x32xf32> to vector<192x32xbf16>
    %cst_46 = arith.constant dense<0.000000e+00> : vector<192x32xf32>
    %131 = tpu.matmul %129, %130, %cst_46 {dimension_numbers = #tpu.dot_dimension_numbers<[1], [0], [0], [1], [0, 0, 1, 1], [], []>} : vector<192x192xbf16>, vector<192x32xbf16>, vector<192x32xf32> -> vector<192x32xf32>
    %132 = arith.addf %111, %131 : vector<192x32xf32>
    %133 = arith.addf %60, %132 : vector<192x32xf32>
    %c7 = arith.constant 7 : index
    %c0_47 = arith.constant 0 : index
    %134 = vector.load %arg4[%c7, %c0_47] : memref<24x128xf32, #tpu.memory_space<vmem>>, vector<1x32xf32>
    %135 = vector.broadcast %134 : vector<1x32xf32> to vector<192x32xf32>
    %136 = arith.addf %133, %135 : vector<192x32xf32>
    %c8 = arith.constant 8 : index
    %c0_48 = arith.constant 0 : index
    %137 = vector.load %arg4[%c8, %c0_48] : memref<24x128xf32, #tpu.memory_space<vmem>>, vector<1x32xf32>
    %c9 = arith.constant 9 : index
    %c0_49 = arith.constant 0 : index
    %138 = vector.load %arg4[%c9, %c0_49] : memref<24x128xf32, #tpu.memory_space<vmem>>, vector<1x32xf32>
    %cst_50 = arith.constant dense<0.000000e+00> : vector<192xf32>
    %139 = vector.multi_reduction <add>, %136, %cst_50 [1] : vector<192x32xf32> to vector<192xf32>
    %140 = vector.shape_cast %139 : vector<192xf32> to vector<192x1xf32>
    %cst_51 = arith.constant 3.200000e+01 : f32
    %141 = vector.broadcast %cst_51 : f32 to vector<192x1xf32>
    %142 = arith.divf %140, %141 : vector<192x1xf32>
    %143 = vector.broadcast %142 : vector<192x1xf32> to vector<192x32xf32>
    %144 = arith.subf %136, %143 : vector<192x32xf32>
    %145 = arith.mulf %144, %144 : vector<192x32xf32>
    %cst_52 = arith.constant dense<0.000000e+00> : vector<192xf32>
    %146 = vector.multi_reduction <add>, %145, %cst_52 [1] : vector<192x32xf32> to vector<192xf32>
    %147 = vector.shape_cast %146 : vector<192xf32> to vector<192x1xf32>
    %cst_53 = arith.constant 3.200000e+01 : f32
    %148 = vector.broadcast %cst_53 : f32 to vector<192x1xf32>
    %149 = arith.divf %147, %148 : vector<192x1xf32>
    %150 = vector.broadcast %142 : vector<192x1xf32> to vector<192x32xf32>
    %151 = arith.subf %136, %150 : vector<192x32xf32>
    %cst_54 = arith.constant 9.99999974E-6 : f32
    %152 = vector.broadcast %cst_54 : f32 to vector<192x1xf32>
    %153 = arith.addf %149, %152 : vector<192x1xf32>
    %154 = math.rsqrt %153 : vector<192x1xf32>
    %155 = vector.broadcast %154 : vector<192x1xf32> to vector<192x32xf32>
    %156 = arith.mulf %151, %155 : vector<192x32xf32>
    %157 = vector.broadcast %137 : vector<1x32xf32> to vector<192x32xf32>
    %158 = arith.mulf %156, %157 : vector<192x32xf32>
    %159 = vector.broadcast %138 : vector<1x32xf32> to vector<192x32xf32>
    %160 = arith.addf %158, %159 : vector<192x32xf32>
    %c0_55 = arith.constant 0 : index
    %c0_56 = arith.constant 0 : index
    %c0_57 = arith.constant 0 : index
    %161 = vector.load %arg7[%c0_55, %c0_56, %c0_57] : memref<2x32x64xbf16, #tpu.memory_space<vmem>>, vector<1x32x64xbf16>
    %162 = vector.shape_cast %161 : vector<1x32x64xbf16> to vector<32x64xbf16>
    %163 = arith.truncf %160 : vector<192x32xf32> to vector<192x32xbf16>
    %cst_58 = arith.constant dense<0.000000e+00> : vector<192x64xf32>
    %164 = tpu.matmul %163, %162, %cst_58 {dimension_numbers = #tpu.dot_dimension_numbers<[1], [0], [0], [1], [0, 0, 1, 1], [], []>} : vector<192x32xbf16>, vector<32x64xbf16>, vector<192x64xf32> -> vector<192x64xf32>
    %c10 = arith.constant 10 : index
    %c0_59 = arith.constant 0 : index
    %165 = vector.load %arg4[%c10, %c0_59] : memref<24x128xf32, #tpu.memory_space<vmem>>, vector<1x64xf32>
    %166 = vector.broadcast %165 : vector<1x64xf32> to vector<192x64xf32>
    %167 = arith.addf %164, %166 : vector<192x64xf32>
    %cst_60 = arith.constant 5.000000e-01 : f32
    %168 = vector.broadcast %cst_60 : f32 to vector<192x64xf32>
    %169 = arith.mulf %168, %167 : vector<192x64xf32>
    %cst_61 = arith.constant 0.707106769 : f32
    %170 = vector.broadcast %cst_61 : f32 to vector<192x64xf32>
    %171 = arith.mulf %167, %170 : vector<192x64xf32>
    %172 = math.absf %171 : vector<192x64xf32>
    %cst_62 = arith.constant 0.327591091 : f32
    %173 = vector.broadcast %cst_62 : f32 to vector<192x64xf32>
    %174 = arith.mulf %173, %172 : vector<192x64xf32>
    %cst_63 = arith.constant 1.000000e+00 : f32
    %175 = vector.broadcast %cst_63 : f32 to vector<192x64xf32>
    %176 = arith.addf %175, %174 : vector<192x64xf32>
    %cst_64 = arith.constant 1.000000e+00 : f32
    %177 = vector.broadcast %cst_64 : f32 to vector<192x64xf32>
    %178 = arith.divf %177, %176 : vector<192x64xf32>
    %cst_65 = arith.constant 1.06140542 : f32
    %179 = vector.broadcast %cst_65 : f32 to vector<192x64xf32>
    %180 = arith.mulf %179, %178 : vector<192x64xf32>
    %cst_66 = arith.constant -1.45315206 : f32
    %181 = vector.broadcast %cst_66 : f32 to vector<192x64xf32>
    %182 = arith.addf %180, %181 : vector<192x64xf32>
    %183 = arith.mulf %182, %178 : vector<192x64xf32>
    %cst_67 = arith.constant 1.42141378 : f32
    %184 = vector.broadcast %cst_67 : f32 to vector<192x64xf32>
    %185 = arith.addf %183, %184 : vector<192x64xf32>
    %186 = arith.mulf %185, %178 : vector<192x64xf32>
    %cst_68 = arith.constant -0.284496725 : f32
    %187 = vector.broadcast %cst_68 : f32 to vector<192x64xf32>
    %188 = arith.addf %186, %187 : vector<192x64xf32>
    %189 = arith.mulf %188, %178 : vector<192x64xf32>
    %cst_69 = arith.constant 0.254829586 : f32
    %190 = vector.broadcast %cst_69 : f32 to vector<192x64xf32>
    %191 = arith.addf %189, %190 : vector<192x64xf32>
    %192 = arith.mulf %191, %178 : vector<192x64xf32>
    %cst_70 = arith.constant 0.000000e+00 : f32
    %193 = vector.broadcast %cst_70 : f32 to vector<192x64xf32>
    %194 = arith.subf %193, %172 : vector<192x64xf32>
    %195 = arith.mulf %194, %172 : vector<192x64xf32>
    %196 = math.exp %195 : vector<192x64xf32>
    %197 = arith.mulf %192, %196 : vector<192x64xf32>
    %cst_71 = arith.constant 1.000000e+00 : f32
    %198 = vector.broadcast %cst_71 : f32 to vector<192x64xf32>
    %199 = arith.subf %198, %197 : vector<192x64xf32>
    %cst_72 = arith.constant 0.000000e+00 : f32
    %200 = vector.broadcast %cst_72 : f32 to vector<192x64xf32>
    %201 = arith.cmpf oge, %171, %200 : vector<192x64xf32>
    %cst_73 = arith.constant 0.000000e+00 : f32
    %202 = vector.broadcast %cst_73 : f32 to vector<192x64xf32>
    %203 = arith.subf %202, %199 : vector<192x64xf32>
    %204 = arith.select %201, %199, %203 : vector<192x64xi1>, vector<192x64xf32>
    %cst_74 = arith.constant 1.000000e+00 : f32
    %205 = vector.broadcast %cst_74 : f32 to vector<192x64xf32>
    %206 = arith.addf %205, %204 : vector<192x64xf32>
    %207 = arith.mulf %169, %206 : vector<192x64xf32>
    %c0_75 = arith.constant 0 : index
    %c0_76 = arith.constant 0 : index
    %c0_77 = arith.constant 0 : index
    %208 = vector.load %arg8[%c0_75, %c0_76, %c0_77] : memref<2x64x32xbf16, #tpu.memory_space<vmem>>, vector<1x64x32xbf16>
    %209 = vector.shape_cast %208 : vector<1x64x32xbf16> to vector<64x32xbf16>
    %210 = arith.truncf %207 : vector<192x64xf32> to vector<192x64xbf16>
    %cst_78 = arith.constant dense<0.000000e+00> : vector<192x32xf32>
    %211 = tpu.matmul %210, %209, %cst_78 {dimension_numbers = #tpu.dot_dimension_numbers<[1], [0], [0], [1], [0, 0, 1, 1], [], []>} : vector<192x64xbf16>, vector<64x32xbf16>, vector<192x32xf32> -> vector<192x32xf32>
    %212 = arith.addf %136, %211 : vector<192x32xf32>
    %c11 = arith.constant 11 : index
    %c0_79 = arith.constant 0 : index
    %213 = vector.load %arg4[%c11, %c0_79] : memref<24x128xf32, #tpu.memory_space<vmem>>, vector<1x32xf32>
    %214 = vector.broadcast %213 : vector<1x32xf32> to vector<192x32xf32>
    %215 = arith.addf %212, %214 : vector<192x32xf32>
    %c12 = arith.constant 12 : index
    %c0_80 = arith.constant 0 : index
    %216 = vector.load %arg4[%c12, %c0_80] : memref<24x128xf32, #tpu.memory_space<vmem>>, vector<1x32xf32>
    %c13 = arith.constant 13 : index
    %c0_81 = arith.constant 0 : index
    %217 = vector.load %arg4[%c13, %c0_81] : memref<24x128xf32, #tpu.memory_space<vmem>>, vector<1x32xf32>
    %cst_82 = arith.constant dense<0.000000e+00> : vector<192xf32>
    %218 = vector.multi_reduction <add>, %215, %cst_82 [1] : vector<192x32xf32> to vector<192xf32>
    %219 = vector.shape_cast %218 : vector<192xf32> to vector<192x1xf32>
    %cst_83 = arith.constant 3.200000e+01 : f32
    %220 = vector.broadcast %cst_83 : f32 to vector<192x1xf32>
    %221 = arith.divf %219, %220 : vector<192x1xf32>
    %222 = vector.broadcast %221 : vector<192x1xf32> to vector<192x32xf32>
    %223 = arith.subf %215, %222 : vector<192x32xf32>
    %224 = arith.mulf %223, %223 : vector<192x32xf32>
    %cst_84 = arith.constant dense<0.000000e+00> : vector<192xf32>
    %225 = vector.multi_reduction <add>, %224, %cst_84 [1] : vector<192x32xf32> to vector<192xf32>
    %226 = vector.shape_cast %225 : vector<192xf32> to vector<192x1xf32>
    %cst_85 = arith.constant 3.200000e+01 : f32
    %227 = vector.broadcast %cst_85 : f32 to vector<192x1xf32>
    %228 = arith.divf %226, %227 : vector<192x1xf32>
    %229 = vector.broadcast %221 : vector<192x1xf32> to vector<192x32xf32>
    %230 = arith.subf %215, %229 : vector<192x32xf32>
    %cst_86 = arith.constant 9.99999974E-6 : f32
    %231 = vector.broadcast %cst_86 : f32 to vector<192x1xf32>
    %232 = arith.addf %228, %231 : vector<192x1xf32>
    %233 = math.rsqrt %232 : vector<192x1xf32>
    %234 = vector.broadcast %233 : vector<192x1xf32> to vector<192x32xf32>
    %235 = arith.mulf %230, %234 : vector<192x32xf32>
    %236 = vector.broadcast %216 : vector<1x32xf32> to vector<192x32xf32>
    %237 = arith.mulf %235, %236 : vector<192x32xf32>
    %238 = vector.broadcast %217 : vector<1x32xf32> to vector<192x32xf32>
    %239 = arith.addf %237, %238 : vector<192x32xf32>
    %c1_87 = arith.constant 1 : index
    %c0_88 = arith.constant 0 : index
    %c0_89 = arith.constant 0 : index
    %240 = vector.load %arg6[%c1_87, %c0_88, %c0_89] : memref<2x32x128xbf16, #tpu.memory_space<vmem>>, vector<1x32x128xbf16>
    %241 = vector.shape_cast %240 : vector<1x32x128xbf16> to vector<32x128xbf16>
    %242 = arith.truncf %239 : vector<192x32xf32> to vector<192x32xbf16>
    %cst_90 = arith.constant dense<0.000000e+00> : vector<192x128xf32>
    %243 = tpu.matmul %242, %241, %cst_90 {dimension_numbers = #tpu.dot_dimension_numbers<[1], [0], [0], [1], [0, 0, 1, 1], [], []>} : vector<192x32xbf16>, vector<32x128xbf16>, vector<192x128xf32> -> vector<192x128xf32>
    %cst_91 = arith.constant 0.000000e+00 : f32
    %244 = vector.broadcast %cst_91 : f32 to vector<192x32xf32>
    %245 = vector.extract_strided_slice %243 {offsets = [0, 0], sizes = [192, 16], strides = [1, 1]} : vector<192x128xf32> to vector<192x16xf32>
    %246 = vector.extract_strided_slice %243 {offsets = [0, 32], sizes = [192, 16], strides = [1, 1]} : vector<192x128xf32> to vector<192x16xf32>
    %247 = vector.extract_strided_slice %243 {offsets = [0, 64], sizes = [192, 32], strides = [1, 1]} : vector<192x128xf32> to vector<192x32xf32>
    %248 = arith.truncf %245 : vector<192x16xf32> to vector<192x16xbf16>
    %249 = arith.truncf %246 : vector<192x16xf32> to vector<192x16xbf16>
    %cst_92 = arith.constant dense<0.000000e+00> : vector<192x192xf32>
    %250 = tpu.matmul %248, %249, %cst_92 {dimension_numbers = #tpu.dot_dimension_numbers<[1], [1], [0], [0], [0, 0, 1, 0], [], []>} : vector<192x16xbf16>, vector<192x16xbf16>, vector<192x192xf32> -> vector<192x192xf32>
    %251 = arith.addf %250, %61 : vector<192x192xf32>
    %cst_93 = arith.constant dense<0xFF800000> : vector<192xf32>
    %252 = vector.multi_reduction <maximumf>, %251, %cst_93 [1] : vector<192x192xf32> to vector<192xf32>
    %253 = vector.shape_cast %252 : vector<192xf32> to vector<192x1xf32>
    %254 = vector.broadcast %253 : vector<192x1xf32> to vector<192x192xf32>
    %255 = arith.subf %251, %254 : vector<192x192xf32>
    %256 = math.exp %255 : vector<192x192xf32>
    %cst_94 = arith.constant dense<0.000000e+00> : vector<192xf32>
    %257 = vector.multi_reduction <add>, %256, %cst_94 [1] : vector<192x192xf32> to vector<192xf32>
    %258 = vector.shape_cast %257 : vector<192xf32> to vector<192x1xf32>
    %259 = tpu.reciprocal %258 {approx = true} : vector<192x1xf32> -> vector<192x1xf32>
    %260 = vector.broadcast %259 : vector<192x1xf32> to vector<192x192xf32>
    %261 = arith.mulf %256, %260 : vector<192x192xf32>
    %262 = arith.truncf %261 : vector<192x192xf32> to vector<192x192xbf16>
    %263 = arith.truncf %247 : vector<192x32xf32> to vector<192x32xbf16>
    %cst_95 = arith.constant dense<0.000000e+00> : vector<192x32xf32>
    %264 = tpu.matmul %262, %263, %cst_95 {dimension_numbers = #tpu.dot_dimension_numbers<[1], [0], [0], [1], [0, 0, 1, 1], [], []>} : vector<192x192xbf16>, vector<192x32xbf16>, vector<192x32xf32> -> vector<192x32xf32>
    %265 = arith.addf %244, %264 : vector<192x32xf32>
    %266 = vector.extract_strided_slice %243 {offsets = [0, 16], sizes = [192, 16], strides = [1, 1]} : vector<192x128xf32> to vector<192x16xf32>
    %267 = vector.extract_strided_slice %243 {offsets = [0, 48], sizes = [192, 16], strides = [1, 1]} : vector<192x128xf32> to vector<192x16xf32>
    %268 = vector.extract_strided_slice %243 {offsets = [0, 96], sizes = [192, 32], strides = [1, 1]} : vector<192x128xf32> to vector<192x32xf32>
    %269 = arith.truncf %266 : vector<192x16xf32> to vector<192x16xbf16>
    %270 = arith.truncf %267 : vector<192x16xf32> to vector<192x16xbf16>
    %cst_96 = arith.constant dense<0.000000e+00> : vector<192x192xf32>
    %271 = tpu.matmul %269, %270, %cst_96 {dimension_numbers = #tpu.dot_dimension_numbers<[1], [1], [0], [0], [0, 0, 1, 0], [], []>} : vector<192x16xbf16>, vector<192x16xbf16>, vector<192x192xf32> -> vector<192x192xf32>
    %272 = arith.addf %271, %61 : vector<192x192xf32>
    %cst_97 = arith.constant dense<0xFF800000> : vector<192xf32>
    %273 = vector.multi_reduction <maximumf>, %272, %cst_97 [1] : vector<192x192xf32> to vector<192xf32>
    %274 = vector.shape_cast %273 : vector<192xf32> to vector<192x1xf32>
    %275 = vector.broadcast %274 : vector<192x1xf32> to vector<192x192xf32>
    %276 = arith.subf %272, %275 : vector<192x192xf32>
    %277 = math.exp %276 : vector<192x192xf32>
    %cst_98 = arith.constant dense<0.000000e+00> : vector<192xf32>
    %278 = vector.multi_reduction <add>, %277, %cst_98 [1] : vector<192x192xf32> to vector<192xf32>
    %279 = vector.shape_cast %278 : vector<192xf32> to vector<192x1xf32>
    %280 = tpu.reciprocal %279 {approx = true} : vector<192x1xf32> -> vector<192x1xf32>
    %281 = vector.broadcast %280 : vector<192x1xf32> to vector<192x192xf32>
    %282 = arith.mulf %277, %281 : vector<192x192xf32>
    %283 = arith.truncf %282 : vector<192x192xf32> to vector<192x192xbf16>
    %284 = arith.truncf %268 : vector<192x32xf32> to vector<192x32xbf16>
    %cst_99 = arith.constant dense<0.000000e+00> : vector<192x32xf32>
    %285 = tpu.matmul %283, %284, %cst_99 {dimension_numbers = #tpu.dot_dimension_numbers<[1], [0], [0], [1], [0, 0, 1, 1], [], []>} : vector<192x192xbf16>, vector<192x32xbf16>, vector<192x32xf32> -> vector<192x32xf32>
    %286 = arith.addf %265, %285 : vector<192x32xf32>
    %287 = arith.addf %215, %286 : vector<192x32xf32>
    %c14 = arith.constant 14 : index
    %c0_100 = arith.constant 0 : index
    %288 = vector.load %arg4[%c14, %c0_100] : memref<24x128xf32, #tpu.memory_space<vmem>>, vector<1x32xf32>
    %289 = vector.broadcast %288 : vector<1x32xf32> to vector<192x32xf32>
    %290 = arith.addf %287, %289 : vector<192x32xf32>
    %c15 = arith.constant 15 : index
    %c0_101 = arith.constant 0 : index
    %291 = vector.load %arg4[%c15, %c0_101] : memref<24x128xf32, #tpu.memory_space<vmem>>, vector<1x32xf32>
    %c16 = arith.constant 16 : index
    %c0_102 = arith.constant 0 : index
    %292 = vector.load %arg4[%c16, %c0_102] : memref<24x128xf32, #tpu.memory_space<vmem>>, vector<1x32xf32>
    %cst_103 = arith.constant dense<0.000000e+00> : vector<192xf32>
    %293 = vector.multi_reduction <add>, %290, %cst_103 [1] : vector<192x32xf32> to vector<192xf32>
    %294 = vector.shape_cast %293 : vector<192xf32> to vector<192x1xf32>
    %cst_104 = arith.constant 3.200000e+01 : f32
    %295 = vector.broadcast %cst_104 : f32 to vector<192x1xf32>
    %296 = arith.divf %294, %295 : vector<192x1xf32>
    %297 = vector.broadcast %296 : vector<192x1xf32> to vector<192x32xf32>
    %298 = arith.subf %290, %297 : vector<192x32xf32>
    %299 = arith.mulf %298, %298 : vector<192x32xf32>
    %cst_105 = arith.constant dense<0.000000e+00> : vector<192xf32>
    %300 = vector.multi_reduction <add>, %299, %cst_105 [1] : vector<192x32xf32> to vector<192xf32>
    %301 = vector.shape_cast %300 : vector<192xf32> to vector<192x1xf32>
    %cst_106 = arith.constant 3.200000e+01 : f32
    %302 = vector.broadcast %cst_106 : f32 to vector<192x1xf32>
    %303 = arith.divf %301, %302 : vector<192x1xf32>
    %304 = vector.broadcast %296 : vector<192x1xf32> to vector<192x32xf32>
    %305 = arith.subf %290, %304 : vector<192x32xf32>
    %cst_107 = arith.constant 9.99999974E-6 : f32
    %306 = vector.broadcast %cst_107 : f32 to vector<192x1xf32>
    %307 = arith.addf %303, %306 : vector<192x1xf32>
    %308 = math.rsqrt %307 : vector<192x1xf32>
    %309 = vector.broadcast %308 : vector<192x1xf32> to vector<192x32xf32>
    %310 = arith.mulf %305, %309 : vector<192x32xf32>
    %311 = vector.broadcast %291 : vector<1x32xf32> to vector<192x32xf32>
    %312 = arith.mulf %310, %311 : vector<192x32xf32>
    %313 = vector.broadcast %292 : vector<1x32xf32> to vector<192x32xf32>
    %314 = arith.addf %312, %313 : vector<192x32xf32>
    %c1_108 = arith.constant 1 : index
    %c0_109 = arith.constant 0 : index
    %c0_110 = arith.constant 0 : index
    %315 = vector.load %arg7[%c1_108, %c0_109, %c0_110] : memref<2x32x64xbf16, #tpu.memory_space<vmem>>, vector<1x32x64xbf16>
    %316 = vector.shape_cast %315 : vector<1x32x64xbf16> to vector<32x64xbf16>
    %317 = arith.truncf %314 : vector<192x32xf32> to vector<192x32xbf16>
    %cst_111 = arith.constant dense<0.000000e+00> : vector<192x64xf32>
    %318 = tpu.matmul %317, %316, %cst_111 {dimension_numbers = #tpu.dot_dimension_numbers<[1], [0], [0], [1], [0, 0, 1, 1], [], []>} : vector<192x32xbf16>, vector<32x64xbf16>, vector<192x64xf32> -> vector<192x64xf32>
    %c17 = arith.constant 17 : index
    %c0_112 = arith.constant 0 : index
    %319 = vector.load %arg4[%c17, %c0_112] : memref<24x128xf32, #tpu.memory_space<vmem>>, vector<1x64xf32>
    %320 = vector.broadcast %319 : vector<1x64xf32> to vector<192x64xf32>
    %321 = arith.addf %318, %320 : vector<192x64xf32>
    %cst_113 = arith.constant 5.000000e-01 : f32
    %322 = vector.broadcast %cst_113 : f32 to vector<192x64xf32>
    %323 = arith.mulf %322, %321 : vector<192x64xf32>
    %cst_114 = arith.constant 0.707106769 : f32
    %324 = vector.broadcast %cst_114 : f32 to vector<192x64xf32>
    %325 = arith.mulf %321, %324 : vector<192x64xf32>
    %326 = math.absf %325 : vector<192x64xf32>
    %cst_115 = arith.constant 0.327591091 : f32
    %327 = vector.broadcast %cst_115 : f32 to vector<192x64xf32>
    %328 = arith.mulf %327, %326 : vector<192x64xf32>
    %cst_116 = arith.constant 1.000000e+00 : f32
    %329 = vector.broadcast %cst_116 : f32 to vector<192x64xf32>
    %330 = arith.addf %329, %328 : vector<192x64xf32>
    %cst_117 = arith.constant 1.000000e+00 : f32
    %331 = vector.broadcast %cst_117 : f32 to vector<192x64xf32>
    %332 = arith.divf %331, %330 : vector<192x64xf32>
    %cst_118 = arith.constant 1.06140542 : f32
    %333 = vector.broadcast %cst_118 : f32 to vector<192x64xf32>
    %334 = arith.mulf %333, %332 : vector<192x64xf32>
    %cst_119 = arith.constant -1.45315206 : f32
    %335 = vector.broadcast %cst_119 : f32 to vector<192x64xf32>
    %336 = arith.addf %334, %335 : vector<192x64xf32>
    %337 = arith.mulf %336, %332 : vector<192x64xf32>
    %cst_120 = arith.constant 1.42141378 : f32
    %338 = vector.broadcast %cst_120 : f32 to vector<192x64xf32>
    %339 = arith.addf %337, %338 : vector<192x64xf32>
    %340 = arith.mulf %339, %332 : vector<192x64xf32>
    %cst_121 = arith.constant -0.284496725 : f32
    %341 = vector.broadcast %cst_121 : f32 to vector<192x64xf32>
    %342 = arith.addf %340, %341 : vector<192x64xf32>
    %343 = arith.mulf %342, %332 : vector<192x64xf32>
    %cst_122 = arith.constant 0.254829586 : f32
    %344 = vector.broadcast %cst_122 : f32 to vector<192x64xf32>
    %345 = arith.addf %343, %344 : vector<192x64xf32>
    %346 = arith.mulf %345, %332 : vector<192x64xf32>
    %cst_123 = arith.constant 0.000000e+00 : f32
    %347 = vector.broadcast %cst_123 : f32 to vector<192x64xf32>
    %348 = arith.subf %347, %326 : vector<192x64xf32>
    %349 = arith.mulf %348, %326 : vector<192x64xf32>
    %350 = math.exp %349 : vector<192x64xf32>
    %351 = arith.mulf %346, %350 : vector<192x64xf32>
    %cst_124 = arith.constant 1.000000e+00 : f32
    %352 = vector.broadcast %cst_124 : f32 to vector<192x64xf32>
    %353 = arith.subf %352, %351 : vector<192x64xf32>
    %cst_125 = arith.constant 0.000000e+00 : f32
    %354 = vector.broadcast %cst_125 : f32 to vector<192x64xf32>
    %355 = arith.cmpf oge, %325, %354 : vector<192x64xf32>
    %cst_126 = arith.constant 0.000000e+00 : f32
    %356 = vector.broadcast %cst_126 : f32 to vector<192x64xf32>
    %357 = arith.subf %356, %353 : vector<192x64xf32>
    %358 = arith.select %355, %353, %357 : vector<192x64xi1>, vector<192x64xf32>
    %cst_127 = arith.constant 1.000000e+00 : f32
    %359 = vector.broadcast %cst_127 : f32 to vector<192x64xf32>
    %360 = arith.addf %359, %358 : vector<192x64xf32>
    %361 = arith.mulf %323, %360 : vector<192x64xf32>
    %c1_128 = arith.constant 1 : index
    %c0_129 = arith.constant 0 : index
    %c0_130 = arith.constant 0 : index
    %362 = vector.load %arg8[%c1_128, %c0_129, %c0_130] : memref<2x64x32xbf16, #tpu.memory_space<vmem>>, vector<1x64x32xbf16>
    %363 = vector.shape_cast %362 : vector<1x64x32xbf16> to vector<64x32xbf16>
    %364 = arith.truncf %361 : vector<192x64xf32> to vector<192x64xbf16>
    %cst_131 = arith.constant dense<0.000000e+00> : vector<192x32xf32>
    %365 = tpu.matmul %364, %363, %cst_131 {dimension_numbers = #tpu.dot_dimension_numbers<[1], [0], [0], [1], [0, 0, 1, 1], [], []>} : vector<192x64xbf16>, vector<64x32xbf16>, vector<192x32xf32> -> vector<192x32xf32>
    %366 = arith.addf %290, %365 : vector<192x32xf32>
    %c18 = arith.constant 18 : index
    %c0_132 = arith.constant 0 : index
    %367 = vector.load %arg4[%c18, %c0_132] : memref<24x128xf32, #tpu.memory_space<vmem>>, vector<1x32xf32>
    %368 = vector.broadcast %367 : vector<1x32xf32> to vector<192x32xf32>
    %369 = arith.addf %366, %368 : vector<192x32xf32>
    %370 = vector.extract_strided_slice %369 {offsets = [0, 0], sizes = [1, 32], strides = [1, 1]} : vector<192x32xf32> to vector<1x32xf32>
    %371 = vector.extract_strided_slice %369 {offsets = [24, 0], sizes = [1, 32], strides = [1, 1]} : vector<192x32xf32> to vector<1x32xf32>
    %372 = vector.extract_strided_slice %369 {offsets = [48, 0], sizes = [1, 32], strides = [1, 1]} : vector<192x32xf32> to vector<1x32xf32>
    %373 = vector.extract_strided_slice %369 {offsets = [72, 0], sizes = [1, 32], strides = [1, 1]} : vector<192x32xf32> to vector<1x32xf32>
    %374 = vector.extract_strided_slice %369 {offsets = [96, 0], sizes = [1, 32], strides = [1, 1]} : vector<192x32xf32> to vector<1x32xf32>
    %375 = vector.extract_strided_slice %369 {offsets = [120, 0], sizes = [1, 32], strides = [1, 1]} : vector<192x32xf32> to vector<1x32xf32>
    %376 = vector.extract_strided_slice %369 {offsets = [144, 0], sizes = [1, 32], strides = [1, 1]} : vector<192x32xf32> to vector<1x32xf32>
    %377 = vector.extract_strided_slice %369 {offsets = [168, 0], sizes = [1, 32], strides = [1, 1]} : vector<192x32xf32> to vector<1x32xf32>
    %378 = vector.extract_strided_slice %369 {offsets = [1, 0], sizes = [1, 32], strides = [1, 1]} : vector<192x32xf32> to vector<1x32xf32>
    %379 = vector.extract_strided_slice %369 {offsets = [25, 0], sizes = [1, 32], strides = [1, 1]} : vector<192x32xf32> to vector<1x32xf32>
    %380 = vector.extract_strided_slice %369 {offsets = [49, 0], sizes = [1, 32], strides = [1, 1]} : vector<192x32xf32> to vector<1x32xf32>
    %381 = vector.extract_strided_slice %369 {offsets = [73, 0], sizes = [1, 32], strides = [1, 1]} : vector<192x32xf32> to vector<1x32xf32>
    %382 = vector.extract_strided_slice %369 {offsets = [97, 0], sizes = [1, 32], strides = [1, 1]} : vector<192x32xf32> to vector<1x32xf32>
    %383 = vector.extract_strided_slice %369 {offsets = [121, 0], sizes = [1, 32], strides = [1, 1]} : vector<192x32xf32> to vector<1x32xf32>
    %384 = vector.extract_strided_slice %369 {offsets = [145, 0], sizes = [1, 32], strides = [1, 1]} : vector<192x32xf32> to vector<1x32xf32>
    %385 = vector.extract_strided_slice %369 {offsets = [169, 0], sizes = [1, 32], strides = [1, 1]} : vector<192x32xf32> to vector<1x32xf32>
    %386 = tpu.concatenate %370, %371, %372, %373, %374, %375, %376, %377, %378, %379, %380, %381, %382, %383, %384, %385 in 0 : vector<1x32xf32>, vector<1x32xf32>, vector<1x32xf32>, vector<1x32xf32>, vector<1x32xf32>, vector<1x32xf32>, vector<1x32xf32>, vector<1x32xf32>, vector<1x32xf32>, vector<1x32xf32>, vector<1x32xf32>, vector<1x32xf32>, vector<1x32xf32>, vector<1x32xf32>, vector<1x32xf32>, vector<1x32xf32> -> vector<16x32xf32>
    %c19 = arith.constant 19 : index
    %c0_133 = arith.constant 0 : index
    %387 = vector.load %arg4[%c19, %c0_133] : memref<24x128xf32, #tpu.memory_space<vmem>>, vector<1x32xf32>
    %c20 = arith.constant 20 : index
    %c0_134 = arith.constant 0 : index
    %388 = vector.load %arg4[%c20, %c0_134] : memref<24x128xf32, #tpu.memory_space<vmem>>, vector<1x32xf32>
    %cst_135 = arith.constant dense<0.000000e+00> : vector<16xf32>
    %389 = vector.multi_reduction <add>, %386, %cst_135 [1] : vector<16x32xf32> to vector<16xf32>
    %390 = vector.shape_cast %389 : vector<16xf32> to vector<16x1xf32>
    %cst_136 = arith.constant 3.200000e+01 : f32
    %391 = vector.broadcast %cst_136 : f32 to vector<16x1xf32>
    %392 = arith.divf %390, %391 : vector<16x1xf32>
    %393 = vector.broadcast %392 : vector<16x1xf32> to vector<16x32xf32>
    %394 = arith.subf %386, %393 : vector<16x32xf32>
    %395 = arith.mulf %394, %394 : vector<16x32xf32>
    %cst_137 = arith.constant dense<0.000000e+00> : vector<16xf32>
    %396 = vector.multi_reduction <add>, %395, %cst_137 [1] : vector<16x32xf32> to vector<16xf32>
    %397 = vector.shape_cast %396 : vector<16xf32> to vector<16x1xf32>
    %cst_138 = arith.constant 3.200000e+01 : f32
    %398 = vector.broadcast %cst_138 : f32 to vector<16x1xf32>
    %399 = arith.divf %397, %398 : vector<16x1xf32>
    %400 = vector.broadcast %392 : vector<16x1xf32> to vector<16x32xf32>
    %401 = arith.subf %386, %400 : vector<16x32xf32>
    %cst_139 = arith.constant 9.99999974E-6 : f32
    %402 = vector.broadcast %cst_139 : f32 to vector<16x1xf32>
    %403 = arith.addf %399, %402 : vector<16x1xf32>
    %404 = math.rsqrt %403 : vector<16x1xf32>
    %405 = vector.broadcast %404 : vector<16x1xf32> to vector<16x32xf32>
    %406 = arith.mulf %401, %405 : vector<16x32xf32>
    %407 = vector.broadcast %387 : vector<1x32xf32> to vector<16x32xf32>
    %408 = arith.mulf %406, %407 : vector<16x32xf32>
    %409 = vector.broadcast %388 : vector<1x32xf32> to vector<16x32xf32>
    %410 = arith.addf %408, %409 : vector<16x32xf32>
    %c0_140 = arith.constant 0 : index
    %c0_141 = arith.constant 0 : index
    %411 = vector.load %arg9[%c0_140, %c0_141] : memref<32x128xbf16, #tpu.memory_space<vmem>>, vector<32x128xbf16>
    %412 = arith.truncf %410 : vector<16x32xf32> to vector<16x32xbf16>
    %cst_142 = arith.constant dense<0.000000e+00> : vector<16x128xf32>
    %413 = tpu.matmul %412, %411, %cst_142 {dimension_numbers = #tpu.dot_dimension_numbers<[1], [0], [0], [1], [0, 0, 1, 1], [], []>} : vector<16x32xbf16>, vector<32x128xbf16>, vector<16x128xf32> -> vector<16x128xf32>
    %c21 = arith.constant 21 : index
    %c0_143 = arith.constant 0 : index
    %414 = vector.load %arg4[%c21, %c0_143] : memref<24x128xf32, #tpu.memory_space<vmem>>, vector<1x128xf32>
    %415 = vector.broadcast %414 : vector<1x128xf32> to vector<16x128xf32>
    %416 = arith.addf %413, %415 : vector<16x128xf32>
    %417 = vector.extract_strided_slice %416 {offsets = [0, 0], sizes = [8, 128], strides = [1, 1]} : vector<16x128xf32> to vector<8x128xf32>
    %418 = vector.extract_strided_slice %416 {offsets = [8, 0], sizes = [8, 128], strides = [1, 1]} : vector<16x128xf32> to vector<8x128xf32>
    %419 = math.absf %418 : vector<8x128xf32>
    %cst_144 = arith.constant 0.000000e+00 : f32
    %420 = vector.broadcast %cst_144 : f32 to vector<8x128xf32>
    %421 = arith.subf %420, %419 : vector<8x128xf32>
    %422 = math.exp %421 : vector<8x128xf32>
    %cst_145 = arith.constant 0.000000e+00 : f32
    %423 = vector.broadcast %cst_145 : f32 to vector<8x128xf32>
    %424 = arith.cmpf oge, %418, %423 : vector<8x128xf32>
    %cst_146 = arith.constant 1.000000e+00 : f32
    %425 = vector.broadcast %cst_146 : f32 to vector<8x128xf32>
    %426 = arith.addf %425, %422 : vector<8x128xf32>
    %cst_147 = arith.constant 1.000000e+00 : f32
    %427 = vector.broadcast %cst_147 : f32 to vector<8x128xf32>
    %428 = arith.divf %427, %426 : vector<8x128xf32>
    %cst_148 = arith.constant 1.000000e+00 : f32
    %429 = vector.broadcast %cst_148 : f32 to vector<8x128xf32>
    %430 = arith.addf %429, %422 : vector<8x128xf32>
    %431 = arith.divf %422, %430 : vector<8x128xf32>
    %432 = arith.select %424, %428, %431 : vector<8x128xi1>, vector<8x128xf32>
    %433 = tpu.iota {dimensions = array<i32: 1>} : vector<8x128xi32>
    %c8_i32 = arith.constant 8 : i32
    %434 = vector.broadcast %c8_i32 : i32 to vector<8x128xi32>
    %435 = arith.cmpi slt, %433, %434 : vector<8x128xi32>
    %cst_149 = arith.constant 0.000000e+00 : f32
    %436 = vector.broadcast %cst_149 : f32 to vector<8x128xf32>
    %437 = arith.select %435, %417, %436 : vector<8x128xi1>, vector<8x128xf32>
    %c8_i32_150 = arith.constant 8 : i32
    %438 = vector.broadcast %c8_i32_150 : i32 to vector<8x128xi32>
    %439 = arith.cmpi sge, %433, %438 : vector<8x128xi32>
    %c12_i32 = arith.constant 12 : i32
    %440 = vector.broadcast %c12_i32 : i32 to vector<8x128xi32>
    %441 = arith.cmpi slt, %433, %440 : vector<8x128xi32>
    %442 = arith.andi %439, %441 : vector<8x128xi1>
    %cst_151 = arith.constant 0.000000e+00 : f32
    %443 = vector.broadcast %cst_151 : f32 to vector<8x128xf32>
    %444 = arith.select %442, %432, %443 : vector<8x128xi1>, vector<8x128xf32>
    %445 = arith.addf %437, %444 : vector<8x128xf32>
    %c0_152 = arith.constant 0 : index
    %c0_153 = arith.constant 0 : index
    %446 = vector.load %arg10[%c0_152, %c0_153] : memref<8x128xf32, #tpu.memory_space<vmem>>, vector<8x128xf32>
    tpu.vector_store %arg10[%c0_152, %c0_153], %445 {strides = array<i32>} : memref<8x128xf32, #tpu.memory_space<vmem>>, vector<8x128xf32>,
    return
  }
  func.func @transform_0(%arg0: i32) -> (i32, i32) {
    %c0_i32 = arith.constant 0 : i32
    %c0_i32_0 = arith.constant 0 : i32
    return %arg0, %c0_i32 : i32, i32
  }
  func.func @transform_1(%arg0: i32) -> (i32, i32, i32) {
    %c0_i32 = arith.constant 0 : i32
    %c0_i32_0 = arith.constant 0 : i32
    %c0_i32_1 = arith.constant 0 : i32
    %c0_i32_2 = arith.constant 0 : i32
    return %c0_i32, %c0_i32_0, %c0_i32_1 : i32, i32, i32
  }
  func.func @transform_2(%arg0: i32) -> (i32, i32) {
    %c0_i32 = arith.constant 0 : i32
    %c0_i32_0 = arith.constant 0 : i32
    %c0_i32_1 = arith.constant 0 : i32
    return %c0_i32, %c0_i32_0 : i32, i32
  }
  func.func @transform_3(%arg0: i32) -> (i32, i32) {
    %c0_i32 = arith.constant 0 : i32
    %c0_i32_0 = arith.constant 0 : i32
    %c0_i32_1 = arith.constant 0 : i32
    return %c0_i32, %c0_i32_0 : i32, i32
  }
  func.func @transform_4(%arg0: i32) -> (i32, i32) {
    %c0_i32 = arith.constant 0 : i32
    %c0_i32_0 = arith.constant 0 : i32
    %c0_i32_1 = arith.constant 0 : i32
    return %c0_i32, %c0_i32_0 : i32, i32
  }
  func.func @transform_5(%arg0: i32) -> (i32, i32, i32) {
    %c0_i32 = arith.constant 0 : i32
    %c0_i32_0 = arith.constant 0 : i32
    %c0_i32_1 = arith.constant 0 : i32
    %c0_i32_2 = arith.constant 0 : i32
    return %c0_i32, %c0_i32_0, %c0_i32_1 : i32, i32, i32
  }
  func.func @transform_6(%arg0: i32) -> (i32, i32, i32) {
    %c0_i32 = arith.constant 0 : i32
    %c0_i32_0 = arith.constant 0 : i32
    %c0_i32_1 = arith.constant 0 : i32
    %c0_i32_2 = arith.constant 0 : i32
    return %c0_i32, %c0_i32_0, %c0_i32_1 : i32, i32, i32
  }
  func.func @transform_7(%arg0: i32) -> (i32, i32, i32) {
    %c0_i32 = arith.constant 0 : i32
    %c0_i32_0 = arith.constant 0 : i32
    %c0_i32_1 = arith.constant 0 : i32
    %c0_i32_2 = arith.constant 0 : i32
    return %c0_i32, %c0_i32_0, %c0_i32_1 : i32, i32, i32
  }
  func.func @transform_8(%arg0: i32) -> (i32, i32) {
    %c0_i32 = arith.constant 0 : i32
    %c0_i32_0 = arith.constant 0 : i32
    %c0_i32_1 = arith.constant 0 : i32
    return %c0_i32, %c0_i32_0 : i32, i32
  }
  func.func @transform_9(%arg0: i32) -> (i32, i32) {
    %c0_i32 = arith.constant 0 : i32
    %c0_i32_0 = arith.constant 0 : i32
    return %arg0, %c0_i32 : i32, i32
  }
}

</mosaic_0001>

<llo_original>
// kernel: vit_detection_forward.1
$region0: #{vit_detection_forward.1}
  #allocation0 [shape = 'u32[]', space=smem, size = 0x4, offset = 0x4, fixed_abs, tag = 'smem constant byte address 0x4 - core index']
  #allocation1 [shape = 'u32[144,128]{1,0:T(1,128)}', space=vmem, size = 0x12000, scoped, tag = 'internal scratch']
  %s0 = inlined_call_operand.vmem [shape: f32[384,64], index: 0, kind: input, shape index: {}]
  %s1 = inlined_call_operand.vmem [shape: f32[2,192,32], index: 1, kind: input, shape index: {}]
  %s2 = inlined_call_operand.vmem [shape: f32[192,192], index: 2, kind: input, shape index: {}]
  %s3 = inlined_call_operand.vmem [shape: f32[24,128], index: 3, kind: input, shape index: {}]
  %s4 = inlined_call_operand.vmem [shape: bf16[64,32], index: 4, kind: input, shape index: {}]
  %s5 = inlined_call_operand.vmem [shape: bf16[2,32,128], index: 5, kind: input, shape index: {}]
  %s6 = inlined_call_operand.vmem [shape: bf16[2,32,64], index: 6, kind: input, shape index: {}]
  %s7 = inlined_call_operand.vmem [shape: bf16[2,64,32], index: 7, kind: input, shape index: {}]
  %s8 = inlined_call_operand.vmem [shape: bf16[32,128], index: 8, kind: input, shape index: {}]
  %s9 = inlined_call_operand.vmem [shape: f32[16,128], index: 9, kind: output, shape index: {}]
  %s10 = sld [smem:[#allocation0]]
  $region69: #{vit_detection_forward.1} parent=0
    _
  %s12 = ssub.s32 1, %s10
  %s13 = scalar_select 0, %s12, %s10
  loop: start=0, step=1, limit=4
  $region2: #{vit_detection_forward.1} parent=0 // loop_pre_header
    _
  $region3: #{vit_detection_forward.1} parent=0 // loop_header
    %s15 = sphi 0, %s19
    %p16 = scmp.ge.s32.totalorder %s15, 4
    %s25 = sphi 0, %s27
    %s28 = sphi 0, %s25
    %s29 = sphi 0, %s28
    %s45 = sphi 0, %s29
    %s49 = sphi 0, %s49
    %s51 = sphi 0, %s49
    %s52 = sphi 0, %s51
    %s66 = sphi 0, %s52
    %s70 = sphi 0, %s70
    %s72 = sphi 0, %s70
    %s73 = sphi 0, %s72
    %s87 = sphi 0, %s73
    %s91 = sphi 0, %s91
    %s93 = sphi 0, %s91
    %s94 = sphi 0, %s93
    %s108 = sphi 0, %s94
    %s112 = sphi 0, %s112
    %s114 = sphi 0, %s112
    %s115 = sphi 0, %s114
    %s129 = sphi 0, %s115
    %s133 = sphi 0, %s133
    %s135 = sphi 0, %s133
    %s136 = sphi 0, %s135
    %s150 = sphi 0, %s136
    %s154 = sphi 0, %s154
    %s156 = sphi 0, %s154
    %s157 = sphi 0, %s156
    %s171 = sphi 0, %s157
    %s175 = sphi 0, %s175
    %s177 = sphi 0, %s175
    %s178 = sphi 0, %s177
    %s192 = sphi 0, %s178
    %s196 = sphi 0, %s196
    %s198 = sphi 0, %s196
    %s199 = sphi 0, %s198
    %s213 = sphi 0, %s199
    %s219 = sphi 0, %s221
    %s222 = sphi 0, %s219
    %s223 = sphi 0, %s222
    %s239 = sphi 0, %s223
  $region4: #{vit_detection_forward.1} parent=0 // loop_header_branch
    %18 = sbr.rel (%p16) target = $region8
  $region5: #{vit_detection_forward.1} parent=0 // loop_body
    %s20 = ssub.s32 %s15, 1
    %s21 = ssub.s32 %s15, 2
    %s22 = sadd.s32 %s15, 1
    %s23 = ssub.s32 %s15, %s22
    %p24 = scmp.eq.s32.totalorder %s23, 0
    %s26 = sadd.s32 %s25, 1
    %s27 = scalar_select %p24, %s25, %s26
    %p30 = pneg %p24
    %p31 = scmp.eq.s32.totalorder %s15, 1
    %p32 = por %p30, %p31
    %p33 = scmp.ne.s32.totalorder %s25, %s28
    %p34 = scmp.eq.s32.totalorder %s15, 0
    %p35 = por %p33, %p34
    %p36 = scmp.ne.s32.totalorder %s25, %s28
    %p37 = scmp.eq.s32.totalorder %s20, 1
    %p38 = por %p36, %p37
    %p39 = scmp.ne.s32.totalorder %s28, %s29
    %p40 = scmp.eq.s32.totalorder %s20, 0
    %p41 = por %p39, %p40
    %p42 = scmp.ne.s32.totalorder %s28, %s29
    %p43 = scmp.eq.s32.totalorder %s21, 1
    %p44 = por %p42, %p43
    %p46 = scmp.ne.s32.totalorder %s29, %s45
    %p47 = scmp.eq.s32.totalorder %s21, 0
    %p48 = por %p46, %p47
    %s50 = sadd.s32 %s49, 1
    %p53 = scmp.eq.s32.totalorder %s15, 1
    %p54 = scmp.ne.s32.totalorder %s49, %s51
    %p55 = scmp.eq.s32.totalorder %s15, 0
    %p56 = por %p54, %p55
    %p57 = scmp.ne.s32.totalorder %s49, %s51
    %p58 = scmp.eq.s32.totalorder %s20, 1
    %p59 = por %p57, %p58
    %p60 = scmp.ne.s32.totalorder %s51, %s52
    %p61 = scmp.eq.s32.totalorder %s20, 0
    %p62 = por %p60, %p61
    %p63 = scmp.ne.s32.totalorder %s51, %s52
    %p64 = scmp.eq.s32.totalorder %s21, 1
    %p65 = por %p63, %p64
    %p67 = scmp.ne.s32.totalorder %s52, %s66
    %p68 = scmp.eq.s32.totalorder %s21, 0
    %p69 = por %p67, %p68
    %s71 = sadd.s32 %s70, 1
    %p74 = scmp.eq.s32.totalorder %s15, 1
    %p75 = scmp.ne.s32.totalorder %s70, %s72
    %p76 = scmp.eq.s32.totalorder %s15, 0
    %p77 = por %p75, %p76
    %p78 = scmp.ne.s32.totalorder %s70, %s72
    %p79 = scmp.eq.s32.totalorder %s20, 1
    %p80 = por %p78, %p79
    %p81 = scmp.ne.s32.totalorder %s72, %s73
    %p82 = scmp.eq.s32.totalorder %s20, 0
    %p83 = por %p81, %p82
    %p84 = scmp.ne.s32.totalorder %s72, %s73
    %p85 = scmp.eq.s32.totalorder %s21, 1
    %p86 = por %p84, %p85
    %p88 = scmp.ne.s32.totalorder %s73, %s87
    %p89 = scmp.eq.s32.totalorder %s21, 0
    %p90 = por %p88, %p89
    %s92 = sadd.s32 %s91, 1
    %p95 = scmp.eq.s32.totalorder %s15, 1
    %p96 = scmp.ne.s32.totalorder %s91, %s93
    %p97 = scmp.eq.s32.totalorder %s15, 0
    %p98 = por %p96, %p97
    %p99 = scmp.ne.s32.totalorder %s91, %s93
    %p100 = scmp.eq.s32.totalorder %s20, 1
    %p101 = por %p99, %p100
    %p102 = scmp.ne.s32.totalorder %s93, %s94
    %p103 = scmp.eq.s32.totalorder %s20, 0
    %p104 = por %p102, %p103
    %p105 = scmp.ne.s32.totalorder %s93, %s94
    %p106 = scmp.eq.s32.totalorder %s21, 1
    %p107 = por %p105, %p106
    %p109 = scmp.ne.s32.totalorder %s94, %s108
    %p110 = scmp.eq.s32.totalorder %s21, 0
    %p111 = por %p109, %p110
    %s113 = sadd.s32 %s112, 1
    %p116 = scmp.eq.s32.totalorder %s15, 1
    %p117 = scmp.ne.s32.totalorder %s112, %s114
    %p118 = scmp.eq.s32.totalorder %s15, 0
    %p119 = por %p117, %p118
    %p120 = scmp.ne.s32.totalorder %s112, %s114
    %p121 = scmp.eq.s32.totalorder %s20, 1
    %p122 = por %p120, %p121
    %p123 = scmp.ne.s32.totalorder %s114, %s115
    %p124 = scmp.eq.s32.totalorder %s20, 0
    %p125 = por %p123, %p124
    %p126 = scmp.ne.s32.totalorder %s114, %s115
    %p127 = scmp.eq.s32.totalorder %s21, 1
    %p128 = por %p126, %p127
    %p130 = scmp.ne.s32.totalorder %s115, %s129
    %p131 = scmp.eq.s32.totalorder %s21, 0
    %p132 = por %p130, %p131
    %s134 = sadd.s32 %s133, 1
    %p137 = scmp.eq.s32.totalorder %s15, 1
    %p138 = scmp.ne.s32.totalorder %s133, %s135
    %p139 = scmp.eq.s32.totalorder %s15, 0
    %p140 = por %p138, %p139
    %p141 = scmp.ne.s32.totalorder %s133, %s135
    %p142 = scmp.eq.s32.totalorder %s20, 1
    %p143 = por %p141, %p142
    %p144 = scmp.ne.s32.totalorder %s135, %s136
    %p145 = scmp.eq.s32.totalorder %s20, 0
    %p146 = por %p144, %p145
    %p147 = scmp.ne.s32.totalorder %s135, %s136
    %p148 = scmp.eq.s32.totalorder %s21, 1
    %p149 = por %p147, %p148
    %p151 = scmp.ne.s32.totalorder %s136, %s150
    %p152 = scmp.eq.s32.totalorder %s21, 0
    %p153 = por %p151, %p152
    %s155 = sadd.s32 %s154, 1
    %p158 = scmp.eq.s32.totalorder %s15, 1
    %p159 = scmp.ne.s32.totalorder %s154, %s156
    %p160 = scmp.eq.s32.totalorder %s15, 0
    %p161 = por %p159, %p160
    %p162 = scmp.ne.s32.totalorder %s154, %s156
    %p163 = scmp.eq.s32.totalorder %s20, 1
    %p164 = por %p162, %p163
    %p165 = scmp.ne.s32.totalorder %s156, %s157
    %p166 = scmp.eq.s32.totalorder %s20, 0
    %p167 = por %p165, %p166
    %p168 = scmp.ne.s32.totalorder %s156, %s157
    %p169 = scmp.eq.s32.totalorder %s21, 1
    %p170 = por %p168, %p169
    %p172 = scmp.ne.s32.totalorder %s157, %s171
    %p173 = scmp.eq.s32.totalorder %s21, 0
    %p174 = por %p172, %p173
    %s176 = sadd.s32 %s175, 1
    %p179 = scmp.eq.s32.totalorder %s15, 1
    %p180 = scmp.ne.s32.totalorder %s175, %s177
    %p181 = scmp.eq.s32.totalorder %s15, 0
    %p182 = por %p180, %p181
    %p183 = scmp.ne.s32.totalorder %s175, %s177
    %p184 = scmp.eq.s32.totalorder %s20, 1
    %p185 = por %p183, %p184
    %p186 = scmp.ne.s32.totalorder %s177, %s178
    %p187 = scmp.eq.s32.totalorder %s20, 0
    %p188 = por %p186, %p187
    %p189 = scmp.ne.s32.totalorder %s177, %s178
    %p190 = scmp.eq.s32.totalorder %s21, 1
    %p191 = por %p189, %p190
    %p193 = scmp.ne.s32.totalorder %s178, %s192
    %p194 = scmp.eq.s32.totalorder %s21, 0
    %p195 = por %p193, %p194
    %s197 = sadd.s32 %s196, 1
    %p200 = scmp.eq.s32.totalorder %s15, 1
    %p201 = scmp.ne.s32.totalorder %s196, %s198
    %p202 = scmp.eq.s32.totalorder %s15, 0
    %p203 = por %p201, %p202
    %p204 = scmp.ne.s32.totalorder %s196, %s198
    %p205 = scmp.eq.s32.totalorder %s20, 1
    %p206 = por %p204, %p205
    %p207 = scmp.ne.s32.totalorder %s198, %s199
    %p208 = scmp.eq.s32.totalorder %s20, 0
    %p209 = por %p207, %p208
    %p210 = scmp.ne.s32.totalorder %s198, %s199
    %p211 = scmp.eq.s32.totalorder %s21, 1
    %p212 = por %p210, %p211
    %p214 = scmp.ne.s32.totalorder %s199, %s213
    %p215 = scmp.eq.s32.totalorder %s21, 0
    %p216 = por %p214, %p215
    %s217 = ssub.s32 %s15, %s22
    %p218 = scmp.eq.s32.totalorder %s217, 0
    %s220 = sadd.s32 %s219, 1
    %s221 = scalar_select %p218, %s219, %s220
    %p224 = pneg %p218
    %p225 = scmp.eq.s32.totalorder %s15, 1
    %p226 = por %p224, %p225
    %p227 = scmp.ne.s32.totalorder %s219, %s222
    %p228 = scmp.eq.s32.totalorder %s15, 0
    %p229 = por %p227, %p228
    %p230 = scmp.ne.s32.totalorder %s219, %s222
    %p231 = scmp.eq.s32.totalorder %s20, 1
    %p232 = por %p230, %p231
    %p233 = scmp.ne.s32.totalorder %s222, %s223
    %p234 = scmp.eq.s32.totalorder %s20, 0
    %p235 = por %p233, %p234
    %p236 = scmp.ne.s32.totalorder %s222, %s223
    %p237 = scmp.eq.s32.totalorder %s21, 1
    %p238 = por %p236, %p237
    %p240 = scmp.ne.s32.totalorder %s223, %s239
    %p241 = scmp.eq.s32.totalorder %s21, 0
    %p242 = por %p240, %p241
    %p243 = scmp.le.s32.totalorder 1, %s15
    %p244 = scmp.lt.s32.totalorder %s15, 3
    %p245 = pnand %p243, %p244
    %p246 = pneg %p245
    // Predicated region
    $region9: #{vit_detection_forward.1} parent=5 // pred_check
      _
    $region10: #{vit_detection_forward.1} parent=5 // pred_check_branch
      %248 = sbr.rel (%p245) target = $region12
    $region11: #{vit_detection_forward.1} parent=5 // pred_region
      %s249 = ssub.s32 %s15, 1
      // Predicated region
      $region13: #{vit_detection_forward.1} parent=11 // pred_check
        %p250 = pneg %p62
      $region14: #{vit_detection_forward.1} parent=11 // pred_check_branch
        %252 = sbr.rel (%p250) target = $region16
      $region15: #{vit_detection_forward.1} parent=11 // pred_region
        _
      $region16: #{vit_detection_forward.1} parent=11 // pred_fallthru
        _
      // Predicated region
      $region17: #{vit_detection_forward.1} parent=11 // pred_check
        %p253 = pneg %p83
      $region18: #{vit_detection_forward.1} parent=11 // pred_check_branch
        %255 = sbr.rel (%p253) target = $region20
      $region19: #{vit_detection_forward.1} parent=11 // pred_region
        _
      $region20: #{vit_detection_forward.1} parent=11 // pred_fallthru
        _
      // Predicated region
      $region21: #{vit_detection_forward.1} parent=11 // pred_check
        %p256 = pneg %p104
      $region22: #{vit_detection_forward.1} parent=11 // pred_check_branch
        %258 = sbr.rel (%p256) target = $region24
      $region23: #{vit_detection_forward.1} parent=11 // pred_region
        _
      $region24: #{vit_detection_forward.1} parent=11 // pred_fallthru
        _
      // Predicated region
      $region25: #{vit_detection_forward.1} parent=11 // pred_check
        %p259 = pneg %p125
      $region26: #{vit_detection_forward.1} parent=11 // pred_check_branch
        %261 = sbr.rel (%p259) target = $region28
      $region27: #{vit_detection_forward.1} parent=11 // pred_region
        _
      $region28: #{vit_detection_forward.1} parent=11 // pred_fallthru
        _
      // Predicated region
      $region29: #{vit_detection_forward.1} parent=11 // pred_check
        %p262 = pneg %p146
      $region30: #{vit_detection_forward.1} parent=11 // pred_check_branch
        %264 = sbr.rel (%p262) target = $region32
      $region31: #{vit_detection_forward.1} parent=11 // pred_region
        _
      $region32: #{vit_detection_forward.1} parent=11 // pred_fallthru
        _
      // Predicated region
      $region33: #{vit_detection_forward.1} parent=11 // pred_check
        %p265 = pneg %p167
      $region34: #{vit_detection_forward.1} parent=11 // pred_check_branch
        %267 = sbr.rel (%p265) target = $region36
      $region35: #{vit_detection_forward.1} parent=11 // pred_region
        _
      $region36: #{vit_detection_forward.1} parent=11 // pred_fallthru
        _
      // Predicated region
      $region37: #{vit_detection_forward.1} parent=11 // pred_check
        %p268 = pneg %p188
      $region38: #{vit_detection_forward.1} parent=11 // pred_check_branch
        %270 = sbr.rel (%p268) target = $region40
      $region39: #{vit_detection_forward.1} parent=11 // pred_region
        _
      $region40: #{vit_detection_forward.1} parent=11 // pred_fallthru
        _
      // Predicated region
      $region41: #{vit_detection_forward.1} parent=11 // pred_check
        %p271 = pneg %p209
      $region42: #{vit_detection_forward.1} parent=11 // pred_check_branch
        %273 = sbr.rel (%p271) target = $region44
      $region43: #{vit_detection_forward.1} parent=11 // pred_region
        _
      $region44: #{vit_detection_forward.1} parent=11 // pred_fallthru
        _
    $region12: #{vit_detection_forward.1} parent=5 // pred_fallthru
      _
    %p274 = scmp.lt.s32.totalorder %s15, 2
    // Predicated region
    $region45: #{vit_detection_forward.1} parent=5 // pred_check
      %p275 = pneg %p274
    $region46: #{vit_detection_forward.1} parent=5 // pred_check_branch
      %277 = sbr.rel (%p275) target = $region48
    $region47: #{vit_detection_forward.1} parent=5 // pred_region
      // Predicated region
      $region49: #{vit_detection_forward.1} parent=47 // pred_check
        %p278 = pneg %p35
      $region50: #{vit_detection_forward.1} parent=47 // pred_check_branch
        %280 = sbr.rel (%p278) target = $region52
      $region51: #{vit_detection_forward.1} parent=47 // pred_region
        %s281 = smul.u32 24, %s15
        %p282 = scmp.lt.s32.totalorder %s281, 47
        %s283 = scalar_select %p282, %s281, 47
        %s284 = smul.addr %s283, 8
        %s285 = scalar_lea.vmem %s0, %s284
        %s286 = smul.u32 24, %s15
      $region52: #{vit_detection_forward.1} parent=47 // pred_fallthru
        _
    $region48: #{vit_detection_forward.1} parent=5 // pred_fallthru
      _
    %p287 = scmp.le.s32.totalorder 1, %s15
    %p288 = scmp.lt.s32.totalorder %s15, 3
    %p289 = pnand %p287, %p288
    %p290 = pneg %p289
    // Predicated region
    $region53: #{vit_detection_forward.1} parent=5 // pred_check
      _
    $region54: #{vit_detection_forward.1} parent=5 // pred_check_branch
      %292 = sbr.rel (%p289) target = $region56
    $region55: #{vit_detection_forward.1} parent=5 // pred_region
      %s293 = ssub.s32 %s15, 1
      %s294 = smul.u32 24, %s20
      %p295 = scmp.lt.s32.totalorder %s294, 47
      %s296 = scalar_select %p295, %s294, 47
      %s297 = smul.addr %s296, 8
      %s298 = scalar_lea.vmem %s0, %s297
      %p299 = pneg %p41
      %p300 = pneg %p38
      %p301 = pneg %p62
      %p302 = pneg %p59
      %p303 = pneg %p83
      %p304 = pneg %p80
      %p305 = pneg %p104
      %p306 = pneg %p101
      %p307 = pneg %p125
      %p308 = pneg %p122
      %p309 = pneg %p146
      %p310 = pneg %p143
      %p311 = pneg %p167
      %p312 = pneg %p164
      %p313 = pneg %p188
      %p314 = pneg %p185
      %p315 = pneg %p209
      %p316 = pneg %p206
      %p317 = pneg %p235
      %p318 = pneg %p232
      %p319 = scmp.lt.s32.totalorder %s20, 1
      %s320 = scalar_select %p319, %s20, 1
      %s321 = smul.addr %s320, 8
      %s322 = scalar_lea.vmem %s9, %s321
      %s323 = smul.u32 24, %s20
      %p324 = scmp.lt.s32.totalorder %s323, 47
      %s325 = scalar_select %p324, %s323, 47
      %s326 = smul.addr %s325, 8
      %s327 = scalar_lea.vmem %s0, %s326
      %s328 = smul.u32 24, %s20
      %p329 = scmp.lt.s32.totalorder %s20, 1
      %s330 = scalar_select %p329, %s20, 1
      %s331 = smul.addr %s330, 8
      %s332 = scalar_lea.vmem %s9, %s331
      %v334 = vld [vmem:[%s327] sm:$0xff]
      %v335 = vld [vmem:[%s327 + $0x8] sm:$0xff]
      %v336 = vld [vmem:[%s327 + $0x10] sm:$0xff]
      %v337 = vld [vmem:[%s327 + $0x18] sm:$0xff]
      %v338 = vld [vmem:[%s327 + $0x20] sm:$0xff]
      %v339 = vld [vmem:[%s327 + $0x28] sm:$0xff]
      %v340 = vld [vmem:[%s327 + $0x30] sm:$0xff]
      %v341 = vld [vmem:[%s327 + $0x38] sm:$0xff]
      %v342 = vld [vmem:[%s327 + $0x40] sm:$0xff]
      %v343 = vld [vmem:[%s327 + $0x48] sm:$0xff]
      %v344 = vld [vmem:[%s327 + $0x50] sm:$0xff]
      %v345 = vld [vmem:[%s327 + $0x58] sm:$0xff]
      %v346 = vld [vmem:[%s327 + $0x60] sm:$0xff]
      %v347 = vld [vmem:[%s327 + $0x68] sm:$0xff]
      %v348 = vld [vmem:[%s327 + $0x70] sm:$0xff]
      %v349 = vld [vmem:[%s327 + $0x78] sm:$0xff]
      %v350 = vld [vmem:[%s327 + $0x80] sm:$0xff]
      %v351 = vld [vmem:[%s327 + $0x88] sm:$0xff]
      %v352 = vld [vmem:[%s327 + $0x90] sm:$0xff]
      %v353 = vld [vmem:[%s327 + $0x98] sm:$0xff]
      %v354 = vld [vmem:[%s327 + $0xa0] sm:$0xff]
      %v355 = vld [vmem:[%s327 + $0xa8] sm:$0xff]
      %v356 = vld [vmem:[%s327 + $0xb0] sm:$0xff]
      %v357 = vld [vmem:[%s327 + $0xb8] sm:$0xff]
      %v358 = vld [vmem:[%s3] sm:$0x1]
      %v359 = vld [vmem:[%s3 + $0x1] sm:$0x1]
      %vm360 = vcmask 523264
      %v361 = vsel %vm360, %v334, 0.0
      %362 = vadd.xlane.f32.xlu0 %v361
      %v363 = vpop.xlane.xlu0 %362
      %v364 = vsel %vm360, %v335, 0.0
      %365 = vadd.xlane.f32.xlu0 %v364
      %v366 = vpop.xlane.xlu0 %365
      %v367 = vsel %vm360, %v336, 0.0
      %368 = vadd.xlane.f32.xlu0 %v367
      %v369 = vpop.xlane.xlu0 %368
      %v370 = vsel %vm360, %v337, 0.0
      %371 = vadd.xlane.f32.xlu0 %v370
      %v372 = vpop.xlane.xlu0 %371
      %v373 = vsel %vm360, %v338, 0.0
      %374 = vadd.xlane.f32.xlu0 %v373
      %v375 = vpop.xlane.xlu0 %374
      %v376 = vsel %vm360, %v339, 0.0
      %377 = vadd.xlane.f32.xlu0 %v376
      %v378 = vpop.xlane.xlu0 %377
      %v379 = vsel %vm360, %v340, 0.0
      %380 = vadd.xlane.f32.xlu0 %v379
      %v381 = vpop.xlane.xlu0 %380
      %v382 = vsel %vm360, %v341, 0.0
      %383 = vadd.xlane.f32.xlu0 %v382
      %v384 = vpop.xlane.xlu0 %383
      %v385 = vsel %vm360, %v342, 0.0
      %386 = vadd.xlane.f32.xlu0 %v385
      %v387 = vpop.xlane.xlu0 %386
      %v388 = vsel %vm360, %v343, 0.0
      %389 = vadd.xlane.f32.xlu0 %v388
      %v390 = vpop.xlane.xlu0 %389
      %v391 = vsel %vm360, %v344, 0.0
      %392 = vadd.xlane.f32.xlu0 %v391
      %v393 = vpop.xlane.xlu0 %392
      %v394 = vsel %vm360, %v345, 0.0
      %395 = vadd.xlane.f32.xlu0 %v394
      %v396 = vpop.xlane.xlu0 %395
      %v397 = vsel %vm360, %v346, 0.0
      %398 = vadd.xlane.f32.xlu0 %v397
      %v399 = vpop.xlane.xlu0 %398
      %v400 = vsel %vm360, %v347, 0.0
      %401 = vadd.xlane.f32.xlu0 %v400
      %v402 = vpop.xlane.xlu0 %401
      %v403 = vsel %vm360, %v348, 0.0
      %404 = vadd.xlane.f32.xlu0 %v403
      %v405 = vpop.xlane.xlu0 %404
      %v406 = vsel %vm360, %v349, 0.0
      %407 = vadd.xlane.f32.xlu0 %v406
      %v408 = vpop.xlane.xlu0 %407
      %v409 = vsel %vm360, %v350, 0.0
      %410 = vadd.xlane.f32.xlu0 %v409
      %v411 = vpop.xlane.xlu0 %410
      %v412 = vsel %vm360, %v351, 0.0
      %413 = vadd.xlane.f32.xlu0 %v412
      %v414 = vpop.xlane.xlu0 %413
      %v415 = vsel %vm360, %v352, 0.0
      %416 = vadd.xlane.f32.xlu0 %v415
      %v417 = vpop.xlane.xlu0 %416
      %v418 = vsel %vm360, %v353, 0.0
      %419 = vadd.xlane.f32.xlu0 %v418
      %v420 = vpop.xlane.xlu0 %419
      %v421 = vsel %vm360, %v354, 0.0
      %422 = vadd.xlane.f32.xlu0 %v421
      %v423 = vpop.xlane.xlu0 %422
      %v424 = vsel %vm360, %v355, 0.0
      %425 = vadd.xlane.f32.xlu0 %v424
      %v426 = vpop.xlane.xlu0 %425
      %v427 = vsel %vm360, %v356, 0.0
      %428 = vadd.xlane.f32.xlu0 %v427
      %v429 = vpop.xlane.xlu0 %428
      %v430 = vsel %vm360, %v357, 0.0
      %431 = vadd.xlane.f32.xlu0 %v430
      %v432 = vpop.xlane.xlu0 %431
      %v433 = vrcp.pop 64.0
      %v434 = vmul.f32 %v363, %v433
      %v435 = vmul.f32 %v366, %v433
      %v436 = vmul.f32 %v369, %v433
      %v437 = vmul.f32 %v372, %v433
      %v438 = vmul.f32 %v375, %v433
      %v439 = vmul.f32 %v378, %v433
      %v440 = vmul.f32 %v381, %v433
      %v441 = vmul.f32 %v384, %v433
      %v442 = vmul.f32 %v387, %v433
      %v443 = vmul.f32 %v390, %v433
      %v444 = vmul.f32 %v393, %v433
      %v445 = vmul.f32 %v396, %v433
      %v446 = vmul.f32 %v399, %v433
      %v447 = vmul.f32 %v402, %v433
      %v448 = vmul.f32 %v405, %v433
      %v449 = vmul.f32 %v408, %v433
      %v450 = vmul.f32 %v411, %v433
      %v451 = vmul.f32 %v414, %v433
      %v452 = vmul.f32 %v417, %v433
      %v453 = vmul.f32 %v420, %v433
      %v454 = vmul.f32 %v423, %v433
      %v455 = vmul.f32 %v426, %v433
      %v456 = vmul.f32 %v429, %v433
      %v457 = vmul.f32 %v432, %v433
      %v458 = vsub.f32 %v334, %v434
      %v459 = vsub.f32 %v335, %v435
      %v460 = vsub.f32 %v336, %v436
      %v461 = vsub.f32 %v337, %v437
      %v462 = vsub.f32 %v338, %v438
      %v463 = vsub.f32 %v339, %v439
      %v464 = vsub.f32 %v340, %v440
      %v465 = vsub.f32 %v341, %v441
      %v466 = vsub.f32 %v342, %v442
      %v467 = vsub.f32 %v343, %v443
      %v468 = vsub.f32 %v344, %v444
      %v469 = vsub.f32 %v345, %v445
      %v470 = vsub.f32 %v346, %v446
      %v471 = vsub.f32 %v347, %v447
      %v472 = vsub.f32 %v348, %v448
      %v473 = vsub.f32 %v349, %v449
      %v474 = vsub.f32 %v350, %v450
      %v475 = vsub.f32 %v351, %v451
      %v476 = vsub.f32 %v352, %v452
      %v477 = vsub.f32 %v353, %v453
      %v478 = vsub.f32 %v354, %v454
      %v479 = vsub.f32 %v355, %v455
      %v480 = vsub.f32 %v356, %v456
      %v481 = vsub.f32 %v357, %v457
      %v482 = vmul.f32 %v458, %v458
      %v483 = vmul.f32 %v459, %v459
      %v484 = vmul.f32 %v460, %v460
      %v485 = vmul.f32 %v461, %v461
      %v486 = vmul.f32 %v462, %v462
      %v487 = vmul.f32 %v463, %v463
      %v488 = vmul.f32 %v464, %v464
      %v489 = vmul.f32 %v465, %v465
      %v490 = vmul.f32 %v466, %v466
      %v491 = vmul.f32 %v467, %v467
      %v492 = vmul.f32 %v468, %v468
      %v493 = vmul.f32 %v469, %v469
      %v494 = vmul.f32 %v470, %v470
      %v495 = vmul.f32 %v471, %v471
      %v496 = vmul.f32 %v472, %v472
      %v497 = vmul.f32 %v473, %v473
      %v498 = vmul.f32 %v474, %v474
      %v499 = vmul.f32 %v475, %v475
      %v500 = vmul.f32 %v476, %v476
      %v501 = vmul.f32 %v477, %v477
      %v502 = vmul.f32 %v478, %v478
      %v503 = vmul.f32 %v479, %v479
      %v504 = vmul.f32 %v480, %v480
      %v505 = vmul.f32 %v481, %v481
      %v506 = vsel %vm360, %v482, 0.0
      %507 = vadd.xlane.f32.xlu0 %v506
      %v508 = vpop.xlane.xlu0 %507
      %v509 = vsel %vm360, %v483, 0.0
      %510 = vadd.xlane.f32.xlu0 %v509
      %v511 = vpop.xlane.xlu0 %510
      %v512 = vsel %vm360, %v484, 0.0
      %513 = vadd.xlane.f32.xlu0 %v512
      %v514 = vpop.xlane.xlu0 %513
      %v515 = vsel %vm360, %v485, 0.0
      %516 = vadd.xlane.f32.xlu0 %v515
      %v517 = vpop.xlane.xlu0 %516
      %v518 = vsel %vm360, %v486, 0.0
      %519 = vadd.xlane.f32.xlu0 %v518
      %v520 = vpop.xlane.xlu0 %519
      %v521 = vsel %vm360, %v487, 0.0
      %522 = vadd.xlane.f32.xlu0 %v521
      %v523 = vpop.xlane.xlu0 %522
      %v524 = vsel %vm360, %v488, 0.0
      %525 = vadd.xlane.f32.xlu0 %v524
      %v526 = vpop.xlane.xlu0 %525
      %v527 = vsel %vm360, %v489, 0.0
      %528 = vadd.xlane.f32.xlu0 %v527
      %v529 = vpop.xlane.xlu0 %528
      %v530 = vsel %vm360, %v490, 0.0
      %531 = vadd.xlane.f32.xlu0 %v530
      %v532 = vpop.xlane.xlu0 %531
      %v533 = vsel %vm360, %v491, 0.0
      %534 = vadd.xlane.f32.xlu0 %v533
      %v535 = vpop.xlane.xlu0 %534
      %v536 = vsel %vm360, %v492, 0.0
      %537 = vadd.xlane.f32.xlu0 %v536
      %v538 = vpop.xlane.xlu0 %537
      %v539 = vsel %vm360, %v493, 0.0
      %540 = vadd.xlane.f32.xlu0 %v539
      %v541 = vpop.xlane.xlu0 %540
      %v542 = vsel %vm360, %v494, 0.0
      %543 = vadd.xlane.f32.xlu0 %v542
      %v544 = vpop.xlane.xlu0 %543
      %v545 = vsel %vm360, %v495, 0.0
      %546 = vadd.xlane.f32.xlu0 %v545
      %v547 = vpop.xlane.xlu0 %546
      %v548 = vsel %vm360, %v496, 0.0
      %549 = vadd.xlane.f32.xlu0 %v548
      %v550 = vpop.xlane.xlu0 %549
      %v551 = vsel %vm360, %v497, 0.0
      %552 = vadd.xlane.f32.xlu0 %v551
      %v553 = vpop.xlane.xlu0 %552
      %v554 = vsel %vm360, %v498, 0.0
      %555 = vadd.xlane.f32.xlu0 %v554
      %v556 = vpop.xlane.xlu0 %555
      %v557 = vsel %vm360, %v499, 0.0
      %558 = vadd.xlane.f32.xlu0 %v557
      %v559 = vpop.xlane.xlu0 %558
      %v560 = vsel %vm360, %v500, 0.0
      %561 = vadd.xlane.f32.xlu0 %v560
      %v562 = vpop.xlane.xlu0 %561
      %v563 = vsel %vm360, %v501, 0.0
      %564 = vadd.xlane.f32.xlu0 %v563
      %v565 = vpop.xlane.xlu0 %564
      %v566 = vsel %vm360, %v502, 0.0
      %567 = vadd.xlane.f32.xlu0 %v566
      %v568 = vpop.xlane.xlu0 %567
      %v569 = vsel %vm360, %v503, 0.0
      %570 = vadd.xlane.f32.xlu0 %v569
      %v571 = vpop.xlane.xlu0 %570
      %v572 = vsel %vm360, %v504, 0.0
      %573 = vadd.xlane.f32.xlu0 %v572
      %v574 = vpop.xlane.xlu0 %573
      %v575 = vsel %vm360, %v505, 0.0
      %576 = vadd.xlane.f32.xlu0 %v575
      %v577 = vpop.xlane.xlu0 %576
      %v578 = vmul.f32 %v508, %v433
      %v579 = vmul.f32 %v511, %v433
      %v580 = vmul.f32 %v514, %v433
      %v581 = vmul.f32 %v517, %v433
      %v582 = vmul.f32 %v520, %v433
      %v583 = vmul.f32 %v523, %v433
      %v584 = vmul.f32 %v526, %v433
      %v585 = vmul.f32 %v529, %v433
      %v586 = vmul.f32 %v532, %v433
      %v587 = vmul.f32 %v535, %v433
      %v588 = vmul.f32 %v538, %v433
      %v589 = vmul.f32 %v541, %v433
      %v590 = vmul.f32 %v544, %v433
      %v591 = vmul.f32 %v547, %v433
      %v592 = vmul.f32 %v550, %v433
      %v593 = vmul.f32 %v553, %v433
      %v594 = vmul.f32 %v556, %v433
      %v595 = vmul.f32 %v559, %v433
      %v596 = vmul.f32 %v562, %v433
      %v597 = vmul.f32 %v565, %v433
      %v598 = vmul.f32 %v568, %v433
      %v599 = vmul.f32 %v571, %v433
      %v600 = vmul.f32 %v574, %v433
      %v601 = vmul.f32 %v577, %v433
      %v602 = vadd.f32 %v578, 1e-05
      %v603 = vadd.f32 %v579, 1e-05
      %v604 = vadd.f32 %v580, 1e-05
      %v605 = vadd.f32 %v581, 1e-05
      %v606 = vadd.f32 %v582, 1e-05
      %v607 = vadd.f32 %v583, 1e-05
      %v608 = vadd.f32 %v584, 1e-05
      %v609 = vadd.f32 %v585, 1e-05
      %v610 = vadd.f32 %v586, 1e-05
      %v611 = vadd.f32 %v587, 1e-05
      %v612 = vadd.f32 %v588, 1e-05
      %v613 = vadd.f32 %v589, 1e-05
      %v614 = vadd.f32 %v590, 1e-05
      %v615 = vadd.f32 %v591, 1e-05
      %v616 = vadd.f32 %v592, 1e-05
      %v617 = vadd.f32 %v593, 1e-05
      %v618 = vadd.f32 %v594, 1e-05
      %v619 = vadd.f32 %v595, 1e-05
      %v620 = vadd.f32 %v596, 1e-05
      %v621 = vadd.f32 %v597, 1e-05
      %v622 = vadd.f32 %v598, 1e-05
      %v623 = vadd.f32 %v599, 1e-05
      %v624 = vadd.f32 %v600, 1e-05
      %v625 = vadd.f32 %v601, 1e-05
      %v626 = vrsqrt.pop %v602
      %v627 = vrsqrt.pop %v603
      %v628 = vrsqrt.pop %v604
      %v629 = vrsqrt.pop %v605
      %v630 = vrsqrt.pop %v606
      %v631 = vrsqrt.pop %v607
      %v632 = vrsqrt.pop %v608
      %v633 = vrsqrt.pop %v609
      %v634 = vrsqrt.pop %v610
      %v635 = vrsqrt.pop %v611
      %v636 = vrsqrt.pop %v612
      %v637 = vrsqrt.pop %v613
      %v638 = vrsqrt.pop %v614
      %v639 = vrsqrt.pop %v615
      %v640 = vrsqrt.pop %v616
      %v641 = vrsqrt.pop %v617
      %v642 = vrsqrt.pop %v618
      %v643 = vrsqrt.pop %v619
      %v644 = vrsqrt.pop %v620
      %v645 = vrsqrt.pop %v621
      %v646 = vrsqrt.pop %v622
      %v647 = vrsqrt.pop %v623
      %v648 = vrsqrt.pop %v624
      %v649 = vrsqrt.pop %v625
      %v650 = vmul.f32 %v458, %v626
      %v651 = vmul.f32 %v459, %v627
      %v652 = vmul.f32 %v460, %v628
      %v653 = vmul.f32 %v461, %v629
      %v654 = vmul.f32 %v462, %v630
      %v655 = vmul.f32 %v463, %v631
      %v656 = vmul.f32 %v464, %v632
      %v657 = vmul.f32 %v465, %v633
      %v658 = vmul.f32 %v466, %v634
      %v659 = vmul.f32 %v467, %v635
      %v660 = vmul.f32 %v468, %v636
      %v661 = vmul.f32 %v469, %v637
      %v662 = vmul.f32 %v470, %v638
      %v663 = vmul.f32 %v471, %v639
      %v664 = vmul.f32 %v472, %v640
      %v665 = vmul.f32 %v473, %v641
      %v666 = vmul.f32 %v474, %v642
      %v667 = vmul.f32 %v475, %v643
      %v668 = vmul.f32 %v476, %v644
      %v669 = vmul.f32 %v477, %v645
      %v670 = vmul.f32 %v478, %v646
      %v671 = vmul.f32 %v479, %v647
      %v672 = vmul.f32 %v480, %v648
      %v673 = vmul.f32 %v481, %v649
      %v674 = vlaneseq
      %v675 = vshrl.u32 %v674, 7
      %v676 = vsub.s32 0, %v675
      %v677 = vrot.slane %v358, %v676
      %v678 = vmul.f32 %v650, %v677
      %v679 = vmul.f32 %v651, %v677
      %v680 = vmul.f32 %v652, %v677
      %v681 = vmul.f32 %v653, %v677
      %v682 = vmul.f32 %v654, %v677
      %v683 = vmul.f32 %v655, %v677
      %v684 = vmul.f32 %v656, %v677
      %v685 = vmul.f32 %v657, %v677
      %v686 = vmul.f32 %v658, %v677
      %v687 = vmul.f32 %v659, %v677
      %v688 = vmul.f32 %v660, %v677
      %v689 = vmul.f32 %v661, %v677
      %v690 = vmul.f32 %v662, %v677
      %v691 = vmul.f32 %v663, %v677
      %v692 = vmul.f32 %v664, %v677
      %v693 = vmul.f32 %v665, %v677
      %v694 = vmul.f32 %v666, %v677
      %v695 = vmul.f32 %v667, %v677
      %v696 = vmul.f32 %v668, %v677
      %v697 = vmul.f32 %v669, %v677
      %v698 = vmul.f32 %v670, %v677
      %v699 = vmul.f32 %v671, %v677
      %v700 = vmul.f32 %v672, %v677
      %v701 = vmul.f32 %v673, %v677
      %v702 = vlaneseq
      %v703 = vshrl.u32 %v702, 7
      %v704 = vsub.s32 0, %v703
      %v705 = vrot.slane %v359, %v704
      %v706 = vadd.f32 %v678, %v705
      %v707 = vadd.f32 %v679, %v705
      %v708 = vadd.f32 %v680, %v705
      %v709 = vadd.f32 %v681, %v705
      %v710 = vadd.f32 %v682, %v705
      %v711 = vadd.f32 %v683, %v705
      %v712 = vadd.f32 %v684, %v705
      %v713 = vadd.f32 %v685, %v705
      %v714 = vadd.f32 %v686, %v705
      %v715 = vadd.f32 %v687, %v705
      %v716 = vadd.f32 %v688, %v705
      %v717 = vadd.f32 %v689, %v705
      %v718 = vadd.f32 %v690, %v705
      %v719 = vadd.f32 %v691, %v705
      %v720 = vadd.f32 %v692, %v705
      %v721 = vadd.f32 %v693, %v705
      %v722 = vadd.f32 %v694, %v705
      %v723 = vadd.f32 %v695, %v705
      %v724 = vadd.f32 %v696, %v705
      %v725 = vadd.f32 %v697, %v705
      %v726 = vadd.f32 %v698, %v705
      %v727 = vadd.f32 %v699, %v705
      %v728 = vadd.f32 %v700, %v705
      %v729 = vadd.f32 %v701, %v705
      %v730 = vld [vmem:[%s4] sm:$0xf]
      %v731 = vld [vmem:[%s4 + $0x4] sm:$0xf]
      %v732 = vld [vmem:[%s4 + $0x8] sm:$0xf]
      %v733 = vld [vmem:[%s4 + $0xc] sm:$0xf]
      %v734 = vld [vmem:[%s4 + $0x10] sm:$0xf]
      %v735 = vld [vmem:[%s4 + $0x14] sm:$0xf]
      %v736 = vld [vmem:[%s4 + $0x18] sm:$0xf]
      %v737 = vld [vmem:[%s4 + $0x1c] sm:$0xf]
      %v738 = vpack.c.bf16 %v707, %v706
      %v739 = vpack.c.bf16 %v709, %v708
      %v740 = vpack.c.bf16 %v711, %v710
      %v741 = vpack.c.bf16 %v713, %v712
      %v742 = vpack.c.bf16 %v715, %v714
      %v743 = vpack.c.bf16 %v717, %v716
      %v744 = vpack.c.bf16 %v719, %v718
      %v745 = vpack.c.bf16 %v721, %v720
      %v746 = vpack.c.bf16 %v723, %v722
      %v747 = vpack.c.bf16 %v725, %v724
      %v748 = vpack.c.bf16 %v727, %v726
      %v749 = vpack.c.bf16 %v729, %v728
      %v750 = vld [vmem:[%s3 + $0x2] sm:$0x1]
      %v751 = vlaneseq
      %v752 = vshrl.u32 %v751, 7
      %v753 = vsub.s32 0, %v752
      %v754 = vrot.slane %v750, %v753
      %v763 = vunpack.c.l.b16 %v730
      %v764 = vunpack.c.l.b16 %v731
      %v765 = vunpack.c.l.b16 %v732
      %v766 = vunpack.c.l.b16 %v733
      %v767 = vunpack.c.l.b16 %v734
      %v768 = vunpack.c.l.b16 %v735
      %v769 = vunpack.c.l.b16 %v736
      %v770 = vunpack.c.l.b16 %v737
      %v771 = vpack.c.b16 %v764, %v763
      %v772 = vpack.c.b16 %v766, %v765
      %v773 = vpack.c.b16 %v768, %v767
      %v774 = vpack.c.b16 %v770, %v769
      %v780 = vsel %vm360, %v738, 0
      %v783 = vsel %vm360, %v739, 0
      %v786 = vsel %vm360, %v740, 0
      %v789 = vsel %vm360, %v741, 0
      %v792 = vsel %vm360, %v742, 0
      %v795 = vsel %vm360, %v743, 0
      %v798 = vsel %vm360, %v744, 0
      %v801 = vsel %vm360, %v745, 0
      %v804 = vsel %vm360, %v746, 0
      %v807 = vsel %vm360, %v747, 0
      %v810 = vsel %vm360, %v748, 0
      %v813 = vsel %vm360, %v749, 0
      %815 = vmatprep.subr.bf16.mxu0 0
      %816 = vmatpush1.bf16.msra.mxu0 %v771
      %817 = vmatprep.subr.bf16.mxu0 0
      %818 = vmatpush1.bf16.msra.mxu0 %v772
      %819 = vmatprep.subr.bf16.mxu0 0
      %820 = vmatpush1.bf16.msra.mxu0 %v773
      %821 = vmatprep.subr.bf16.mxu0 0
      %822 = vmatpush1.bf16.msra.mxu0 %v774
      %823 = vmatprep.subr.bf16.mxu0 0
      %824 = vmatpush1.bf16.msra.mxu0 0
      %825 = vmatprep.subr.bf16.mxu0 0
      %826 = vmatpush1.bf16.msra.mxu0 0
      %827 = vmatprep.subr.bf16.mxu0 0
      %828 = vmatpush1.bf16.msra.mxu0 0
      %829 = vmatprep.subr.bf16.mxu0 0
      %830 = vmatpush1.bf16.msra.mxu0 0
      %831 = vmatprep.subr.bf16.mxu0 0
      %832 = vmatpush1.bf16.msra.mxu0 0
      %833 = vmatprep.subr.bf16.mxu0 0
      %834 = vmatpush1.bf16.msra.mxu0 0
      %835 = vmatprep.subr.bf16.mxu0 0
      %836 = vmatpush1.bf16.msra.mxu0 0
      %837 = vmatprep.subr.bf16.mxu0 0
      %838 = vmatpush1.bf16.msra.mxu0 0
      %839 = vmatprep.subr.bf16.mxu0 0
      %840 = vmatpush1.bf16.msra.mxu0 0
      %841 = vmatprep.subr.bf16.mxu0 0
      %842 = vmatpush1.bf16.msra.mxu0 0
      %843 = vmatprep.subr.bf16.mxu0 0
      %844 = vmatpush1.bf16.msra.mxu0 0
      %845 = vmatprep.subr.bf16.mxu0 0
      %846 = vmatpush1.bf16.msra.mxu0 0
      %847 = vmatprep.mubr.bf16.mxu0 0
      %848 = vmatmul.mubr.bf16.gmra.mrb[0].mxu0 %v780
      %v849 = vpop.f32.mrb[0].mxu0
      %v850 = vadd.f32 %v754, %v849
      %v851 = vpop.f32.mrb[0].mxu0
      %v852 = vpop.f32.mrb[0].mxu0
      %v853 = vadd.f32 %v754, %v852
      %v854 = vpop.f32.mrb[0].mxu0
      %855 = vmatprep.mubr.bf16.mxu0 0
      %856 = vmatmul.mubr.bf16.gmra.mrb[0].mxu0 %v783
      %v857 = vpop.f32.mrb[0].mxu0
      %v858 = vadd.f32 %v754, %v857
      %v859 = vpop.f32.mrb[0].mxu0
      %v860 = vpop.f32.mrb[0].mxu0
      %v861 = vadd.f32 %v754, %v860
      %v862 = vpop.f32.mrb[0].mxu0
      %863 = vmatprep.mubr.bf16.mxu0 0
      %864 = vmatmul.mubr.bf16.gmra.mrb[0].mxu0 %v786
      %v865 = vpop.f32.mrb[0].mxu0
      %v866 = vadd.f32 %v754, %v865
      %v867 = vpop.f32.mrb[0].mxu0
      %v868 = vpop.f32.mrb[0].mxu0
      %v869 = vadd.f32 %v754, %v868
      %v870 = vpop.f32.mrb[0].mxu0
      %871 = vmatprep.mubr.bf16.mxu0 0
      %872 = vmatmul.mubr.bf16.gmra.mrb[0].mxu0 %v789
      %v873 = vpop.f32.mrb[0].mxu0
      %v874 = vadd.f32 %v754, %v873
      %v875 = vpop.f32.mrb[0].mxu0
      %v876 = vpop.f32.mrb[0].mxu0
      %v877 = vadd.f32 %v754, %v876
      %v878 = vpop.f32.mrb[0].mxu0
      %879 = vmatprep.mubr.bf16.mxu0 0
      %880 = vmatmul.mubr.bf16.gmra.mrb[0].mxu0 %v792
      %v881 = vpop.f32.mrb[0].mxu0
      %v882 = vadd.f32 %v754, %v881
      %v883 = vpop.f32.mrb[0].mxu0
      %v884 = vpop.f32.mrb[0].mxu0
      %v885 = vadd.f32 %v754, %v884
      %v886 = vpop.f32.mrb[0].mxu0
      %887 = vmatprep.mubr.bf16.mxu0 0
      %888 = vmatmul.mubr.bf16.gmra.mrb[0].mxu0 %v795
      %v889 = vpop.f32.mrb[0].mxu0
      %v890 = vadd.f32 %v754, %v889
      %v891 = vpop.f32.mrb[0].mxu0
      %v892 = vpop.f32.mrb[0].mxu0
      %v893 = vadd.f32 %v754, %v892
      %v894 = vpop.f32.mrb[0].mxu0
      %895 = vmatprep.mubr.bf16.mxu0 0
      %896 = vmatmul.mubr.bf16.gmra.mrb[0].mxu0 %v798
      %v897 = vpop.f32.mrb[0].mxu0
      %v898 = vadd.f32 %v754, %v897
      %v899 = vpop.f32.mrb[0].mxu0
      %v900 = vpop.f32.mrb[0].mxu0
      %v901 = vadd.f32 %v754, %v900
      %v902 = vpop.f32.mrb[0].mxu0
      %903 = vmatprep.mubr.bf16.mxu0 0
      %904 = vmatmul.mubr.bf16.gmra.mrb[0].mxu0 %v801
      %v905 = vpop.f32.mrb[0].mxu0
      %v906 = vadd.f32 %v754, %v905
      %v907 = vpop.f32.mrb[0].mxu0
      %v908 = vpop.f32.mrb[0].mxu0
      %v909 = vadd.f32 %v754, %v908
      %v910 = vpop.f32.mrb[0].mxu0
      %911 = vmatprep.mubr.bf16.mxu0 0
      %912 = vmatmul.mubr.bf16.gmra.mrb[0].mxu0 %v804
      %v913 = vpop.f32.mrb[0].mxu0
      %v914 = vadd.f32 %v754, %v913
      %v915 = vpop.f32.mrb[0].mxu0
      %v916 = vpop.f32.mrb[0].mxu0
      %v917 = vadd.f32 %v754, %v916
      %v918 = vpop.f32.mrb[0].mxu0
      %919 = vmatprep.mubr.bf16.mxu0 0
      %920 = vmatmul.mubr.bf16.gmra.mrb[0].mxu0 %v807
      %v921 = vpop.f32.mrb[0].mxu0
      %v922 = vadd.f32 %v754, %v921
      %v923 = vpop.f32.mrb[0].mxu0
      %v924 = vpop.f32.mrb[0].mxu0
      %v925 = vadd.f32 %v754, %v924
      %v926 = vpop.f32.mrb[0].mxu0
      %927 = vmatprep.mubr.bf16.mxu0 0
      %928 = vmatmul.mubr.bf16.gmra.mrb[0].mxu0 %v810
      %v929 = vpop.f32.mrb[0].mxu0
      %v930 = vadd.f32 %v754, %v929
      %v931 = vpop.f32.mrb[0].mxu0
      %v932 = vpop.f32.mrb[0].mxu0
      %v933 = vadd.f32 %v754, %v932
      %v934 = vpop.f32.mrb[0].mxu0
      %935 = vmatprep.mubr.bf16.mxu0 0
      %936 = vmatmul.mubr.bf16.gmra.mrb[0].mxu0 %v813
      %v937 = vpop.f32.mrb[0].mxu0
      %v938 = vadd.f32 %v754, %v937
      %v939 = vpop.f32.mrb[0].mxu0
      %v940 = vpop.f32.mrb[0].mxu0
      %v941 = vadd.f32 %v754, %v940
      %v942 = vpop.f32.mrb[0].mxu0
      %943 = vdwg.mxu0
      %v944 = vld [vmem:[%s3 + $0x3] sm:$0x1]
      %v945 = vld [vmem:[%s3 + $0x4] sm:$0x1]
      %vm946 = vcmask 261120
      %v947 = vsel %vm946, %v850, 0.0
      %948 = vadd.xlane.f32.xlu0 %v947
      %v949 = vpop.xlane.xlu0 %948
      %v950 = vsel %vm946, %v853, 0.0
      %951 = vadd.xlane.f32.xlu0 %v950
      %v952 = vpop.xlane.xlu0 %951
      %v953 = vsel %vm946, %v858, 0.0
      %954 = vadd.xlane.f32.xlu0 %v953
      %v955 = vpop.xlane.xlu0 %954
      %v956 = vsel %vm946, %v861, 0.0
      %957 = vadd.xlane.f32.xlu0 %v956
      %v958 = vpop.xlane.xlu0 %957
      %v959 = vsel %vm946, %v866, 0.0
      %960 = vadd.xlane.f32.xlu0 %v959
      %v961 = vpop.xlane.xlu0 %960
      %v962 = vsel %vm946, %v869, 0.0
      %963 = vadd.xlane.f32.xlu0 %v962
      %v964 = vpop.xlane.xlu0 %963
      %v965 = vsel %vm946, %v874, 0.0
      %966 = vadd.xlane.f32.xlu0 %v965
      %v967 = vpop.xlane.xlu0 %966
      %v968 = vsel %vm946, %v877, 0.0
      %969 = vadd.xlane.f32.xlu0 %v968
      %v970 = vpop.xlane.xlu0 %969
      %v971 = vsel %vm946, %v882, 0.0
      %972 = vadd.xlane.f32.xlu0 %v971
      %v973 = vpop.xlane.xlu0 %972
      %v974 = vsel %vm946, %v885, 0.0
      %975 = vadd.xlane.f32.xlu0 %v974
      %v976 = vpop.xlane.xlu0 %975
      %v977 = vsel %vm946, %v890, 0.0
      %978 = vadd.xlane.f32.xlu0 %v977
      %v979 = vpop.xlane.xlu0 %978
      %v980 = vsel %vm946, %v893, 0.0
      %981 = vadd.xlane.f32.xlu0 %v980
      %v982 = vpop.xlane.xlu0 %981
      %v983 = vsel %vm946, %v898, 0.0
      %984 = vadd.xlane.f32.xlu0 %v983
      %v985 = vpop.xlane.xlu0 %984
      %v986 = vsel %vm946, %v901, 0.0
      %987 = vadd.xlane.f32.xlu0 %v986
      %v988 = vpop.xlane.xlu0 %987
      %v989 = vsel %vm946, %v906, 0.0
      %990 = vadd.xlane.f32.xlu0 %v989
      %v991 = vpop.xlane.xlu0 %990
      %v992 = vsel %vm946, %v909, 0.0
      %993 = vadd.xlane.f32.xlu0 %v992
      %v994 = vpop.xlane.xlu0 %993
      %v995 = vsel %vm946, %v914, 0.0
      %996 = vadd.xlane.f32.xlu0 %v995
      %v997 = vpop.xlane.xlu0 %996
      %v998 = vsel %vm946, %v917, 0.0
      %999 = vadd.xlane.f32.xlu0 %v998
      %v1000 = vpop.xlane.xlu0 %999
      %v1001 = vsel %vm946, %v922, 0.0
      %1002 = vadd.xlane.f32.xlu0 %v1001
      %v1003 = vpop.xlane.xlu0 %1002
      %v1004 = vsel %vm946, %v925, 0.0
      %1005 = vadd.xlane.f32.xlu0 %v1004
      %v1006 = vpop.xlane.xlu0 %1005
      %v1007 = vsel %vm946, %v930, 0.0
      %1008 = vadd.xlane.f32.xlu0 %v1007
      %v1009 = vpop.xlane.xlu0 %1008
      %v1010 = vsel %vm946, %v933, 0.0
      %1011 = vadd.xlane.f32.xlu0 %v1010
      %v1012 = vpop.xlane.xlu0 %1011
      %v1013 = vsel %vm946, %v938, 0.0
      %1014 = vadd.xlane.f32.xlu0 %v1013
      %v1015 = vpop.xlane.xlu0 %1014
      %v1016 = vsel %vm946, %v941, 0.0
      %1017 = vadd.xlane.f32.xlu0 %v1016
      %v1018 = vpop.xlane.xlu0 %1017
      %v1019 = vrcp.pop 32.0
      %v1020 = vmul.f32 %v949, %v1019
      %v1021 = vmul.f32 %v952, %v1019
      %v1022 = vmul.f32 %v955, %v1019
      %v1023 = vmul.f32 %v958, %v1019
      %v1024 = vmul.f32 %v961, %v1019
      %v1025 = vmul.f32 %v964, %v1019
      %v1026 = vmul.f32 %v967, %v1019
      %v1027 = vmul.f32 %v970, %v1019
      %v1028 = vmul.f32 %v973, %v1019
      %v1029 = vmul.f32 %v976, %v1019
      %v1030 = vmul.f32 %v979, %v1019
      %v1031 = vmul.f32 %v982, %v1019
      %v1032 = vmul.f32 %v985, %v1019
      %v1033 = vmul.f32 %v988, %v1019
      %v1034 = vmul.f32 %v991, %v1019
      %v1035 = vmul.f32 %v994, %v1019
      %v1036 = vmul.f32 %v997, %v1019
      %v1037 = vmul.f32 %v1000, %v1019
      %v1038 = vmul.f32 %v1003, %v1019
      %v1039 = vmul.f32 %v1006, %v1019
      %v1040 = vmul.f32 %v1009, %v1019
      %v1041 = vmul.f32 %v1012, %v1019
      %v1042 = vmul.f32 %v1015, %v1019
      %v1043 = vmul.f32 %v1018, %v1019
      %v1044 = vsub.f32 %v850, %v1020
      %v1045 = vsub.f32 %v853, %v1021
      %v1046 = vsub.f32 %v858, %v1022
      %v1047 = vsub.f32 %v861, %v1023
      %v1048 = vsub.f32 %v866, %v1024
      %v1049 = vsub.f32 %v869, %v1025
      %v1050 = vsub.f32 %v874, %v1026
      %v1051 = vsub.f32 %v877, %v1027
      %v1052 = vsub.f32 %v882, %v1028
      %v1053 = vsub.f32 %v885, %v1029
      %v1054 = vsub.f32 %v890, %v1030
      %v1055 = vsub.f32 %v893, %v1031
      %v1056 = vsub.f32 %v898, %v1032
      %v1057 = vsub.f32 %v901, %v1033
      %v1058 = vsub.f32 %v906, %v1034
      %v1059 = vsub.f32 %v909, %v1035
      %v1060 = vsub.f32 %v914, %v1036
      %v1061 = vsub.f32 %v917, %v1037
      %v1062 = vsub.f32 %v922, %v1038
      %v1063 = vsub.f32 %v925, %v1039
      %v1064 = vsub.f32 %v930, %v1040
      %v1065 = vsub.f32 %v933, %v1041
      %v1066 = vsub.f32 %v938, %v1042
      %v1067 = vsub.f32 %v941, %v1043
      %v1068 = vmul.f32 %v1044, %v1044
      %v1069 = vmul.f32 %v1045, %v1045
      %v1070 = vmul.f32 %v1046, %v1046
      %v1071 = vmul.f32 %v1047, %v1047
      %v1072 = vmul.f32 %v1048, %v1048
      %v1073 = vmul.f32 %v1049, %v1049
      %v1074 = vmul.f32 %v1050, %v1050
      %v1075 = vmul.f32 %v1051, %v1051
      %v1076 = vmul.f32 %v1052, %v1052
      %v1077 = vmul.f32 %v1053, %v1053
      %v1078 = vmul.f32 %v1054, %v1054
      %v1079 = vmul.f32 %v1055, %v1055
      %v1080 = vmul.f32 %v1056, %v1056
      %v1081 = vmul.f32 %v1057, %v1057
      %v1082 = vmul.f32 %v1058, %v1058
      %v1083 = vmul.f32 %v1059, %v1059
      %v1084 = vmul.f32 %v1060, %v1060
      %v1085 = vmul.f32 %v1061, %v1061
      %v1086 = vmul.f32 %v1062, %v1062
      %v1087 = vmul.f32 %v1063, %v1063
      %v1088 = vmul.f32 %v1064, %v1064
      %v1089 = vmul.f32 %v1065, %v1065
      %v1090 = vmul.f32 %v1066, %v1066
      %v1091 = vmul.f32 %v1067, %v1067
      %v1092 = vsel %vm946, %v1068, 0.0
      %1093 = vadd.xlane.f32.xlu0 %v1092
      %v1094 = vpop.xlane.xlu0 %1093
      %v1095 = vsel %vm946, %v1069, 0.0
      %1096 = vadd.xlane.f32.xlu0 %v1095
      %v1097 = vpop.xlane.xlu0 %1096
      %v1098 = vsel %vm946, %v1070, 0.0
      %1099 = vadd.xlane.f32.xlu0 %v1098
      %v1100 = vpop.xlane.xlu0 %1099
      %v1101 = vsel %vm946, %v1071, 0.0
      %1102 = vadd.xlane.f32.xlu0 %v1101
      %v1103 = vpop.xlane.xlu0 %1102
      %v1104 = vsel %vm946, %v1072, 0.0
      %1105 = vadd.xlane.f32.xlu0 %v1104
      %v1106 = vpop.xlane.xlu0 %1105
      %v1107 = vsel %vm946, %v1073, 0.0
      %1108 = vadd.xlane.f32.xlu0 %v1107
      %v1109 = vpop.xlane.xlu0 %1108
      %v1110 = vsel %vm946, %v1074, 0.0
      %1111 = vadd.xlane.f32.xlu0 %v1110
      %v1112 = vpop.xlane.xlu0 %1111
      %v1113 = vsel %vm946, %v1075, 0.0
      %1114 = vadd.xlane.f32.xlu0 %v1113
      %v1115 = vpop.xlane.xlu0 %1114
      %v1116 = vsel %vm946, %v1076, 0.0
      %1117 = vadd.xlane.f32.xlu0 %v1116
      %v1118 = vpop.xlane.xlu0 %1117
      %v1119 = vsel %vm946, %v1077, 0.0
      %1120 = vadd.xlane.f32.xlu0 %v1119
      %v1121 = vpop.xlane.xlu0 %1120
      %v1122 = vsel %vm946, %v1078, 0.0
      %1123 = vadd.xlane.f32.xlu0 %v1122
      %v1124 = vpop.xlane.xlu0 %1123
      %v1125 = vsel %vm946, %v1079, 0.0
      %1126 = vadd.xlane.f32.xlu0 %v1125
      %v1127 = vpop.xlane.xlu0 %1126
      %v1128 = vsel %vm946, %v1080, 0.0
      %1129 = vadd.xlane.f32.xlu0 %v1128
      %v1130 = vpop.xlane.xlu0 %1129
      %v1131 = vsel %vm946, %v1081, 0.0
      %1132 = vadd.xlane.f32.xlu0 %v1131
      %v1133 = vpop.xlane.xlu0 %1132
      %v1134 = vsel %vm946, %v1082, 0.0
      %1135 = vadd.xlane.f32.xlu0 %v1134
      %v1136 = vpop.xlane.xlu0 %1135
      %v1137 = vsel %vm946, %v1083, 0.0
      %1138 = vadd.xlane.f32.xlu0 %v1137
      %v1139 = vpop.xlane.xlu0 %1138
      %v1140 = vsel %vm946, %v1084, 0.0
      %1141 = vadd.xlane.f32.xlu0 %v1140
      %v1142 = vpop.xlane.xlu0 %1141
      %v1143 = vsel %vm946, %v1085, 0.0
      %1144 = vadd.xlane.f32.xlu0 %v1143
      %v1145 = vpop.xlane.xlu0 %1144
      %v1146 = vsel %vm946, %v1086, 0.0
      %1147 = vadd.xlane.f32.xlu0 %v1146
      %v1148 = vpop.xlane.xlu0 %1147
      %v1149 = vsel %vm946, %v1087, 0.0
      %1150 = vadd.xlane.f32.xlu0 %v1149
      %v1151 = vpop.xlane.xlu0 %1150
      %v1152 = vsel %vm946, %v1088, 0.0
      %1153 = vadd.xlane.f32.xlu0 %v1152
      %v1154 = vpop.xlane.xlu0 %1153
      %v1155 = vsel %vm946, %v1089, 0.0
      %1156 = vadd.xlane.f32.xlu0 %v1155
      %v1157 = vpop.xlane.xlu0 %1156
      %v1158 = vsel %vm946, %v1090, 0.0
      %1159 = vadd.xlane.f32.xlu0 %v1158
      %v1160 = vpop.xlane.xlu0 %1159
      %v1161 = vsel %vm946, %v1091, 0.0
      %1162 = vadd.xlane.f32.xlu0 %v1161
      %v1163 = vpop.xlane.xlu0 %1162
      %v1164 = vmul.f32 %v1094, %v1019
      %v1165 = vmul.f32 %v1097, %v1019
      %v1166 = vmul.f32 %v1100, %v1019
      %v1167 = vmul.f32 %v1103, %v1019
      %v1168 = vmul.f32 %v1106, %v1019
      %v1169 = vmul.f32 %v1109, %v1019
      %v1170 = vmul.f32 %v1112, %v1019
      %v1171 = vmul.f32 %v1115, %v1019
      %v1172 = vmul.f32 %v1118, %v1019
      %v1173 = vmul.f32 %v1121, %v1019
      %v1174 = vmul.f32 %v1124, %v1019
      %v1175 = vmul.f32 %v1127, %v1019
      %v1176 = vmul.f32 %v1130, %v1019
      %v1177 = vmul.f32 %v1133, %v1019
      %v1178 = vmul.f32 %v1136, %v1019
      %v1179 = vmul.f32 %v1139, %v1019
      %v1180 = vmul.f32 %v1142, %v1019
      %v1181 = vmul.f32 %v1145, %v1019
      %v1182 = vmul.f32 %v1148, %v1019
      %v1183 = vmul.f32 %v1151, %v1019
      %v1184 = vmul.f32 %v1154, %v1019
      %v1185 = vmul.f32 %v1157, %v1019
      %v1186 = vmul.f32 %v1160, %v1019
      %v1187 = vmul.f32 %v1163, %v1019
      %v1188 = vadd.f32 %v1164, 1e-05
      %v1189 = vadd.f32 %v1165, 1e-05
      %v1190 = vadd.f32 %v1166, 1e-05
      %v1191 = vadd.f32 %v1167, 1e-05
      %v1192 = vadd.f32 %v1168, 1e-05
      %v1193 = vadd.f32 %v1169, 1e-05
      %v1194 = vadd.f32 %v1170, 1e-05
      %v1195 = vadd.f32 %v1171, 1e-05
      %v1196 = vadd.f32 %v1172, 1e-05
      %v1197 = vadd.f32 %v1173, 1e-05
      %v1198 = vadd.f32 %v1174, 1e-05
      %v1199 = vadd.f32 %v1175, 1e-05
      %v1200 = vadd.f32 %v1176, 1e-05
      %v1201 = vadd.f32 %v1177, 1e-05
      %v1202 = vadd.f32 %v1178, 1e-05
      %v1203 = vadd.f32 %v1179, 1e-05
      %v1204 = vadd.f32 %v1180, 1e-05
      %v1205 = vadd.f32 %v1181, 1e-05
      %v1206 = vadd.f32 %v1182, 1e-05
      %v1207 = vadd.f32 %v1183, 1e-05
      %v1208 = vadd.f32 %v1184, 1e-05
      %v1209 = vadd.f32 %v1185, 1e-05
      %v1210 = vadd.f32 %v1186, 1e-05
      %v1211 = vadd.f32 %v1187, 1e-05
      %v1212 = vrsqrt.pop %v1188
      %v1213 = vrsqrt.pop %v1189
      %v1214 = vrsqrt.pop %v1190
      %v1215 = vrsqrt.pop %v1191
      %v1216 = vrsqrt.pop %v1192
      %v1217 = vrsqrt.pop %v1193
      %v1218 = vrsqrt.pop %v1194
      %v1219 = vrsqrt.pop %v1195
      %v1220 = vrsqrt.pop %v1196
      %v1221 = vrsqrt.pop %v1197
      %v1222 = vrsqrt.pop %v1198
      %v1223 = vrsqrt.pop %v1199
      %v1224 = vrsqrt.pop %v1200
      %v1225 = vrsqrt.pop %v1201
      %v1226 = vrsqrt.pop %v1202
      %v1227 = vrsqrt.pop %v1203
      %v1228 = vrsqrt.pop %v1204
      %v1229 = vrsqrt.pop %v1205
      %v1230 = vrsqrt.pop %v1206
      %v1231 = vrsqrt.pop %v1207
      %v1232 = vrsqrt.pop %v1208
      %v1233 = vrsqrt.pop %v1209
      %v1234 = vrsqrt.pop %v1210
      %v1235 = vrsqrt.pop %v1211
      %v1236 = vmul.f32 %v1044, %v1212
      %v1237 = vmul.f32 %v1045, %v1213
      %v1238 = vmul.f32 %v1046, %v1214
      %v1239 = vmul.f32 %v1047, %v1215
      %v1240 = vmul.f32 %v1048, %v1216
      %v1241 = vmul.f32 %v1049, %v1217
      %v1242 = vmul.f32 %v1050, %v1218
      %v1243 = vmul.f32 %v1051, %v1219
      %v1244 = vmul.f32 %v1052, %v1220
      %v1245 = vmul.f32 %v1053, %v1221
      %v1246 = vmul.f32 %v1054, %v1222
      %v1247 = vmul.f32 %v1055, %v1223
      %v1248 = vmul.f32 %v1056, %v1224
      %v1249 = vmul.f32 %v1057, %v1225
      %v1250 = vmul.f32 %v1058, %v1226
      %v1251 = vmul.f32 %v1059, %v1227
      %v1252 = vmul.f32 %v1060, %v1228
      %v1253 = vmul.f32 %v1061, %v1229
      %v1254 = vmul.f32 %v1062, %v1230
      %v1255 = vmul.f32 %v1063, %v1231
      %v1256 = vmul.f32 %v1064, %v1232
      %v1257 = vmul.f32 %v1065, %v1233
      %v1258 = vmul.f32 %v1066, %v1234
      %v1259 = vmul.f32 %v1067, %v1235
      %v1260 = vlaneseq
      %v1261 = vshrl.u32 %v1260, 7
      %v1262 = vsub.s32 0, %v1261
      %v1263 = vrot.slane %v944, %v1262
      %v1264 = vmul.f32 %v1236, %v1263
      %v1265 = vmul.f32 %v1237, %v1263
      %v1266 = vmul.f32 %v1238, %v1263
      %v1267 = vmul.f32 %v1239, %v1263
      %v1268 = vmul.f32 %v1240, %v1263
      %v1269 = vmul.f32 %v1241, %v1263
      %v1270 = vmul.f32 %v1242, %v1263
      %v1271 = vmul.f32 %v1243, %v1263
      %v1272 = vmul.f32 %v1244, %v1263
      %v1273 = vmul.f32 %v1245, %v1263
      %v1274 = vmul.f32 %v1246, %v1263
      %v1275 = vmul.f32 %v1247, %v1263
      %v1276 = vmul.f32 %v1248, %v1263
      %v1277 = vmul.f32 %v1249, %v1263
      %v1278 = vmul.f32 %v1250, %v1263
      %v1279 = vmul.f32 %v1251, %v1263
      %v1280 = vmul.f32 %v1252, %v1263
      %v1281 = vmul.f32 %v1253, %v1263
      %v1282 = vmul.f32 %v1254, %v1263
      %v1283 = vmul.f32 %v1255, %v1263
      %v1284 = vmul.f32 %v1256, %v1263
      %v1285 = vmul.f32 %v1257, %v1263
      %v1286 = vmul.f32 %v1258, %v1263
      %v1287 = vmul.f32 %v1259, %v1263
      %v1288 = vlaneseq
      %v1289 = vshrl.u32 %v1288, 7
      %v1290 = vsub.s32 0, %v1289
      %v1291 = vrot.slane %v945, %v1290
      %v1292 = vadd.f32 %v1264, %v1291
      %v1293 = vadd.f32 %v1265, %v1291
      %v1294 = vadd.f32 %v1266, %v1291
      %v1295 = vadd.f32 %v1267, %v1291
      %v1296 = vadd.f32 %v1268, %v1291
      %v1297 = vadd.f32 %v1269, %v1291
      %v1298 = vadd.f32 %v1270, %v1291
      %v1299 = vadd.f32 %v1271, %v1291
      %v1300 = vadd.f32 %v1272, %v1291
      %v1301 = vadd.f32 %v1273, %v1291
      %v1302 = vadd.f32 %v1274, %v1291
      %v1303 = vadd.f32 %v1275, %v1291
      %v1304 = vadd.f32 %v1276, %v1291
      %v1305 = vadd.f32 %v1277, %v1291
      %v1306 = vadd.f32 %v1278, %v1291
      %v1307 = vadd.f32 %v1279, %v1291
      %v1308 = vadd.f32 %v1280, %v1291
      %v1309 = vadd.f32 %v1281, %v1291
      %v1310 = vadd.f32 %v1282, %v1291
      %v1311 = vadd.f32 %v1283, %v1291
      %v1312 = vadd.f32 %v1284, %v1291
      %v1313 = vadd.f32 %v1285, %v1291
      %v1314 = vadd.f32 %v1286, %v1291
      %v1315 = vadd.f32 %v1287, %v1291
      %s1316 = scalar_lea.vmem %s1, 192
      %v1317 = vld [vmem:[%s1316] sm:$0xff]
      %v1318 = vld [vmem:[%s1316 + $0x8] sm:$0xff]
      %v1319 = vld [vmem:[%s1316 + $0x10] sm:$0xff]
      %v1320 = vld [vmem:[%s1316 + $0x18] sm:$0xff]
      %v1321 = vld [vmem:[%s1316 + $0x20] sm:$0xff]
      %v1322 = vld [vmem:[%s1316 + $0x28] sm:$0xff]
      %v1323 = vld [vmem:[%s1316 + $0x30] sm:$0xff]
      %v1324 = vld [vmem:[%s1316 + $0x38] sm:$0xff]
      %v1325 = vld [vmem:[%s1316 + $0x40] sm:$0xff]
      %v1326 = vld [vmem:[%s1316 + $0x48] sm:$0xff]
      %v1327 = vld [vmem:[%s1316 + $0x50] sm:$0xff]
      %v1328 = vld [vmem:[%s1316 + $0x58] sm:$0xff]
      %v1329 = vld [vmem:[%s1316 + $0x60] sm:$0xff]
      %v1330 = vld [vmem:[%s1316 + $0x68] sm:$0xff]
      %v1331 = vld [vmem:[%s1316 + $0x70] sm:$0xff]
      %v1332 = vld [vmem:[%s1316 + $0x78] sm:$0xff]
      %v1333 = vld [vmem:[%s1316 + $0x80] sm:$0xff]
      %v1334 = vld [vmem:[%s1316 + $0x88] sm:$0xff]
      %v1335 = vld [vmem:[%s1316 + $0x90] sm:$0xff]
      %v1336 = vld [vmem:[%s1316 + $0x98] sm:$0xff]
      %v1337 = vld [vmem:[%s1316 + $0xa0] sm:$0xff]
      %v1338 = vld [vmem:[%s1316 + $0xa8] sm:$0xff]
      %v1339 = vld [vmem:[%s1316 + $0xb0] sm:$0xff]
      %v1340 = vld [vmem:[%s1316 + $0xb8] sm:$0xff]
      %v1341 = vmul.f32 %v1292, %v1317
      %v1342 = vmul.f32 %v1293, %v1318
      %v1343 = vmul.f32 %v1294, %v1319
      %v1344 = vmul.f32 %v1295, %v1320
      %v1345 = vmul.f32 %v1296, %v1321
      %v1346 = vmul.f32 %v1297, %v1322
      %v1347 = vmul.f32 %v1298, %v1323
      %v1348 = vmul.f32 %v1299, %v1324
      %v1349 = vmul.f32 %v1300, %v1325
      %v1350 = vmul.f32 %v1301, %v1326
      %v1351 = vmul.f32 %v1302, %v1327
      %v1352 = vmul.f32 %v1303, %v1328
      %v1353 = vmul.f32 %v1304, %v1329
      %v1354 = vmul.f32 %v1305, %v1330
      %v1355 = vmul.f32 %v1306, %v1331
      %v1356 = vmul.f32 %v1307, %v1332
      %v1357 = vmul.f32 %v1308, %v1333
      %v1358 = vmul.f32 %v1309, %v1334
      %v1359 = vmul.f32 %v1310, %v1335
      %v1360 = vmul.f32 %v1311, %v1336
      %v1361 = vmul.f32 %v1312, %v1337
      %v1362 = vmul.f32 %v1313, %v1338
      %v1363 = vmul.f32 %v1314, %v1339
      %v1364 = vmul.f32 %v1315, %v1340
      %v1365 = vld [vmem:[%s1] sm:$0xff]
      %v1366 = vld [vmem:[%s1 + $0x8] sm:$0xff]
      %v1367 = vld [vmem:[%s1 + $0x10] sm:$0xff]
      %v1368 = vld [vmem:[%s1 + $0x18] sm:$0xff]
      %v1369 = vld [vmem:[%s1 + $0x20] sm:$0xff]
      %v1370 = vld [vmem:[%s1 + $0x28] sm:$0xff]
      %v1371 = vld [vmem:[%s1 + $0x30] sm:$0xff]
      %v1372 = vld [vmem:[%s1 + $0x38] sm:$0xff]
      %v1373 = vld [vmem:[%s1 + $0x40] sm:$0xff]
      %v1374 = vld [vmem:[%s1 + $0x48] sm:$0xff]
      %v1375 = vld [vmem:[%s1 + $0x50] sm:$0xff]
      %v1376 = vld [vmem:[%s1 + $0x58] sm:$0xff]
      %v1377 = vld [vmem:[%s1 + $0x60] sm:$0xff]
      %v1378 = vld [vmem:[%s1 + $0x68] sm:$0xff]
      %v1379 = vld [vmem:[%s1 + $0x70] sm:$0xff]
      %v1380 = vld [vmem:[%s1 + $0x78] sm:$0xff]
      %v1381 = vld [vmem:[%s1 + $0x80] sm:$0xff]
      %v1382 = vld [vmem:[%s1 + $0x88] sm:$0xff]
      %v1383 = vld [vmem:[%s1 + $0x90] sm:$0xff]
      %v1384 = vld [vmem:[%s1 + $0x98] sm:$0xff]
      %v1385 = vld [vmem:[%s1 + $0xa0] sm:$0xff]
      %v1386 = vld [vmem:[%s1 + $0xa8] sm:$0xff]
      %v1387 = vld [vmem:[%s1 + $0xb0] sm:$0xff]
      %v1388 = vld [vmem:[%s1 + $0xb8] sm:$0xff]
      %v1389 = vadd.f32 %v1341, %v1365
      %v1390 = vadd.f32 %v1342, %v1366
      %v1391 = vadd.f32 %v1343, %v1367
      %v1392 = vadd.f32 %v1344, %v1368
      %v1393 = vadd.f32 %v1345, %v1369
      %v1394 = vadd.f32 %v1346, %v1370
      %v1395 = vadd.f32 %v1347, %v1371
      %v1396 = vadd.f32 %v1348, %v1372
      %v1397 = vadd.f32 %v1349, %v1373
      %v1398 = vadd.f32 %v1350, %v1374
      %v1399 = vadd.f32 %v1351, %v1375
      %v1400 = vadd.f32 %v1352, %v1376
      %v1401 = vadd.f32 %v1353, %v1377
      %v1402 = vadd.f32 %v1354, %v1378
      %v1403 = vadd.f32 %v1355, %v1379
      %v1404 = vadd.f32 %v1356, %v1380
      %v1405 = vadd.f32 %v1357, %v1381
      %v1406 = vadd.f32 %v1358, %v1382
      %v1407 = vadd.f32 %v1359, %v1383
      %v1408 = vadd.f32 %v1360, %v1384
      %v1409 = vadd.f32 %v1361, %v1385
      %v1410 = vadd.f32 %v1362, %v1386
      %v1411 = vadd.f32 %v1363, %v1387
      %v1412 = vadd.f32 %v1364, %v1388
      %v1413 = vld [vmem:[%s2] sm:$0xff]
      %v1414 = vld [vmem:[%s2 + $0x8] sm:$0xff]
      %v1415 = vld [vmem:[%s2 + $0x10] sm:$0xff]
      %v1416 = vld [vmem:[%s2 + $0x18] sm:$0xff]
      %v1417 = vld [vmem:[%s2 + $0x20] sm:$0xff]
      %v1418 = vld [vmem:[%s2 + $0x28] sm:$0xff]
      %v1419 = vld [vmem:[%s2 + $0x30] sm:$0xff]
      %v1420 = vld [vmem:[%s2 + $0x38] sm:$0xff]
      %v1421 = vld [vmem:[%s2 + $0x40] sm:$0xff]
      %v1422 = vld [vmem:[%s2 + $0x48] sm:$0xff]
      %v1423 = vld [vmem:[%s2 + $0x50] sm:$0xff]
      %v1424 = vld [vmem:[%s2 + $0x58] sm:$0xff]
      %v1425 = vld [vmem:[%s2 + $0x60] sm:$0xff]
      %v1426 = vld [vmem:[%s2 + $0x68] sm:$0xff]
      %v1427 = vld [vmem:[%s2 + $0x70] sm:$0xff]
      %v1428 = vld [vmem:[%s2 + $0x78] sm:$0xff]
      %v1429 = vld [vmem:[%s2 + $0x80] sm:$0xff]
      %v1430 = vld [vmem:[%s2 + $0x88] sm:$0xff]
      %v1431 = vld [vmem:[%s2 + $0x90] sm:$0xff]
      %v1432 = vld [vmem:[%s2 + $0x98] sm:$0xff]
      %v1433 = vld [vmem:[%s2 + $0xa0] sm:$0xff]
      %v1434 = vld [vmem:[%s2 + $0xa8] sm:$0xff]
      %v1435 = vld [vmem:[%s2 + $0xb0] sm:$0xff]
      %v1436 = vld [vmem:[%s2 + $0xb8] sm:$0xff]
      %v1437 = vld [vmem:[%s2 + $0xc0] sm:$0xff]
      %v1438 = vld [vmem:[%s2 + $0xc8] sm:$0xff]
      %v1439 = vld [vmem:[%s2 + $0xd0] sm:$0xff]
      %v1440 = vld [vmem:[%s2 + $0xd8] sm:$0xff]
      %v1441 = vld [vmem:[%s2 + $0xe0] sm:$0xff]
      %v1442 = vld [vmem:[%s2 + $0xe8] sm:$0xff]
      %v1443 = vld [vmem:[%s2 + $0xf0] sm:$0xff]
      %v1444 = vld [vmem:[%s2 + $0xf8] sm:$0xff]
      %v1445 = vld [vmem:[%s2 + $0x100] sm:$0xff]
      %v1446 = vld [vmem:[%s2 + $0x108] sm:$0xff]
      %v1447 = vld [vmem:[%s2 + $0x110] sm:$0xff]
      %v1448 = vld [vmem:[%s2 + $0x118] sm:$0xff]
      %v1449 = vld [vmem:[%s2 + $0x120] sm:$0xff]
      %v1450 = vld [vmem:[%s2 + $0x128] sm:$0xff]
      %v1451 = vld [vmem:[%s2 + $0x130] sm:$0xff]
      %v1452 = vld [vmem:[%s2 + $0x138] sm:$0xff]
      %v1453 = vld [vmem:[%s2 + $0x140] sm:$0xff]
      %v1454 = vld [vmem:[%s2 + $0x148] sm:$0xff]
      %v1455 = vld [vmem:[%s2 + $0x150] sm:$0xff]
      %v1456 = vld [vmem:[%s2 + $0x158] sm:$0xff]
      %v1457 = vld [vmem:[%s2 + $0x160] sm:$0xff]
      %v1458 = vld [vmem:[%s2 + $0x168] sm:$0xff]
      %v1459 = vld [vmem:[%s2 + $0x170] sm:$0xff]
      %v1460 = vld [vmem:[%s2 + $0x178] sm:$0xff]
      %v1461 = vld [vmem:[%s3 + $0x5] sm:$0x1]
      %v1462 = vld [vmem:[%s3 + $0x6] sm:$0x1]
      %v1463 = vsel %vm946, %v1389, 0.0
      %1464 = vadd.xlane.f32.xlu0 %v1463
      %v1465 = vpop.xlane.xlu0 %1464
      %v1466 = vsel %vm946, %v1390, 0.0
      %1467 = vadd.xlane.f32.xlu0 %v1466
      %v1468 = vpop.xlane.xlu0 %1467
      %v1469 = vsel %vm946, %v1391, 0.0
      %1470 = vadd.xlane.f32.xlu0 %v1469
      %v1471 = vpop.xlane.xlu0 %1470
      %v1472 = vsel %vm946, %v1392, 0.0
      %1473 = vadd.xlane.f32.xlu0 %v1472
      %v1474 = vpop.xlane.xlu0 %1473
      %v1475 = vsel %vm946, %v1393, 0.0
      %1476 = vadd.xlane.f32.xlu0 %v1475
      %v1477 = vpop.xlane.xlu0 %1476
      %v1478 = vsel %vm946, %v1394, 0.0
      %1479 = vadd.xlane.f32.xlu0 %v1478
      %v1480 = vpop.xlane.xlu0 %1479
      %v1481 = vsel %vm946, %v1395, 0.0
      %1482 = vadd.xlane.f32.xlu0 %v1481
      %v1483 = vpop.xlane.xlu0 %1482
      %v1484 = vsel %vm946, %v1396, 0.0
      %1485 = vadd.xlane.f32.xlu0 %v1484
      %v1486 = vpop.xlane.xlu0 %1485
      %v1487 = vsel %vm946, %v1397, 0.0
      %1488 = vadd.xlane.f32.xlu0 %v1487
      %v1489 = vpop.xlane.xlu0 %1488
      %v1490 = vsel %vm946, %v1398, 0.0
      %1491 = vadd.xlane.f32.xlu0 %v1490
      %v1492 = vpop.xlane.xlu0 %1491
      %v1493 = vsel %vm946, %v1399, 0.0
      %1494 = vadd.xlane.f32.xlu0 %v1493
      %v1495 = vpop.xlane.xlu0 %1494
      %v1496 = vsel %vm946, %v1400, 0.0
      %1497 = vadd.xlane.f32.xlu0 %v1496
      %v1498 = vpop.xlane.xlu0 %1497
      %v1499 = vsel %vm946, %v1401, 0.0
      %1500 = vadd.xlane.f32.xlu0 %v1499
      %v1501 = vpop.xlane.xlu0 %1500
      %v1502 = vsel %vm946, %v1402, 0.0
      %1503 = vadd.xlane.f32.xlu0 %v1502
      %v1504 = vpop.xlane.xlu0 %1503
      %v1505 = vsel %vm946, %v1403, 0.0
      %1506 = vadd.xlane.f32.xlu0 %v1505
      %v1507 = vpop.xlane.xlu0 %1506
      %v1508 = vsel %vm946, %v1404, 0.0
      %1509 = vadd.xlane.f32.xlu0 %v1508
      %v1510 = vpop.xlane.xlu0 %1509
      %v1511 = vsel %vm946, %v1405, 0.0
      %1512 = vadd.xlane.f32.xlu0 %v1511
      %v1513 = vpop.xlane.xlu0 %1512
      %v1514 = vsel %vm946, %v1406, 0.0
      %1515 = vadd.xlane.f32.xlu0 %v1514
      %v1516 = vpop.xlane.xlu0 %1515
      %v1517 = vsel %vm946, %v1407, 0.0
      %1518 = vadd.xlane.f32.xlu0 %v1517
      %v1519 = vpop.xlane.xlu0 %1518
      %v1520 = vsel %vm946, %v1408, 0.0
      %1521 = vadd.xlane.f32.xlu0 %v1520
      %v1522 = vpop.xlane.xlu0 %1521
      %v1523 = vsel %vm946, %v1409, 0.0
      %1524 = vadd.xlane.f32.xlu0 %v1523
      %v1525 = vpop.xlane.xlu0 %1524
      %v1526 = vsel %vm946, %v1410, 0.0
      %1527 = vadd.xlane.f32.xlu0 %v1526
      %v1528 = vpop.xlane.xlu0 %1527
      %v1529 = vsel %vm946, %v1411, 0.0
      %1530 = vadd.xlane.f32.xlu0 %v1529
      %v1531 = vpop.xlane.xlu0 %1530
      %v1532 = vsel %vm946, %v1412, 0.0
      %1533 = vadd.xlane.f32.xlu0 %v1532
      %v1534 = vpop.xlane.xlu0 %1533
      %v1535 = vmul.f32 %v1465, %v1019
      %v1536 = vmul.f32 %v1468, %v1019
      %v1537 = vmul.f32 %v1471, %v1019
      %v1538 = vmul.f32 %v1474, %v1019
      %v1539 = vmul.f32 %v1477, %v1019
      %v1540 = vmul.f32 %v1480, %v1019
      %v1541 = vmul.f32 %v1483, %v1019
      %v1542 = vmul.f32 %v1486, %v1019
      %v1543 = vmul.f32 %v1489, %v1019
      %v1544 = vmul.f32 %v1492, %v1019
      %v1545 = vmul.f32 %v1495, %v1019
      %v1546 = vmul.f32 %v1498, %v1019
      %v1547 = vmul.f32 %v1501, %v1019
      %v1548 = vmul.f32 %v1504, %v1019
      %v1549 = vmul.f32 %v1507, %v1019
      %v1550 = vmul.f32 %v1510, %v1019
      %v1551 = vmul.f32 %v1513, %v1019
      %v1552 = vmul.f32 %v1516, %v1019
      %v1553 = vmul.f32 %v1519, %v1019
      %v1554 = vmul.f32 %v1522, %v1019
      %v1555 = vmul.f32 %v1525, %v1019
      %v1556 = vmul.f32 %v1528, %v1019
      %v1557 = vmul.f32 %v1531, %v1019
      %v1558 = vmul.f32 %v1534, %v1019
      %v1559 = vsub.f32 %v1389, %v1535
      %v1560 = vsub.f32 %v1390, %v1536
      %v1561 = vsub.f32 %v1391, %v1537
      %v1562 = vsub.f32 %v1392, %v1538
      %v1563 = vsub.f32 %v1393, %v1539
      %v1564 = vsub.f32 %v1394, %v1540
      %v1565 = vsub.f32 %v1395, %v1541
      %v1566 = vsub.f32 %v1396, %v1542
      %v1567 = vsub.f32 %v1397, %v1543
      %v1568 = vsub.f32 %v1398, %v1544
      %v1569 = vsub.f32 %v1399, %v1545
      %v1570 = vsub.f32 %v1400, %v1546
      %v1571 = vsub.f32 %v1401, %v1547
      %v1572 = vsub.f32 %v1402, %v1548
      %v1573 = vsub.f32 %v1403, %v1549
      %v1574 = vsub.f32 %v1404, %v1550
      %v1575 = vsub.f32 %v1405, %v1551
      %v1576 = vsub.f32 %v1406, %v1552
      %v1577 = vsub.f32 %v1407, %v1553
      %v1578 = vsub.f32 %v1408, %v1554
      %v1579 = vsub.f32 %v1409, %v1555
      %v1580 = vsub.f32 %v1410, %v1556
      %v1581 = vsub.f32 %v1411, %v1557
      %v1582 = vsub.f32 %v1412, %v1558
      %v1583 = vmul.f32 %v1559, %v1559
      %v1584 = vmul.f32 %v1560, %v1560
      %v1585 = vmul.f32 %v1561, %v1561
      %v1586 = vmul.f32 %v1562, %v1562
      %v1587 = vmul.f32 %v1563, %v1563
      %v1588 = vmul.f32 %v1564, %v1564
      %v1589 = vmul.f32 %v1565, %v1565
      %v1590 = vmul.f32 %v1566, %v1566
      %v1591 = vmul.f32 %v1567, %v1567
      %v1592 = vmul.f32 %v1568, %v1568
      %v1593 = vmul.f32 %v1569, %v1569
      %v1594 = vmul.f32 %v1570, %v1570
      %v1595 = vmul.f32 %v1571, %v1571
      %v1596 = vmul.f32 %v1572, %v1572
      %v1597 = vmul.f32 %v1573, %v1573
      %v1598 = vmul.f32 %v1574, %v1574
      %v1599 = vmul.f32 %v1575, %v1575
      %v1600 = vmul.f32 %v1576, %v1576
      %v1601 = vmul.f32 %v1577, %v1577
      %v1602 = vmul.f32 %v1578, %v1578
      %v1603 = vmul.f32 %v1579, %v1579
      %v1604 = vmul.f32 %v1580, %v1580
      %v1605 = vmul.f32 %v1581, %v1581
      %v1606 = vmul.f32 %v1582, %v1582
      %v1607 = vsel %vm946, %v1583, 0.0
      %1608 = vadd.xlane.f32.xlu0 %v1607
      %v1609 = vpop.xlane.xlu0 %1608
      %v1610 = vsel %vm946, %v1584, 0.0
      %1611 = vadd.xlane.f32.xlu0 %v1610
      %v1612 = vpop.xlane.xlu0 %1611
      %v1613 = vsel %vm946, %v1585, 0.0
      %1614 = vadd.xlane.f32.xlu0 %v1613
      %v1615 = vpop.xlane.xlu0 %1614
      %v1616 = vsel %vm946, %v1586, 0.0
      %1617 = vadd.xlane.f32.xlu0 %v1616
      %v1618 = vpop.xlane.xlu0 %1617
      %v1619 = vsel %vm946, %v1587, 0.0
      %1620 = vadd.xlane.f32.xlu0 %v1619
      %v1621 = vpop.xlane.xlu0 %1620
      %v1622 = vsel %vm946, %v1588, 0.0
      %1623 = vadd.xlane.f32.xlu0 %v1622
      %v1624 = vpop.xlane.xlu0 %1623
      %v1625 = vsel %vm946, %v1589, 0.0
      %1626 = vadd.xlane.f32.xlu0 %v1625
      %v1627 = vpop.xlane.xlu0 %1626
      %v1628 = vsel %vm946, %v1590, 0.0
      %1629 = vadd.xlane.f32.xlu0 %v1628
      %v1630 = vpop.xlane.xlu0 %1629
      %v1631 = vsel %vm946, %v1591, 0.0
      %1632 = vadd.xlane.f32.xlu0 %v1631
      %v1633 = vpop.xlane.xlu0 %1632
      %v1634 = vsel %vm946, %v1592, 0.0
      %1635 = vadd.xlane.f32.xlu0 %v1634
      %v1636 = vpop.xlane.xlu0 %1635
      %v1637 = vsel %vm946, %v1593, 0.0
      %1638 = vadd.xlane.f32.xlu0 %v1637
      %v1639 = vpop.xlane.xlu0 %1638
      %v1640 = vsel %vm946, %v1594, 0.0
      %1641 = vadd.xlane.f32.xlu0 %v1640
      %v1642 = vpop.xlane.xlu0 %1641
      %v1643 = vsel %vm946, %v1595, 0.0
      %1644 = vadd.xlane.f32.xlu0 %v1643
      %v1645 = vpop.xlane.xlu0 %1644
      %v1646 = vsel %vm946, %v1596, 0.0
      %1647 = vadd.xlane.f32.xlu0 %v1646
      %v1648 = vpop.xlane.xlu0 %1647
      %v1649 = vsel %vm946, %v1597, 0.0
      %1650 = vadd.xlane.f32.xlu0 %v1649
      %v1651 = vpop.xlane.xlu0 %1650
      %v1652 = vsel %vm946, %v1598, 0.0
      %1653 = vadd.xlane.f32.xlu0 %v1652
      %v1654 = vpop.xlane.xlu0 %1653
      %v1655 = vsel %vm946, %v1599, 0.0
      %1656 = vadd.xlane.f32.xlu0 %v1655
      %v1657 = vpop.xlane.xlu0 %1656
      %v1658 = vsel %vm946, %v1600, 0.0
      %1659 = vadd.xlane.f32.xlu0 %v1658
      %v1660 = vpop.xlane.xlu0 %1659
      %v1661 = vsel %vm946, %v1601, 0.0
      %1662 = vadd.xlane.f32.xlu0 %v1661
      %v1663 = vpop.xlane.xlu0 %1662
      %v1664 = vsel %vm946, %v1602, 0.0
      %1665 = vadd.xlane.f32.xlu0 %v1664
      %v1666 = vpop.xlane.xlu0 %1665
      %v1667 = vsel %vm946, %v1603, 0.0
      %1668 = vadd.xlane.f32.xlu0 %v1667
      %v1669 = vpop.xlane.xlu0 %1668
      %v1670 = vsel %vm946, %v1604, 0.0
      %1671 = vadd.xlane.f32.xlu0 %v1670
      %v1672 = vpop.xlane.xlu0 %1671
      %v1673 = vsel %vm946, %v1605, 0.0
      %1674 = vadd.xlane.f32.xlu0 %v1673
      %v1675 = vpop.xlane.xlu0 %1674
      %v1676 = vsel %vm946, %v1606, 0.0
      %1677 = vadd.xlane.f32.xlu0 %v1676
      %v1678 = vpop.xlane.xlu0 %1677
      %v1679 = vmul.f32 %v1609, %v1019
      %v1680 = vmul.f32 %v1612, %v1019
      %v1681 = vmul.f32 %v1615, %v1019
      %v1682 = vmul.f32 %v1618, %v1019
      %v1683 = vmul.f32 %v1621, %v1019
      %v1684 = vmul.f32 %v1624, %v1019
      %v1685 = vmul.f32 %v1627, %v1019
      %v1686 = vmul.f32 %v1630, %v1019
      %v1687 = vmul.f32 %v1633, %v1019
      %v1688 = vmul.f32 %v1636, %v1019
      %v1689 = vmul.f32 %v1639, %v1019
      %v1690 = vmul.f32 %v1642, %v1019
      %v1691 = vmul.f32 %v1645, %v1019
      %v1692 = vmul.f32 %v1648, %v1019
      %v1693 = vmul.f32 %v1651, %v1019
      %v1694 = vmul.f32 %v1654, %v1019
      %v1695 = vmul.f32 %v1657, %v1019
      %v1696 = vmul.f32 %v1660, %v1019
      %v1697 = vmul.f32 %v1663, %v1019
      %v1698 = vmul.f32 %v1666, %v1019
      %v1699 = vmul.f32 %v1669, %v1019
      %v1700 = vmul.f32 %v1672, %v1019
      %v1701 = vmul.f32 %v1675, %v1019
      %v1702 = vmul.f32 %v1678, %v1019
      %v1703 = vadd.f32 %v1679, 1e-05
      %v1704 = vadd.f32 %v1680, 1e-05
      %v1705 = vadd.f32 %v1681, 1e-05
      %v1706 = vadd.f32 %v1682, 1e-05
      %v1707 = vadd.f32 %v1683, 1e-05
      %v1708 = vadd.f32 %v1684, 1e-05
      %v1709 = vadd.f32 %v1685, 1e-05
      %v1710 = vadd.f32 %v1686, 1e-05
      %v1711 = vadd.f32 %v1687, 1e-05
      %v1712 = vadd.f32 %v1688, 1e-05
      %v1713 = vadd.f32 %v1689, 1e-05
      %v1714 = vadd.f32 %v1690, 1e-05
      %v1715 = vadd.f32 %v1691, 1e-05
      %v1716 = vadd.f32 %v1692, 1e-05
      %v1717 = vadd.f32 %v1693, 1e-05
      %v1718 = vadd.f32 %v1694, 1e-05
      %v1719 = vadd.f32 %v1695, 1e-05
      %v1720 = vadd.f32 %v1696, 1e-05
      %v1721 = vadd.f32 %v1697, 1e-05
      %v1722 = vadd.f32 %v1698, 1e-05
      %v1723 = vadd.f32 %v1699, 1e-05
      %v1724 = vadd.f32 %v1700, 1e-05
      %v1725 = vadd.f32 %v1701, 1e-05
      %v1726 = vadd.f32 %v1702, 1e-05
      %v1727 = vrsqrt.pop %v1703
      %v1728 = vrsqrt.pop %v1704
      %v1729 = vrsqrt.pop %v1705
      %v1730 = vrsqrt.pop %v1706
      %v1731 = vrsqrt.pop %v1707
      %v1732 = vrsqrt.pop %v1708
      %v1733 = vrsqrt.pop %v1709
      %v1734 = vrsqrt.pop %v1710
      %v1735 = vrsqrt.pop %v1711
      %v1736 = vrsqrt.pop %v1712
      %v1737 = vrsqrt.pop %v1713
      %v1738 = vrsqrt.pop %v1714
      %v1739 = vrsqrt.pop %v1715
      %v1740 = vrsqrt.pop %v1716
      %v1741 = vrsqrt.pop %v1717
      %v1742 = vrsqrt.pop %v1718
      %v1743 = vrsqrt.pop %v1719
      %v1744 = vrsqrt.pop %v1720
      %v1745 = vrsqrt.pop %v1721
      %v1746 = vrsqrt.pop %v1722
      %v1747 = vrsqrt.pop %v1723
      %v1748 = vrsqrt.pop %v1724
      %v1749 = vrsqrt.pop %v1725
      %v1750 = vrsqrt.pop %v1726
      %v1751 = vmul.f32 %v1559, %v1727
      %v1752 = vmul.f32 %v1560, %v1728
      %v1753 = vmul.f32 %v1561, %v1729
      %v1754 = vmul.f32 %v1562, %v1730
      %v1755 = vmul.f32 %v1563, %v1731
      %v1756 = vmul.f32 %v1564, %v1732
      %v1757 = vmul.f32 %v1565, %v1733
      %v1758 = vmul.f32 %v1566, %v1734
      %v1759 = vmul.f32 %v1567, %v1735
      %v1760 = vmul.f32 %v1568, %v1736
      %v1761 = vmul.f32 %v1569, %v1737
      %v1762 = vmul.f32 %v1570, %v1738
      %v1763 = vmul.f32 %v1571, %v1739
      %v1764 = vmul.f32 %v1572, %v1740
      %v1765 = vmul.f32 %v1573, %v1741
      %v1766 = vmul.f32 %v1574, %v1742
      %v1767 = vmul.f32 %v1575, %v1743
      %v1768 = vmul.f32 %v1576, %v1744
      %v1769 = vmul.f32 %v1577, %v1745
      %v1770 = vmul.f32 %v1578, %v1746
      %v1771 = vmul.f32 %v1579, %v1747
      %v1772 = vmul.f32 %v1580, %v1748
      %v1773 = vmul.f32 %v1581, %v1749
      %v1774 = vmul.f32 %v1582, %v1750
      %v1775 = vlaneseq
      %v1776 = vshrl.u32 %v1775, 7
      %v1777 = vsub.s32 0, %v1776
      %v1778 = vrot.slane %v1461, %v1777
      %v1779 = vmul.f32 %v1751, %v1778
      %v1780 = vmul.f32 %v1752, %v1778
      %v1781 = vmul.f32 %v1753, %v1778
      %v1782 = vmul.f32 %v1754, %v1778
      %v1783 = vmul.f32 %v1755, %v1778
      %v1784 = vmul.f32 %v1756, %v1778
      %v1785 = vmul.f32 %v1757, %v1778
      %v1786 = vmul.f32 %v1758, %v1778
      %v1787 = vmul.f32 %v1759, %v1778
      %v1788 = vmul.f32 %v1760, %v1778
      %v1789 = vmul.f32 %v1761, %v1778
      %v1790 = vmul.f32 %v1762, %v1778
      %v1791 = vmul.f32 %v1763, %v1778
      %v1792 = vmul.f32 %v1764, %v1778
      %v1793 = vmul.f32 %v1765, %v1778
      %v1794 = vmul.f32 %v1766, %v1778
      %v1795 = vmul.f32 %v1767, %v1778
      %v1796 = vmul.f32 %v1768, %v1778
      %v1797 = vmul.f32 %v1769, %v1778
      %v1798 = vmul.f32 %v1770, %v1778
      %v1799 = vmul.f32 %v1771, %v1778
      %v1800 = vmul.f32 %v1772, %v1778
      %v1801 = vmul.f32 %v1773, %v1778
      %v1802 = vmul.f32 %v1774, %v1778
      %v1803 = vlaneseq
      %v1804 = vshrl.u32 %v1803, 7
      %v1805 = vsub.s32 0, %v1804
      %v1806 = vrot.slane %v1462, %v1805
      %v1807 = vadd.f32 %v1779, %v1806
      %v1808 = vadd.f32 %v1780, %v1806
      %v1809 = vadd.f32 %v1781, %v1806
      %v1810 = vadd.f32 %v1782, %v1806
      %v1811 = vadd.f32 %v1783, %v1806
      %v1812 = vadd.f32 %v1784, %v1806
      %v1813 = vadd.f32 %v1785, %v1806
      %v1814 = vadd.f32 %v1786, %v1806
      %v1815 = vadd.f32 %v1787, %v1806
      %v1816 = vadd.f32 %v1788, %v1806
      %v1817 = vadd.f32 %v1789, %v1806
      %v1818 = vadd.f32 %v1790, %v1806
      %v1819 = vadd.f32 %v1791, %v1806
      %v1820 = vadd.f32 %v1792, %v1806
      %v1821 = vadd.f32 %v1793, %v1806
      %v1822 = vadd.f32 %v1794, %v1806
      %v1823 = vadd.f32 %v1795, %v1806
      %v1824 = vadd.f32 %v1796, %v1806
      %v1825 = vadd.f32 %v1797, %v1806
      %v1826 = vadd.f32 %v1798, %v1806
      %v1827 = vadd.f32 %v1799, %v1806
      %v1828 = vadd.f32 %v1800, %v1806
      %v1829 = vadd.f32 %v1801, %v1806
      %v1830 = vadd.f32 %v1802, %v1806
      %v1831 = vld [vmem:[%s5] sm:$0xf]
      %v1832 = vld [vmem:[%s5 + $0x4] sm:$0xf]
      %v1833 = vld [vmem:[%s5 + $0x8] sm:$0xf]
      %v1834 = vld [vmem:[%s5 + $0xc] sm:$0xf]
      %v1835 = vpack.c.bf16 %v1808, %v1807
      %v1836 = vpack.c.bf16 %v1810, %v1809
      %v1837 = vpack.c.bf16 %v1812, %v1811
      %v1838 = vpack.c.bf16 %v1814, %v1813
      %v1839 = vpack.c.bf16 %v1816, %v1815
      %v1840 = vpack.c.bf16 %v1818, %v1817
      %v1841 = vpack.c.bf16 %v1820, %v1819
      %v1842 = vpack.c.bf16 %v1822, %v1821
      %v1843 = vpack.c.bf16 %v1824, %v1823
      %v1844 = vpack.c.bf16 %v1826, %v1825
      %v1845 = vpack.c.bf16 %v1828, %v1827
      %v1846 = vpack.c.bf16 %v1830, %v1829
      %v1851 = vunpack.c.l.b16 %v1831
      %v1852 = vunpack.c.l.b16 %v1832
      %v1853 = vunpack.c.l.b16 %v1833
      %v1854 = vunpack.c.l.b16 %v1834
      %v1855 = vpack.c.b16 %v1852, %v1851
      %v1856 = vpack.c.b16 %v1854, %v1853
      %v1860 = vsel %vm946, %v1835, 0
      %v1863 = vsel %vm946, %v1836, 0
      %v1866 = vsel %vm946, %v1837, 0
      %v1869 = vsel %vm946, %v1838, 0
      %v1872 = vsel %vm946, %v1839, 0
      %v1875 = vsel %vm946, %v1840, 0
      %v1878 = vsel %vm946, %v1841, 0
      %v1881 = vsel %vm946, %v1842, 0
      %v1884 = vsel %vm946, %v1843, 0
      %v1887 = vsel %vm946, %v1844, 0
      %v1890 = vsel %vm946, %v1845, 0
      %v1893 = vsel %vm946, %v1846, 0
      %1895 = vmatprep.subr.bf16.mxu0 0
      %1896 = vmatpush1.bf16.msra.mxu0 %v1855
      %1897 = vmatprep.subr.bf16.mxu0 0
      %1898 = vmatpush1.bf16.msra.mxu0 %v1856
      %1899 = vmatprep.subr.bf16.mxu0 0
      %1900 = vmatpush1.bf16.msra.mxu0 0
      %1901 = vmatprep.subr.bf16.mxu0 0
      %1902 = vmatpush1.bf16.msra.mxu0 0
      %1903 = vmatprep.subr.bf16.mxu0 0
      %1904 = vmatpush1.bf16.msra.mxu0 0
      %1905 = vmatprep.subr.bf16.mxu0 0
      %1906 = vmatpush1.bf16.msra.mxu0 0
      %1907 = vmatprep.subr.bf16.mxu0 0
      %1908 = vmatpush1.bf16.msra.mxu0 0
      %1909 = vmatprep.subr.bf16.mxu0 0
      %1910 = vmatpush1.bf16.msra.mxu0 0
      %1911 = vmatprep.subr.bf16.mxu0 0
      %1912 = vmatpush1.bf16.msra.mxu0 0
      %1913 = vmatprep.subr.bf16.mxu0 0
      %1914 = vmatpush1.bf16.msra.mxu0 0
      %1915 = vmatprep.subr.bf16.mxu0 0
      %1916 = vmatpush1.bf16.msra.mxu0 0
      %1917 = vmatprep.subr.bf16.mxu0 0
      %1918 = vmatpush1.bf16.msra.mxu0 0
      %1919 = vmatprep.subr.bf16.mxu0 0
      %1920 = vmatpush1.bf16.msra.mxu0 0
      %1921 = vmatprep.subr.bf16.mxu0 0
      %1922 = vmatpush1.bf16.msra.mxu0 0
      %1923 = vmatprep.subr.bf16.mxu0 0
      %1924 = vmatpush1.bf16.msra.mxu0 0
      %1925 = vmatprep.subr.bf16.mxu0 0
      %1926 = vmatpush1.bf16.msra.mxu0 0
      %1927 = vmatprep.mubr.bf16.mxu0 0
      %1928 = vmatmul.mubr.bf16.gmra.mrb[0].mxu0 %v1860
      %v1929 = vpop.f32.mrb[0].mxu0
      %v1930 = vadd.f32 0.0, %v1929
      %v1931 = vpop.f32.mrb[0].mxu0
      %v1932 = vpop.f32.mrb[0].mxu0
      %v1933 = vadd.f32 0.0, %v1932
      %v1934 = vpop.f32.mrb[0].mxu0
      %1935 = vmatprep.mubr.bf16.mxu0 0
      %1936 = vmatmul.mubr.bf16.gmra.mrb[0].mxu0 %v1863
      %v1937 = vpop.f32.mrb[0].mxu0
      %v1938 = vadd.f32 0.0, %v1937
      %v1939 = vpop.f32.mrb[0].mxu0
      %v1940 = vpop.f32.mrb[0].mxu0
      %v1941 = vadd.f32 0.0, %v1940
      %v1942 = vpop.f32.mrb[0].mxu0
      %1943 = vmatprep.mubr.bf16.mxu0 0
      %1944 = vmatmul.mubr.bf16.gmra.mrb[0].mxu0 %v1866
      %v1945 = vpop.f32.mrb[0].mxu0
      %v1946 = vadd.f32 0.0, %v1945
      %v1947 = vpop.f32.mrb[0].mxu0
      %v1948 = vpop.f32.mrb[0].mxu0
      %v1949 = vadd.f32 0.0, %v1948
      %v1950 = vpop.f32.mrb[0].mxu0
      %1951 = vmatprep.mubr.bf16.mxu0 0
      %1952 = vmatmul.mubr.bf16.gmra.mrb[0].mxu0 %v1869
      %v1953 = vpop.f32.mrb[0].mxu0
      %v1954 = vadd.f32 0.0, %v1953
      %v1955 = vpop.f32.mrb[0].mxu0
      %v1956 = vpop.f32.mrb[0].mxu0
      %v1957 = vadd.f32 0.0, %v1956
      %v1958 = vpop.f32.mrb[0].mxu0
      %1959 = vmatprep.mubr.bf16.mxu0 0
      %1960 = vmatmul.mubr.bf16.gmra.mrb[0].mxu0 %v1872
      %v1961 = vpop.f32.mrb[0].mxu0
      %v1962 = vadd.f32 0.0, %v1961
      %v1963 = vpop.f32.mrb[0].mxu0
      %v1964 = vpop.f32.mrb[0].mxu0
      %v1965 = vadd.f32 0.0, %v1964
      %v1966 = vpop.f32.mrb[0].mxu0
      %1967 = vmatprep.mubr.bf16.mxu0 0
      %1968 = vmatmul.mubr.bf16.gmra.mrb[0].mxu0 %v1875
      %v1969 = vpop.f32.mrb[0].mxu0
      %v1970 = vadd.f32 0.0, %v1969
      %v1971 = vpop.f32.mrb[0].mxu0
      %v1972 = vpop.f32.mrb[0].mxu0
      %v1973 = vadd.f32 0.0, %v1972
      %v1974 = vpop.f32.mrb[0].mxu0
      %1975 = vmatprep.mubr.bf16.mxu0 0
      %1976 = vmatmul.mubr.bf16.gmra.mrb[0].mxu0 %v1878
      %v1977 = vpop.f32.mrb[0].mxu0
      %v1978 = vadd.f32 0.0, %v1977
      %v1979 = vpop.f32.mrb[0].mxu0
      %v1980 = vpop.f32.mrb[0].mxu0
      %v1981 = vadd.f32 0.0, %v1980
      %v1982 = vpop.f32.mrb[0].mxu0
      %1983 = vmatprep.mubr.bf16.mxu0 0
      %1984 = vmatmul.mubr.bf16.gmra.mrb[0].mxu0 %v1881
      %v1985 = vpop.f32.mrb[0].mxu0
      %v1986 = vadd.f32 0.0, %v1985
      %v1987 = vpop.f32.mrb[0].mxu0
      %v1988 = vpop.f32.mrb[0].mxu0
      %v1989 = vadd.f32 0.0, %v1988
      %v1990 = vpop.f32.mrb[0].mxu0
      %1991 = vmatprep.mubr.bf16.mxu0 0
      %1992 = vmatmul.mubr.bf16.gmra.mrb[0].mxu0 %v1884
      %v1993 = vpop.f32.mrb[0].mxu0
      %v1994 = vadd.f32 0.0, %v1993
      %v1995 = vpop.f32.mrb[0].mxu0
      %v1996 = vpop.f32.mrb[0].mxu0
      %v1997 = vadd.f32 0.0, %v1996
      %v1998 = vpop.f32.mrb[0].mxu0
      %1999 = vmatprep.mubr.bf16.mxu0 0
      %2000 = vmatmul.mubr.bf16.gmra.mrb[0].mxu0 %v1887
      %v2001 = vpop.f32.mrb[0].mxu0
      %v2002 = vadd.f32 0.0, %v2001
      %v2003 = vpop.f32.mrb[0].mxu0
      %v2004 = vpop.f32.mrb[0].mxu0
      %v2005 = vadd.f32 0.0, %v2004
      %v2006 = vpop.f32.mrb[0].mxu0
      %2007 = vmatprep.mubr.bf16.mxu0 0
      %2008 = vmatmul.mubr.bf16.gmra.mrb[0].mxu0 %v1890
      %v2009 = vpop.f32.mrb[0].mxu0
      %v2010 = vadd.f32 0.0, %v2009
      %v2011 = vpop.f32.mrb[0].mxu0
      %v2012 = vpop.f32.mrb[0].mxu0
      %v2013 = vadd.f32 0.0, %v2012
      %v2014 = vpop.f32.mrb[0].mxu0
      %2015 = vmatprep.mubr.bf16.mxu0 0
      %2016 = vmatmul.mubr.bf16.gmra.mrb[0].mxu0 %v1893
      %v2017 = vpop.f32.mrb[0].mxu0
      %v2018 = vadd.f32 0.0, %v2017
      %v2019 = vpop.f32.mrb[0].mxu0
      %v2020 = vpop.f32.mrb[0].mxu0
      %v2021 = vadd.f32 0.0, %v2020
      %v2022 = vpop.f32.mrb[0].mxu0
      %2023 = vdwg.mxu0
      %v2024 = vpack.c.bf16 %v1933, %v1930
      %v2025 = vpack.c.bf16 %v1941, %v1938
      %v2026 = vpack.c.bf16 %v1949, %v1946
      %v2027 = vpack.c.bf16 %v1957, %v1954
      %v2028 = vpack.c.bf16 %v1965, %v1962
      %v2029 = vpack.c.bf16 %v1973, %v1970
      %v2030 = vpack.c.bf16 %v1981, %v1978
      %v2031 = vpack.c.bf16 %v1989, %v1986
      %v2032 = vpack.c.bf16 %v1997, %v1994
      %v2033 = vpack.c.bf16 %v2005, %v2002
      %v2034 = vpack.c.bf16 %v2013, %v2010
      %v2035 = vpack.c.bf16 %v2021, %v2018
      %2048 = vrot.lane.b32.xlu0 %v2024, 96
      %v2049 = vpop.permute.xlu0 %2048
      %2050 = vrot.lane.b32.xlu0 %v2025, 96
      %v2051 = vpop.permute.xlu0 %2050
      %2052 = vrot.lane.b32.xlu0 %v2026, 96
      %v2053 = vpop.permute.xlu0 %2052
      %2054 = vrot.lane.b32.xlu0 %v2027, 96
      %v2055 = vpop.permute.xlu0 %2054
      %2056 = vrot.lane.b32.xlu0 %v2028, 96
      %v2057 = vpop.permute.xlu0 %2056
      %2058 = vrot.lane.b32.xlu0 %v2029, 96
      %v2059 = vpop.permute.xlu0 %2058
      %2060 = vrot.lane.b32.xlu0 %v2030, 96
      %v2061 = vpop.permute.xlu0 %2060
      %2062 = vrot.lane.b32.xlu0 %v2031, 96
      %v2063 = vpop.permute.xlu0 %2062
      %2064 = vrot.lane.b32.xlu0 %v2032, 96
      %v2065 = vpop.permute.xlu0 %2064
      %2066 = vrot.lane.b32.xlu0 %v2033, 96
      %v2067 = vpop.permute.xlu0 %2066
      %2068 = vrot.lane.b32.xlu0 %v2034, 96
      %v2069 = vpop.permute.xlu0 %2068
      %2070 = vrot.lane.b32.xlu0 %v2035, 96
      %v2071 = vpop.permute.xlu0 %2070
      %vm2072 = vcmask 130048
      %v2074 = vsel %vm2072, %v2024, 0
      %v2077 = vsel %vm2072, %v2025, 0
      %v2080 = vsel %vm2072, %v2026, 0
      %v2083 = vsel %vm2072, %v2027, 0
      %v2086 = vsel %vm2072, %v2028, 0
      %v2089 = vsel %vm2072, %v2029, 0
      %v2092 = vsel %vm2072, %v2030, 0
      %v2095 = vsel %vm2072, %v2031, 0
      %v2098 = vsel %vm2072, %v2032, 0
      %v2101 = vsel %vm2072, %v2033, 0
      %v2104 = vsel %vm2072, %v2034, 0
      %v2107 = vsel %vm2072, %v2035, 0
      %v2110 = vsel %vm2072, %v2049, 0
      %v2113 = vsel %vm2072, %v2051, 0
      %v2116 = vsel %vm2072, %v2053, 0
      %v2119 = vsel %vm2072, %v2055, 0
      %v2122 = vsel %vm2072, %v2057, 0
      %v2125 = vsel %vm2072, %v2059, 0
      %v2128 = vsel %vm2072, %v2061, 0
      %v2131 = vsel %vm2072, %v2063, 0
      %v2134 = vsel %vm2072, %v2065, 0
      %v2137 = vsel %vm2072, %v2067, 0
      %v2140 = vsel %vm2072, %v2069, 0
      %v2143 = vsel %vm2072, %v2071, 0
      %2145 = vmatprep.subr.bf16.mxu0 0
      %2146 = vmatpush1.bf16.xpose.msra.mxu0 %v2110
      %2147 = vmatprep.subr.bf16.mxu0 0
      %2148 = vmatpush1.bf16.xpose.msra.mxu0 %v2113
      %2149 = vmatprep.subr.bf16.mxu0 0
      %2150 = vmatpush1.bf16.xpose.msra.mxu0 %v2116
      %2151 = vmatprep.subr.bf16.mxu0 0
      %2152 = vmatpush1.bf16.xpose.msra.mxu0 %v2119
      %2153 = vmatprep.subr.bf16.mxu0 0
      %2154 = vmatpush1.bf16.xpose.msra.mxu0 %v2122
      %2155 = vmatprep.subr.bf16.mxu0 0
      %2156 = vmatpush1.bf16.xpose.msra.mxu0 %v2125
      %2157 = vmatprep.subr.bf16.mxu0 0
      %2158 = vmatpush1.bf16.xpose.msra.mxu0 %v2128
      %2159 = vmatprep.subr.bf16.mxu0 0
      %2160 = vmatpush1.bf16.xpose.msra.mxu0 %v2131
      %2161 = vmatprep.subr.bf16.mxu0 0
      %2162 = vmatpush1.bf16.xpose.msra.mxu0 %v2134
      %2163 = vmatprep.subr.bf16.mxu0 0
      %2164 = vmatpush1.bf16.xpose.msra.mxu0 %v2137
      %2165 = vmatprep.subr.bf16.mxu0 0
      %2166 = vmatpush1.bf16.xpose.msra.mxu0 %v2140
      %2167 = vmatprep.subr.bf16.mxu0 0
      %2168 = vmatpush1.bf16.xpose.msra.mxu0 %v2143
      %2169 = vmatprep.subr.bf16.mxu0 0
      %2170 = vmatpush1.bf16.xpose.msra.mxu0 0
      %2171 = vmatprep.subr.bf16.mxu0 0
      %2172 = vmatpush1.bf16.xpose.msra.mxu0 0
      %2173 = vmatprep.subr.bf16.mxu0 0
      %2174 = vmatpush1.bf16.xpose.msra.mxu0 0
      %2175 = vmatprep.subr.bf16.mxu0 0
      %2176 = vmatpush1.bf16.xpose.msra.mxu0 0
      %2177 = vmatprep.mubr.bf16.mxu0 0
      %2178 = vmatmul.mubr.bf16.gmra.mrb[0].mxu0 %v2074
      %v2179 = vpop.f32.mrb[0].mxu0
      %v2180 = vadd.f32 %v1413, %v2179
      %v2181 = vpop.f32.mrb[0].mxu0
      %v2182 = vadd.f32 %v1414, %v2181
      %v2183 = vpop.f32.mrb[0].mxu0
      %v2184 = vadd.f32 %v1415, %v2183
      %v2185 = vpop.f32.mrb[0].mxu0
      %v2186 = vadd.f32 %v1416, %v2185
      %2187 = vmatprep.mubr.bf16.mxu0 0
      %2188 = vmatmul.mubr.bf16.gmra.mrb[0].mxu0 %v2077
      %v2189 = vpop.f32.mrb[0].mxu0
      %v2190 = vadd.f32 %v1417, %v2189
      %v2191 = vpop.f32.mrb[0].mxu0
      %v2192 = vadd.f32 %v1418, %v2191
      %v2193 = vpop.f32.mrb[0].mxu0
      %v2194 = vadd.f32 %v1419, %v2193
      %v2195 = vpop.f32.mrb[0].mxu0
      %v2196 = vadd.f32 %v1420, %v2195
      %2197 = vmatprep.mubr.bf16.mxu0 0
      %2198 = vmatmul.mubr.bf16.gmra.mrb[0].mxu0 %v2080
      %v2199 = vpop.f32.mrb[0].mxu0
      %v2200 = vadd.f32 %v1421, %v2199
      %v2201 = vpop.f32.mrb[0].mxu0
      %v2202 = vadd.f32 %v1422, %v2201
      %v2203 = vpop.f32.mrb[0].mxu0
      %v2204 = vadd.f32 %v1423, %v2203
      %v2205 = vpop.f32.mrb[0].mxu0
      %v2206 = vadd.f32 %v1424, %v2205
      %2207 = vmatprep.mubr.bf16.mxu0 0
      %2208 = vmatmul.mubr.bf16.gmra.mrb[0].mxu0 %v2083
      %v2209 = vpop.f32.mrb[0].mxu0
      %v2210 = vadd.f32 %v1425, %v2209
      %v2211 = vpop.f32.mrb[0].mxu0
      %v2212 = vadd.f32 %v1426, %v2211
      %v2213 = vpop.f32.mrb[0].mxu0
      %v2214 = vadd.f32 %v1427, %v2213
      %v2215 = vpop.f32.mrb[0].mxu0
      %v2216 = vadd.f32 %v1428, %v2215
      %2217 = vmatprep.mubr.bf16.mxu0 0
      %2218 = vmatmul.mubr.bf16.gmra.mrb[0].mxu0 %v2086
      %v2219 = vpop.f32.mrb[0].mxu0
      %v2220 = vadd.f32 %v1429, %v2219
      %v2221 = vpop.f32.mrb[0].mxu0
      %v2222 = vadd.f32 %v1430, %v2221
      %v2223 = vpop.f32.mrb[0].mxu0
      %v2224 = vadd.f32 %v1431, %v2223
      %v2225 = vpop.f32.mrb[0].mxu0
      %v2226 = vadd.f32 %v1432, %v2225
      %2227 = vmatprep.mubr.bf16.mxu0 0
      %2228 = vmatmul.mubr.bf16.gmra.mrb[0].mxu0 %v2089
      %v2229 = vpop.f32.mrb[0].mxu0
      %v2230 = vadd.f32 %v1433, %v2229
      %v2231 = vpop.f32.mrb[0].mxu0
      %v2232 = vadd.f32 %v1434, %v2231
      %v2233 = vpop.f32.mrb[0].mxu0
      %v2234 = vadd.f32 %v1435, %v2233
      %v2235 = vpop.f32.mrb[0].mxu0
      %v2236 = vadd.f32 %v1436, %v2235
      %2237 = vmatprep.mubr.bf16.mxu0 0
      %2238 = vmatmul.mubr.bf16.gmra.mrb[0].mxu0 %v2092
      %v2239 = vpop.f32.mrb[0].mxu0
      %v2240 = vadd.f32 %v1437, %v2239
      %v2241 = vpop.f32.mrb[0].mxu0
      %v2242 = vadd.f32 %v1438, %v2241
      %v2243 = vpop.f32.mrb[0].mxu0
      %v2244 = vadd.f32 %v1439, %v2243
      %v2245 = vpop.f32.mrb[0].mxu0
      %v2246 = vadd.f32 %v1440, %v2245
      %2247 = vmatprep.mubr.bf16.mxu0 0
      %2248 = vmatmul.mubr.bf16.gmra.mrb[0].mxu0 %v2095
      %v2249 = vpop.f32.mrb[0].mxu0
      %v2250 = vadd.f32 %v1441, %v2249
      %v2251 = vpop.f32.mrb[0].mxu0
      %v2252 = vadd.f32 %v1442, %v2251
      %v2253 = vpop.f32.mrb[0].mxu0
      %v2254 = vadd.f32 %v1443, %v2253
      %v2255 = vpop.f32.mrb[0].mxu0
      %v2256 = vadd.f32 %v1444, %v2255
      %2257 = vmatprep.mubr.bf16.mxu0 0
      %2258 = vmatmul.mubr.bf16.gmra.mrb[0].mxu0 %v2098
      %v2259 = vpop.f32.mrb[0].mxu0
      %v2260 = vadd.f32 %v1445, %v2259
      %v2261 = vpop.f32.mrb[0].mxu0
      %v2262 = vadd.f32 %v1446, %v2261
      %v2263 = vpop.f32.mrb[0].mxu0
      %v2264 = vadd.f32 %v1447, %v2263
      %v2265 = vpop.f32.mrb[0].mxu0
      %v2266 = vadd.f32 %v1448, %v2265
      %2267 = vmatprep.mubr.bf16.mxu0 0
      %2268 = vmatmul.mubr.bf16.gmra.mrb[0].mxu0 %v2101
      %v2269 = vpop.f32.mrb[0].mxu0
      %v2270 = vadd.f32 %v1449, %v2269
      %v2271 = vpop.f32.mrb[0].mxu0
      %v2272 = vadd.f32 %v1450, %v2271
      %v2273 = vpop.f32.mrb[0].mxu0
      %v2274 = vadd.f32 %v1451, %v2273
      %v2275 = vpop.f32.mrb[0].mxu0
      %v2276 = vadd.f32 %v1452, %v2275
      %2277 = vmatprep.mubr.bf16.mxu0 0
      %2278 = vmatmul.mubr.bf16.gmra.mrb[0].mxu0 %v2104
      %v2279 = vpop.f32.mrb[0].mxu0
      %v2280 = vadd.f32 %v1453, %v2279
      %v2281 = vpop.f32.mrb[0].mxu0
      %v2282 = vadd.f32 %v1454, %v2281
      %v2283 = vpop.f32.mrb[0].mxu0
      %v2284 = vadd.f32 %v1455, %v2283
      %v2285 = vpop.f32.mrb[0].mxu0
      %v2286 = vadd.f32 %v1456, %v2285
      %2287 = vmatprep.mubr.bf16.mxu0 0
      %2288 = vmatmul.mubr.bf16.gmra.mrb[0].mxu0 %v2107
      %v2289 = vpop.f32.mrb[0].mxu0
      %v2290 = vadd.f32 %v1457, %v2289
      %v2291 = vpop.f32.mrb[0].mxu0
      %v2292 = vadd.f32 %v1458, %v2291
      %v2293 = vpop.f32.mrb[0].mxu0
      %v2294 = vadd.f32 %v1459, %v2293
      %v2295 = vpop.f32.mrb[0].mxu0
      %v2296 = vadd.f32 %v1460, %v2295
      %2297 = vdwg.mxu0
      %v2298 = vsel %vm360, %v2182, -inf
      %v2299 = vmax.f32 %v2180, %v2298
      %2300 = vmax.xlane.f32.xlu0 %v2299
      %v2301 = vpop.xlane.xlu0 %2300
      %v2302 = vsel %vm360, %v2186, -inf
      %v2303 = vmax.f32 %v2184, %v2302
      %2304 = vmax.xlane.f32.xlu0 %v2303
      %v2305 = vpop.xlane.xlu0 %2304
      %v2306 = vsel %vm360, %v2192, -inf
      %v2307 = vmax.f32 %v2190, %v2306
      %2308 = vmax.xlane.f32.xlu0 %v2307
      %v2309 = vpop.xlane.xlu0 %2308
      %v2310 = vsel %vm360, %v2196, -inf
      %v2311 = vmax.f32 %v2194, %v2310
      %2312 = vmax.xlane.f32.xlu0 %v2311
      %v2313 = vpop.xlane.xlu0 %2312
      %v2314 = vsel %vm360, %v2202, -inf
      %v2315 = vmax.f32 %v2200, %v2314
      %2316 = vmax.xlane.f32.xlu0 %v2315
      %v2317 = vpop.xlane.xlu0 %2316
      %v2318 = vsel %vm360, %v2206, -inf
      %v2319 = vmax.f32 %v2204, %v2318
      %2320 = vmax.xlane.f32.xlu0 %v2319
      %v2321 = vpop.xlane.xlu0 %2320
      %v2322 = vsel %vm360, %v2212, -inf
      %v2323 = vmax.f32 %v2210, %v2322
      %2324 = vmax.xlane.f32.xlu0 %v2323
      %v2325 = vpop.xlane.xlu0 %2324
      %v2326 = vsel %vm360, %v2216, -inf
      %v2327 = vmax.f32 %v2214, %v2326
      %2328 = vmax.xlane.f32.xlu0 %v2327
      %v2329 = vpop.xlane.xlu0 %2328
      %v2330 = vsel %vm360, %v2222, -inf
      %v2331 = vmax.f32 %v2220, %v2330
      %2332 = vmax.xlane.f32.xlu0 %v2331
      %v2333 = vpop.xlane.xlu0 %2332
      %v2334 = vsel %vm360, %v2226, -inf
      %v2335 = vmax.f32 %v2224, %v2334
      %2336 = vmax.xlane.f32.xlu0 %v2335
      %v2337 = vpop.xlane.xlu0 %2336
      %v2338 = vsel %vm360, %v2232, -inf
      %v2339 = vmax.f32 %v2230, %v2338
      %2340 = vmax.xlane.f32.xlu0 %v2339
      %v2341 = vpop.xlane.xlu0 %2340
      %v2342 = vsel %vm360, %v2236, -inf
      %v2343 = vmax.f32 %v2234, %v2342
      %2344 = vmax.xlane.f32.xlu0 %v2343
      %v2345 = vpop.xlane.xlu0 %2344
      %v2346 = vsel %vm360, %v2242, -inf
      %v2347 = vmax.f32 %v2240, %v2346
      %2348 = vmax.xlane.f32.xlu0 %v2347
      %v2349 = vpop.xlane.xlu0 %2348
      %v2350 = vsel %vm360, %v2246, -inf
      %v2351 = vmax.f32 %v2244, %v2350
      %2352 = vmax.xlane.f32.xlu0 %v2351
      %v2353 = vpop.xlane.xlu0 %2352
      %v2354 = vsel %vm360, %v2252, -inf
      %v2355 = vmax.f32 %v2250, %v2354
      %2356 = vmax.xlane.f32.xlu0 %v2355
      %v2357 = vpop.xlane.xlu0 %2356
      %v2358 = vsel %vm360, %v2256, -inf
      %v2359 = vmax.f32 %v2254, %v2358
      %2360 = vmax.xlane.f32.xlu0 %v2359
      %v2361 = vpop.xlane.xlu0 %2360
      %v2362 = vsel %vm360, %v2262, -inf
      %v2363 = vmax.f32 %v2260, %v2362
      %2364 = vmax.xlane.f32.xlu0 %v2363
      %v2365 = vpop.xlane.xlu0 %2364
      %v2366 = vsel %vm360, %v2266, -inf
      %v2367 = vmax.f32 %v2264, %v2366
      %2368 = vmax.xlane.f32.xlu0 %v2367
      %v2369 = vpop.xlane.xlu0 %2368
      %v2370 = vsel %vm360, %v2272, -inf
      %v2371 = vmax.f32 %v2270, %v2370
      %2372 = vmax.xlane.f32.xlu0 %v2371
      %v2373 = vpop.xlane.xlu0 %2372
      %v2374 = vsel %vm360, %v2276, -inf
      %v2375 = vmax.f32 %v2274, %v2374
      %2376 = vmax.xlane.f32.xlu0 %v2375
      %v2377 = vpop.xlane.xlu0 %2376
      %v2378 = vsel %vm360, %v2282, -inf
      %v2379 = vmax.f32 %v2280, %v2378
      %2380 = vmax.xlane.f32.xlu0 %v2379
      %v2381 = vpop.xlane.xlu0 %2380
      %v2382 = vsel %vm360, %v2286, -inf
      %v2383 = vmax.f32 %v2284, %v2382
      %2384 = vmax.xlane.f32.xlu0 %v2383
      %v2385 = vpop.xlane.xlu0 %2384
      %v2386 = vsel %vm360, %v2292, -inf
      %v2387 = vmax.f32 %v2290, %v2386
      %2388 = vmax.xlane.f32.xlu0 %v2387
      %v2389 = vpop.xlane.xlu0 %2388
      %v2390 = vsel %vm360, %v2296, -inf
      %v2391 = vmax.f32 %v2294, %v2390
      %2392 = vmax.xlane.f32.xlu0 %v2391
      %v2393 = vpop.xlane.xlu0 %2392
      %v2394 = vsub.f32 %v2180, %v2301
      %v2395 = vsub.f32 %v2182, %v2301
      %v2396 = vsub.f32 %v2184, %v2305
      %v2397 = vsub.f32 %v2186, %v2305
      %v2398 = vsub.f32 %v2190, %v2309
      %v2399 = vsub.f32 %v2192, %v2309
      %v2400 = vsub.f32 %v2194, %v2313
      %v2401 = vsub.f32 %v2196, %v2313
      %v2402 = vsub.f32 %v2200, %v2317
      %v2403 = vsub.f32 %v2202, %v2317
      %v2404 = vsub.f32 %v2204, %v2321
      %v2405 = vsub.f32 %v2206, %v2321
      %v2406 = vsub.f32 %v2210, %v2325
      %v2407 = vsub.f32 %v2212, %v2325
      %v2408 = vsub.f32 %v2214, %v2329
      %v2409 = vsub.f32 %v2216, %v2329
      %v2410 = vsub.f32 %v2220, %v2333
      %v2411 = vsub.f32 %v2222, %v2333
      %v2412 = vsub.f32 %v2224, %v2337
      %v2413 = vsub.f32 %v2226, %v2337
      %v2414 = vsub.f32 %v2230, %v2341
      %v2415 = vsub.f32 %v2232, %v2341
      %v2416 = vsub.f32 %v2234, %v2345
      %v2417 = vsub.f32 %v2236, %v2345
      %v2418 = vsub.f32 %v2240, %v2349
      %v2419 = vsub.f32 %v2242, %v2349
      %v2420 = vsub.f32 %v2244, %v2353
      %v2421 = vsub.f32 %v2246, %v2353
      %v2422 = vsub.f32 %v2250, %v2357
      %v2423 = vsub.f32 %v2252, %v2357
      %v2424 = vsub.f32 %v2254, %v2361
      %v2425 = vsub.f32 %v2256, %v2361
      %v2426 = vsub.f32 %v2260, %v2365
      %v2427 = vsub.f32 %v2262, %v2365
      %v2428 = vsub.f32 %v2264, %v2369
      %v2429 = vsub.f32 %v2266, %v2369
      %v2430 = vsub.f32 %v2270, %v2373
      %v2431 = vsub.f32 %v2272, %v2373
      %v2432 = vsub.f32 %v2274, %v2377
      %v2433 = vsub.f32 %v2276, %v2377
      %v2434 = vsub.f32 %v2280, %v2381
      %v2435 = vsub.f32 %v2282, %v2381
      %v2436 = vsub.f32 %v2284, %v2385
      %v2437 = vsub.f32 %v2286, %v2385
      %v2438 = vsub.f32 %v2290, %v2389
      %v2439 = vsub.f32 %v2292, %v2389
      %v2440 = vsub.f32 %v2294, %v2393
      %v2441 = vsub.f32 %v2296, %v2393
      %v2442 = vmul.f32 %v2394, 1.442695
      %v2443 = vpow.pop %v2442
      %v2444 = vmul.f32 %v2395, 1.442695
      %v2445 = vpow.pop %v2444
      %v2446 = vmul.f32 %v2396, 1.442695
      %v2447 = vpow.pop %v2446
      %v2448 = vmul.f32 %v2397, 1.442695
      %v2449 = vpow.pop %v2448
      %v2450 = vmul.f32 %v2398, 1.442695
      %v2451 = vpow.pop %v2450
      %v2452 = vmul.f32 %v2399, 1.442695
      %v2453 = vpow.pop %v2452
      %v2454 = vmul.f32 %v2400, 1.442695
      %v2455 = vpow.pop %v2454
      %v2456 = vmul.f32 %v2401, 1.442695
      %v2457 = vpow.pop %v2456
      %v2458 = vmul.f32 %v2402, 1.442695
      %v2459 = vpow.pop %v2458
      %v2460 = vmul.f32 %v2403, 1.442695
      %v2461 = vpow.pop %v2460
      %v2462 = vmul.f32 %v2404, 1.442695
      %v2463 = vpow.pop %v2462
      %v2464 = vmul.f32 %v2405, 1.442695
      %v2465 = vpow.pop %v2464
      %v2466 = vmul.f32 %v2406, 1.442695
      %v2467 = vpow.pop %v2466
      %v2468 = vmul.f32 %v2407, 1.442695
      %v2469 = vpow.pop %v2468
      %v2470 = vmul.f32 %v2408, 1.442695
      %v2471 = vpow.pop %v2470
      %v2472 = vmul.f32 %v2409, 1.442695
      %v2473 = vpow.pop %v2472
      %v2474 = vmul.f32 %v2410, 1.442695
      %v2475 = vpow.pop %v2474
      %v2476 = vmul.f32 %v2411, 1.442695
      %v2477 = vpow.pop %v2476
      %v2478 = vmul.f32 %v2412, 1.442695
      %v2479 = vpow.pop %v2478
      %v2480 = vmul.f32 %v2413, 1.442695
      %v2481 = vpow.pop %v2480
      %v2482 = vmul.f32 %v2414, 1.442695
      %v2483 = vpow.pop %v2482
      %v2484 = vmul.f32 %v2415, 1.442695
      %v2485 = vpow.pop %v2484
      %v2486 = vmul.f32 %v2416, 1.442695
      %v2487 = vpow.pop %v2486
      %v2488 = vmul.f32 %v2417, 1.442695
      %v2489 = vpow.pop %v2488
      %v2490 = vmul.f32 %v2418, 1.442695
      %v2491 = vpow.pop %v2490
      %v2492 = vmul.f32 %v2419, 1.442695
      %v2493 = vpow.pop %v2492
      %v2494 = vmul.f32 %v2420, 1.442695
      %v2495 = vpow.pop %v2494
      %v2496 = vmul.f32 %v2421, 1.442695
      %v2497 = vpow.pop %v2496
      %v2498 = vmul.f32 %v2422, 1.442695
      %v2499 = vpow.pop %v2498
      %v2500 = vmul.f32 %v2423, 1.442695
      %v2501 = vpow.pop %v2500
      %v2502 = vmul.f32 %v2424, 1.442695
      %v2503 = vpow.pop %v2502
      %v2504 = vmul.f32 %v2425, 1.442695
      %v2505 = vpow.pop %v2504
      %v2506 = vmul.f32 %v2426, 1.442695
      %v2507 = vpow.pop %v2506
      %v2508 = vmul.f32 %v2427, 1.442695
      %v2509 = vpow.pop %v2508
      %v2510 = vmul.f32 %v2428, 1.442695
      %v2511 = vpow.pop %v2510
      %v2512 = vmul.f32 %v2429, 1.442695
      %v2513 = vpow.pop %v2512
      %v2514 = vmul.f32 %v2430, 1.442695
      %v2515 = vpow.pop %v2514
      %v2516 = vmul.f32 %v2431, 1.442695
      %v2517 = vpow.pop %v2516
      %v2518 = vmul.f32 %v2432, 1.442695
      %v2519 = vpow.pop %v2518
      %v2520 = vmul.f32 %v2433, 1.442695
      %v2521 = vpow.pop %v2520
      %v2522 = vmul.f32 %v2434, 1.442695
      %v2523 = vpow.pop %v2522
      %v2524 = vmul.f32 %v2435, 1.442695
      %v2525 = vpow.pop %v2524
      %v2526 = vmul.f32 %v2436, 1.442695
      %v2527 = vpow.pop %v2526
      %v2528 = vmul.f32 %v2437, 1.442695
      %v2529 = vpow.pop %v2528
      %v2530 = vmul.f32 %v2438, 1.442695
      %v2531 = vpow.pop %v2530
      %v2532 = vmul.f32 %v2439, 1.442695
      %v2533 = vpow.pop %v2532
      %v2534 = vmul.f32 %v2440, 1.442695
      %v2535 = vpow.pop %v2534
      %v2536 = vmul.f32 %v2441, 1.442695
      %v2537 = vpow.pop %v2536
      %v2538 = vsel %vm360, %v2445, 0.0
      %v2539 = vadd.f32 %v2443, %v2538
      %2540 = vadd.xlane.f32.xlu0 %v2539
      %v2541 = vpop.xlane.xlu0 %2540
      %v2542 = vsel %vm360, %v2449, 0.0
      %v2543 = vadd.f32 %v2447, %v2542
      %2544 = vadd.xlane.f32.xlu0 %v2543
      %v2545 = vpop.xlane.xlu0 %2544
      %v2546 = vsel %vm360, %v2453, 0.0
      %v2547 = vadd.f32 %v2451, %v2546
      %2548 = vadd.xlane.f32.xlu0 %v2547
      %v2549 = vpop.xlane.xlu0 %2548
      %v2550 = vsel %vm360, %v2457, 0.0
      %v2551 = vadd.f32 %v2455, %v2550
      %2552 = vadd.xlane.f32.xlu0 %v2551
      %v2553 = vpop.xlane.xlu0 %2552
      %v2554 = vsel %vm360, %v2461, 0.0
      %v2555 = vadd.f32 %v2459, %v2554
      %2556 = vadd.xlane.f32.xlu0 %v2555
      %v2557 = vpop.xlane.xlu0 %2556
      %v2558 = vsel %vm360, %v2465, 0.0
      %v2559 = vadd.f32 %v2463, %v2558
      %2560 = vadd.xlane.f32.xlu0 %v2559
      %v2561 = vpop.xlane.xlu0 %2560
      %v2562 = vsel %vm360, %v2469, 0.0
      %v2563 = vadd.f32 %v2467, %v2562
      %2564 = vadd.xlane.f32.xlu0 %v2563
      %v2565 = vpop.xlane.xlu0 %2564
      %v2566 = vsel %vm360, %v2473, 0.0
      %v2567 = vadd.f32 %v2471, %v2566
      %2568 = vadd.xlane.f32.xlu0 %v2567
      %v2569 = vpop.xlane.xlu0 %2568
      %v2570 = vsel %vm360, %v2477, 0.0
      %v2571 = vadd.f32 %v2475, %v2570
      %2572 = vadd.xlane.f32.xlu0 %v2571
      %v2573 = vpop.xlane.xlu0 %2572
      %v2574 = vsel %vm360, %v2481, 0.0
      %v2575 = vadd.f32 %v2479, %v2574
      %2576 = vadd.xlane.f32.xlu0 %v2575
      %v2577 = vpop.xlane.xlu0 %2576
      %v2578 = vsel %vm360, %v2485, 0.0
      %v2579 = vadd.f32 %v2483, %v2578
      %2580 = vadd.xlane.f32.xlu0 %v2579
      %v2581 = vpop.xlane.xlu0 %2580
      %v2582 = vsel %vm360, %v2489, 0.0
      %v2583 = vadd.f32 %v2487, %v2582
      %2584 = vadd.xlane.f32.xlu0 %v2583
      %v2585 = vpop.xlane.xlu0 %2584
      %v2586 = vsel %vm360, %v2493, 0.0
      %v2587 = vadd.f32 %v2491, %v2586
      %2588 = vadd.xlane.f32.xlu0 %v2587
      %v2589 = vpop.xlane.xlu0 %2588
      %v2590 = vsel %vm360, %v2497, 0.0
      %v2591 = vadd.f32 %v2495, %v2590
      %2592 = vadd.xlane.f32.xlu0 %v2591
      %v2593 = vpop.xlane.xlu0 %2592
      %v2594 = vsel %vm360, %v2501, 0.0
      %v2595 = vadd.f32 %v2499, %v2594
      %2596 = vadd.xlane.f32.xlu0 %v2595
      %v2597 = vpop.xlane.xlu0 %2596
      %v2598 = vsel %vm360, %v2505, 0.0
      %v2599 = vadd.f32 %v2503, %v2598
      %2600 = vadd.xlane.f32.xlu0 %v2599
      %v2601 = vpop.xlane.xlu0 %2600
      %v2602 = vsel %vm360, %v2509, 0.0
      %v2603 = vadd.f32 %v2507, %v2602
      %2604 = vadd.xlane.f32.xlu0 %v2603
      %v2605 = vpop.xlane.xlu0 %2604
      %v2606 = vsel %vm360, %v2513, 0.0
      %v2607 = vadd.f32 %v2511, %v2606
      %2608 = vadd.xlane.f32.xlu0 %v2607
      %v2609 = vpop.xlane.xlu0 %2608
      %v2610 = vsel %vm360, %v2517, 0.0
      %v2611 = vadd.f32 %v2515, %v2610
      %2612 = vadd.xlane.f32.xlu0 %v2611
      %v2613 = vpop.xlane.xlu0 %2612
      %v2614 = vsel %vm360, %v2521, 0.0
      %v2615 = vadd.f32 %v2519, %v2614
      %2616 = vadd.xlane.f32.xlu0 %v2615
      %v2617 = vpop.xlane.xlu0 %2616
      %v2618 = vsel %vm360, %v2525, 0.0
      %v2619 = vadd.f32 %v2523, %v2618
      %2620 = vadd.xlane.f32.xlu0 %v2619
      %v2621 = vpop.xlane.xlu0 %2620
      %v2622 = vsel %vm360, %v2529, 0.0
      %v2623 = vadd.f32 %v2527, %v2622
      %2624 = vadd.xlane.f32.xlu0 %v2623
      %v2625 = vpop.xlane.xlu0 %2624
      %v2626 = vsel %vm360, %v2533, 0.0
      %v2627 = vadd.f32 %v2531, %v2626
      %2628 = vadd.xlane.f32.xlu0 %v2627
      %v2629 = vpop.xlane.xlu0 %2628
      %v2630 = vsel %vm360, %v2537, 0.0
      %v2631 = vadd.f32 %v2535, %v2630
      %2632 = vadd.xlane.f32.xlu0 %v2631
      %v2633 = vpop.xlane.xlu0 %2632
      %v2634 = vrcp.pop %v2541
      %v2635 = vrcp.pop %v2545
      %v2636 = vrcp.pop %v2549
      %v2637 = vrcp.pop %v2553
      %v2638 = vrcp.pop %v2557
      %v2639 = vrcp.pop %v2561
      %v2640 = vrcp.pop %v2565
      %v2641 = vrcp.pop %v2569
      %v2642 = vrcp.pop %v2573
      %v2643 = vrcp.pop %v2577
      %v2644 = vrcp.pop %v2581
      %v2645 = vrcp.pop %v2585
      %v2646 = vrcp.pop %v2589
      %v2647 = vrcp.pop %v2593
      %v2648 = vrcp.pop %v2597
      %v2649 = vrcp.pop %v2601
      %v2650 = vrcp.pop %v2605
      %v2651 = vrcp.pop %v2609
      %v2652 = vrcp.pop %v2613
      %v2653 = vrcp.pop %v2617
      %v2654 = vrcp.pop %v2621
      %v2655 = vrcp.pop %v2625
      %v2656 = vrcp.pop %v2629
      %v2657 = vrcp.pop %v2633
      %v2658 = vmul.f32 %v2443, %v2634
      %v2659 = vmul.f32 %v2445, %v2634
      %v2660 = vmul.f32 %v2447, %v2635
      %v2661 = vmul.f32 %v2449, %v2635
      %v2662 = vmul.f32 %v2451, %v2636
      %v2663 = vmul.f32 %v2453, %v2636
      %v2664 = vmul.f32 %v2455, %v2637
      %v2665 = vmul.f32 %v2457, %v2637
      %v2666 = vmul.f32 %v2459, %v2638
      %v2667 = vmul.f32 %v2461, %v2638
      %v2668 = vmul.f32 %v2463, %v2639
      %v2669 = vmul.f32 %v2465, %v2639
      %v2670 = vmul.f32 %v2467, %v2640
      %v2671 = vmul.f32 %v2469, %v2640
      %v2672 = vmul.f32 %v2471, %v2641
      %v2673 = vmul.f32 %v2473, %v2641
      %v2674 = vmul.f32 %v2475, %v2642
      %v2675 = vmul.f32 %v2477, %v2642
      %v2676 = vmul.f32 %v2479, %v2643
      %v2677 = vmul.f32 %v2481, %v2643
      %v2678 = vmul.f32 %v2483, %v2644
      %v2679 = vmul.f32 %v2485, %v2644
      %v2680 = vmul.f32 %v2487, %v2645
      %v2681 = vmul.f32 %v2489, %v2645
      %v2682 = vmul.f32 %v2491, %v2646
      %v2683 = vmul.f32 %v2493, %v2646
      %v2684 = vmul.f32 %v2495, %v2647
      %v2685 = vmul.f32 %v2497, %v2647
      %v2686 = vmul.f32 %v2499, %v2648
      %v2687 = vmul.f32 %v2501, %v2648
      %v2688 = vmul.f32 %v2503, %v2649
      %v2689 = vmul.f32 %v2505, %v2649
      %v2690 = vmul.f32 %v2507, %v2650
      %v2691 = vmul.f32 %v2509, %v2650
      %v2692 = vmul.f32 %v2511, %v2651
      %v2693 = vmul.f32 %v2513, %v2651
      %v2694 = vmul.f32 %v2515, %v2652
      %v2695 = vmul.f32 %v2517, %v2652
      %v2696 = vmul.f32 %v2519, %v2653
      %v2697 = vmul.f32 %v2521, %v2653
      %v2698 = vmul.f32 %v2523, %v2654
      %v2699 = vmul.f32 %v2525, %v2654
      %v2700 = vmul.f32 %v2527, %v2655
      %v2701 = vmul.f32 %v2529, %v2655
      %v2702 = vmul.f32 %v2531, %v2656
      %v2703 = vmul.f32 %v2533, %v2656
      %v2704 = vmul.f32 %v2535, %v2657
      %v2705 = vmul.f32 %v2537, %v2657
      %v2706 = vpack.c.bf16 %v2660, %v2658
      %v2707 = vpack.c.bf16 %v2661, %v2659
      %v2708 = vpack.c.bf16 %v2664, %v2662
      %v2709 = vpack.c.bf16 %v2665, %v2663
      %v2710 = vpack.c.bf16 %v2668, %v2666
      %v2711 = vpack.c.bf16 %v2669, %v2667
      %v2712 = vpack.c.bf16 %v2672, %v2670
      %v2713 = vpack.c.bf16 %v2673, %v2671
      %v2714 = vpack.c.bf16 %v2676, %v2674
      %v2715 = vpack.c.bf16 %v2677, %v2675
      %v2716 = vpack.c.bf16 %v2680, %v2678
      %v2717 = vpack.c.bf16 %v2681, %v2679
      %v2718 = vpack.c.bf16 %v2684, %v2682
      %v2719 = vpack.c.bf16 %v2685, %v2683
      %v2720 = vpack.c.bf16 %v2688, %v2686
      %v2721 = vpack.c.bf16 %v2689, %v2687
      %v2722 = vpack.c.bf16 %v2692, %v2690
      %v2723 = vpack.c.bf16 %v2693, %v2691
      %v2724 = vpack.c.bf16 %v2696, %v2694
      %v2725 = vpack.c.bf16 %v2697, %v2695
      %v2726 = vpack.c.bf16 %v2700, %v2698
      %v2727 = vpack.c.bf16 %v2701, %v2699
      %v2728 = vpack.c.bf16 %v2704, %v2702
      %v2729 = vpack.c.bf16 %v2705, %v2703
      %2730 = vrot.lane.b32.xlu0 %v2024, 112
      %v2731 = vpop.permute.xlu0 %2730
      %2732 = vrot.lane.b32.xlu0 %v2025, 112
      %v2733 = vpop.permute.xlu0 %2732
      %2734 = vrot.lane.b32.xlu0 %v2026, 112
      %v2735 = vpop.permute.xlu0 %2734
      %2736 = vrot.lane.b32.xlu0 %v2027, 112
      %v2737 = vpop.permute.xlu0 %2736
      %2738 = vrot.lane.b32.xlu0 %v2028, 112
      %v2739 = vpop.permute.xlu0 %2738
      %2740 = vrot.lane.b32.xlu0 %v2029, 112
      %v2741 = vpop.permute.xlu0 %2740
      %2742 = vrot.lane.b32.xlu0 %v2030, 112
      %v2743 = vpop.permute.xlu0 %2742
      %2744 = vrot.lane.b32.xlu0 %v2031, 112
      %v2745 = vpop.permute.xlu0 %2744
      %2746 = vrot.lane.b32.xlu0 %v2032, 112
      %v2747 = vpop.permute.xlu0 %2746
      %2748 = vrot.lane.b32.xlu0 %v2033, 112
      %v2749 = vpop.permute.xlu0 %2748
      %2750 = vrot.lane.b32.xlu0 %v2034, 112
      %v2751 = vpop.permute.xlu0 %2750
      %2752 = vrot.lane.b32.xlu0 %v2035, 112
      %v2753 = vpop.permute.xlu0 %2752
      %2754 = vrot.lane.b32.xlu0 %v2024, 80
      %v2755 = vpop.permute.xlu0 %2754
      %2756 = vrot.lane.b32.xlu0 %v2025, 80
      %v2757 = vpop.permute.xlu0 %2756
      %2758 = vrot.lane.b32.xlu0 %v2026, 80
      %v2759 = vpop.permute.xlu0 %2758
      %2760 = vrot.lane.b32.xlu0 %v2027, 80
      %v2761 = vpop.permute.xlu0 %2760
      %2762 = vrot.lane.b32.xlu0 %v2028, 80
      %v2763 = vpop.permute.xlu0 %2762
      %2764 = vrot.lane.b32.xlu0 %v2029, 80
      %v2765 = vpop.permute.xlu0 %2764
      %2766 = vrot.lane.b32.xlu0 %v2030, 80
      %v2767 = vpop.permute.xlu0 %2766
      %2768 = vrot.lane.b32.xlu0 %v2031, 80
      %v2769 = vpop.permute.xlu0 %2768
      %2770 = vrot.lane.b32.xlu0 %v2032, 80
      %v2771 = vpop.permute.xlu0 %2770
      %2772 = vrot.lane.b32.xlu0 %v2033, 80
      %v2773 = vpop.permute.xlu0 %2772
      %2774 = vrot.lane.b32.xlu0 %v2034, 80
      %v2775 = vpop.permute.xlu0 %2774
      %2776 = vrot.lane.b32.xlu0 %v2035, 80
      %v2777 = vpop.permute.xlu0 %2776
      %v2779 = vsel %vm2072, %v2731, 0
      %v2782 = vsel %vm2072, %v2733, 0
      %v2785 = vsel %vm2072, %v2735, 0
      %v2788 = vsel %vm2072, %v2737, 0
      %v2791 = vsel %vm2072, %v2739, 0
      %v2794 = vsel %vm2072, %v2741, 0
      %v2797 = vsel %vm2072, %v2743, 0
      %v2800 = vsel %vm2072, %v2745, 0
      %v2803 = vsel %vm2072, %v2747, 0
      %v2806 = vsel %vm2072, %v2749, 0
      %v2809 = vsel %vm2072, %v2751, 0
      %v2812 = vsel %vm2072, %v2753, 0
      %v2815 = vsel %vm2072, %v2755, 0
      %v2818 = vsel %vm2072, %v2757, 0
      %v2821 = vsel %vm2072, %v2759, 0
      %v2824 = vsel %vm2072, %v2761, 0
      %v2827 = vsel %vm2072, %v2763, 0
      %v2830 = vsel %vm2072, %v2765, 0
      %v2833 = vsel %vm2072, %v2767, 0
      %v2836 = vsel %vm2072, %v2769, 0
      %v2839 = vsel %vm2072, %v2771, 0
      %v2842 = vsel %vm2072, %v2773, 0
      %v2845 = vsel %vm2072, %v2775, 0
      %v2848 = vsel %vm2072, %v2777, 0
      %2850 = vmatprep.subr.bf16.mxu0 0
      %2851 = vmatpush1.bf16.xpose.msra.mxu0 %v2815
      %2852 = vmatprep.subr.bf16.mxu0 0
      %2853 = vmatpush1.bf16.xpose.msra.mxu0 %v2818
      %2854 = vmatprep.subr.bf16.mxu0 0
      %2855 = vmatpush1.bf16.xpose.msra.mxu0 %v2821
      %2856 = vmatprep.subr.bf16.mxu0 0
      %2857 = vmatpush1.bf16.xpose.msra.mxu0 %v2824
      %2858 = vmatprep.subr.bf16.mxu0 0
      %2859 = vmatpush1.bf16.xpose.msra.mxu0 %v2827
      %2860 = vmatprep.subr.bf16.mxu0 0
      %2861 = vmatpush1.bf16.xpose.msra.mxu0 %v2830
      %2862 = vmatprep.subr.bf16.mxu0 0
      %2863 = vmatpush1.bf16.xpose.msra.mxu0 %v2833
      %2864 = vmatprep.subr.bf16.mxu0 0
      %2865 = vmatpush1.bf16.xpose.msra.mxu0 %v2836
      %2866 = vmatprep.subr.bf16.mxu0 0
      %2867 = vmatpush1.bf16.xpose.msra.mxu0 %v2839
      %2868 = vmatprep.subr.bf16.mxu0 0
      %2869 = vmatpush1.bf16.xpose.msra.mxu0 %v2842
      %2870 = vmatprep.subr.bf16.mxu0 0
      %2871 = vmatpush1.bf16.xpose.msra.mxu0 %v2845
      %2872 = vmatprep.subr.bf16.mxu0 0
      %2873 = vmatpush1.bf16.xpose.msra.mxu0 %v2848
      %2874 = vmatprep.subr.bf16.mxu0 0
      %2875 = vmatpush1.bf16.xpose.msra.mxu0 0
      %2876 = vmatprep.subr.bf16.mxu0 0
      %2877 = vmatpush1.bf16.xpose.msra.mxu0 0
      %2878 = vmatprep.subr.bf16.mxu0 0
      %2879 = vmatpush1.bf16.xpose.msra.mxu0 0
      %2880 = vmatprep.subr.bf16.mxu0 0
      %2881 = vmatpush1.bf16.xpose.msra.mxu0 0
      %2882 = vmatprep.mubr.bf16.mxu0 0
      %2883 = vmatmul.mubr.bf16.gmra.mrb[0].mxu0 %v2779
      %v2884 = vpop.f32.mrb[0].mxu0
      %v2885 = vadd.f32 %v1413, %v2884
      %v2886 = vpop.f32.mrb[0].mxu0
      %v2887 = vadd.f32 %v1414, %v2886
      %v2888 = vpop.f32.mrb[0].mxu0
      %v2889 = vadd.f32 %v1415, %v2888
      %v2890 = vpop.f32.mrb[0].mxu0
      %v2891 = vadd.f32 %v1416, %v2890
      %2892 = vmatprep.mubr.bf16.mxu0 0
      %2893 = vmatmul.mubr.bf16.gmra.mrb[0].mxu0 %v2782
      %v2894 = vpop.f32.mrb[0].mxu0
      %v2895 = vadd.f32 %v1417, %v2894
      %v2896 = vpop.f32.mrb[0].mxu0
      %v2897 = vadd.f32 %v1418, %v2896
      %v2898 = vpop.f32.mrb[0].mxu0
      %v2899 = vadd.f32 %v1419, %v2898
      %v2900 = vpop.f32.mrb[0].mxu0
      %v2901 = vadd.f32 %v1420, %v2900
      %2902 = vmatprep.mubr.bf16.mxu0 0
      %2903 = vmatmul.mubr.bf16.gmra.mrb[0].mxu0 %v2785
      %v2904 = vpop.f32.mrb[0].mxu0
      %v2905 = vadd.f32 %v1421, %v2904
      %v2906 = vpop.f32.mrb[0].mxu0
      %v2907 = vadd.f32 %v1422, %v2906
      %v2908 = vpop.f32.mrb[0].mxu0
      %v2909 = vadd.f32 %v1423, %v2908
      %v2910 = vpop.f32.mrb[0].mxu0
      %v2911 = vadd.f32 %v1424, %v2910
      %2912 = vmatprep.mubr.bf16.mxu0 0
      %2913 = vmatmul.mubr.bf16.gmra.mrb[0].mxu0 %v2788
      %v2914 = vpop.f32.mrb[0].mxu0
      %v2915 = vadd.f32 %v1425, %v2914
      %v2916 = vpop.f32.mrb[0].mxu0
      %v2917 = vadd.f32 %v1426, %v2916
      %v2918 = vpop.f32.mrb[0].mxu0
      %v2919 = vadd.f32 %v1427, %v2918
      %v2920 = vpop.f32.mrb[0].mxu0
      %v2921 = vadd.f32 %v1428, %v2920
      %2922 = vmatprep.mubr.bf16.mxu0 0
      %2923 = vmatmul.mubr.bf16.gmra.mrb[0].mxu0 %v2791
      %v2924 = vpop.f32.mrb[0].mxu0
      %v2925 = vadd.f32 %v1429, %v2924
      %v2926 = vpop.f32.mrb[0].mxu0
      %v2927 = vadd.f32 %v1430, %v2926
      %v2928 = vpop.f32.mrb[0].mxu0
      %v2929 = vadd.f32 %v1431, %v2928
      %v2930 = vpop.f32.mrb[0].mxu0
      %v2931 = vadd.f32 %v1432, %v2930
      %2932 = vmatprep.mubr.bf16.mxu0 0
      %2933 = vmatmul.mubr.bf16.gmra.mrb[0].mxu0 %v2794
      %v2934 = vpop.f32.mrb[0].mxu0
      %v2935 = vadd.f32 %v1433, %v2934
      %v2936 = vpop.f32.mrb[0].mxu0
      %v2937 = vadd.f32 %v1434, %v2936
      %v2938 = vpop.f32.mrb[0].mxu0
      %v2939 = vadd.f32 %v1435, %v2938
      %v2940 = vpop.f32.mrb[0].mxu0
      %v2941 = vadd.f32 %v1436, %v2940
      %2942 = vmatprep.mubr.bf16.mxu0 0
      %2943 = vmatmul.mubr.bf16.gmra.mrb[0].mxu0 %v2797
      %v2944 = vpop.f32.mrb[0].mxu0
      %v2945 = vadd.f32 %v1437, %v2944
      %v2946 = vpop.f32.mrb[0].mxu0
      %v2947 = vadd.f32 %v1438, %v2946
      %v2948 = vpop.f32.mrb[0].mxu0
      %v2949 = vadd.f32 %v1439, %v2948
      %v2950 = vpop.f32.mrb[0].mxu0
      %v2951 = vadd.f32 %v1440, %v2950
      %2952 = vmatprep.mubr.bf16.mxu0 0
      %2953 = vmatmul.mubr.bf16.gmra.mrb[0].mxu0 %v2800
      %v2954 = vpop.f32.mrb[0].mxu0
      %v2955 = vadd.f32 %v1441, %v2954
      %v2956 = vpop.f32.mrb[0].mxu0
      %v2957 = vadd.f32 %v1442, %v2956
      %v2958 = vpop.f32.mrb[0].mxu0
      %v2959 = vadd.f32 %v1443, %v2958
      %v2960 = vpop.f32.mrb[0].mxu0
      %v2961 = vadd.f32 %v1444, %v2960
      %2962 = vmatprep.mubr.bf16.mxu0 0
      %2963 = vmatmul.mubr.bf16.gmra.mrb[0].mxu0 %v2803
      %v2964 = vpop.f32.mrb[0].mxu0
      %v2965 = vadd.f32 %v1445, %v2964
      %v2966 = vpop.f32.mrb[0].mxu0
      %v2967 = vadd.f32 %v1446, %v2966
      %v2968 = vpop.f32.mrb[0].mxu0
      %v2969 = vadd.f32 %v1447, %v2968
      %v2970 = vpop.f32.mrb[0].mxu0
      %v2971 = vadd.f32 %v1448, %v2970
      %2972 = vmatprep.mubr.bf16.mxu0 0
      %2973 = vmatmul.mubr.bf16.gmra.mrb[0].mxu0 %v2806
      %v2974 = vpop.f32.mrb[0].mxu0
      %v2975 = vadd.f32 %v1449, %v2974
      %v2976 = vpop.f32.mrb[0].mxu0
      %v2977 = vadd.f32 %v1450, %v2976
      %v2978 = vpop.f32.mrb[0].mxu0
      %v2979 = vadd.f32 %v1451, %v2978
      %v2980 = vpop.f32.mrb[0].mxu0
      %v2981 = vadd.f32 %v1452, %v2980
      %2982 = vmatprep.mubr.bf16.mxu0 0
      %2983 = vmatmul.mubr.bf16.gmra.mrb[0].mxu0 %v2809
      %v2984 = vpop.f32.mrb[0].mxu0
      %v2985 = vadd.f32 %v1453, %v2984
      %v2986 = vpop.f32.mrb[0].mxu0
      %v2987 = vadd.f32 %v1454, %v2986
      %v2988 = vpop.f32.mrb[0].mxu0
      %v2989 = vadd.f32 %v1455, %v2988
      %v2990 = vpop.f32.mrb[0].mxu0
      %v2991 = vadd.f32 %v1456, %v2990
      %2992 = vmatprep.mubr.bf16.mxu0 0
      %2993 = vmatmul.mubr.bf16.gmra.mrb[0].mxu0 %v2812
      %v2994 = vpop.f32.mrb[0].mxu0
      %v2995 = vadd.f32 %v1457, %v2994
      %v2996 = vpop.f32.mrb[0].mxu0
      %v2997 = vadd.f32 %v1458, %v2996
      %v2998 = vpop.f32.mrb[0].mxu0
      %v2999 = vadd.f32 %v1459, %v2998
      %v3000 = vpop.f32.mrb[0].mxu0
      %v3001 = vadd.f32 %v1460, %v3000
      %3002 = vdwg.mxu0
      %v3003 = vsel %vm360, %v2887, -inf
      %v3004 = vmax.f32 %v2885, %v3003
      %3005 = vmax.xlane.f32.xlu0 %v3004
      %v3006 = vpop.xlane.xlu0 %3005
      %v3007 = vsel %vm360, %v2891, -inf
      %v3008 = vmax.f32 %v2889, %v3007
      %3009 = vmax.xlane.f32.xlu0 %v3008
      %v3010 = vpop.xlane.xlu0 %3009
      %v3011 = vsel %vm360, %v2897, -inf
      %v3012 = vmax.f32 %v2895, %v3011
      %3013 = vmax.xlane.f32.xlu0 %v3012
      %v3014 = vpop.xlane.xlu0 %3013
      %v3015 = vsel %vm360, %v2901, -inf
      %v3016 = vmax.f32 %v2899, %v3015
      %3017 = vmax.xlane.f32.xlu0 %v3016
      %v3018 = vpop.xlane.xlu0 %3017
      %v3019 = vsel %vm360, %v2907, -inf
      %v3020 = vmax.f32 %v2905, %v3019
      %3021 = vmax.xlane.f32.xlu0 %v3020
      %v3022 = vpop.xlane.xlu0 %3021
      %v3023 = vsel %vm360, %v2911, -inf
      %v3024 = vmax.f32 %v2909, %v3023
      %3025 = vmax.xlane.f32.xlu0 %v3024
      %v3026 = vpop.xlane.xlu0 %3025
      %v3027 = vsel %vm360, %v2917, -inf
      %v3028 = vmax.f32 %v2915, %v3027
      %3029 = vmax.xlane.f32.xlu0 %v3028
      %v3030 = vpop.xlane.xlu0 %3029
      %v3031 = vsel %vm360, %v2921, -inf
      %v3032 = vmax.f32 %v2919, %v3031
      %3033 = vmax.xlane.f32.xlu0 %v3032
      %v3034 = vpop.xlane.xlu0 %3033
      %v3035 = vsel %vm360, %v2927, -inf
      %v3036 = vmax.f32 %v2925, %v3035
      %3037 = vmax.xlane.f32.xlu0 %v3036
      %v3038 = vpop.xlane.xlu0 %3037
      %v3039 = vsel %vm360, %v2931, -inf
      %v3040 = vmax.f32 %v2929, %v3039
      %3041 = vmax.xlane.f32.xlu0 %v3040
      %v3042 = vpop.xlane.xlu0 %3041
      %v3043 = vsel %vm360, %v2937, -inf
      %v3044 = vmax.f32 %v2935, %v3043
      %3045 = vmax.xlane.f32.xlu0 %v3044
      %v3046 = vpop.xlane.xlu0 %3045
      %v3047 = vsel %vm360, %v2941, -inf
      %v3048 = vmax.f32 %v2939, %v3047
      %3049 = vmax.xlane.f32.xlu0 %v3048
      %v3050 = vpop.xlane.xlu0 %3049
      %v3051 = vsel %vm360, %v2947, -inf
      %v3052 = vmax.f32 %v2945, %v3051
      %3053 = vmax.xlane.f32.xlu0 %v3052
      %v3054 = vpop.xlane.xlu0 %3053
      %v3055 = vsel %vm360, %v2951, -inf
      %v3056 = vmax.f32 %v2949, %v3055
      %3057 = vmax.xlane.f32.xlu0 %v3056
      %v3058 = vpop.xlane.xlu0 %3057
      %v3059 = vsel %vm360, %v2957, -inf
      %v3060 = vmax.f32 %v2955, %v3059
      %3061 = vmax.xlane.f32.xlu0 %v3060
      %v3062 = vpop.xlane.xlu0 %3061
      %v3063 = vsel %vm360, %v2961, -inf
      %v3064 = vmax.f32 %v2959, %v3063
      %3065 = vmax.xlane.f32.xlu0 %v3064
      %v3066 = vpop.xlane.xlu0 %3065
      %v3067 = vsel %vm360, %v2967, -inf
      %v3068 = vmax.f32 %v2965, %v3067
      %3069 = vmax.xlane.f32.xlu0 %v3068
      %v3070 = vpop.xlane.xlu0 %3069
      %v3071 = vsel %vm360, %v2971, -inf
      %v3072 = vmax.f32 %v2969, %v3071
      %3073 = vmax.xlane.f32.xlu0 %v3072
      %v3074 = vpop.xlane.xlu0 %3073
      %v3075 = vsel %vm360, %v2977, -inf
      %v3076 = vmax.f32 %v2975, %v3075
      %3077 = vmax.xlane.f32.xlu0 %v3076
      %v3078 = vpop.xlane.xlu0 %3077
      %v3079 = vsel %vm360, %v2981, -inf
      %v3080 = vmax.f32 %v2979, %v3079
      %3081 = vmax.xlane.f32.xlu0 %v3080
      %v3082 = vpop.xlane.xlu0 %3081
      %v3083 = vsel %vm360, %v2987, -inf
      %v3084 = vmax.f32 %v2985, %v3083
      %3085 = vmax.xlane.f32.xlu0 %v3084
      %v3086 = vpop.xlane.xlu0 %3085
      %v3087 = vsel %vm360, %v2991, -inf
      %v3088 = vmax.f32 %v2989, %v3087
      %3089 = vmax.xlane.f32.xlu0 %v3088
      %v3090 = vpop.xlane.xlu0 %3089
      %v3091 = vsel %vm360, %v2997, -inf
      %v3092 = vmax.f32 %v2995, %v3091
      %3093 = vmax.xlane.f32.xlu0 %v3092
      %v3094 = vpop.xlane.xlu0 %3093
      %v3095 = vsel %vm360, %v3001, -inf
      %v3096 = vmax.f32 %v2999, %v3095
      %3097 = vmax.xlane.f32.xlu0 %v3096
      %v3098 = vpop.xlane.xlu0 %3097
      %v3099 = vsub.f32 %v2885, %v3006
      %v3100 = vsub.f32 %v2887, %v3006
      %v3101 = vsub.f32 %v2889, %v3010
      %v3102 = vsub.f32 %v2891, %v3010
      %v3103 = vsub.f32 %v2895, %v3014
      %v3104 = vsub.f32 %v2897, %v3014
      %v3105 = vsub.f32 %v2899, %v3018
      %v3106 = vsub.f32 %v2901, %v3018
      %v3107 = vsub.f32 %v2905, %v3022
      %v3108 = vsub.f32 %v2907, %v3022
      %v3109 = vsub.f32 %v2909, %v3026
      %v3110 = vsub.f32 %v2911, %v3026
      %v3111 = vsub.f32 %v2915, %v3030
      %v3112 = vsub.f32 %v2917, %v3030
      %v3113 = vsub.f32 %v2919, %v3034
      %v3114 = vsub.f32 %v2921, %v3034
      %v3115 = vsub.f32 %v2925, %v3038
      %v3116 = vsub.f32 %v2927, %v3038
      %v3117 = vsub.f32 %v2929, %v3042
      %v3118 = vsub.f32 %v2931, %v3042
      %v3119 = vsub.f32 %v2935, %v3046
      %v3120 = vsub.f32 %v2937, %v3046
      %v3121 = vsub.f32 %v2939, %v3050
      %v3122 = vsub.f32 %v2941, %v3050
      %v3123 = vsub.f32 %v2945, %v3054
      %v3124 = vsub.f32 %v2947, %v3054
      %v3125 = vsub.f32 %v2949, %v3058
      %v3126 = vsub.f32 %v2951, %v3058
      %v3127 = vsub.f32 %v2955, %v3062
      %v3128 = vsub.f32 %v2957, %v3062
      %v3129 = vsub.f32 %v2959, %v3066
      %v3130 = vsub.f32 %v2961, %v3066
      %v3131 = vsub.f32 %v2965, %v3070
      %v3132 = vsub.f32 %v2967, %v3070
      %v3133 = vsub.f32 %v2969, %v3074
      %v3134 = vsub.f32 %v2971, %v3074
      %v3135 = vsub.f32 %v2975, %v3078
      %v3136 = vsub.f32 %v2977, %v3078
      %v3137 = vsub.f32 %v2979, %v3082
      %v3138 = vsub.f32 %v2981, %v3082
      %v3139 = vsub.f32 %v2985, %v3086
      %v3140 = vsub.f32 %v2987, %v3086
      %v3141 = vsub.f32 %v2989, %v3090
      %v3142 = vsub.f32 %v2991, %v3090
      %v3143 = vsub.f32 %v2995, %v3094
      %v3144 = vsub.f32 %v2997, %v3094
      %v3145 = vsub.f32 %v2999, %v3098
      %v3146 = vsub.f32 %v3001, %v3098
      %v3147 = vmul.f32 %v3099, 1.442695
      %v3148 = vpow.pop %v3147
      %v3149 = vmul.f32 %v3100, 1.442695
      %v3150 = vpow.pop %v3149
      %v3151 = vmul.f32 %v3101, 1.442695
      %v3152 = vpow.pop %v3151
      %v3153 = vmul.f32 %v3102, 1.442695
      %v3154 = vpow.pop %v3153
      %v3155 = vmul.f32 %v3103, 1.442695
      %v3156 = vpow.pop %v3155
      %v3157 = vmul.f32 %v3104, 1.442695
      %v3158 = vpow.pop %v3157
      %v3159 = vmul.f32 %v3105, 1.442695
      %v3160 = vpow.pop %v3159
      %v3161 = vmul.f32 %v3106, 1.442695
      %v3162 = vpow.pop %v3161
      %v3163 = vmul.f32 %v3107, 1.442695
      %v3164 = vpow.pop %v3163
      %v3165 = vmul.f32 %v3108, 1.442695
      %v3166 = vpow.pop %v3165
      %v3167 = vmul.f32 %v3109, 1.442695
      %v3168 = vpow.pop %v3167
      %v3169 = vmul.f32 %v3110, 1.442695
      %v3170 = vpow.pop %v3169
      %v3171 = vmul.f32 %v3111, 1.442695
      %v3172 = vpow.pop %v3171
      %v3173 = vmul.f32 %v3112, 1.442695
      %v3174 = vpow.pop %v3173
      %v3175 = vmul.f32 %v3113, 1.442695
      %v3176 = vpow.pop %v3175
      %v3177 = vmul.f32 %v3114, 1.442695
      %v3178 = vpow.pop %v3177
      %v3179 = vmul.f32 %v3115, 1.442695
      %v3180 = vpow.pop %v3179
      %v3181 = vmul.f32 %v3116, 1.442695
      %v3182 = vpow.pop %v3181
      %v3183 = vmul.f32 %v3117, 1.442695
      %v3184 = vpow.pop %v3183
      %v3185 = vmul.f32 %v3118, 1.442695
      %v3186 = vpow.pop %v3185
      %v3187 = vmul.f32 %v3119, 1.442695
      %v3188 = vpow.pop %v3187
      %v3189 = vmul.f32 %v3120, 1.442695
      %v3190 = vpow.pop %v3189
      %v3191 = vmul.f32 %v3121, 1.442695
      %v3192 = vpow.pop %v3191
      %v3193 = vmul.f32 %v3122, 1.442695
      %v3194 = vpow.pop %v3193
      %v3195 = vmul.f32 %v3123, 1.442695
      %v3196 = vpow.pop %v3195
      %v3197 = vmul.f32 %v3124, 1.442695
      %v3198 = vpow.pop %v3197
      %v3199 = vmul.f32 %v3125, 1.442695
      %v3200 = vpow.pop %v3199
      %v3201 = vmul.f32 %v3126, 1.442695
      %v3202 = vpow.pop %v3201
      %v3203 = vmul.f32 %v3127, 1.442695
      %v3204 = vpow.pop %v3203
      %v3205 = vmul.f32 %v3128, 1.442695
      %v3206 = vpow.pop %v3205
      %v3207 = vmul.f32 %v3129, 1.442695
      %v3208 = vpow.pop %v3207
      %v3209 = vmul.f32 %v3130, 1.442695
      %v3210 = vpow.pop %v3209
      %v3211 = vmul.f32 %v3131, 1.442695
      %v3212 = vpow.pop %v3211
      %v3213 = vmul.f32 %v3132, 1.442695
      %v3214 = vpow.pop %v3213
      %v3215 = vmul.f32 %v3133, 1.442695
      %v3216 = vpow.pop %v3215
      %v3217 = vmul.f32 %v3134, 1.442695
      %v3218 = vpow.pop %v3217
      %v3219 = vmul.f32 %v3135, 1.442695
      %v3220 = vpow.pop %v3219
      %v3221 = vmul.f32 %v3136, 1.442695
      %v3222 = vpow.pop %v3221
      %v3223 = vmul.f32 %v3137, 1.442695
      %v3224 = vpow.pop %v3223
      %v3225 = vmul.f32 %v3138, 1.442695
      %v3226 = vpow.pop %v3225
      %v3227 = vmul.f32 %v3139, 1.442695
      %v3228 = vpow.pop %v3227
      %v3229 = vmul.f32 %v3140, 1.442695
      %v3230 = vpow.pop %v3229
      %v3231 = vmul.f32 %v3141, 1.442695
      %v3232 = vpow.pop %v3231
      %v3233 = vmul.f32 %v3142, 1.442695
      %v3234 = vpow.pop %v3233
      %v3235 = vmul.f32 %v3143, 1.442695
      %v3236 = vpow.pop %v3235
      %v3237 = vmul.f32 %v3144, 1.442695
      %v3238 = vpow.pop %v3237
      %v3239 = vmul.f32 %v3145, 1.442695
      %v3240 = vpow.pop %v3239
      %v3241 = vmul.f32 %v3146, 1.442695
      %v3242 = vpow.pop %v3241
      %v3243 = vsel %vm360, %v3150, 0.0
      %v3244 = vadd.f32 %v3148, %v3243
      %3245 = vadd.xlane.f32.xlu0 %v3244
      %v3246 = vpop.xlane.xlu0 %3245
      %v3247 = vsel %vm360, %v3154, 0.0
      %v3248 = vadd.f32 %v3152, %v3247
      %3249 = vadd.xlane.f32.xlu0 %v3248
      %v3250 = vpop.xlane.xlu0 %3249
      %v3251 = vsel %vm360, %v3158, 0.0
      %v3252 = vadd.f32 %v3156, %v3251
      %3253 = vadd.xlane.f32.xlu0 %v3252
      %v3254 = vpop.xlane.xlu0 %3253
      %v3255 = vsel %vm360, %v3162, 0.0
      %v3256 = vadd.f32 %v3160, %v3255
      %3257 = vadd.xlane.f32.xlu0 %v3256
      %v3258 = vpop.xlane.xlu0 %3257
      %v3259 = vsel %vm360, %v3166, 0.0
      %v3260 = vadd.f32 %v3164, %v3259
      %3261 = vadd.xlane.f32.xlu0 %v3260
      %v3262 = vpop.xlane.xlu0 %3261
      %v3263 = vsel %vm360, %v3170, 0.0
      %v3264 = vadd.f32 %v3168, %v3263
      %3265 = vadd.xlane.f32.xlu0 %v3264
      %v3266 = vpop.xlane.xlu0 %3265
      %v3267 = vsel %vm360, %v3174, 0.0
      %v3268 = vadd.f32 %v3172, %v3267
      %3269 = vadd.xlane.f32.xlu0 %v3268
      %v3270 = vpop.xlane.xlu0 %3269
      %v3271 = vsel %vm360, %v3178, 0.0
      %v3272 = vadd.f32 %v3176, %v3271
      %3273 = vadd.xlane.f32.xlu0 %v3272
      %v3274 = vpop.xlane.xlu0 %3273
      %v3275 = vsel %vm360, %v3182, 0.0
      %v3276 = vadd.f32 %v3180, %v3275
      %3277 = vadd.xlane.f32.xlu0 %v3276
      %v3278 = vpop.xlane.xlu0 %3277
      %v3279 = vsel %vm360, %v3186, 0.0
      %v3280 = vadd.f32 %v3184, %v3279
      %3281 = vadd.xlane.f32.xlu0 %v3280
      %v3282 = vpop.xlane.xlu0 %3281
      %v3283 = vsel %vm360, %v3190, 0.0
      %v3284 = vadd.f32 %v3188, %v3283
      %3285 = vadd.xlane.f32.xlu0 %v3284
      %v3286 = vpop.xlane.xlu0 %3285
      %v3287 = vsel %vm360, %v3194, 0.0
      %v3288 = vadd.f32 %v3192, %v3287
      %3289 = vadd.xlane.f32.xlu0 %v3288
      %v3290 = vpop.xlane.xlu0 %3289
      %v3291 = vsel %vm360, %v3198, 0.0
      %v3292 = vadd.f32 %v3196, %v3291
      %3293 = vadd.xlane.f32.xlu0 %v3292
      %v3294 = vpop.xlane.xlu0 %3293
      %v3295 = vsel %vm360, %v3202, 0.0
      %v3296 = vadd.f32 %v3200, %v3295
      %3297 = vadd.xlane.f32.xlu0 %v3296
      %v3298 = vpop.xlane.xlu0 %3297
      %v3299 = vsel %vm360, %v3206, 0.0
      %v3300 = vadd.f32 %v3204, %v3299
      %3301 = vadd.xlane.f32.xlu0 %v3300
      %v3302 = vpop.xlane.xlu0 %3301
      %v3303 = vsel %vm360, %v3210, 0.0
      %v3304 = vadd.f32 %v3208, %v3303
      %3305 = vadd.xlane.f32.xlu0 %v3304
      %v3306 = vpop.xlane.xlu0 %3305
      %v3307 = vsel %vm360, %v3214, 0.0
      %v3308 = vadd.f32 %v3212, %v3307
      %3309 = vadd.xlane.f32.xlu0 %v3308
      %v3310 = vpop.xlane.xlu0 %3309
      %v3311 = vsel %vm360, %v3218, 0.0
      %v3312 = vadd.f32 %v3216, %v3311
      %3313 = vadd.xlane.f32.xlu0 %v3312
      %v3314 = vpop.xlane.xlu0 %3313
      %v3315 = vsel %vm360, %v3222, 0.0
      %v3316 = vadd.f32 %v3220, %v3315
      %3317 = vadd.xlane.f32.xlu0 %v3316
      %v3318 = vpop.xlane.xlu0 %3317
      %v3319 = vsel %vm360, %v3226, 0.0
      %v3320 = vadd.f32 %v3224, %v3319
      %3321 = vadd.xlane.f32.xlu0 %v3320
      %v3322 = vpop.xlane.xlu0 %3321
      %v3323 = vsel %vm360, %v3230, 0.0
      %v3324 = vadd.f32 %v3228, %v3323
      %3325 = vadd.xlane.f32.xlu0 %v3324
      %v3326 = vpop.xlane.xlu0 %3325
      %v3327 = vsel %vm360, %v3234, 0.0
      %v3328 = vadd.f32 %v3232, %v3327
      %3329 = vadd.xlane.f32.xlu0 %v3328
      %v3330 = vpop.xlane.xlu0 %3329
      %v3331 = vsel %vm360, %v3238, 0.0
      %v3332 = vadd.f32 %v3236, %v3331
      %3333 = vadd.xlane.f32.xlu0 %v3332
      %v3334 = vpop.xlane.xlu0 %3333
      %v3335 = vsel %vm360, %v3242, 0.0
      %v3336 = vadd.f32 %v3240, %v3335
      %3337 = vadd.xlane.f32.xlu0 %v3336
      %v3338 = vpop.xlane.xlu0 %3337
      %v3339 = vrcp.pop %v3246
      %v3340 = vrcp.pop %v3250
      %v3341 = vrcp.pop %v3254
      %v3342 = vrcp.pop %v3258
      %v3343 = vrcp.pop %v3262
      %v3344 = vrcp.pop %v3266
      %v3345 = vrcp.pop %v3270
      %v3346 = vrcp.pop %v3274
      %v3347 = vrcp.pop %v3278
      %v3348 = vrcp.pop %v3282
      %v3349 = vrcp.pop %v3286
      %v3350 = vrcp.pop %v3290
      %v3351 = vrcp.pop %v3294
      %v3352 = vrcp.pop %v3298
      %v3353 = vrcp.pop %v3302
      %v3354 = vrcp.pop %v3306
      %v3355 = vrcp.pop %v3310
      %v3356 = vrcp.pop %v3314
      %v3357 = vrcp.pop %v3318
      %v3358 = vrcp.pop %v3322
      %v3359 = vrcp.pop %v3326
      %v3360 = vrcp.pop %v3330
      %v3361 = vrcp.pop %v3334
      %v3362 = vrcp.pop %v3338
      %v3363 = vmul.f32 %v3148, %v3339
      %v3364 = vmul.f32 %v3150, %v3339
      %v3365 = vmul.f32 %v3152, %v3340
      %v3366 = vmul.f32 %v3154, %v3340
      %v3367 = vmul.f32 %v3156, %v3341
      %v3368 = vmul.f32 %v3158, %v3341
      %v3369 = vmul.f32 %v3160, %v3342
      %v3370 = vmul.f32 %v3162, %v3342
      %v3371 = vmul.f32 %v3164, %v3343
      %v3372 = vmul.f32 %v3166, %v3343
      %v3373 = vmul.f32 %v3168, %v3344
      %v3374 = vmul.f32 %v3170, %v3344
      %v3375 = vmul.f32 %v3172, %v3345
      %v3376 = vmul.f32 %v3174, %v3345
      %v3377 = vmul.f32 %v3176, %v3346
      %v3378 = vmul.f32 %v3178, %v3346
      %v3379 = vmul.f32 %v3180, %v3347
      %v3380 = vmul.f32 %v3182, %v3347
      %v3381 = vmul.f32 %v3184, %v3348
      %v3382 = vmul.f32 %v3186, %v3348
      %v3383 = vmul.f32 %v3188, %v3349
      %v3384 = vmul.f32 %v3190, %v3349
      %v3385 = vmul.f32 %v3192, %v3350
      %v3386 = vmul.f32 %v3194, %v3350
      %v3387 = vmul.f32 %v3196, %v3351
      %v3388 = vmul.f32 %v3198, %v3351
      %v3389 = vmul.f32 %v3200, %v3352
      %v3390 = vmul.f32 %v3202, %v3352
      %v3391 = vmul.f32 %v3204, %v3353
      %v3392 = vmul.f32 %v3206, %v3353
      %v3393 = vmul.f32 %v3208, %v3354
      %v3394 = vmul.f32 %v3210, %v3354
      %v3395 = vmul.f32 %v3212, %v3355
      %v3396 = vmul.f32 %v3214, %v3355
      %v3397 = vmul.f32 %v3216, %v3356
      %v3398 = vmul.f32 %v3218, %v3356
      %v3399 = vmul.f32 %v3220, %v3357
      %v3400 = vmul.f32 %v3222, %v3357
      %v3401 = vmul.f32 %v3224, %v3358
      %v3402 = vmul.f32 %v3226, %v3358
      %v3403 = vmul.f32 %v3228, %v3359
      %v3404 = vmul.f32 %v3230, %v3359
      %v3405 = vmul.f32 %v3232, %v3360
      %v3406 = vmul.f32 %v3234, %v3360
      %v3407 = vmul.f32 %v3236, %v3361
      %v3408 = vmul.f32 %v3238, %v3361
      %v3409 = vmul.f32 %v3240, %v3362
      %v3410 = vmul.f32 %v3242, %v3362
      %v3411 = vpack.c.bf16 %v3365, %v3363
      %v3412 = vpack.c.bf16 %v3366, %v3364
      %v3413 = vpack.c.bf16 %v3369, %v3367
      %v3414 = vpack.c.bf16 %v3370, %v3368
      %v3415 = vpack.c.bf16 %v3373, %v3371
      %v3416 = vpack.c.bf16 %v3374, %v3372
      %v3417 = vpack.c.bf16 %v3377, %v3375
      %v3418 = vpack.c.bf16 %v3378, %v3376
      %v3419 = vpack.c.bf16 %v3381, %v3379
      %v3420 = vpack.c.bf16 %v3382, %v3380
      %v3421 = vpack.c.bf16 %v3385, %v3383
      %v3422 = vpack.c.bf16 %v3386, %v3384
      %v3423 = vpack.c.bf16 %v3389, %v3387
      %v3424 = vpack.c.bf16 %v3390, %v3388
      %v3425 = vpack.c.bf16 %v3393, %v3391
      %v3426 = vpack.c.bf16 %v3394, %v3392
      %v3427 = vpack.c.bf16 %v3397, %v3395
      %v3428 = vpack.c.bf16 %v3398, %v3396
      %v3429 = vpack.c.bf16 %v3401, %v3399
      %v3430 = vpack.c.bf16 %v3402, %v3400
      %v3431 = vpack.c.bf16 %v3405, %v3403
      %v3432 = vpack.c.bf16 %v3406, %v3404
      %v3433 = vpack.c.bf16 %v3409, %v3407
      %v3434 = vpack.c.bf16 %v3410, %v3408
      %3435 = vrot.lane.b32.xlu0 %v2024, 32
      %v3436 = vpop.permute.xlu0 %3435
      %3437 = vrot.lane.b32.xlu0 %v2025, 32
      %v3438 = vpop.permute.xlu0 %3437
      %3439 = vrot.lane.b32.xlu0 %v2026, 32
      %v3440 = vpop.permute.xlu0 %3439
      %3441 = vrot.lane.b32.xlu0 %v2027, 32
      %v3442 = vpop.permute.xlu0 %3441
      %3443 = vrot.lane.b32.xlu0 %v2028, 32
      %v3444 = vpop.permute.xlu0 %3443
      %3445 = vrot.lane.b32.xlu0 %v2029, 32
      %v3446 = vpop.permute.xlu0 %3445
      %3447 = vrot.lane.b32.xlu0 %v2030, 32
      %v3448 = vpop.permute.xlu0 %3447
      %3449 = vrot.lane.b32.xlu0 %v2031, 32
      %v3450 = vpop.permute.xlu0 %3449
      %3451 = vrot.lane.b32.xlu0 %v2032, 32
      %v3452 = vpop.permute.xlu0 %3451
      %3453 = vrot.lane.b32.xlu0 %v2033, 32
      %v3454 = vpop.permute.xlu0 %3453
      %3455 = vrot.lane.b32.xlu0 %v2034, 32
      %v3456 = vpop.permute.xlu0 %3455
      %3457 = vrot.lane.b32.xlu0 %v2035, 32
      %v3458 = vpop.permute.xlu0 %3457
      %v3472 = vsel %vm360, %v3412, 0
      %v3475 = vsel %vm360, %v3414, 0
      %v3478 = vsel %vm360, %v3416, 0
      %v3481 = vsel %vm360, %v3418, 0
      %v3484 = vsel %vm360, %v3420, 0
      %v3487 = vsel %vm360, %v3422, 0
      %v3490 = vsel %vm360, %v3424, 0
      %v3493 = vsel %vm360, %v3426, 0
      %v3496 = vsel %vm360, %v3428, 0
      %v3499 = vsel %vm360, %v3430, 0
      %v3502 = vsel %vm360, %v3432, 0
      %v3505 = vsel %vm360, %v3434, 0
      %3507 = vmatprep.subr.bf16.mxu0 0
      %3508 = vmatpush1.bf16.msra.mxu0 %v3436
      %3509 = vmatprep.subr.bf16.mxu0 0
      %3510 = vmatpush1.bf16.msra.mxu0 %v3438
      %3511 = vmatprep.subr.bf16.mxu0 0
      %3512 = vmatpush1.bf16.msra.mxu0 %v3440
      %3513 = vmatprep.subr.bf16.mxu0 0
      %3514 = vmatpush1.bf16.msra.mxu0 %v3442
      %3515 = vmatprep.subr.bf16.mxu0 0
      %3516 = vmatpush1.bf16.msra.mxu0 %v3444
      %3517 = vmatprep.subr.bf16.mxu0 0
      %3518 = vmatpush1.bf16.msra.mxu0 %v3446
      %3519 = vmatprep.subr.bf16.mxu0 0
      %3520 = vmatpush1.bf16.msra.mxu0 %v3448
      %3521 = vmatprep.subr.bf16.mxu0 0
      %3522 = vmatpush1.bf16.msra.mxu0 %v3450
      %3523 = vmatprep.subr.bf16.mxu0 0
      %3524 = vmatpush1.bf16.msra.mxu0 %v3452
      %3525 = vmatprep.subr.bf16.mxu0 0
      %3526 = vmatpush1.bf16.msra.mxu0 %v3454
      %3527 = vmatprep.subr.bf16.mxu0 0
      %3528 = vmatpush1.bf16.msra.mxu0 %v3456
      %3529 = vmatprep.subr.bf16.mxu0 0
      %3530 = vmatpush1.bf16.msra.mxu0 %v3458
      %3531 = vmatprep.subr.bf16.mxu0 0
      %3532 = vmatpush1.bf16.msra.mxu0 0
      %3533 = vmatprep.subr.bf16.mxu0 0
      %3534 = vmatpush1.bf16.msra.mxu0 0
      %3535 = vmatprep.subr.bf16.mxu0 0
      %3536 = vmatpush1.bf16.msra.mxu0 0
      %3537 = vmatprep.subr.bf16.mxu0 0
      %3538 = vmatpush1.bf16.msra.mxu0 0
      %3539 = vmatprep.mubr.bf16.mxu0 %v3472
      %3540 = vmatmul.mubr.bf16.gmra.mrb[0].mxu0 %v3411
      %v3541 = vpop.f32.mrb[0].mxu0
      %v3542 = vadd.f32 0.0, %v3541
      %v3543 = vpop.f32.mrb[0].mxu0
      %v3544 = vpop.f32.mrb[0].mxu0
      %v3545 = vadd.f32 0.0, %v3544
      %v3546 = vpop.f32.mrb[0].mxu0
      %3547 = vmatprep.mubr.bf16.mxu0 %v3475
      %3548 = vmatmul.mubr.bf16.gmra.mrb[0].mxu0 %v3413
      %v3549 = vpop.f32.mrb[0].mxu0
      %v3550 = vadd.f32 0.0, %v3549
      %v3551 = vpop.f32.mrb[0].mxu0
      %v3552 = vpop.f32.mrb[0].mxu0
      %v3553 = vadd.f32 0.0, %v3552
      %v3554 = vpop.f32.mrb[0].mxu0
      %3555 = vmatprep.mubr.bf16.mxu0 %v3478
      %3556 = vmatmul.mubr.bf16.gmra.mrb[0].mxu0 %v3415
      %v3557 = vpop.f32.mrb[0].mxu0
      %v3558 = vadd.f32 0.0, %v3557
      %v3559 = vpop.f32.mrb[0].mxu0
      %v3560 = vpop.f32.mrb[0].mxu0
      %v3561 = vadd.f32 0.0, %v3560
      %v3562 = vpop.f32.mrb[0].mxu0
      %3563 = vmatprep.mubr.bf16.mxu0 %v3481
      %3564 = vmatmul.mubr.bf16.gmra.mrb[0].mxu0 %v3417
      %v3565 = vpop.f32.mrb[0].mxu0
      %v3566 = vadd.f32 0.0, %v3565
      %v3567 = vpop.f32.mrb[0].mxu0
      %v3568 = vpop.f32.mrb[0].mxu0
      %v3569 = vadd.f32 0.0, %v3568
      %v3570 = vpop.f32.mrb[0].mxu0
      %3571 = vmatprep.mubr.bf16.mxu0 %v3484
      %3572 = vmatmul.mubr.bf16.gmra.mrb[0].mxu0 %v3419
      %v3573 = vpop.f32.mrb[0].mxu0
      %v3574 = vadd.f32 0.0, %v3573
      %v3575 = vpop.f32.mrb[0].mxu0
      %v3576 = vpop.f32.mrb[0].mxu0
      %v3577 = vadd.f32 0.0, %v3576
      %v3578 = vpop.f32.mrb[0].mxu0
      %3579 = vmatprep.mubr.bf16.mxu0 %v3487
      %3580 = vmatmul.mubr.bf16.gmra.mrb[0].mxu0 %v3421
      %v3581 = vpop.f32.mrb[0].mxu0
      %v3582 = vadd.f32 0.0, %v3581
      %v3583 = vpop.f32.mrb[0].mxu0
      %v3584 = vpop.f32.mrb[0].mxu0
      %v3585 = vadd.f32 0.0, %v3584
      %v3586 = vpop.f32.mrb[0].mxu0
      %3587 = vmatprep.mubr.bf16.mxu0 %v3490
      %3588 = vmatmul.mubr.bf16.gmra.mrb[0].mxu0 %v3423
      %v3589 = vpop.f32.mrb[0].mxu0
      %v3590 = vadd.f32 0.0, %v3589
      %v3591 = vpop.f32.mrb[0].mxu0
      %v3592 = vpop.f32.mrb[0].mxu0
      %v3593 = vadd.f32 0.0, %v3592
      %v3594 = vpop.f32.mrb[0].mxu0
      %3595 = vmatprep.mubr.bf16.mxu0 %v3493
      %3596 = vmatmul.mubr.bf16.gmra.mrb[0].mxu0 %v3425
      %v3597 = vpop.f32.mrb[0].mxu0
      %v3598 = vadd.f32 0.0, %v3597
      %v3599 = vpop.f32.mrb[0].mxu0
      %v3600 = vpop.f32.mrb[0].mxu0
      %v3601 = vadd.f32 0.0, %v3600
      %v3602 = vpop.f32.mrb[0].mxu0
      %3603 = vmatprep.mubr.bf16.mxu0 %v3496
      %3604 = vmatmul.mubr.bf16.gmra.mrb[0].mxu0 %v3427
      %v3605 = vpop.f32.mrb[0].mxu0
      %v3606 = vadd.f32 0.0, %v3605
      %v3607 = vpop.f32.mrb[0].mxu0
      %v3608 = vpop.f32.mrb[0].mxu0
      %v3609 = vadd.f32 0.0, %v3608
      %v3610 = vpop.f32.mrb[0].mxu0
      %3611 = vmatprep.mubr.bf16.mxu0 %v3499
      %3612 = vmatmul.mubr.bf16.gmra.mrb[0].mxu0 %v3429
      %v3613 = vpop.f32.mrb[0].mxu0
      %v3614 = vadd.f32 0.0, %v3613
      %v3615 = vpop.f32.mrb[0].mxu0
      %v3616 = vpop.f32.mrb[0].mxu0
      %v3617 = vadd.f32 0.0, %v3616
      %v3618 = vpop.f32.mrb[0].mxu0
      %3619 = vmatprep.mubr.bf16.mxu0 %v3502
      %3620 = vmatmul.mubr.bf16.gmra.mrb[0].mxu0 %v3431
      %v3621 = vpop.f32.mrb[0].mxu0
      %v3622 = vadd.f32 0.0, %v3621
      %v3623 = vpop.f32.mrb[0].mxu0
      %v3624 = vpop.f32.mrb[0].mxu0
      %v3625 = vadd.f32 0.0, %v3624
      %v3626 = vpop.f32.mrb[0].mxu0
      %3627 = vmatprep.mubr.bf16.mxu0 %v3505
      %3628 = vmatmul.mubr.bf16.gmra.mrb[0].mxu0 %v3433
      %v3629 = vpop.f32.mrb[0].mxu0
      %v3630 = vadd.f32 0.0, %v3629
      %v3631 = vpop.f32.mrb[0].mxu0
      %v3632 = vpop.f32.mrb[0].mxu0
      %v3633 = vadd.f32 0.0, %v3632
      %v3634 = vpop.f32.mrb[0].mxu0
      %3635 = vdwg.mxu0
      %3636 = vrot.lane.b32.xlu0 %v2024, 64
      %v3637 = vpop.permute.xlu0 %3636
      %3638 = vrot.lane.b32.xlu0 %v2025, 64
      %v3639 = vpop.permute.xlu0 %3638
      %3640 = vrot.lane.b32.xlu0 %v2026, 64
      %v3641 = vpop.permute.xlu0 %3640
      %3642 = vrot.lane.b32.xlu0 %v2027, 64
      %v3643 = vpop.permute.xlu0 %3642
      %3644 = vrot.lane.b32.xlu0 %v2028, 64
      %v3645 = vpop.permute.xlu0 %3644
      %3646 = vrot.lane.b32.xlu0 %v2029, 64
      %v3647 = vpop.permute.xlu0 %3646
      %3648 = vrot.lane.b32.xlu0 %v2030, 64
      %v3649 = vpop.permute.xlu0 %3648
      %3650 = vrot.lane.b32.xlu0 %v2031, 64
      %v3651 = vpop.permute.xlu0 %3650
      %3652 = vrot.lane.b32.xlu0 %v2032, 64
      %v3653 = vpop.permute.xlu0 %3652
      %3654 = vrot.lane.b32.xlu0 %v2033, 64
      %v3655 = vpop.permute.xlu0 %3654
      %3656 = vrot.lane.b32.xlu0 %v2034, 64
      %v3657 = vpop.permute.xlu0 %3656
      %3658 = vrot.lane.b32.xlu0 %v2035, 64
      %v3659 = vpop.permute.xlu0 %3658
      %v3673 = vsel %vm360, %v2707, 0
      %v3676 = vsel %vm360, %v2709, 0
      %v3679 = vsel %vm360, %v2711, 0
      %v3682 = vsel %vm360, %v2713, 0
      %v3685 = vsel %vm360, %v2715, 0
      %v3688 = vsel %vm360, %v2717, 0
      %v3691 = vsel %vm360, %v2719, 0
      %v3694 = vsel %vm360, %v2721, 0
      %v3697 = vsel %vm360, %v2723, 0
      %v3700 = vsel %vm360, %v2725, 0
      %v3703 = vsel %vm360, %v2727, 0
      %v3706 = vsel %vm360, %v2729, 0
      %3708 = vmatprep.subr.bf16.mxu0 0
      %3709 = vmatpush1.bf16.msra.mxu0 %v3637
      %3710 = vmatprep.subr.bf16.mxu0 0
      %3711 = vmatpush1.bf16.msra.mxu0 %v3639
      %3712 = vmatprep.subr.bf16.mxu0 0
      %3713 = vmatpush1.bf16.msra.mxu0 %v3641
      %3714 = vmatprep.subr.bf16.mxu0 0
      %3715 = vmatpush1.bf16.msra.mxu0 %v3643
      %3716 = vmatprep.subr.bf16.mxu0 0
      %3717 = vmatpush1.bf16.msra.mxu0 %v3645
      %3718 = vmatprep.subr.bf16.mxu0 0
      %3719 = vmatpush1.bf16.msra.mxu0 %v3647
      %3720 = vmatprep.subr.bf16.mxu0 0
      %3721 = vmatpush1.bf16.msra.mxu0 %v3649
      %3722 = vmatprep.subr.bf16.mxu0 0
      %3723 = vmatpush1.bf16.msra.mxu0 %v3651
      %3724 = vmatprep.subr.bf16.mxu0 0
      %3725 = vmatpush1.bf16.msra.mxu0 %v3653
      %3726 = vmatprep.subr.bf16.mxu0 0
      %3727 = vmatpush1.bf16.msra.mxu0 %v3655
      %3728 = vmatprep.subr.bf16.mxu0 0
      %3729 = vmatpush1.bf16.msra.mxu0 %v3657
      %3730 = vmatprep.subr.bf16.mxu0 0
      %3731 = vmatpush1.bf16.msra.mxu0 %v3659
      %3732 = vmatprep.subr.bf16.mxu0 0
      %3733 = vmatpush1.bf16.msra.mxu0 0
      %3734 = vmatprep.subr.bf16.mxu0 0
      %3735 = vmatpush1.bf16.msra.mxu0 0
      %3736 = vmatprep.subr.bf16.mxu0 0
      %3737 = vmatpush1.bf16.msra.mxu0 0
      %3738 = vmatprep.subr.bf16.mxu0 0
      %3739 = vmatpush1.bf16.msra.mxu0 0
      %3740 = vmatprep.mubr.bf16.mxu0 %v3673
      %3741 = vmatmul.mubr.bf16.gmra.mrb[0].mxu0 %v2706
      %v3742 = vpop.f32.mrb[0].mxu0
      %v3743 = vadd.f32 %v3542, %v3742
      %v3744 = vpop.f32.mrb[0].mxu0
      %v3745 = vpop.f32.mrb[0].mxu0
      %v3746 = vadd.f32 %v3545, %v3745
      %v3747 = vpop.f32.mrb[0].mxu0
      %3748 = vmatprep.mubr.bf16.mxu0 %v3676
      %3749 = vmatmul.mubr.bf16.gmra.mrb[0].mxu0 %v2708
      %v3750 = vpop.f32.mrb[0].mxu0
      %v3751 = vadd.f32 %v3550, %v3750
      %v3752 = vpop.f32.mrb[0].mxu0
      %v3753 = vpop.f32.mrb[0].mxu0
      %v3754 = vadd.f32 %v3553, %v3753
      %v3755 = vpop.f32.mrb[0].mxu0
      %3756 = vmatprep.mubr.bf16.mxu0 %v3679
      %3757 = vmatmul.mubr.bf16.gmra.mrb[0].mxu0 %v2710
      %v3758 = vpop.f32.mrb[0].mxu0
      %v3759 = vadd.f32 %v3558, %v3758
      %v3760 = vpop.f32.mrb[0].mxu0
      %v3761 = vpop.f32.mrb[0].mxu0
      %v3762 = vadd.f32 %v3561, %v3761
      %v3763 = vpop.f32.mrb[0].mxu0
      %3764 = vmatprep.mubr.bf16.mxu0 %v3682
      %3765 = vmatmul.mubr.bf16.gmra.mrb[0].mxu0 %v2712
      %v3766 = vpop.f32.mrb[0].mxu0
      %v3767 = vadd.f32 %v3566, %v3766
      %v3768 = vpop.f32.mrb[0].mxu0
      %v3769 = vpop.f32.mrb[0].mxu0
      %v3770 = vadd.f32 %v3569, %v3769
      %v3771 = vpop.f32.mrb[0].mxu0
      %3772 = vmatprep.mubr.bf16.mxu0 %v3685
      %3773 = vmatmul.mubr.bf16.gmra.mrb[0].mxu0 %v2714
      %v3774 = vpop.f32.mrb[0].mxu0
      %v3775 = vadd.f32 %v3574, %v3774
      %v3776 = vpop.f32.mrb[0].mxu0
      %v3777 = vpop.f32.mrb[0].mxu0
      %v3778 = vadd.f32 %v3577, %v3777
      %v3779 = vpop.f32.mrb[0].mxu0
      %3780 = vmatprep.mubr.bf16.mxu0 %v3688
      %3781 = vmatmul.mubr.bf16.gmra.mrb[0].mxu0 %v2716
      %v3782 = vpop.f32.mrb[0].mxu0
      %v3783 = vadd.f32 %v3582, %v3782
      %v3784 = vpop.f32.mrb[0].mxu0
      %v3785 = vpop.f32.mrb[0].mxu0
      %v3786 = vadd.f32 %v3585, %v3785
      %v3787 = vpop.f32.mrb[0].mxu0
      %3788 = vmatprep.mubr.bf16.mxu0 %v3691
      %3789 = vmatmul.mubr.bf16.gmra.mrb[0].mxu0 %v2718
      %v3790 = vpop.f32.mrb[0].mxu0
      %v3791 = vadd.f32 %v3590, %v3790
      %v3792 = vpop.f32.mrb[0].mxu0
      %v3793 = vpop.f32.mrb[0].mxu0
      %v3794 = vadd.f32 %v3593, %v3793
      %v3795 = vpop.f32.mrb[0].mxu0
      %3796 = vmatprep.mubr.bf16.mxu0 %v3694
      %3797 = vmatmul.mubr.bf16.gmra.mrb[0].mxu0 %v2720
      %v3798 = vpop.f32.mrb[0].mxu0
      %v3799 = vadd.f32 %v3598, %v3798
      %v3800 = vpop.f32.mrb[0].mxu0
      %v3801 = vpop.f32.mrb[0].mxu0
      %v3802 = vadd.f32 %v3601, %v3801
      %v3803 = vpop.f32.mrb[0].mxu0
      %3804 = vmatprep.mubr.bf16.mxu0 %v3697
      %3805 = vmatmul.mubr.bf16.gmra.mrb[0].mxu0 %v2722
      %v3806 = vpop.f32.mrb[0].mxu0
      %v3807 = vadd.f32 %v3606, %v3806
      %v3808 = vpop.f32.mrb[0].mxu0
      %v3809 = vpop.f32.mrb[0].mxu0
      %v3810 = vadd.f32 %v3609, %v3809
      %v3811 = vpop.f32.mrb[0].mxu0
      %3812 = vmatprep.mubr.bf16.mxu0 %v3700
      %3813 = vmatmul.mubr.bf16.gmra.mrb[0].mxu0 %v2724
      %v3814 = vpop.f32.mrb[0].mxu0
      %v3815 = vadd.f32 %v3614, %v3814
      %v3816 = vpop.f32.mrb[0].mxu0
      %v3817 = vpop.f32.mrb[0].mxu0
      %v3818 = vadd.f32 %v3617, %v3817
      %v3819 = vpop.f32.mrb[0].mxu0
      %3820 = vmatprep.mubr.bf16.mxu0 %v3703
      %3821 = vmatmul.mubr.bf16.gmra.mrb[0].mxu0 %v2726
      %v3822 = vpop.f32.mrb[0].mxu0
      %v3823 = vadd.f32 %v3622, %v3822
      %v3824 = vpop.f32.mrb[0].mxu0
      %v3825 = vpop.f32.mrb[0].mxu0
      %v3826 = vadd.f32 %v3625, %v3825
      %v3827 = vpop.f32.mrb[0].mxu0
      %3828 = vmatprep.mubr.bf16.mxu0 %v3706
      %3829 = vmatmul.mubr.bf16.gmra.mrb[0].mxu0 %v2728
      %v3830 = vpop.f32.mrb[0].mxu0
      %v3831 = vadd.f32 %v3630, %v3830
      %v3832 = vpop.f32.mrb[0].mxu0
      %v3833 = vpop.f32.mrb[0].mxu0
      %v3834 = vadd.f32 %v3633, %v3833
      %v3835 = vpop.f32.mrb[0].mxu0
      %3836 = vdwg.mxu0
      %v3837 = vadd.f32 %v1389, %v3743
      %v3838 = vadd.f32 %v1390, %v3746
      %v3839 = vadd.f32 %v1391, %v3751
      %v3840 = vadd.f32 %v1392, %v3754
      %v3841 = vadd.f32 %v1393, %v3759
      %v3842 = vadd.f32 %v1394, %v3762
      %v3843 = vadd.f32 %v1395, %v3767
      %v3844 = vadd.f32 %v1396, %v3770
      %v3845 = vadd.f32 %v1397, %v3775
      %v3846 = vadd.f32 %v1398, %v3778
      %v3847 = vadd.f32 %v1399, %v3783
      %v3848 = vadd.f32 %v1400, %v3786
      %v3849 = vadd.f32 %v1401, %v3791
      %v3850 = vadd.f32 %v1402, %v3794
      %v3851 = vadd.f32 %v1403, %v3799
      %v3852 = vadd.f32 %v1404, %v3802
      %v3853 = vadd.f32 %v1405, %v3807
      %v3854 = vadd.f32 %v1406, %v3810
      %v3855 = vadd.f32 %v1407, %v3815
      %v3856 = vadd.f32 %v1408, %v3818
      %v3857 = vadd.f32 %v1409, %v3823
      %v3858 = vadd.f32 %v1410, %v3826
      %v3859 = vadd.f32 %v1411, %v3831
      %v3860 = vadd.f32 %v1412, %v3834
      %v3861 = vld [vmem:[%s3 + $0x7] sm:$0x1]
      %v3862 = vlaneseq
      %v3863 = vshrl.u32 %v3862, 7
      %v3864 = vsub.s32 0, %v3863
      %v3865 = vrot.slane %v3861, %v3864
      %v3866 = vadd.f32 %v3837, %v3865
      %v3867 = vadd.f32 %v3838, %v3865
      %v3868 = vadd.f32 %v3839, %v3865
      %v3869 = vadd.f32 %v3840, %v3865
      %v3870 = vadd.f32 %v3841, %v3865
      %v3871 = vadd.f32 %v3842, %v3865
      %v3872 = vadd.f32 %v3843, %v3865
      %v3873 = vadd.f32 %v3844, %v3865
      %v3874 = vadd.f32 %v3845, %v3865
      %v3875 = vadd.f32 %v3846, %v3865
      %v3876 = vadd.f32 %v3847, %v3865
      %v3877 = vadd.f32 %v3848, %v3865
      %v3878 = vadd.f32 %v3849, %v3865
      %v3879 = vadd.f32 %v3850, %v3865
      %v3880 = vadd.f32 %v3851, %v3865
      %v3881 = vadd.f32 %v3852, %v3865
      %v3882 = vadd.f32 %v3853, %v3865
      %v3883 = vadd.f32 %v3854, %v3865
      %v3884 = vadd.f32 %v3855, %v3865
      %v3885 = vadd.f32 %v3856, %v3865
      %v3886 = vadd.f32 %v3857, %v3865
      %v3887 = vadd.f32 %v3858, %v3865
      %v3888 = vadd.f32 %v3859, %v3865
      %v3889 = vadd.f32 %v3860, %v3865
      %v3890 = vld [vmem:[%s3 + $0x8] sm:$0x1]
      %v3891 = vld [vmem:[%s3 + $0x9] sm:$0x1]
      %v3892 = vsel %vm946, %v3866, 0.0
      %3893 = vadd.xlane.f32.xlu0 %v3892
      %v3894 = vpop.xlane.xlu0 %3893
      %v3895 = vsel %vm946, %v3867, 0.0
      %3896 = vadd.xlane.f32.xlu0 %v3895
      %v3897 = vpop.xlane.xlu0 %3896
      %v3898 = vsel %vm946, %v3868, 0.0
      %3899 = vadd.xlane.f32.xlu0 %v3898
      %v3900 = vpop.xlane.xlu0 %3899
      %v3901 = vsel %vm946, %v3869, 0.0
      %3902 = vadd.xlane.f32.xlu0 %v3901
      %v3903 = vpop.xlane.xlu0 %3902
      %v3904 = vsel %vm946, %v3870, 0.0
      %3905 = vadd.xlane.f32.xlu0 %v3904
      %v3906 = vpop.xlane.xlu0 %3905
      %v3907 = vsel %vm946, %v3871, 0.0
      %3908 = vadd.xlane.f32.xlu0 %v3907
      %v3909 = vpop.xlane.xlu0 %3908
      %v3910 = vsel %vm946, %v3872, 0.0
      %3911 = vadd.xlane.f32.xlu0 %v3910
      %v3912 = vpop.xlane.xlu0 %3911
      %v3913 = vsel %vm946, %v3873, 0.0
      %3914 = vadd.xlane.f32.xlu0 %v3913
      %v3915 = vpop.xlane.xlu0 %3914
      %v3916 = vsel %vm946, %v3874, 0.0
      %3917 = vadd.xlane.f32.xlu0 %v3916
      %v3918 = vpop.xlane.xlu0 %3917
      %v3919 = vsel %vm946, %v3875, 0.0
      %3920 = vadd.xlane.f32.xlu0 %v3919
      %v3921 = vpop.xlane.xlu0 %3920
      %v3922 = vsel %vm946, %v3876, 0.0
      %3923 = vadd.xlane.f32.xlu0 %v3922
      %v3924 = vpop.xlane.xlu0 %3923
      %v3925 = vsel %vm946, %v3877, 0.0
      %3926 = vadd.xlane.f32.xlu0 %v3925
      %v3927 = vpop.xlane.xlu0 %3926
      %v3928 = vsel %vm946, %v3878, 0.0
      %3929 = vadd.xlane.f32.xlu0 %v3928
      %v3930 = vpop.xlane.xlu0 %3929
      %v3931 = vsel %vm946, %v3879, 0.0
      %3932 = vadd.xlane.f32.xlu0 %v3931
      %v3933 = vpop.xlane.xlu0 %3932
      %v3934 = vsel %vm946, %v3880, 0.0
      %3935 = vadd.xlane.f32.xlu0 %v3934
      %v3936 = vpop.xlane.xlu0 %3935
      %v3937 = vsel %vm946, %v3881, 0.0
      %3938 = vadd.xlane.f32.xlu0 %v3937
      %v3939 = vpop.xlane.xlu0 %3938
      %v3940 = vsel %vm946, %v3882, 0.0
      %3941 = vadd.xlane.f32.xlu0 %v3940
      %v3942 = vpop.xlane.xlu0 %3941
      %v3943 = vsel %vm946, %v3883, 0.0
      %3944 = vadd.xlane.f32.xlu0 %v3943
      %v3945 = vpop.xlane.xlu0 %3944
      %v3946 = vsel %vm946, %v3884, 0.0
      %3947 = vadd.xlane.f32.xlu0 %v3946
      %v3948 = vpop.xlane.xlu0 %3947
      %v3949 = vsel %vm946, %v3885, 0.0
      %3950 = vadd.xlane.f32.xlu0 %v3949
      %v3951 = vpop.xlane.xlu0 %3950
      %v3952 = vsel %vm946, %v3886, 0.0
      %3953 = vadd.xlane.f32.xlu0 %v3952
      %v3954 = vpop.xlane.xlu0 %3953
      %v3955 = vsel %vm946, %v3887, 0.0
      %3956 = vadd.xlane.f32.xlu0 %v3955
      %v3957 = vpop.xlane.xlu0 %3956
      %v3958 = vsel %vm946, %v3888, 0.0
      %3959 = vadd.xlane.f32.xlu0 %v3958
      %v3960 = vpop.xlane.xlu0 %3959
      %v3961 = vsel %vm946, %v3889, 0.0
      %3962 = vadd.xlane.f32.xlu0 %v3961
      %v3963 = vpop.xlane.xlu0 %3962
      %v3964 = vmul.f32 %v3894, %v1019
      %v3965 = vmul.f32 %v3897, %v1019
      %v3966 = vmul.f32 %v3900, %v1019
      %v3967 = vmul.f32 %v3903, %v1019
      %v3968 = vmul.f32 %v3906, %v1019
      %v3969 = vmul.f32 %v3909, %v1019
      %v3970 = vmul.f32 %v3912, %v1019
      %v3971 = vmul.f32 %v3915, %v1019
      %v3972 = vmul.f32 %v3918, %v1019
      %v3973 = vmul.f32 %v3921, %v1019
      %v3974 = vmul.f32 %v3924, %v1019
      %v3975 = vmul.f32 %v3927, %v1019
      %v3976 = vmul.f32 %v3930, %v1019
      %v3977 = vmul.f32 %v3933, %v1019
      %v3978 = vmul.f32 %v3936, %v1019
      %v3979 = vmul.f32 %v3939, %v1019
      %v3980 = vmul.f32 %v3942, %v1019
      %v3981 = vmul.f32 %v3945, %v1019
      %v3982 = vmul.f32 %v3948, %v1019
      %v3983 = vmul.f32 %v3951, %v1019
      %v3984 = vmul.f32 %v3954, %v1019
      %v3985 = vmul.f32 %v3957, %v1019
      %v3986 = vmul.f32 %v3960, %v1019
      %v3987 = vmul.f32 %v3963, %v1019
      %v3988 = vsub.f32 %v3866, %v3964
      %v3989 = vsub.f32 %v3867, %v3965
      %v3990 = vsub.f32 %v3868, %v3966
      %v3991 = vsub.f32 %v3869, %v3967
      %v3992 = vsub.f32 %v3870, %v3968
      %v3993 = vsub.f32 %v3871, %v3969
      %v3994 = vsub.f32 %v3872, %v3970
      %v3995 = vsub.f32 %v3873, %v3971
      %v3996 = vsub.f32 %v3874, %v3972
      %v3997 = vsub.f32 %v3875, %v3973
      %v3998 = vsub.f32 %v3876, %v3974
      %v3999 = vsub.f32 %v3877, %v3975
      %v4000 = vsub.f32 %v3878, %v3976
      %v4001 = vsub.f32 %v3879, %v3977
      %v4002 = vsub.f32 %v3880, %v3978
      %v4003 = vsub.f32 %v3881, %v3979
      %v4004 = vsub.f32 %v3882, %v3980
      %v4005 = vsub.f32 %v3883, %v3981
      %v4006 = vsub.f32 %v3884, %v3982
      %v4007 = vsub.f32 %v3885, %v3983
      %v4008 = vsub.f32 %v3886, %v3984
      %v4009 = vsub.f32 %v3887, %v3985
      %v4010 = vsub.f32 %v3888, %v3986
      %v4011 = vsub.f32 %v3889, %v3987
      %v4012 = vmul.f32 %v3988, %v3988
      %v4013 = vmul.f32 %v3989, %v3989
      %v4014 = vmul.f32 %v3990, %v3990
      %v4015 = vmul.f32 %v3991, %v3991
      %v4016 = vmul.f32 %v3992, %v3992
      %v4017 = vmul.f32 %v3993, %v3993
      %v4018 = vmul.f32 %v3994, %v3994
      %v4019 = vmul.f32 %v3995, %v3995
      %v4020 = vmul.f32 %v3996, %v3996
      %v4021 = vmul.f32 %v3997, %v3997
      %v4022 = vmul.f32 %v3998, %v3998
      %v4023 = vmul.f32 %v3999, %v3999
      %v4024 = vmul.f32 %v4000, %v4000
      %v4025 = vmul.f32 %v4001, %v4001
      %v4026 = vmul.f32 %v4002, %v4002
      %v4027 = vmul.f32 %v4003, %v4003
      %v4028 = vmul.f32 %v4004, %v4004
      %v4029 = vmul.f32 %v4005, %v4005
      %v4030 = vmul.f32 %v4006, %v4006
      %v4031 = vmul.f32 %v4007, %v4007
      %v4032 = vmul.f32 %v4008, %v4008
      %v4033 = vmul.f32 %v4009, %v4009
      %v4034 = vmul.f32 %v4010, %v4010
      %v4035 = vmul.f32 %v4011, %v4011
      %v4036 = vsel %vm946, %v4012, 0.0
      %4037 = vadd.xlane.f32.xlu0 %v4036
      %v4038 = vpop.xlane.xlu0 %4037
      %v4039 = vsel %vm946, %v4013, 0.0
      %4040 = vadd.xlane.f32.xlu0 %v4039
      %v4041 = vpop.xlane.xlu0 %4040
      %v4042 = vsel %vm946, %v4014, 0.0
      %4043 = vadd.xlane.f32.xlu0 %v4042
      %v4044 = vpop.xlane.xlu0 %4043
      %v4045 = vsel %vm946, %v4015, 0.0
      %4046 = vadd.xlane.f32.xlu0 %v4045
      %v4047 = vpop.xlane.xlu0 %4046
      %v4048 = vsel %vm946, %v4016, 0.0
      %4049 = vadd.xlane.f32.xlu0 %v4048
      %v4050 = vpop.xlane.xlu0 %4049
      %v4051 = vsel %vm946, %v4017, 0.0
      %4052 = vadd.xlane.f32.xlu0 %v4051
      %v4053 = vpop.xlane.xlu0 %4052
      %v4054 = vsel %vm946, %v4018, 0.0
      %4055 = vadd.xlane.f32.xlu0 %v4054
      %v4056 = vpop.xlane.xlu0 %4055
      %v4057 = vsel %vm946, %v4019, 0.0
      %4058 = vadd.xlane.f32.xlu0 %v4057
      %v4059 = vpop.xlane.xlu0 %4058
      %v4060 = vsel %vm946, %v4020, 0.0
      %4061 = vadd.xlane.f32.xlu0 %v4060
      %v4062 = vpop.xlane.xlu0 %4061
      %v4063 = vsel %vm946, %v4021, 0.0
      %4064 = vadd.xlane.f32.xlu0 %v4063
      %v4065 = vpop.xlane.xlu0 %4064
      %v4066 = vsel %vm946, %v4022, 0.0
      %4067 = vadd.xlane.f32.xlu0 %v4066
      %v4068 = vpop.xlane.xlu0 %4067
      %v4069 = vsel %vm946, %v4023, 0.0
      %4070 = vadd.xlane.f32.xlu0 %v4069
      %v4071 = vpop.xlane.xlu0 %4070
      %v4072 = vsel %vm946, %v4024, 0.0
      %4073 = vadd.xlane.f32.xlu0 %v4072
      %v4074 = vpop.xlane.xlu0 %4073
      %v4075 = vsel %vm946, %v4025, 0.0
      %4076 = vadd.xlane.f32.xlu0 %v4075
      %v4077 = vpop.xlane.xlu0 %4076
      %v4078 = vsel %vm946, %v4026, 0.0
      %4079 = vadd.xlane.f32.xlu0 %v4078
      %v4080 = vpop.xlane.xlu0 %4079
      %v4081 = vsel %vm946, %v4027, 0.0
      %4082 = vadd.xlane.f32.xlu0 %v4081
      %v4083 = vpop.xlane.xlu0 %4082
      %v4084 = vsel %vm946, %v4028, 0.0
      %4085 = vadd.xlane.f32.xlu0 %v4084
      %v4086 = vpop.xlane.xlu0 %4085
      %v4087 = vsel %vm946, %v4029, 0.0
      %4088 = vadd.xlane.f32.xlu0 %v4087
      %v4089 = vpop.xlane.xlu0 %4088
      %v4090 = vsel %vm946, %v4030, 0.0
      %4091 = vadd.xlane.f32.xlu0 %v4090
      %v4092 = vpop.xlane.xlu0 %4091
      %v4093 = vsel %vm946, %v4031, 0.0
      %4094 = vadd.xlane.f32.xlu0 %v4093
      %v4095 = vpop.xlane.xlu0 %4094
      %v4096 = vsel %vm946, %v4032, 0.0
      %4097 = vadd.xlane.f32.xlu0 %v4096
      %v4098 = vpop.xlane.xlu0 %4097
      %v4099 = vsel %vm946, %v4033, 0.0
      %4100 = vadd.xlane.f32.xlu0 %v4099
      %v4101 = vpop.xlane.xlu0 %4100
      %v4102 = vsel %vm946, %v4034, 0.0
      %4103 = vadd.xlane.f32.xlu0 %v4102
      %v4104 = vpop.xlane.xlu0 %4103
      %v4105 = vsel %vm946, %v4035, 0.0
      %4106 = vadd.xlane.f32.xlu0 %v4105
      %v4107 = vpop.xlane.xlu0 %4106
      %v4108 = vmul.f32 %v4038, %v1019
      %v4109 = vmul.f32 %v4041, %v1019
      %v4110 = vmul.f32 %v4044, %v1019
      %v4111 = vmul.f32 %v4047, %v1019
      %v4112 = vmul.f32 %v4050, %v1019
      %v4113 = vmul.f32 %v4053, %v1019
      %v4114 = vmul.f32 %v4056, %v1019
      %v4115 = vmul.f32 %v4059, %v1019
      %v4116 = vmul.f32 %v4062, %v1019
      %v4117 = vmul.f32 %v4065, %v1019
      %v4118 = vmul.f32 %v4068, %v1019
      %v4119 = vmul.f32 %v4071, %v1019
      %v4120 = vmul.f32 %v4074, %v1019
      %v4121 = vmul.f32 %v4077, %v1019
      %v4122 = vmul.f32 %v4080, %v1019
      %v4123 = vmul.f32 %v4083, %v1019
      %v4124 = vmul.f32 %v4086, %v1019
      %v4125 = vmul.f32 %v4089, %v1019
      %v4126 = vmul.f32 %v4092, %v1019
      %v4127 = vmul.f32 %v4095, %v1019
      %v4128 = vmul.f32 %v4098, %v1019
      %v4129 = vmul.f32 %v4101, %v1019
      %v4130 = vmul.f32 %v4104, %v1019
      %v4131 = vmul.f32 %v4107, %v1019
      %v4132 = vadd.f32 %v4108, 1e-05
      %v4133 = vadd.f32 %v4109, 1e-05
      %v4134 = vadd.f32 %v4110, 1e-05
      %v4135 = vadd.f32 %v4111, 1e-05
      %v4136 = vadd.f32 %v4112, 1e-05
      %v4137 = vadd.f32 %v4113, 1e-05
      %v4138 = vadd.f32 %v4114, 1e-05
      %v4139 = vadd.f32 %v4115, 1e-05
      %v4140 = vadd.f32 %v4116, 1e-05
      %v4141 = vadd.f32 %v4117, 1e-05
      %v4142 = vadd.f32 %v4118, 1e-05
      %v4143 = vadd.f32 %v4119, 1e-05
      %v4144 = vadd.f32 %v4120, 1e-05
      %v4145 = vadd.f32 %v4121, 1e-05
      %v4146 = vadd.f32 %v4122, 1e-05
      %v4147 = vadd.f32 %v4123, 1e-05
      %v4148 = vadd.f32 %v4124, 1e-05
      %v4149 = vadd.f32 %v4125, 1e-05
      %v4150 = vadd.f32 %v4126, 1e-05
      %v4151 = vadd.f32 %v4127, 1e-05
      %v4152 = vadd.f32 %v4128, 1e-05
      %v4153 = vadd.f32 %v4129, 1e-05
      %v4154 = vadd.f32 %v4130, 1e-05
      %v4155 = vadd.f32 %v4131, 1e-05
      %v4156 = vrsqrt.pop %v4132
      %v4157 = vrsqrt.pop %v4133
      %v4158 = vrsqrt.pop %v4134
      %v4159 = vrsqrt.pop %v4135
      %v4160 = vrsqrt.pop %v4136
      %v4161 = vrsqrt.pop %v4137
      %v4162 = vrsqrt.pop %v4138
      %v4163 = vrsqrt.pop %v4139
      %v4164 = vrsqrt.pop %v4140
      %v4165 = vrsqrt.pop %v4141
      %v4166 = vrsqrt.pop %v4142
      %v4167 = vrsqrt.pop %v4143
      %v4168 = vrsqrt.pop %v4144
      %v4169 = vrsqrt.pop %v4145
      %v4170 = vrsqrt.pop %v4146
      %v4171 = vrsqrt.pop %v4147
      %v4172 = vrsqrt.pop %v4148
      %v4173 = vrsqrt.pop %v4149
      %v4174 = vrsqrt.pop %v4150
      %v4175 = vrsqrt.pop %v4151
      %v4176 = vrsqrt.pop %v4152
      %v4177 = vrsqrt.pop %v4153
      %v4178 = vrsqrt.pop %v4154
      %v4179 = vrsqrt.pop %v4155
      %v4180 = vmul.f32 %v3988, %v4156
      %v4181 = vmul.f32 %v3989, %v4157
      %v4182 = vmul.f32 %v3990, %v4158
      %v4183 = vmul.f32 %v3991, %v4159
      %v4184 = vmul.f32 %v3992, %v4160
      %v4185 = vmul.f32 %v3993, %v4161
      %v4186 = vmul.f32 %v3994, %v4162
      %v4187 = vmul.f32 %v3995, %v4163
      %v4188 = vmul.f32 %v3996, %v4164
      %v4189 = vmul.f32 %v3997, %v4165
      %v4190 = vmul.f32 %v3998, %v4166
      %v4191 = vmul.f32 %v3999, %v4167
      %v4192 = vmul.f32 %v4000, %v4168
      %v4193 = vmul.f32 %v4001, %v4169
      %v4194 = vmul.f32 %v4002, %v4170
      %v4195 = vmul.f32 %v4003, %v4171
      %v4196 = vmul.f32 %v4004, %v4172
      %v4197 = vmul.f32 %v4005, %v4173
      %v4198 = vmul.f32 %v4006, %v4174
      %v4199 = vmul.f32 %v4007, %v4175
      %v4200 = vmul.f32 %v4008, %v4176
      %v4201 = vmul.f32 %v4009, %v4177
      %v4202 = vmul.f32 %v4010, %v4178
      %v4203 = vmul.f32 %v4011, %v4179
      %v4204 = vlaneseq
      %v4205 = vshrl.u32 %v4204, 7
      %v4206 = vsub.s32 0, %v4205
      %v4207 = vrot.slane %v3890, %v4206
      %v4208 = vmul.f32 %v4180, %v4207
      %v4209 = vmul.f32 %v4181, %v4207
      %v4210 = vmul.f32 %v4182, %v4207
      %v4211 = vmul.f32 %v4183, %v4207
      %v4212 = vmul.f32 %v4184, %v4207
      %v4213 = vmul.f32 %v4185, %v4207
      %v4214 = vmul.f32 %v4186, %v4207
      %v4215 = vmul.f32 %v4187, %v4207
      %v4216 = vmul.f32 %v4188, %v4207
      %v4217 = vmul.f32 %v4189, %v4207
      %v4218 = vmul.f32 %v4190, %v4207
      %v4219 = vmul.f32 %v4191, %v4207
      %v4220 = vmul.f32 %v4192, %v4207
      %v4221 = vmul.f32 %v4193, %v4207
      %v4222 = vmul.f32 %v4194, %v4207
      %v4223 = vmul.f32 %v4195, %v4207
      %v4224 = vmul.f32 %v4196, %v4207
      %v4225 = vmul.f32 %v4197, %v4207
      %v4226 = vmul.f32 %v4198, %v4207
      %v4227 = vmul.f32 %v4199, %v4207
      %v4228 = vmul.f32 %v4200, %v4207
      %v4229 = vmul.f32 %v4201, %v4207
      %v4230 = vmul.f32 %v4202, %v4207
      %v4231 = vmul.f32 %v4203, %v4207
      %v4232 = vlaneseq
      %v4233 = vshrl.u32 %v4232, 7
      %v4234 = vsub.s32 0, %v4233
      %v4235 = vrot.slane %v3891, %v4234
      %v4236 = vadd.f32 %v4208, %v4235
      %v4237 = vadd.f32 %v4209, %v4235
      %v4238 = vadd.f32 %v4210, %v4235
      %v4239 = vadd.f32 %v4211, %v4235
      %v4240 = vadd.f32 %v4212, %v4235
      %v4241 = vadd.f32 %v4213, %v4235
      %v4242 = vadd.f32 %v4214, %v4235
      %v4243 = vadd.f32 %v4215, %v4235
      %v4244 = vadd.f32 %v4216, %v4235
      %v4245 = vadd.f32 %v4217, %v4235
      %v4246 = vadd.f32 %v4218, %v4235
      %v4247 = vadd.f32 %v4219, %v4235
      %v4248 = vadd.f32 %v4220, %v4235
      %v4249 = vadd.f32 %v4221, %v4235
      %v4250 = vadd.f32 %v4222, %v4235
      %v4251 = vadd.f32 %v4223, %v4235
      %v4252 = vadd.f32 %v4224, %v4235
      %v4253 = vadd.f32 %v4225, %v4235
      %v4254 = vadd.f32 %v4226, %v4235
      %v4255 = vadd.f32 %v4227, %v4235
      %v4256 = vadd.f32 %v4228, %v4235
      %v4257 = vadd.f32 %v4229, %v4235
      %v4258 = vadd.f32 %v4230, %v4235
      %v4259 = vadd.f32 %v4231, %v4235
      %v4260 = vld [vmem:[%s6] sm:$0xf]
      %v4261 = vld [vmem:[%s6 + $0x4] sm:$0xf]
      %v4262 = vld [vmem:[%s6 + $0x8] sm:$0xf]
      %v4263 = vld [vmem:[%s6 + $0xc] sm:$0xf]
      %v4264 = vpack.c.bf16 %v4237, %v4236
      %v4265 = vpack.c.bf16 %v4239, %v4238
      %v4266 = vpack.c.bf16 %v4241, %v4240
      %v4267 = vpack.c.bf16 %v4243, %v4242
      %v4268 = vpack.c.bf16 %v4245, %v4244
      %v4269 = vpack.c.bf16 %v4247, %v4246
      %v4270 = vpack.c.bf16 %v4249, %v4248
      %v4271 = vpack.c.bf16 %v4251, %v4250
      %v4272 = vpack.c.bf16 %v4253, %v4252
      %v4273 = vpack.c.bf16 %v4255, %v4254
      %v4274 = vpack.c.bf16 %v4257, %v4256
      %v4275 = vpack.c.bf16 %v4259, %v4258
      %v4276 = vld [vmem:[%s3 + $0xa] sm:$0x1]
      %v4277 = vlaneseq
      %v4278 = vshrl.u32 %v4277, 7
      %v4279 = vsub.s32 0, %v4278
      %v4280 = vrot.slane %v4276, %v4279
      %v4285 = vunpack.c.l.b16 %v4260
      %v4286 = vunpack.c.l.b16 %v4261
      %v4287 = vunpack.c.l.b16 %v4262
      %v4288 = vunpack.c.l.b16 %v4263
      %v4289 = vpack.c.b16 %v4286, %v4285
      %v4290 = vpack.c.b16 %v4288, %v4287
      %v4294 = vsel %vm946, %v4264, 0
      %v4297 = vsel %vm946, %v4265, 0
      %v4300 = vsel %vm946, %v4266, 0
      %v4303 = vsel %vm946, %v4267, 0
      %v4306 = vsel %vm946, %v4268, 0
      %v4309 = vsel %vm946, %v4269, 0
      %v4312 = vsel %vm946, %v4270, 0
      %v4315 = vsel %vm946, %v4271, 0
      %v4318 = vsel %vm946, %v4272, 0
      %v4321 = vsel %vm946, %v4273, 0
      %v4324 = vsel %vm946, %v4274, 0
      %v4327 = vsel %vm946, %v4275, 0
      %4329 = vmatprep.subr.bf16.mxu0 0
      %4330 = vmatpush1.bf16.msra.mxu0 %v4289
      %4331 = vmatprep.subr.bf16.mxu0 0
      %4332 = vmatpush1.bf16.msra.mxu0 %v4290
      %4333 = vmatprep.subr.bf16.mxu0 0
      %4334 = vmatpush1.bf16.msra.mxu0 0
      %4335 = vmatprep.subr.bf16.mxu0 0
      %4336 = vmatpush1.bf16.msra.mxu0 0
      %4337 = vmatprep.subr.bf16.mxu0 0
      %4338 = vmatpush1.bf16.msra.mxu0 0
      %4339 = vmatprep.subr.bf16.mxu0 0
      %4340 = vmatpush1.bf16.msra.mxu0 0
      %4341 = vmatprep.subr.bf16.mxu0 0
      %4342 = vmatpush1.bf16.msra.mxu0 0
      %4343 = vmatprep.subr.bf16.mxu0 0
      %4344 = vmatpush1.bf16.msra.mxu0 0
      %4345 = vmatprep.subr.bf16.mxu0 0
      %4346 = vmatpush1.bf16.msra.mxu0 0
      %4347 = vmatprep.subr.bf16.mxu0 0
      %4348 = vmatpush1.bf16.msra.mxu0 0
      %4349 = vmatprep.subr.bf16.mxu0 0
      %4350 = vmatpush1.bf16.msra.mxu0 0
      %4351 = vmatprep.subr.bf16.mxu0 0
      %4352 = vmatpush1.bf16.msra.mxu0 0
      %4353 = vmatprep.subr.bf16.mxu0 0
      %4354 = vmatpush1.bf16.msra.mxu0 0
      %4355 = vmatprep.subr.bf16.mxu0 0
      %4356 = vmatpush1.bf16.msra.mxu0 0
      %4357 = vmatprep.subr.bf16.mxu0 0
      %4358 = vmatpush1.bf16.msra.mxu0 0
      %4359 = vmatprep.subr.bf16.mxu0 0
      %4360 = vmatpush1.bf16.msra.mxu0 0
      %4361 = vmatprep.mubr.bf16.mxu0 0
      %4362 = vmatmul.mubr.bf16.gmra.mrb[0].mxu0 %v4294
      %v4363 = vpop.f32.mrb[0].mxu0
      %v4364 = vadd.f32 %v4280, %v4363
      %v4365 = vpop.f32.mrb[0].mxu0
      %v4366 = vpop.f32.mrb[0].mxu0
      %v4367 = vadd.f32 %v4280, %v4366
      %v4368 = vpop.f32.mrb[0].mxu0
      %4369 = vmatprep.mubr.bf16.mxu0 0
      %4370 = vmatmul.mubr.bf16.gmra.mrb[0].mxu0 %v4297
      %v4371 = vpop.f32.mrb[0].mxu0
      %v4372 = vadd.f32 %v4280, %v4371
      %v4373 = vpop.f32.mrb[0].mxu0
      %v4374 = vpop.f32.mrb[0].mxu0
      %v4375 = vadd.f32 %v4280, %v4374
      %v4376 = vpop.f32.mrb[0].mxu0
      %4377 = vmatprep.mubr.bf16.mxu0 0
      %4378 = vmatmul.mubr.bf16.gmra.mrb[0].mxu0 %v4300
      %v4379 = vpop.f32.mrb[0].mxu0
      %v4380 = vadd.f32 %v4280, %v4379
      %v4381 = vpop.f32.mrb[0].mxu0
      %v4382 = vpop.f32.mrb[0].mxu0
      %v4383 = vadd.f32 %v4280, %v4382
      %v4384 = vpop.f32.mrb[0].mxu0
      %4385 = vmatprep.mubr.bf16.mxu0 0
      %4386 = vmatmul.mubr.bf16.gmra.mrb[0].mxu0 %v4303
      %v4387 = vpop.f32.mrb[0].mxu0
      %v4388 = vadd.f32 %v4280, %v4387
      %v4389 = vpop.f32.mrb[0].mxu0
      %v4390 = vpop.f32.mrb[0].mxu0
      %v4391 = vadd.f32 %v4280, %v4390
      %v4392 = vpop.f32.mrb[0].mxu0
      %4393 = vmatprep.mubr.bf16.mxu0 0
      %4394 = vmatmul.mubr.bf16.gmra.mrb[0].mxu0 %v4306
      %v4395 = vpop.f32.mrb[0].mxu0
      %v4396 = vadd.f32 %v4280, %v4395
      %v4397 = vpop.f32.mrb[0].mxu0
      %v4398 = vpop.f32.mrb[0].mxu0
      %v4399 = vadd.f32 %v4280, %v4398
      %v4400 = vpop.f32.mrb[0].mxu0
      %4401 = vmatprep.mubr.bf16.mxu0 0
      %4402 = vmatmul.mubr.bf16.gmra.mrb[0].mxu0 %v4309
      %v4403 = vpop.f32.mrb[0].mxu0
      %v4404 = vadd.f32 %v4280, %v4403
      %v4405 = vpop.f32.mrb[0].mxu0
      %v4406 = vpop.f32.mrb[0].mxu0
      %v4407 = vadd.f32 %v4280, %v4406
      %v4408 = vpop.f32.mrb[0].mxu0
      %4409 = vmatprep.mubr.bf16.mxu0 0
      %4410 = vmatmul.mubr.bf16.gmra.mrb[0].mxu0 %v4312
      %v4411 = vpop.f32.mrb[0].mxu0
      %v4412 = vadd.f32 %v4280, %v4411
      %v4413 = vpop.f32.mrb[0].mxu0
      %v4414 = vpop.f32.mrb[0].mxu0
      %v4415 = vadd.f32 %v4280, %v4414
      %v4416 = vpop.f32.mrb[0].mxu0
      %4417 = vmatprep.mubr.bf16.mxu0 0
      %4418 = vmatmul.mubr.bf16.gmra.mrb[0].mxu0 %v4315
      %v4419 = vpop.f32.mrb[0].mxu0
      %v4420 = vadd.f32 %v4280, %v4419
      %v4421 = vpop.f32.mrb[0].mxu0
      %v4422 = vpop.f32.mrb[0].mxu0
      %v4423 = vadd.f32 %v4280, %v4422
      %v4424 = vpop.f32.mrb[0].mxu0
      %4425 = vmatprep.mubr.bf16.mxu0 0
      %4426 = vmatmul.mubr.bf16.gmra.mrb[0].mxu0 %v4318
      %v4427 = vpop.f32.mrb[0].mxu0
      %v4428 = vadd.f32 %v4280, %v4427
      %v4429 = vpop.f32.mrb[0].mxu0
      %v4430 = vpop.f32.mrb[0].mxu0
      %v4431 = vadd.f32 %v4280, %v4430
      %v4432 = vpop.f32.mrb[0].mxu0
      %4433 = vmatprep.mubr.bf16.mxu0 0
      %4434 = vmatmul.mubr.bf16.gmra.mrb[0].mxu0 %v4321
      %v4435 = vpop.f32.mrb[0].mxu0
      %v4436 = vadd.f32 %v4280, %v4435
      %v4437 = vpop.f32.mrb[0].mxu0
      %v4438 = vpop.f32.mrb[0].mxu0
      %v4439 = vadd.f32 %v4280, %v4438
      %v4440 = vpop.f32.mrb[0].mxu0
      %4441 = vmatprep.mubr.bf16.mxu0 0
      %4442 = vmatmul.mubr.bf16.gmra.mrb[0].mxu0 %v4324
      %v4443 = vpop.f32.mrb[0].mxu0
      %v4444 = vadd.f32 %v4280, %v4443
      %v4445 = vpop.f32.mrb[0].mxu0
      %v4446 = vpop.f32.mrb[0].mxu0
      %v4447 = vadd.f32 %v4280, %v4446
      %v4448 = vpop.f32.mrb[0].mxu0
      %4449 = vmatprep.mubr.bf16.mxu0 0
      %4450 = vmatmul.mubr.bf16.gmra.mrb[0].mxu0 %v4327
      %v4451 = vpop.f32.mrb[0].mxu0
      %v4452 = vadd.f32 %v4280, %v4451
      %v4453 = vpop.f32.mrb[0].mxu0
      %v4454 = vpop.f32.mrb[0].mxu0
      %v4455 = vadd.f32 %v4280, %v4454
      %v4456 = vpop.f32.mrb[0].mxu0
      %4457 = vdwg.mxu0
      %v4458 = vmul.f32 %v4364, 0.5
      %v4459 = vmul.f32 %v4367, 0.5
      %v4460 = vmul.f32 %v4372, 0.5
      %v4461 = vmul.f32 %v4375, 0.5
      %v4462 = vmul.f32 %v4380, 0.5
      %v4463 = vmul.f32 %v4383, 0.5
      %v4464 = vmul.f32 %v4388, 0.5
      %v4465 = vmul.f32 %v4391, 0.5
      %v4466 = vmul.f32 %v4396, 0.5
      %v4467 = vmul.f32 %v4399, 0.5
      %v4468 = vmul.f32 %v4404, 0.5
      %v4469 = vmul.f32 %v4407, 0.5
      %v4470 = vmul.f32 %v4412, 0.5
      %v4471 = vmul.f32 %v4415, 0.5
      %v4472 = vmul.f32 %v4420, 0.5
      %v4473 = vmul.f32 %v4423, 0.5
      %v4474 = vmul.f32 %v4428, 0.5
      %v4475 = vmul.f32 %v4431, 0.5
      %v4476 = vmul.f32 %v4436, 0.5
      %v4477 = vmul.f32 %v4439, 0.5
      %v4478 = vmul.f32 %v4444, 0.5
      %v4479 = vmul.f32 %v4447, 0.5
      %v4480 = vmul.f32 %v4452, 0.5
      %v4481 = vmul.f32 %v4455, 0.5
      %v4482 = vmul.f32 %v4364, 0.70710677
      %v4483 = vmul.f32 %v4367, 0.70710677
      %v4484 = vmul.f32 %v4372, 0.70710677
      %v4485 = vmul.f32 %v4375, 0.70710677
      %v4486 = vmul.f32 %v4380, 0.70710677
      %v4487 = vmul.f32 %v4383, 0.70710677
      %v4488 = vmul.f32 %v4388, 0.70710677
      %v4489 = vmul.f32 %v4391, 0.70710677
      %v4490 = vmul.f32 %v4396, 0.70710677
      %v4491 = vmul.f32 %v4399, 0.70710677
      %v4492 = vmul.f32 %v4404, 0.70710677
      %v4493 = vmul.f32 %v4407, 0.70710677
      %v4494 = vmul.f32 %v4412, 0.70710677
      %v4495 = vmul.f32 %v4415, 0.70710677
      %v4496 = vmul.f32 %v4420, 0.70710677
      %v4497 = vmul.f32 %v4423, 0.70710677
      %v4498 = vmul.f32 %v4428, 0.70710677
      %v4499 = vmul.f32 %v4431, 0.70710677
      %v4500 = vmul.f32 %v4436, 0.70710677
      %v4501 = vmul.f32 %v4439, 0.70710677
      %v4502 = vmul.f32 %v4444, 0.70710677
      %v4503 = vmul.f32 %v4447, 0.70710677
      %v4504 = vmul.f32 %v4452, 0.70710677
      %v4505 = vmul.f32 %v4455, 0.70710677
      %v4506 = vand.u32 2147483647, %v4482
      %v4507 = vand.u32 2147483647, %v4483
      %v4508 = vand.u32 2147483647, %v4484
      %v4509 = vand.u32 2147483647, %v4485
      %v4510 = vand.u32 2147483647, %v4486
      %v4511 = vand.u32 2147483647, %v4487
      %v4512 = vand.u32 2147483647, %v4488
      %v4513 = vand.u32 2147483647, %v4489
      %v4514 = vand.u32 2147483647, %v4490
      %v4515 = vand.u32 2147483647, %v4491
      %v4516 = vand.u32 2147483647, %v4492
      %v4517 = vand.u32 2147483647, %v4493
      %v4518 = vand.u32 2147483647, %v4494
      %v4519 = vand.u32 2147483647, %v4495
      %v4520 = vand.u32 2147483647, %v4496
      %v4521 = vand.u32 2147483647, %v4497
      %v4522 = vand.u32 2147483647, %v4498
      %v4523 = vand.u32 2147483647, %v4499
      %v4524 = vand.u32 2147483647, %v4500
      %v4525 = vand.u32 2147483647, %v4501
      %v4526 = vand.u32 2147483647, %v4502
      %v4527 = vand.u32 2147483647, %v4503
      %v4528 = vand.u32 2147483647, %v4504
      %v4529 = vand.u32 2147483647, %v4505
      %v4530 = vmul.f32 %v4506, 0.3275911
      %v4531 = vmul.f32 %v4507, 0.3275911
      %v4532 = vmul.f32 %v4508, 0.3275911
      %v4533 = vmul.f32 %v4509, 0.3275911
      %v4534 = vmul.f32 %v4510, 0.3275911
      %v4535 = vmul.f32 %v4511, 0.3275911
      %v4536 = vmul.f32 %v4512, 0.3275911
      %v4537 = vmul.f32 %v4513, 0.3275911
      %v4538 = vmul.f32 %v4514, 0.3275911
      %v4539 = vmul.f32 %v4515, 0.3275911
      %v4540 = vmul.f32 %v4516, 0.3275911
      %v4541 = vmul.f32 %v4517, 0.3275911
      %v4542 = vmul.f32 %v4518, 0.3275911
      %v4543 = vmul.f32 %v4519, 0.3275911
      %v4544 = vmul.f32 %v4520, 0.3275911
      %v4545 = vmul.f32 %v4521, 0.3275911
      %v4546 = vmul.f32 %v4522, 0.3275911
      %v4547 = vmul.f32 %v4523, 0.3275911
      %v4548 = vmul.f32 %v4524, 0.3275911
      %v4549 = vmul.f32 %v4525, 0.3275911
      %v4550 = vmul.f32 %v4526, 0.3275911
      %v4551 = vmul.f32 %v4527, 0.3275911
      %v4552 = vmul.f32 %v4528, 0.3275911
      %v4553 = vmul.f32 %v4529, 0.3275911
      %v4554 = vadd.f32 %v4530, 1.0
      %v4555 = vadd.f32 %v4531, 1.0
      %v4556 = vadd.f32 %v4532, 1.0
      %v4557 = vadd.f32 %v4533, 1.0
      %v4558 = vadd.f32 %v4534, 1.0
      %v4559 = vadd.f32 %v4535, 1.0
      %v4560 = vadd.f32 %v4536, 1.0
      %v4561 = vadd.f32 %v4537, 1.0
      %v4562 = vadd.f32 %v4538, 1.0
      %v4563 = vadd.f32 %v4539, 1.0
      %v4564 = vadd.f32 %v4540, 1.0
      %v4565 = vadd.f32 %v4541, 1.0
      %v4566 = vadd.f32 %v4542, 1.0
      %v4567 = vadd.f32 %v4543, 1.0
      %v4568 = vadd.f32 %v4544, 1.0
      %v4569 = vadd.f32 %v4545, 1.0
      %v4570 = vadd.f32 %v4546, 1.0
      %v4571 = vadd.f32 %v4547, 1.0
      %v4572 = vadd.f32 %v4548, 1.0
      %v4573 = vadd.f32 %v4549, 1.0
      %v4574 = vadd.f32 %v4550, 1.0
      %v4575 = vadd.f32 %v4551, 1.0
      %v4576 = vadd.f32 %v4552, 1.0
      %v4577 = vadd.f32 %v4553, 1.0
      %v4578 = vrcp.pop %v4554
      %v4579 = vmul.f32 1.0, %v4578
      %v4580 = vrcp.pop %v4555
      %v4581 = vmul.f32 1.0, %v4580
      %v4582 = vrcp.pop %v4556
      %v4583 = vmul.f32 1.0, %v4582
      %v4584 = vrcp.pop %v4557
      %v4585 = vmul.f32 1.0, %v4584
      %v4586 = vrcp.pop %v4558
      %v4587 = vmul.f32 1.0, %v4586
      %v4588 = vrcp.pop %v4559
      %v4589 = vmul.f32 1.0, %v4588
      %v4590 = vrcp.pop %v4560
      %v4591 = vmul.f32 1.0, %v4590
      %v4592 = vrcp.pop %v4561
      %v4593 = vmul.f32 1.0, %v4592
      %v4594 = vrcp.pop %v4562
      %v4595 = vmul.f32 1.0, %v4594
      %v4596 = vrcp.pop %v4563
      %v4597 = vmul.f32 1.0, %v4596
      %v4598 = vrcp.pop %v4564
      %v4599 = vmul.f32 1.0, %v4598
      %v4600 = vrcp.pop %v4565
      %v4601 = vmul.f32 1.0, %v4600
      %v4602 = vrcp.pop %v4566
      %v4603 = vmul.f32 1.0, %v4602
      %v4604 = vrcp.pop %v4567
      %v4605 = vmul.f32 1.0, %v4604
      %v4606 = vrcp.pop %v4568
      %v4607 = vmul.f32 1.0, %v4606
      %v4608 = vrcp.pop %v4569
      %v4609 = vmul.f32 1.0, %v4608
      %v4610 = vrcp.pop %v4570
      %v4611 = vmul.f32 1.0, %v4610
      %v4612 = vrcp.pop %v4571
      %v4613 = vmul.f32 1.0, %v4612
      %v4614 = vrcp.pop %v4572
      %v4615 = vmul.f32 1.0, %v4614
      %v4616 = vrcp.pop %v4573
      %v4617 = vmul.f32 1.0, %v4616
      %v4618 = vrcp.pop %v4574
      %v4619 = vmul.f32 1.0, %v4618
      %v4620 = vrcp.pop %v4575
      %v4621 = vmul.f32 1.0, %v4620
      %v4622 = vrcp.pop %v4576
      %v4623 = vmul.f32 1.0, %v4622
      %v4624 = vrcp.pop %v4577
      %v4625 = vmul.f32 1.0, %v4624
      %v4626 = vmul.f32 %v4579, 1.0614054
      %v4627 = vmul.f32 %v4581, 1.0614054
      %v4628 = vmul.f32 %v4583, 1.0614054
      %v4629 = vmul.f32 %v4585, 1.0614054
      %v4630 = vmul.f32 %v4587, 1.0614054
      %v4631 = vmul.f32 %v4589, 1.0614054
      %v4632 = vmul.f32 %v4591, 1.0614054
      %v4633 = vmul.f32 %v4593, 1.0614054
      %v4634 = vmul.f32 %v4595, 1.0614054
      %v4635 = vmul.f32 %v4597, 1.0614054
      %v4636 = vmul.f32 %v4599, 1.0614054
      %v4637 = vmul.f32 %v4601, 1.0614054
      %v4638 = vmul.f32 %v4603, 1.0614054
      %v4639 = vmul.f32 %v4605, 1.0614054
      %v4640 = vmul.f32 %v4607, 1.0614054
      %v4641 = vmul.f32 %v4609, 1.0614054
      %v4642 = vmul.f32 %v4611, 1.0614054
      %v4643 = vmul.f32 %v4613, 1.0614054
      %v4644 = vmul.f32 %v4615, 1.0614054
      %v4645 = vmul.f32 %v4617, 1.0614054
      %v4646 = vmul.f32 %v4619, 1.0614054
      %v4647 = vmul.f32 %v4621, 1.0614054
      %v4648 = vmul.f32 %v4623, 1.0614054
      %v4649 = vmul.f32 %v4625, 1.0614054
      %v4650 = vadd.f32 %v4626, -1.4531521
      %v4651 = vadd.f32 %v4627, -1.4531521
      %v4652 = vadd.f32 %v4628, -1.4531521
      %v4653 = vadd.f32 %v4629, -1.4531521
      %v4654 = vadd.f32 %v4630, -1.4531521
      %v4655 = vadd.f32 %v4631, -1.4531521
      %v4656 = vadd.f32 %v4632, -1.4531521
      %v4657 = vadd.f32 %v4633, -1.4531521
      %v4658 = vadd.f32 %v4634, -1.4531521
      %v4659 = vadd.f32 %v4635, -1.4531521
      %v4660 = vadd.f32 %v4636, -1.4531521
      %v4661 = vadd.f32 %v4637, -1.4531521
      %v4662 = vadd.f32 %v4638, -1.4531521
      %v4663 = vadd.f32 %v4639, -1.4531521
      %v4664 = vadd.f32 %v4640, -1.4531521
      %v4665 = vadd.f32 %v4641, -1.4531521
      %v4666 = vadd.f32 %v4642, -1.4531521
      %v4667 = vadd.f32 %v4643, -1.4531521
      %v4668 = vadd.f32 %v4644, -1.4531521
      %v4669 = vadd.f32 %v4645, -1.4531521
      %v4670 = vadd.f32 %v4646, -1.4531521
      %v4671 = vadd.f32 %v4647, -1.4531521
      %v4672 = vadd.f32 %v4648, -1.4531521
      %v4673 = vadd.f32 %v4649, -1.4531521
      %v4674 = vmul.f32 %v4650, %v4579
      %v4675 = vmul.f32 %v4651, %v4581
      %v4676 = vmul.f32 %v4652, %v4583
      %v4677 = vmul.f32 %v4653, %v4585
      %v4678 = vmul.f32 %v4654, %v4587
      %v4679 = vmul.f32 %v4655, %v4589
      %v4680 = vmul.f32 %v4656, %v4591
      %v4681 = vmul.f32 %v4657, %v4593
      %v4682 = vmul.f32 %v4658, %v4595
      %v4683 = vmul.f32 %v4659, %v4597
      %v4684 = vmul.f32 %v4660, %v4599
      %v4685 = vmul.f32 %v4661, %v4601
      %v4686 = vmul.f32 %v4662, %v4603
      %v4687 = vmul.f32 %v4663, %v4605
      %v4688 = vmul.f32 %v4664, %v4607
      %v4689 = vmul.f32 %v4665, %v4609
      %v4690 = vmul.f32 %v4666, %v4611
      %v4691 = vmul.f32 %v4667, %v4613
      %v4692 = vmul.f32 %v4668, %v4615
      %v4693 = vmul.f32 %v4669, %v4617
      %v4694 = vmul.f32 %v4670, %v4619
      %v4695 = vmul.f32 %v4671, %v4621
      %v4696 = vmul.f32 %v4672, %v4623
      %v4697 = vmul.f32 %v4673, %v4625
      %v4698 = vadd.f32 %v4674, 1.4214138
      %v4699 = vadd.f32 %v4675, 1.4214138
      %v4700 = vadd.f32 %v4676, 1.4214138
      %v4701 = vadd.f32 %v4677, 1.4214138
      %v4702 = vadd.f32 %v4678, 1.4214138
      %v4703 = vadd.f32 %v4679, 1.4214138
      %v4704 = vadd.f32 %v4680, 1.4214138
      %v4705 = vadd.f32 %v4681, 1.4214138
      %v4706 = vadd.f32 %v4682, 1.4214138
      %v4707 = vadd.f32 %v4683, 1.4214138
      %v4708 = vadd.f32 %v4684, 1.4214138
      %v4709 = vadd.f32 %v4685, 1.4214138
      %v4710 = vadd.f32 %v4686, 1.4214138
      %v4711 = vadd.f32 %v4687, 1.4214138
      %v4712 = vadd.f32 %v4688, 1.4214138
      %v4713 = vadd.f32 %v4689, 1.4214138
      %v4714 = vadd.f32 %v4690, 1.4214138
      %v4715 = vadd.f32 %v4691, 1.4214138
      %v4716 = vadd.f32 %v4692, 1.4214138
      %v4717 = vadd.f32 %v4693, 1.4214138
      %v4718 = vadd.f32 %v4694, 1.4214138
      %v4719 = vadd.f32 %v4695, 1.4214138
      %v4720 = vadd.f32 %v4696, 1.4214138
      %v4721 = vadd.f32 %v4697, 1.4214138
      %v4722 = vmul.f32 %v4698, %v4579
      %v4723 = vmul.f32 %v4699, %v4581
      %v4724 = vmul.f32 %v4700, %v4583
      %v4725 = vmul.f32 %v4701, %v4585
      %v4726 = vmul.f32 %v4702, %v4587
      %v4727 = vmul.f32 %v4703, %v4589
      %v4728 = vmul.f32 %v4704, %v4591
      %v4729 = vmul.f32 %v4705, %v4593
      %v4730 = vmul.f32 %v4706, %v4595
      %v4731 = vmul.f32 %v4707, %v4597
      %v4732 = vmul.f32 %v4708, %v4599
      %v4733 = vmul.f32 %v4709, %v4601
      %v4734 = vmul.f32 %v4710, %v4603
      %v4735 = vmul.f32 %v4711, %v4605
      %v4736 = vmul.f32 %v4712, %v4607
      %v4737 = vmul.f32 %v4713, %v4609
      %v4738 = vmul.f32 %v4714, %v4611
      %v4739 = vmul.f32 %v4715, %v4613
      %v4740 = vmul.f32 %v4716, %v4615
      %v4741 = vmul.f32 %v4717, %v4617
      %v4742 = vmul.f32 %v4718, %v4619
      %v4743 = vmul.f32 %v4719, %v4621
      %v4744 = vmul.f32 %v4720, %v4623
      %v4745 = vmul.f32 %v4721, %v4625
      %v4746 = vadd.f32 %v4722, -0.28449672
      %v4747 = vadd.f32 %v4723, -0.28449672
      %v4748 = vadd.f32 %v4724, -0.28449672
      %v4749 = vadd.f32 %v4725, -0.28449672
      %v4750 = vadd.f32 %v4726, -0.28449672
      %v4751 = vadd.f32 %v4727, -0.28449672
      %v4752 = vadd.f32 %v4728, -0.28449672
      %v4753 = vadd.f32 %v4729, -0.28449672
      %v4754 = vadd.f32 %v4730, -0.28449672
      %v4755 = vadd.f32 %v4731, -0.28449672
      %v4756 = vadd.f32 %v4732, -0.28449672
      %v4757 = vadd.f32 %v4733, -0.28449672
      %v4758 = vadd.f32 %v4734, -0.28449672
      %v4759 = vadd.f32 %v4735, -0.28449672
      %v4760 = vadd.f32 %v4736, -0.28449672
      %v4761 = vadd.f32 %v4737, -0.28449672
      %v4762 = vadd.f32 %v4738, -0.28449672
      %v4763 = vadd.f32 %v4739, -0.28449672
      %v4764 = vadd.f32 %v4740, -0.28449672
      %v4765 = vadd.f32 %v4741, -0.28449672
      %v4766 = vadd.f32 %v4742, -0.28449672
      %v4767 = vadd.f32 %v4743, -0.28449672
      %v4768 = vadd.f32 %v4744, -0.28449672
      %v4769 = vadd.f32 %v4745, -0.28449672
      %v4770 = vmul.f32 %v4746, %v4579
      %v4771 = vmul.f32 %v4747, %v4581
      %v4772 = vmul.f32 %v4748, %v4583
      %v4773 = vmul.f32 %v4749, %v4585
      %v4774 = vmul.f32 %v4750, %v4587
      %v4775 = vmul.f32 %v4751, %v4589
      %v4776 = vmul.f32 %v4752, %v4591
      %v4777 = vmul.f32 %v4753, %v4593
      %v4778 = vmul.f32 %v4754, %v4595
      %v4779 = vmul.f32 %v4755, %v4597
      %v4780 = vmul.f32 %v4756, %v4599
      %v4781 = vmul.f32 %v4757, %v4601
      %v4782 = vmul.f32 %v4758, %v4603
      %v4783 = vmul.f32 %v4759, %v4605
      %v4784 = vmul.f32 %v4760, %v4607
      %v4785 = vmul.f32 %v4761, %v4609
      %v4786 = vmul.f32 %v4762, %v4611
      %v4787 = vmul.f32 %v4763, %v4613
      %v4788 = vmul.f32 %v4764, %v4615
      %v4789 = vmul.f32 %v4765, %v4617
      %v4790 = vmul.f32 %v4766, %v4619
      %v4791 = vmul.f32 %v4767, %v4621
      %v4792 = vmul.f32 %v4768, %v4623
      %v4793 = vmul.f32 %v4769, %v4625
      %v4794 = vadd.f32 %v4770, 0.2548296
      %v4795 = vadd.f32 %v4771, 0.2548296
      %v4796 = vadd.f32 %v4772, 0.2548296
      %v4797 = vadd.f32 %v4773, 0.2548296
      %v4798 = vadd.f32 %v4774, 0.2548296
      %v4799 = vadd.f32 %v4775, 0.2548296
      %v4800 = vadd.f32 %v4776, 0.2548296
      %v4801 = vadd.f32 %v4777, 0.2548296
      %v4802 = vadd.f32 %v4778, 0.2548296
      %v4803 = vadd.f32 %v4779, 0.2548296
      %v4804 = vadd.f32 %v4780, 0.2548296
      %v4805 = vadd.f32 %v4781, 0.2548296
      %v4806 = vadd.f32 %v4782, 0.2548296
      %v4807 = vadd.f32 %v4783, 0.2548296
      %v4808 = vadd.f32 %v4784, 0.2548296
      %v4809 = vadd.f32 %v4785, 0.2548296
      %v4810 = vadd.f32 %v4786, 0.2548296
      %v4811 = vadd.f32 %v4787, 0.2548296
      %v4812 = vadd.f32 %v4788, 0.2548296
      %v4813 = vadd.f32 %v4789, 0.2548296
      %v4814 = vadd.f32 %v4790, 0.2548296
      %v4815 = vadd.f32 %v4791, 0.2548296
      %v4816 = vadd.f32 %v4792, 0.2548296
      %v4817 = vadd.f32 %v4793, 0.2548296
      %v4818 = vmul.f32 %v4794, %v4579
      %v4819 = vmul.f32 %v4795, %v4581
      %v4820 = vmul.f32 %v4796, %v4583
      %v4821 = vmul.f32 %v4797, %v4585
      %v4822 = vmul.f32 %v4798, %v4587
      %v4823 = vmul.f32 %v4799, %v4589
      %v4824 = vmul.f32 %v4800, %v4591
      %v4825 = vmul.f32 %v4801, %v4593
      %v4826 = vmul.f32 %v4802, %v4595
      %v4827 = vmul.f32 %v4803, %v4597
      %v4828 = vmul.f32 %v4804, %v4599
      %v4829 = vmul.f32 %v4805, %v4601
      %v4830 = vmul.f32 %v4806, %v4603
      %v4831 = vmul.f32 %v4807, %v4605
      %v4832 = vmul.f32 %v4808, %v4607
      %v4833 = vmul.f32 %v4809, %v4609
      %v4834 = vmul.f32 %v4810, %v4611
      %v4835 = vmul.f32 %v4811, %v4613
      %v4836 = vmul.f32 %v4812, %v4615
      %v4837 = vmul.f32 %v4813, %v4617
      %v4838 = vmul.f32 %v4814, %v4619
      %v4839 = vmul.f32 %v4815, %v4621
      %v4840 = vmul.f32 %v4816, %v4623
      %v4841 = vmul.f32 %v4817, %v4625
      %v4842 = vsub.f32 0.0, %v4506
      %v4843 = vsub.f32 0.0, %v4507
      %v4844 = vsub.f32 0.0, %v4508
      %v4845 = vsub.f32 0.0, %v4509
      %v4846 = vsub.f32 0.0, %v4510
      %v4847 = vsub.f32 0.0, %v4511
      %v4848 = vsub.f32 0.0, %v4512
      %v4849 = vsub.f32 0.0, %v4513
      %v4850 = vsub.f32 0.0, %v4514
      %v4851 = vsub.f32 0.0, %v4515
      %v4852 = vsub.f32 0.0, %v4516
      %v4853 = vsub.f32 0.0, %v4517
      %v4854 = vsub.f32 0.0, %v4518
      %v4855 = vsub.f32 0.0, %v4519
      %v4856 = vsub.f32 0.0, %v4520
      %v4857 = vsub.f32 0.0, %v4521
      %v4858 = vsub.f32 0.0, %v4522
      %v4859 = vsub.f32 0.0, %v4523
      %v4860 = vsub.f32 0.0, %v4524
      %v4861 = vsub.f32 0.0, %v4525
      %v4862 = vsub.f32 0.0, %v4526
      %v4863 = vsub.f32 0.0, %v4527
      %v4864 = vsub.f32 0.0, %v4528
      %v4865 = vsub.f32 0.0, %v4529
      %v4866 = vmul.f32 %v4842, %v4506
      %v4867 = vmul.f32 %v4843, %v4507
      %v4868 = vmul.f32 %v4844, %v4508
      %v4869 = vmul.f32 %v4845, %v4509
      %v4870 = vmul.f32 %v4846, %v4510
      %v4871 = vmul.f32 %v4847, %v4511
      %v4872 = vmul.f32 %v4848, %v4512
      %v4873 = vmul.f32 %v4849, %v4513
      %v4874 = vmul.f32 %v4850, %v4514
      %v4875 = vmul.f32 %v4851, %v4515
      %v4876 = vmul.f32 %v4852, %v4516
      %v4877 = vmul.f32 %v4853, %v4517
      %v4878 = vmul.f32 %v4854, %v4518
      %v4879 = vmul.f32 %v4855, %v4519
      %v4880 = vmul.f32 %v4856, %v4520
      %v4881 = vmul.f32 %v4857, %v4521
      %v4882 = vmul.f32 %v4858, %v4522
      %v4883 = vmul.f32 %v4859, %v4523
      %v4884 = vmul.f32 %v4860, %v4524
      %v4885 = vmul.f32 %v4861, %v4525
      %v4886 = vmul.f32 %v4862, %v4526
      %v4887 = vmul.f32 %v4863, %v4527
      %v4888 = vmul.f32 %v4864, %v4528
      %v4889 = vmul.f32 %v4865, %v4529
      %v4890 = vmul.f32 %v4866, 1.442695
      %v4891 = vpow.pop %v4890
      %v4892 = vmul.f32 %v4867, 1.442695
      %v4893 = vpow.pop %v4892
      %v4894 = vmul.f32 %v4868, 1.442695
      %v4895 = vpow.pop %v4894
      %v4896 = vmul.f32 %v4869, 1.442695
      %v4897 = vpow.pop %v4896
      %v4898 = vmul.f32 %v4870, 1.442695
      %v4899 = vpow.pop %v4898
      %v4900 = vmul.f32 %v4871, 1.442695
      %v4901 = vpow.pop %v4900
      %v4902 = vmul.f32 %v4872, 1.442695
      %v4903 = vpow.pop %v4902
      %v4904 = vmul.f32 %v4873, 1.442695
      %v4905 = vpow.pop %v4904
      %v4906 = vmul.f32 %v4874, 1.442695
      %v4907 = vpow.pop %v4906
      %v4908 = vmul.f32 %v4875, 1.442695
      %v4909 = vpow.pop %v4908
      %v4910 = vmul.f32 %v4876, 1.442695
      %v4911 = vpow.pop %v4910
      %v4912 = vmul.f32 %v4877, 1.442695
      %v4913 = vpow.pop %v4912
      %v4914 = vmul.f32 %v4878, 1.442695
      %v4915 = vpow.pop %v4914
      %v4916 = vmul.f32 %v4879, 1.442695
      %v4917 = vpow.pop %v4916
      %v4918 = vmul.f32 %v4880, 1.442695
      %v4919 = vpow.pop %v4918
      %v4920 = vmul.f32 %v4881, 1.442695
      %v4921 = vpow.pop %v4920
      %v4922 = vmul.f32 %v4882, 1.442695
      %v4923 = vpow.pop %v4922
      %v4924 = vmul.f32 %v4883, 1.442695
      %v4925 = vpow.pop %v4924
      %v4926 = vmul.f32 %v4884, 1.442695
      %v4927 = vpow.pop %v4926
      %v4928 = vmul.f32 %v4885, 1.442695
      %v4929 = vpow.pop %v4928
      %v4930 = vmul.f32 %v4886, 1.442695
      %v4931 = vpow.pop %v4930
      %v4932 = vmul.f32 %v4887, 1.442695
      %v4933 = vpow.pop %v4932
      %v4934 = vmul.f32 %v4888, 1.442695
      %v4935 = vpow.pop %v4934
      %v4936 = vmul.f32 %v4889, 1.442695
      %v4937 = vpow.pop %v4936
      %v4938 = vmul.f32 %v4818, %v4891
      %v4939 = vmul.f32 %v4819, %v4893
      %v4940 = vmul.f32 %v4820, %v4895
      %v4941 = vmul.f32 %v4821, %v4897
      %v4942 = vmul.f32 %v4822, %v4899
      %v4943 = vmul.f32 %v4823, %v4901
      %v4944 = vmul.f32 %v4824, %v4903
      %v4945 = vmul.f32 %v4825, %v4905
      %v4946 = vmul.f32 %v4826, %v4907
      %v4947 = vmul.f32 %v4827, %v4909
      %v4948 = vmul.f32 %v4828, %v4911
      %v4949 = vmul.f32 %v4829, %v4913
      %v4950 = vmul.f32 %v4830, %v4915
      %v4951 = vmul.f32 %v4831, %v4917
      %v4952 = vmul.f32 %v4832, %v4919
      %v4953 = vmul.f32 %v4833, %v4921
      %v4954 = vmul.f32 %v4834, %v4923
      %v4955 = vmul.f32 %v4835, %v4925
      %v4956 = vmul.f32 %v4836, %v4927
      %v4957 = vmul.f32 %v4837, %v4929
      %v4958 = vmul.f32 %v4838, %v4931
      %v4959 = vmul.f32 %v4839, %v4933
      %v4960 = vmul.f32 %v4840, %v4935
      %v4961 = vmul.f32 %v4841, %v4937
      %v4962 = vsub.f32 1.0, %v4938
      %v4963 = vsub.f32 1.0, %v4939
      %v4964 = vsub.f32 1.0, %v4940
      %v4965 = vsub.f32 1.0, %v4941
      %v4966 = vsub.f32 1.0, %v4942
      %v4967 = vsub.f32 1.0, %v4943
      %v4968 = vsub.f32 1.0, %v4944
      %v4969 = vsub.f32 1.0, %v4945
      %v4970 = vsub.f32 1.0, %v4946
      %v4971 = vsub.f32 1.0, %v4947
      %v4972 = vsub.f32 1.0, %v4948
      %v4973 = vsub.f32 1.0, %v4949
      %v4974 = vsub.f32 1.0, %v4950
      %v4975 = vsub.f32 1.0, %v4951
      %v4976 = vsub.f32 1.0, %v4952
      %v4977 = vsub.f32 1.0, %v4953
      %v4978 = vsub.f32 1.0, %v4954
      %v4979 = vsub.f32 1.0, %v4955
      %v4980 = vsub.f32 1.0, %v4956
      %v4981 = vsub.f32 1.0, %v4957
      %v4982 = vsub.f32 1.0, %v4958
      %v4983 = vsub.f32 1.0, %v4959
      %v4984 = vsub.f32 1.0, %v4960
      %v4985 = vsub.f32 1.0, %v4961
      %vm4986 = vcmp.ge.f32.partialorder %v4482, 0.0
      %vm4987 = vcmp.ge.f32.partialorder %v4483, 0.0
      %vm4988 = vcmp.ge.f32.partialorder %v4484, 0.0
      %vm4989 = vcmp.ge.f32.partialorder %v4485, 0.0
      %vm4990 = vcmp.ge.f32.partialorder %v4486, 0.0
      %vm4991 = vcmp.ge.f32.partialorder %v4487, 0.0
      %vm4992 = vcmp.ge.f32.partialorder %v4488, 0.0
      %vm4993 = vcmp.ge.f32.partialorder %v4489, 0.0
      %vm4994 = vcmp.ge.f32.partialorder %v4490, 0.0
      %vm4995 = vcmp.ge.f32.partialorder %v4491, 0.0
      %vm4996 = vcmp.ge.f32.partialorder %v4492, 0.0
      %vm4997 = vcmp.ge.f32.partialorder %v4493, 0.0
      %vm4998 = vcmp.ge.f32.partialorder %v4494, 0.0
      %vm4999 = vcmp.ge.f32.partialorder %v4495, 0.0
      %vm5000 = vcmp.ge.f32.partialorder %v4496, 0.0
      %vm5001 = vcmp.ge.f32.partialorder %v4497, 0.0
      %vm5002 = vcmp.ge.f32.partialorder %v4498, 0.0
      %vm5003 = vcmp.ge.f32.partialorder %v4499, 0.0
      %vm5004 = vcmp.ge.f32.partialorder %v4500, 0.0
      %vm5005 = vcmp.ge.f32.partialorder %v4501, 0.0
      %vm5006 = vcmp.ge.f32.partialorder %v4502, 0.0
      %vm5007 = vcmp.ge.f32.partialorder %v4503, 0.0
      %vm5008 = vcmp.ge.f32.partialorder %v4504, 0.0
      %vm5009 = vcmp.ge.f32.partialorder %v4505, 0.0
      %v5010 = vsub.f32 0.0, %v4962
      %v5011 = vsub.f32 0.0, %v4963
      %v5012 = vsub.f32 0.0, %v4964
      %v5013 = vsub.f32 0.0, %v4965
      %v5014 = vsub.f32 0.0, %v4966
      %v5015 = vsub.f32 0.0, %v4967
      %v5016 = vsub.f32 0.0, %v4968
      %v5017 = vsub.f32 0.0, %v4969
      %v5018 = vsub.f32 0.0, %v4970
      %v5019 = vsub.f32 0.0, %v4971
      %v5020 = vsub.f32 0.0, %v4972
      %v5021 = vsub.f32 0.0, %v4973
      %v5022 = vsub.f32 0.0, %v4974
      %v5023 = vsub.f32 0.0, %v4975
      %v5024 = vsub.f32 0.0, %v4976
      %v5025 = vsub.f32 0.0, %v4977
      %v5026 = vsub.f32 0.0, %v4978
      %v5027 = vsub.f32 0.0, %v4979
      %v5028 = vsub.f32 0.0, %v4980
      %v5029 = vsub.f32 0.0, %v4981
      %v5030 = vsub.f32 0.0, %v4982
      %v5031 = vsub.f32 0.0, %v4983
      %v5032 = vsub.f32 0.0, %v4984
      %v5033 = vsub.f32 0.0, %v4985
      %v5034 = vsel %vm4986, %v4962, %v5010
      %v5035 = vsel %vm4987, %v4963, %v5011
      %v5036 = vsel %vm4988, %v4964, %v5012
      %v5037 = vsel %vm4989, %v4965, %v5013
      %v5038 = vsel %vm4990, %v4966, %v5014
      %v5039 = vsel %vm4991, %v4967, %v5015
      %v5040 = vsel %vm4992, %v4968, %v5016
      %v5041 = vsel %vm4993, %v4969, %v5017
      %v5042 = vsel %vm4994, %v4970, %v5018
      %v5043 = vsel %vm4995, %v4971, %v5019
      %v5044 = vsel %vm4996, %v4972, %v5020
      %v5045 = vsel %vm4997, %v4973, %v5021
      %v5046 = vsel %vm4998, %v4974, %v5022
      %v5047 = vsel %vm4999, %v4975, %v5023
      %v5048 = vsel %vm5000, %v4976, %v5024
      %v5049 = vsel %vm5001, %v4977, %v5025
      %v5050 = vsel %vm5002, %v4978, %v5026
      %v5051 = vsel %vm5003, %v4979, %v5027
      %v5052 = vsel %vm5004, %v4980, %v5028
      %v5053 = vsel %vm5005, %v4981, %v5029
      %v5054 = vsel %vm5006, %v4982, %v5030
      %v5055 = vsel %vm5007, %v4983, %v5031
      %v5056 = vsel %vm5008, %v4984, %v5032
      %v5057 = vsel %vm5009, %v4985, %v5033
      %v5058 = vadd.f32 %v5034, 1.0
      %v5059 = vadd.f32 %v5035, 1.0
      %v5060 = vadd.f32 %v5036, 1.0
      %v5061 = vadd.f32 %v5037, 1.0
      %v5062 = vadd.f32 %v5038, 1.0
      %v5063 = vadd.f32 %v5039, 1.0
      %v5064 = vadd.f32 %v5040, 1.0
      %v5065 = vadd.f32 %v5041, 1.0
      %v5066 = vadd.f32 %v5042, 1.0
      %v5067 = vadd.f32 %v5043, 1.0
      %v5068 = vadd.f32 %v5044, 1.0
      %v5069 = vadd.f32 %v5045, 1.0
      %v5070 = vadd.f32 %v5046, 1.0
      %v5071 = vadd.f32 %v5047, 1.0
      %v5072 = vadd.f32 %v5048, 1.0
      %v5073 = vadd.f32 %v5049, 1.0
      %v5074 = vadd.f32 %v5050, 1.0
      %v5075 = vadd.f32 %v5051, 1.0
      %v5076 = vadd.f32 %v5052, 1.0
      %v5077 = vadd.f32 %v5053, 1.0
      %v5078 = vadd.f32 %v5054, 1.0
      %v5079 = vadd.f32 %v5055, 1.0
      %v5080 = vadd.f32 %v5056, 1.0
      %v5081 = vadd.f32 %v5057, 1.0
      %v5082 = vmul.f32 %v4458, %v5058
      %v5083 = vmul.f32 %v4459, %v5059
      %v5084 = vmul.f32 %v4460, %v5060
      %v5085 = vmul.f32 %v4461, %v5061
      %v5086 = vmul.f32 %v4462, %v5062
      %v5087 = vmul.f32 %v4463, %v5063
      %v5088 = vmul.f32 %v4464, %v5064
      %v5089 = vmul.f32 %v4465, %v5065
      %v5090 = vmul.f32 %v4466, %v5066
      %v5091 = vmul.f32 %v4467, %v5067
      %v5092 = vmul.f32 %v4468, %v5068
      %v5093 = vmul.f32 %v4469, %v5069
      %v5094 = vmul.f32 %v4470, %v5070
      %v5095 = vmul.f32 %v4471, %v5071
      %v5096 = vmul.f32 %v4472, %v5072
      %v5097 = vmul.f32 %v4473, %v5073
      %v5098 = vmul.f32 %v4474, %v5074
      %v5099 = vmul.f32 %v4475, %v5075
      %v5100 = vmul.f32 %v4476, %v5076
      %v5101 = vmul.f32 %v4477, %v5077
      %v5102 = vmul.f32 %v4478, %v5078
      %v5103 = vmul.f32 %v4479, %v5079
      %v5104 = vmul.f32 %v4480, %v5080
      %v5105 = vmul.f32 %v4481, %v5081
      %v5106 = vld [vmem:[%s7] sm:$0xf]
      %v5107 = vld [vmem:[%s7 + $0x4] sm:$0xf]
      %v5108 = vld [vmem:[%s7 + $0x8] sm:$0xf]
      %v5109 = vld [vmem:[%s7 + $0xc] sm:$0xf]
      %v5110 = vld [vmem:[%s7 + $0x10] sm:$0xf]
      %v5111 = vld [vmem:[%s7 + $0x14] sm:$0xf]
      %v5112 = vld [vmem:[%s7 + $0x18] sm:$0xf]
      %v5113 = vld [vmem:[%s7 + $0x1c] sm:$0xf]
      %v5114 = vpack.c.bf16 %v5083, %v5082
      %v5115 = vpack.c.bf16 %v5085, %v5084
      %v5116 = vpack.c.bf16 %v5087, %v5086
      %v5117 = vpack.c.bf16 %v5089, %v5088
      %v5118 = vpack.c.bf16 %v5091, %v5090
      %v5119 = vpack.c.bf16 %v5093, %v5092
      %v5120 = vpack.c.bf16 %v5095, %v5094
      %v5121 = vpack.c.bf16 %v5097, %v5096
      %v5122 = vpack.c.bf16 %v5099, %v5098
      %v5123 = vpack.c.bf16 %v5101, %v5100
      %v5124 = vpack.c.bf16 %v5103, %v5102
      %v5125 = vpack.c.bf16 %v5105, %v5104
      %v5134 = vunpack.c.l.b16 %v5106
      %v5135 = vunpack.c.l.b16 %v5107
      %v5136 = vunpack.c.l.b16 %v5108
      %v5137 = vunpack.c.l.b16 %v5109
      %v5138 = vunpack.c.l.b16 %v5110
      %v5139 = vunpack.c.l.b16 %v5111
      %v5140 = vunpack.c.l.b16 %v5112
      %v5141 = vunpack.c.l.b16 %v5113
      %v5142 = vpack.c.b16 %v5135, %v5134
      %v5143 = vpack.c.b16 %v5137, %v5136
      %v5144 = vpack.c.b16 %v5139, %v5138
      %v5145 = vpack.c.b16 %v5141, %v5140
      %v5151 = vsel %vm360, %v5114, 0
      %v5154 = vsel %vm360, %v5115, 0
      %v5157 = vsel %vm360, %v5116, 0
      %v5160 = vsel %vm360, %v5117, 0
      %v5163 = vsel %vm360, %v5118, 0
      %v5166 = vsel %vm360, %v5119, 0
      %v5169 = vsel %vm360, %v5120, 0
      %v5172 = vsel %vm360, %v5121, 0
      %v5175 = vsel %vm360, %v5122, 0
      %v5178 = vsel %vm360, %v5123, 0
      %v5181 = vsel %vm360, %v5124, 0
      %v5184 = vsel %vm360, %v5125, 0
      %5186 = vmatprep.subr.bf16.mxu0 0
      %5187 = vmatpush1.bf16.msra.mxu0 %v5142
      %5188 = vmatprep.subr.bf16.mxu0 0
      %5189 = vmatpush1.bf16.msra.mxu0 %v5143
      %5190 = vmatprep.subr.bf16.mxu0 0
      %5191 = vmatpush1.bf16.msra.mxu0 %v5144
      %5192 = vmatprep.subr.bf16.mxu0 0
      %5193 = vmatpush1.bf16.msra.mxu0 %v5145
      %5194 = vmatprep.subr.bf16.mxu0 0
      %5195 = vmatpush1.bf16.msra.mxu0 0
      %5196 = vmatprep.subr.bf16.mxu0 0
      %5197 = vmatpush1.bf16.msra.mxu0 0
      %5198 = vmatprep.subr.bf16.mxu0 0
      %5199 = vmatpush1.bf16.msra.mxu0 0
      %5200 = vmatprep.subr.bf16.mxu0 0
      %5201 = vmatpush1.bf16.msra.mxu0 0
      %5202 = vmatprep.subr.bf16.mxu0 0
      %5203 = vmatpush1.bf16.msra.mxu0 0
      %5204 = vmatprep.subr.bf16.mxu0 0
      %5205 = vmatpush1.bf16.msra.mxu0 0
      %5206 = vmatprep.subr.bf16.mxu0 0
      %5207 = vmatpush1.bf16.msra.mxu0 0
      %5208 = vmatprep.subr.bf16.mxu0 0
      %5209 = vmatpush1.bf16.msra.mxu0 0
      %5210 = vmatprep.subr.bf16.mxu0 0
      %5211 = vmatpush1.bf16.msra.mxu0 0
      %5212 = vmatprep.subr.bf16.mxu0 0
      %5213 = vmatpush1.bf16.msra.mxu0 0
      %5214 = vmatprep.subr.bf16.mxu0 0
      %5215 = vmatpush1.bf16.msra.mxu0 0
      %5216 = vmatprep.subr.bf16.mxu0 0
      %5217 = vmatpush1.bf16.msra.mxu0 0
      %5218 = vmatprep.mubr.bf16.mxu0 0
      %5219 = vmatmul.mubr.bf16.gmra.mrb[0].mxu0 %v5151
      %v5220 = vpop.f32.mrb[0].mxu0
      %v5221 = vadd.f32 0.0, %v5220
      %v5222 = vpop.f32.mrb[0].mxu0
      %v5223 = vpop.f32.mrb[0].mxu0
      %v5224 = vadd.f32 0.0, %v5223
      %v5225 = vpop.f32.mrb[0].mxu0
      %5226 = vmatprep.mubr.bf16.mxu0 0
      %5227 = vmatmul.mubr.bf16.gmra.mrb[0].mxu0 %v5154
      %v5228 = vpop.f32.mrb[0].mxu0
      %v5229 = vadd.f32 0.0, %v5228
      %v5230 = vpop.f32.mrb[0].mxu0
      %v5231 = vpop.f32.mrb[0].mxu0
      %v5232 = vadd.f32 0.0, %v5231
      %v5233 = vpop.f32.mrb[0].mxu0
      %5234 = vmatprep.mubr.bf16.mxu0 0
      %5235 = vmatmul.mubr.bf16.gmra.mrb[0].mxu0 %v5157
      %v5236 = vpop.f32.mrb[0].mxu0
      %v5237 = vadd.f32 0.0, %v5236
      %v5238 = vpop.f32.mrb[0].mxu0
      %v5239 = vpop.f32.mrb[0].mxu0
      %v5240 = vadd.f32 0.0, %v5239
      %v5241 = vpop.f32.mrb[0].mxu0
      %5242 = vmatprep.mubr.bf16.mxu0 0
      %5243 = vmatmul.mubr.bf16.gmra.mrb[0].mxu0 %v5160
      %v5244 = vpop.f32.mrb[0].mxu0
      %v5245 = vadd.f32 0.0, %v5244
      %v5246 = vpop.f32.mrb[0].mxu0
      %v5247 = vpop.f32.mrb[0].mxu0
      %v5248 = vadd.f32 0.0, %v5247
      %v5249 = vpop.f32.mrb[0].mxu0
      %5250 = vmatprep.mubr.bf16.mxu0 0
      %5251 = vmatmul.mubr.bf16.gmra.mrb[0].mxu0 %v5163
      %v5252 = vpop.f32.mrb[0].mxu0
      %v5253 = vadd.f32 0.0, %v5252
      %v5254 = vpop.f32.mrb[0].mxu0
      %v5255 = vpop.f32.mrb[0].mxu0
      %v5256 = vadd.f32 0.0, %v5255
      %v5257 = vpop.f32.mrb[0].mxu0
      %5258 = vmatprep.mubr.bf16.mxu0 0
      %5259 = vmatmul.mubr.bf16.gmra.mrb[0].mxu0 %v5166
      %v5260 = vpop.f32.mrb[0].mxu0
      %v5261 = vadd.f32 0.0, %v5260
      %v5262 = vpop.f32.mrb[0].mxu0
      %v5263 = vpop.f32.mrb[0].mxu0
      %v5264 = vadd.f32 0.0, %v5263
      %v5265 = vpop.f32.mrb[0].mxu0
      %5266 = vmatprep.mubr.bf16.mxu0 0
      %5267 = vmatmul.mubr.bf16.gmra.mrb[0].mxu0 %v5169
      %v5268 = vpop.f32.mrb[0].mxu0
      %v5269 = vadd.f32 0.0, %v5268
      %v5270 = vpop.f32.mrb[0].mxu0
      %v5271 = vpop.f32.mrb[0].mxu0
      %v5272 = vadd.f32 0.0, %v5271
      %v5273 = vpop.f32.mrb[0].mxu0
      %5274 = vmatprep.mubr.bf16.mxu0 0
      %5275 = vmatmul.mubr.bf16.gmra.mrb[0].mxu0 %v5172
      %v5276 = vpop.f32.mrb[0].mxu0
      %v5277 = vadd.f32 0.0, %v5276
      %v5278 = vpop.f32.mrb[0].mxu0
      %v5279 = vpop.f32.mrb[0].mxu0
      %v5280 = vadd.f32 0.0, %v5279
      %v5281 = vpop.f32.mrb[0].mxu0
      %5282 = vmatprep.mubr.bf16.mxu0 0
      %5283 = vmatmul.mubr.bf16.gmra.mrb[0].mxu0 %v5175
      %v5284 = vpop.f32.mrb[0].mxu0
      %v5285 = vadd.f32 0.0, %v5284
      %v5286 = vpop.f32.mrb[0].mxu0
      %v5287 = vpop.f32.mrb[0].mxu0
      %v5288 = vadd.f32 0.0, %v5287
      %v5289 = vpop.f32.mrb[0].mxu0
      %5290 = vmatprep.mubr.bf16.mxu0 0
      %5291 = vmatmul.mubr.bf16.gmra.mrb[0].mxu0 %v5178
      %v5292 = vpop.f32.mrb[0].mxu0
      %v5293 = vadd.f32 0.0, %v5292
      %v5294 = vpop.f32.mrb[0].mxu0
      %v5295 = vpop.f32.mrb[0].mxu0
      %v5296 = vadd.f32 0.0, %v5295
      %v5297 = vpop.f32.mrb[0].mxu0
      %5298 = vmatprep.mubr.bf16.mxu0 0
      %5299 = vmatmul.mubr.bf16.gmra.mrb[0].mxu0 %v5181
      %v5300 = vpop.f32.mrb[0].mxu0
      %v5301 = vadd.f32 0.0, %v5300
      %v5302 = vpop.f32.mrb[0].mxu0
      %v5303 = vpop.f32.mrb[0].mxu0
      %v5304 = vadd.f32 0.0, %v5303
      %v5305 = vpop.f32.mrb[0].mxu0
      %5306 = vmatprep.mubr.bf16.mxu0 0
      %5307 = vmatmul.mubr.bf16.gmra.mrb[0].mxu0 %v5184
      %v5308 = vpop.f32.mrb[0].mxu0
      %v5309 = vadd.f32 0.0, %v5308
      %v5310 = vpop.f32.mrb[0].mxu0
      %v5311 = vpop.f32.mrb[0].mxu0
      %v5312 = vadd.f32 0.0, %v5311
      %v5313 = vpop.f32.mrb[0].mxu0
      %5314 = vdwg.mxu0
      %v5315 = vadd.f32 %v3866, %v5221
      %v5316 = vadd.f32 %v3867, %v5224
      %v5317 = vadd.f32 %v3868, %v5229
      %v5318 = vadd.f32 %v3869, %v5232
      %v5319 = vadd.f32 %v3870, %v5237
      %v5320 = vadd.f32 %v3871, %v5240
      %v5321 = vadd.f32 %v3872, %v5245
      %v5322 = vadd.f32 %v3873, %v5248
      %v5323 = vadd.f32 %v3874, %v5253
      %v5324 = vadd.f32 %v3875, %v5256
      %v5325 = vadd.f32 %v3876, %v5261
      %v5326 = vadd.f32 %v3877, %v5264
      %v5327 = vadd.f32 %v3878, %v5269
      %v5328 = vadd.f32 %v3879, %v5272
      %v5329 = vadd.f32 %v3880, %v5277
      %v5330 = vadd.f32 %v3881, %v5280
      %v5331 = vadd.f32 %v3882, %v5285
      %v5332 = vadd.f32 %v3883, %v5288
      %v5333 = vadd.f32 %v3884, %v5293
      %v5334 = vadd.f32 %v3885, %v5296
      %v5335 = vadd.f32 %v3886, %v5301
      %v5336 = vadd.f32 %v3887, %v5304
      %v5337 = vadd.f32 %v3888, %v5309
      %v5338 = vadd.f32 %v3889, %v5312
      %v5339 = vld [vmem:[%s3 + $0xb] sm:$0x1]
      %v5340 = vlaneseq
      %v5341 = vshrl.u32 %v5340, 7
      %v5342 = vsub.s32 0, %v5341
      %v5343 = vrot.slane %v5339, %v5342
      %v5344 = vadd.f32 %v5315, %v5343
      %v5345 = vadd.f32 %v5316, %v5343
      %v5346 = vadd.f32 %v5317, %v5343
      %v5347 = vadd.f32 %v5318, %v5343
      %v5348 = vadd.f32 %v5319, %v5343
      %v5349 = vadd.f32 %v5320, %v5343
      %v5350 = vadd.f32 %v5321, %v5343
      %v5351 = vadd.f32 %v5322, %v5343
      %v5352 = vadd.f32 %v5323, %v5343
      %v5353 = vadd.f32 %v5324, %v5343
      %v5354 = vadd.f32 %v5325, %v5343
      %v5355 = vadd.f32 %v5326, %v5343
      %v5356 = vadd.f32 %v5327, %v5343
      %v5357 = vadd.f32 %v5328, %v5343
      %v5358 = vadd.f32 %v5329, %v5343
      %v5359 = vadd.f32 %v5330, %v5343
      %v5360 = vadd.f32 %v5331, %v5343
      %v5361 = vadd.f32 %v5332, %v5343
      %v5362 = vadd.f32 %v5333, %v5343
      %v5363 = vadd.f32 %v5334, %v5343
      %v5364 = vadd.f32 %v5335, %v5343
      %v5365 = vadd.f32 %v5336, %v5343
      %v5366 = vadd.f32 %v5337, %v5343
      %v5367 = vadd.f32 %v5338, %v5343
      %v5368 = vld [vmem:[%s3 + $0xc] sm:$0x1]
      %v5369 = vld [vmem:[%s3 + $0xd] sm:$0x1]
      %v5370 = vsel %vm946, %v5344, 0.0
      %5371 = vadd.xlane.f32.xlu0 %v5370
      %v5372 = vpop.xlane.xlu0 %5371
      %v5373 = vsel %vm946, %v5345, 0.0
      %5374 = vadd.xlane.f32.xlu0 %v5373
      %v5375 = vpop.xlane.xlu0 %5374
      %v5376 = vsel %vm946, %v5346, 0.0
      %5377 = vadd.xlane.f32.xlu0 %v5376
      %v5378 = vpop.xlane.xlu0 %5377
      %v5379 = vsel %vm946, %v5347, 0.0
      %5380 = vadd.xlane.f32.xlu0 %v5379
      %v5381 = vpop.xlane.xlu0 %5380
      %v5382 = vsel %vm946, %v5348, 0.0
      %5383 = vadd.xlane.f32.xlu0 %v5382
      %v5384 = vpop.xlane.xlu0 %5383
      %v5385 = vsel %vm946, %v5349, 0.0
      %5386 = vadd.xlane.f32.xlu0 %v5385
      %v5387 = vpop.xlane.xlu0 %5386
      %v5388 = vsel %vm946, %v5350, 0.0
      %5389 = vadd.xlane.f32.xlu0 %v5388
      %v5390 = vpop.xlane.xlu0 %5389
      %v5391 = vsel %vm946, %v5351, 0.0
      %5392 = vadd.xlane.f32.xlu0 %v5391
      %v5393 = vpop.xlane.xlu0 %5392
      %v5394 = vsel %vm946, %v5352, 0.0
      %5395 = vadd.xlane.f32.xlu0 %v5394
      %v5396 = vpop.xlane.xlu0 %5395
      %v5397 = vsel %vm946, %v5353, 0.0
      %5398 = vadd.xlane.f32.xlu0 %v5397
      %v5399 = vpop.xlane.xlu0 %5398
      %v5400 = vsel %vm946, %v5354, 0.0
      %5401 = vadd.xlane.f32.xlu0 %v5400
      %v5402 = vpop.xlane.xlu0 %5401
      %v5403 = vsel %vm946, %v5355, 0.0
      %5404 = vadd.xlane.f32.xlu0 %v5403
      %v5405 = vpop.xlane.xlu0 %5404
      %v5406 = vsel %vm946, %v5356, 0.0
      %5407 = vadd.xlane.f32.xlu0 %v5406
      %v5408 = vpop.xlane.xlu0 %5407
      %v5409 = vsel %vm946, %v5357, 0.0
      %5410 = vadd.xlane.f32.xlu0 %v5409
      %v5411 = vpop.xlane.xlu0 %5410
      %v5412 = vsel %vm946, %v5358, 0.0
      %5413 = vadd.xlane.f32.xlu0 %v5412
      %v5414 = vpop.xlane.xlu0 %5413
      %v5415 = vsel %vm946, %v5359, 0.0
      %5416 = vadd.xlane.f32.xlu0 %v5415
      %v5417 = vpop.xlane.xlu0 %5416
      %v5418 = vsel %vm946, %v5360, 0.0
      %5419 = vadd.xlane.f32.xlu0 %v5418
      %v5420 = vpop.xlane.xlu0 %5419
      %v5421 = vsel %vm946, %v5361, 0.0
      %5422 = vadd.xlane.f32.xlu0 %v5421
      %v5423 = vpop.xlane.xlu0 %5422
      %v5424 = vsel %vm946, %v5362, 0.0
      %5425 = vadd.xlane.f32.xlu0 %v5424
      %v5426 = vpop.xlane.xlu0 %5425
      %v5427 = vsel %vm946, %v5363, 0.0
      %5428 = vadd.xlane.f32.xlu0 %v5427
      %v5429 = vpop.xlane.xlu0 %5428
      %v5430 = vsel %vm946, %v5364, 0.0
      %5431 = vadd.xlane.f32.xlu0 %v5430
      %v5432 = vpop.xlane.xlu0 %5431
      %v5433 = vsel %vm946, %v5365, 0.0
      %5434 = vadd.xlane.f32.xlu0 %v5433
      %v5435 = vpop.xlane.xlu0 %5434
      %v5436 = vsel %vm946, %v5366, 0.0
      %5437 = vadd.xlane.f32.xlu0 %v5436
      %v5438 = vpop.xlane.xlu0 %5437
      %v5439 = vsel %vm946, %v5367, 0.0
      %5440 = vadd.xlane.f32.xlu0 %v5439
      %v5441 = vpop.xlane.xlu0 %5440
      %v5442 = vmul.f32 %v5372, %v1019
      %v5443 = vmul.f32 %v5375, %v1019
      %v5444 = vmul.f32 %v5378, %v1019
      %v5445 = vmul.f32 %v5381, %v1019
      %v5446 = vmul.f32 %v5384, %v1019
      %v5447 = vmul.f32 %v5387, %v1019
      %v5448 = vmul.f32 %v5390, %v1019
      %v5449 = vmul.f32 %v5393, %v1019
      %v5450 = vmul.f32 %v5396, %v1019
      %v5451 = vmul.f32 %v5399, %v1019
      %v5452 = vmul.f32 %v5402, %v1019
      %v5453 = vmul.f32 %v5405, %v1019
      %v5454 = vmul.f32 %v5408, %v1019
      %v5455 = vmul.f32 %v5411, %v1019
      %v5456 = vmul.f32 %v5414, %v1019
      %v5457 = vmul.f32 %v5417, %v1019
      %v5458 = vmul.f32 %v5420, %v1019
      %v5459 = vmul.f32 %v5423, %v1019
      %v5460 = vmul.f32 %v5426, %v1019
      %v5461 = vmul.f32 %v5429, %v1019
      %v5462 = vmul.f32 %v5432, %v1019
      %v5463 = vmul.f32 %v5435, %v1019
      %v5464 = vmul.f32 %v5438, %v1019
      %v5465 = vmul.f32 %v5441, %v1019
      %v5466 = vsub.f32 %v5344, %v5442
      %v5467 = vsub.f32 %v5345, %v5443
      %v5468 = vsub.f32 %v5346, %v5444
      %v5469 = vsub.f32 %v5347, %v5445
      %v5470 = vsub.f32 %v5348, %v5446
      %v5471 = vsub.f32 %v5349, %v5447
      %v5472 = vsub.f32 %v5350, %v5448
      %v5473 = vsub.f32 %v5351, %v5449
      %v5474 = vsub.f32 %v5352, %v5450
      %v5475 = vsub.f32 %v5353, %v5451
      %v5476 = vsub.f32 %v5354, %v5452
      %v5477 = vsub.f32 %v5355, %v5453
      %v5478 = vsub.f32 %v5356, %v5454
      %v5479 = vsub.f32 %v5357, %v5455
      %v5480 = vsub.f32 %v5358, %v5456
      %v5481 = vsub.f32 %v5359, %v5457
      %v5482 = vsub.f32 %v5360, %v5458
      %v5483 = vsub.f32 %v5361, %v5459
      %v5484 = vsub.f32 %v5362, %v5460
      %v5485 = vsub.f32 %v5363, %v5461
      %v5486 = vsub.f32 %v5364, %v5462
      %v5487 = vsub.f32 %v5365, %v5463
      %v5488 = vsub.f32 %v5366, %v5464
      %v5489 = vsub.f32 %v5367, %v5465
      %v5490 = vmul.f32 %v5466, %v5466
      %v5491 = vmul.f32 %v5467, %v5467
      %v5492 = vmul.f32 %v5468, %v5468
      %v5493 = vmul.f32 %v5469, %v5469
      %v5494 = vmul.f32 %v5470, %v5470
      %v5495 = vmul.f32 %v5471, %v5471
      %v5496 = vmul.f32 %v5472, %v5472
      %v5497 = vmul.f32 %v5473, %v5473
      %v5498 = vmul.f32 %v5474, %v5474
      %v5499 = vmul.f32 %v5475, %v5475
      %v5500 = vmul.f32 %v5476, %v5476
      %v5501 = vmul.f32 %v5477, %v5477
      %v5502 = vmul.f32 %v5478, %v5478
      %v5503 = vmul.f32 %v5479, %v5479
      %v5504 = vmul.f32 %v5480, %v5480
      %v5505 = vmul.f32 %v5481, %v5481
      %v5506 = vmul.f32 %v5482, %v5482
      %v5507 = vmul.f32 %v5483, %v5483
      %v5508 = vmul.f32 %v5484, %v5484
      %v5509 = vmul.f32 %v5485, %v5485
      %v5510 = vmul.f32 %v5486, %v5486
      %v5511 = vmul.f32 %v5487, %v5487
      %v5512 = vmul.f32 %v5488, %v5488
      %v5513 = vmul.f32 %v5489, %v5489
      %v5514 = vsel %vm946, %v5490, 0.0
      %5515 = vadd.xlane.f32.xlu0 %v5514
      %v5516 = vpop.xlane.xlu0 %5515
      %v5517 = vsel %vm946, %v5491, 0.0
      %5518 = vadd.xlane.f32.xlu0 %v5517
      %v5519 = vpop.xlane.xlu0 %5518
      %v5520 = vsel %vm946, %v5492, 0.0
      %5521 = vadd.xlane.f32.xlu0 %v5520
      %v5522 = vpop.xlane.xlu0 %5521
      %v5523 = vsel %vm946, %v5493, 0.0
      %5524 = vadd.xlane.f32.xlu0 %v5523
      %v5525 = vpop.xlane.xlu0 %5524
      %v5526 = vsel %vm946, %v5494, 0.0
      %5527 = vadd.xlane.f32.xlu0 %v5526
      %v5528 = vpop.xlane.xlu0 %5527
      %v5529 = vsel %vm946, %v5495, 0.0
      %5530 = vadd.xlane.f32.xlu0 %v5529
      %v5531 = vpop.xlane.xlu0 %5530
      %v5532 = vsel %vm946, %v5496, 0.0
      %5533 = vadd.xlane.f32.xlu0 %v5532
      %v5534 = vpop.xlane.xlu0 %5533
      %v5535 = vsel %vm946, %v5497, 0.0
      %5536 = vadd.xlane.f32.xlu0 %v5535
      %v5537 = vpop.xlane.xlu0 %5536
      %v5538 = vsel %vm946, %v5498, 0.0
      %5539 = vadd.xlane.f32.xlu0 %v5538
      %v5540 = vpop.xlane.xlu0 %5539
      %v5541 = vsel %vm946, %v5499, 0.0
      %5542 = vadd.xlane.f32.xlu0 %v5541
      %v5543 = vpop.xlane.xlu0 %5542
      %v5544 = vsel %vm946, %v5500, 0.0
      %5545 = vadd.xlane.f32.xlu0 %v5544
      %v5546 = vpop.xlane.xlu0 %5545
      %v5547 = vsel %vm946, %v5501, 0.0
      %5548 = vadd.xlane.f32.xlu0 %v5547
      %v5549 = vpop.xlane.xlu0 %5548
      %v5550 = vsel %vm946, %v5502, 0.0
      %5551 = vadd.xlane.f32.xlu0 %v5550
      %v5552 = vpop.xlane.xlu0 %5551
      %v5553 = vsel %vm946, %v5503, 0.0
      %5554 = vadd.xlane.f32.xlu0 %v5553
      %v5555 = vpop.xlane.xlu0 %5554
      %v5556 = vsel %vm946, %v5504, 0.0
      %5557 = vadd.xlane.f32.xlu0 %v5556
      %v5558 = vpop.xlane.xlu0 %5557
      %v5559 = vsel %vm946, %v5505, 0.0
      %5560 = vadd.xlane.f32.xlu0 %v5559
      %v5561 = vpop.xlane.xlu0 %5560
      %v5562 = vsel %vm946, %v5506, 0.0
      %5563 = vadd.xlane.f32.xlu0 %v5562
      %v5564 = vpop.xlane.xlu0 %5563
      %v5565 = vsel %vm946, %v5507, 0.0
      %5566 = vadd.xlane.f32.xlu0 %v5565
      %v5567 = vpop.xlane.xlu0 %5566
      %v5568 = vsel %vm946, %v5508, 0.0
      %5569 = vadd.xlane.f32.xlu0 %v5568
      %v5570 = vpop.xlane.xlu0 %5569
      %v5571 = vsel %vm946, %v5509, 0.0
      %5572 = vadd.xlane.f32.xlu0 %v5571
      %v5573 = vpop.xlane.xlu0 %5572
      %v5574 = vsel %vm946, %v5510, 0.0
      %5575 = vadd.xlane.f32.xlu0 %v5574
      %v5576 = vpop.xlane.xlu0 %5575
      %v5577 = vsel %vm946, %v5511, 0.0
      %5578 = vadd.xlane.f32.xlu0 %v5577
      %v5579 = vpop.xlane.xlu0 %5578
      %v5580 = vsel %vm946, %v5512, 0.0
      %5581 = vadd.xlane.f32.xlu0 %v5580
      %v5582 = vpop.xlane.xlu0 %5581
      %v5583 = vsel %vm946, %v5513, 0.0
      %5584 = vadd.xlane.f32.xlu0 %v5583
      %v5585 = vpop.xlane.xlu0 %5584
      %v5586 = vmul.f32 %v5516, %v1019
      %v5587 = vmul.f32 %v5519, %v1019
      %v5588 = vmul.f32 %v5522, %v1019
      %v5589 = vmul.f32 %v5525, %v1019
      %v5590 = vmul.f32 %v5528, %v1019
      %v5591 = vmul.f32 %v5531, %v1019
      %v5592 = vmul.f32 %v5534, %v1019
      %v5593 = vmul.f32 %v5537, %v1019
      %v5594 = vmul.f32 %v5540, %v1019
      %v5595 = vmul.f32 %v5543, %v1019
      %v5596 = vmul.f32 %v5546, %v1019
      %v5597 = vmul.f32 %v5549, %v1019
      %v5598 = vmul.f32 %v5552, %v1019
      %v5599 = vmul.f32 %v5555, %v1019
      %v5600 = vmul.f32 %v5558, %v1019
      %v5601 = vmul.f32 %v5561, %v1019
      %v5602 = vmul.f32 %v5564, %v1019
      %v5603 = vmul.f32 %v5567, %v1019
      %v5604 = vmul.f32 %v5570, %v1019
      %v5605 = vmul.f32 %v5573, %v1019
      %v5606 = vmul.f32 %v5576, %v1019
      %v5607 = vmul.f32 %v5579, %v1019
      %v5608 = vmul.f32 %v5582, %v1019
      %v5609 = vmul.f32 %v5585, %v1019
      %v5610 = vadd.f32 %v5586, 1e-05
      %v5611 = vadd.f32 %v5587, 1e-05
      %v5612 = vadd.f32 %v5588, 1e-05
      %v5613 = vadd.f32 %v5589, 1e-05
      %v5614 = vadd.f32 %v5590, 1e-05
      %v5615 = vadd.f32 %v5591, 1e-05
      %v5616 = vadd.f32 %v5592, 1e-05
      %v5617 = vadd.f32 %v5593, 1e-05
      %v5618 = vadd.f32 %v5594, 1e-05
      %v5619 = vadd.f32 %v5595, 1e-05
      %v5620 = vadd.f32 %v5596, 1e-05
      %v5621 = vadd.f32 %v5597, 1e-05
      %v5622 = vadd.f32 %v5598, 1e-05
      %v5623 = vadd.f32 %v5599, 1e-05
      %v5624 = vadd.f32 %v5600, 1e-05
      %v5625 = vadd.f32 %v5601, 1e-05
      %v5626 = vadd.f32 %v5602, 1e-05
      %v5627 = vadd.f32 %v5603, 1e-05
      %v5628 = vadd.f32 %v5604, 1e-05
      %v5629 = vadd.f32 %v5605, 1e-05
      %v5630 = vadd.f32 %v5606, 1e-05
      %v5631 = vadd.f32 %v5607, 1e-05
      %v5632 = vadd.f32 %v5608, 1e-05
      %v5633 = vadd.f32 %v5609, 1e-05
      %v5634 = vrsqrt.pop %v5610
      %v5635 = vrsqrt.pop %v5611
      %v5636 = vrsqrt.pop %v5612
      %v5637 = vrsqrt.pop %v5613
      %v5638 = vrsqrt.pop %v5614
      %v5639 = vrsqrt.pop %v5615
      %v5640 = vrsqrt.pop %v5616
      %v5641 = vrsqrt.pop %v5617
      %v5642 = vrsqrt.pop %v5618
      %v5643 = vrsqrt.pop %v5619
      %v5644 = vrsqrt.pop %v5620
      %v5645 = vrsqrt.pop %v5621
      %v5646 = vrsqrt.pop %v5622
      %v5647 = vrsqrt.pop %v5623
      %v5648 = vrsqrt.pop %v5624
      %v5649 = vrsqrt.pop %v5625
      %v5650 = vrsqrt.pop %v5626
      %v5651 = vrsqrt.pop %v5627
      %v5652 = vrsqrt.pop %v5628
      %v5653 = vrsqrt.pop %v5629
      %v5654 = vrsqrt.pop %v5630
      %v5655 = vrsqrt.pop %v5631
      %v5656 = vrsqrt.pop %v5632
      %v5657 = vrsqrt.pop %v5633
      %v5658 = vmul.f32 %v5466, %v5634
      %v5659 = vmul.f32 %v5467, %v5635
      %v5660 = vmul.f32 %v5468, %v5636
      %v5661 = vmul.f32 %v5469, %v5637
      %v5662 = vmul.f32 %v5470, %v5638
      %v5663 = vmul.f32 %v5471, %v5639
      %v5664 = vmul.f32 %v5472, %v5640
      %v5665 = vmul.f32 %v5473, %v5641
      %v5666 = vmul.f32 %v5474, %v5642
      %v5667 = vmul.f32 %v5475, %v5643
      %v5668 = vmul.f32 %v5476, %v5644
      %v5669 = vmul.f32 %v5477, %v5645
      %v5670 = vmul.f32 %v5478, %v5646
      %v5671 = vmul.f32 %v5479, %v5647
      %v5672 = vmul.f32 %v5480, %v5648
      %v5673 = vmul.f32 %v5481, %v5649
      %v5674 = vmul.f32 %v5482, %v5650
      %v5675 = vmul.f32 %v5483, %v5651
      %v5676 = vmul.f32 %v5484, %v5652
      %v5677 = vmul.f32 %v5485, %v5653
      %v5678 = vmul.f32 %v5486, %v5654
      %v5679 = vmul.f32 %v5487, %v5655
      %v5680 = vmul.f32 %v5488, %v5656
      %v5681 = vmul.f32 %v5489, %v5657
      %v5682 = vlaneseq
      %v5683 = vshrl.u32 %v5682, 7
      %v5684 = vsub.s32 0, %v5683
      %v5685 = vrot.slane %v5368, %v5684
      %v5686 = vmul.f32 %v5658, %v5685
      %v5687 = vmul.f32 %v5659, %v5685
      %v5688 = vmul.f32 %v5660, %v5685
      %v5689 = vmul.f32 %v5661, %v5685
      %v5690 = vmul.f32 %v5662, %v5685
      %v5691 = vmul.f32 %v5663, %v5685
      %v5692 = vmul.f32 %v5664, %v5685
      %v5693 = vmul.f32 %v5665, %v5685
      %v5694 = vmul.f32 %v5666, %v5685
      %v5695 = vmul.f32 %v5667, %v5685
      %v5696 = vmul.f32 %v5668, %v5685
      %v5697 = vmul.f32 %v5669, %v5685
      %v5698 = vmul.f32 %v5670, %v5685
      %v5699 = vmul.f32 %v5671, %v5685
      %v5700 = vmul.f32 %v5672, %v5685
      %v5701 = vmul.f32 %v5673, %v5685
      %v5702 = vmul.f32 %v5674, %v5685
      %v5703 = vmul.f32 %v5675, %v5685
      %v5704 = vmul.f32 %v5676, %v5685
      %v5705 = vmul.f32 %v5677, %v5685
      %v5706 = vmul.f32 %v5678, %v5685
      %v5707 = vmul.f32 %v5679, %v5685
      %v5708 = vmul.f32 %v5680, %v5685
      %v5709 = vmul.f32 %v5681, %v5685
      %v5710 = vlaneseq
      %v5711 = vshrl.u32 %v5710, 7
      %v5712 = vsub.s32 0, %v5711
      %v5713 = vrot.slane %v5369, %v5712
      %v5714 = vadd.f32 %v5686, %v5713
      %v5715 = vadd.f32 %v5687, %v5713
      %v5716 = vadd.f32 %v5688, %v5713
      %v5717 = vadd.f32 %v5689, %v5713
      %v5718 = vadd.f32 %v5690, %v5713
      %v5719 = vadd.f32 %v5691, %v5713
      %v5720 = vadd.f32 %v5692, %v5713
      %v5721 = vadd.f32 %v5693, %v5713
      %v5722 = vadd.f32 %v5694, %v5713
      %v5723 = vadd.f32 %v5695, %v5713
      %v5724 = vadd.f32 %v5696, %v5713
      %v5725 = vadd.f32 %v5697, %v5713
      %v5726 = vadd.f32 %v5698, %v5713
      %v5727 = vadd.f32 %v5699, %v5713
      %v5728 = vadd.f32 %v5700, %v5713
      %v5729 = vadd.f32 %v5701, %v5713
      %v5730 = vadd.f32 %v5702, %v5713
      %v5731 = vadd.f32 %v5703, %v5713
      %v5732 = vadd.f32 %v5704, %v5713
      %v5733 = vadd.f32 %v5705, %v5713
      %v5734 = vadd.f32 %v5706, %v5713
      %v5735 = vadd.f32 %v5707, %v5713
      %v5736 = vadd.f32 %v5708, %v5713
      %v5737 = vadd.f32 %v5709, %v5713
      %s5738 = scalar_lea.vmem %s5, 16
      %v5739 = vld [vmem:[%s5738] sm:$0xf]
      %v5740 = vld [vmem:[%s5738 + $0x4] sm:$0xf]
      %v5741 = vld [vmem:[%s5738 + $0x8] sm:$0xf]
      %v5742 = vld [vmem:[%s5738 + $0xc] sm:$0xf]
      %v5743 = vpack.c.bf16 %v5715, %v5714
      %v5744 = vpack.c.bf16 %v5717, %v5716
      %v5745 = vpack.c.bf16 %v5719, %v5718
      %v5746 = vpack.c.bf16 %v5721, %v5720
      %v5747 = vpack.c.bf16 %v5723, %v5722
      %v5748 = vpack.c.bf16 %v5725, %v5724
      %v5749 = vpack.c.bf16 %v5727, %v5726
      %v5750 = vpack.c.bf16 %v5729, %v5728
      %v5751 = vpack.c.bf16 %v5731, %v5730
      %v5752 = vpack.c.bf16 %v5733, %v5732
      %v5753 = vpack.c.bf16 %v5735, %v5734
      %v5754 = vpack.c.bf16 %v5737, %v5736
      %v5759 = vunpack.c.l.b16 %v5739
      %v5760 = vunpack.c.l.b16 %v5740
      %v5761 = vunpack.c.l.b16 %v5741
      %v5762 = vunpack.c.l.b16 %v5742
      %v5763 = vpack.c.b16 %v5760, %v5759
      %v5764 = vpack.c.b16 %v5762, %v5761
      %v5768 = vsel %vm946, %v5743, 0
      %v5771 = vsel %vm946, %v5744, 0
      %v5774 = vsel %vm946, %v5745, 0
      %v5777 = vsel %vm946, %v5746, 0
      %v5780 = vsel %vm946, %v5747, 0
      %v5783 = vsel %vm946, %v5748, 0
      %v5786 = vsel %vm946, %v5749, 0
      %v5789 = vsel %vm946, %v5750, 0
      %v5792 = vsel %vm946, %v5751, 0
      %v5795 = vsel %vm946, %v5752, 0
      %v5798 = vsel %vm946, %v5753, 0
      %v5801 = vsel %vm946, %v5754, 0
      %5803 = vmatprep.subr.bf16.mxu0 0
      %5804 = vmatpush1.bf16.msra.mxu0 %v5763
      %5805 = vmatprep.subr.bf16.mxu0 0
      %5806 = vmatpush1.bf16.msra.mxu0 %v5764
      %5807 = vmatprep.subr.bf16.mxu0 0
      %5808 = vmatpush1.bf16.msra.mxu0 0
      %5809 = vmatprep.subr.bf16.mxu0 0
      %5810 = vmatpush1.bf16.msra.mxu0 0
      %5811 = vmatprep.subr.bf16.mxu0 0
      %5812 = vmatpush1.bf16.msra.mxu0 0
      %5813 = vmatprep.subr.bf16.mxu0 0
      %5814 = vmatpush1.bf16.msra.mxu0 0
      %5815 = vmatprep.subr.bf16.mxu0 0
      %5816 = vmatpush1.bf16.msra.mxu0 0
      %5817 = vmatprep.subr.bf16.mxu0 0
      %5818 = vmatpush1.bf16.msra.mxu0 0
      %5819 = vmatprep.subr.bf16.mxu0 0
      %5820 = vmatpush1.bf16.msra.mxu0 0
      %5821 = vmatprep.subr.bf16.mxu0 0
      %5822 = vmatpush1.bf16.msra.mxu0 0
      %5823 = vmatprep.subr.bf16.mxu0 0
      %5824 = vmatpush1.bf16.msra.mxu0 0
      %5825 = vmatprep.subr.bf16.mxu0 0
      %5826 = vmatpush1.bf16.msra.mxu0 0
      %5827 = vmatprep.subr.bf16.mxu0 0
      %5828 = vmatpush1.bf16.msra.mxu0 0
      %5829 = vmatprep.subr.bf16.mxu0 0
      %5830 = vmatpush1.bf16.msra.mxu0 0
      %5831 = vmatprep.subr.bf16.mxu0 0
      %5832 = vmatpush1.bf16.msra.mxu0 0
      %5833 = vmatprep.subr.bf16.mxu0 0
      %5834 = vmatpush1.bf16.msra.mxu0 0
      %5835 = vmatprep.mubr.bf16.mxu0 0
      %5836 = vmatmul.mubr.bf16.gmra.mrb[0].mxu0 %v5768
      %v5837 = vpop.f32.mrb[0].mxu0
      %v5838 = vadd.f32 0.0, %v5837
      %v5839 = vpop.f32.mrb[0].mxu0
      %v5840 = vpop.f32.mrb[0].mxu0
      %v5841 = vadd.f32 0.0, %v5840
      %v5842 = vpop.f32.mrb[0].mxu0
      %5843 = vmatprep.mubr.bf16.mxu0 0
      %5844 = vmatmul.mubr.bf16.gmra.mrb[0].mxu0 %v5771
      %v5845 = vpop.f32.mrb[0].mxu0
      %v5846 = vadd.f32 0.0, %v5845
      %v5847 = vpop.f32.mrb[0].mxu0
      %v5848 = vpop.f32.mrb[0].mxu0
      %v5849 = vadd.f32 0.0, %v5848
      %v5850 = vpop.f32.mrb[0].mxu0
      %5851 = vmatprep.mubr.bf16.mxu0 0
      %5852 = vmatmul.mubr.bf16.gmra.mrb[0].mxu0 %v5774
      %v5853 = vpop.f32.mrb[0].mxu0
      %v5854 = vadd.f32 0.0, %v5853
      %v5855 = vpop.f32.mrb[0].mxu0
      %v5856 = vpop.f32.mrb[0].mxu0
      %v5857 = vadd.f32 0.0, %v5856
      %v5858 = vpop.f32.mrb[0].mxu0
      %5859 = vmatprep.mubr.bf16.mxu0 0
      %5860 = vmatmul.mubr.bf16.gmra.mrb[0].mxu0 %v5777
      %v5861 = vpop.f32.mrb[0].mxu0
      %v5862 = vadd.f32 0.0, %v5861
      %v5863 = vpop.f32.mrb[0].mxu0
      %v5864 = vpop.f32.mrb[0].mxu0
      %v5865 = vadd.f32 0.0, %v5864
      %v5866 = vpop.f32.mrb[0].mxu0
      %5867 = vmatprep.mubr.bf16.mxu0 0
      %5868 = vmatmul.mubr.bf16.gmra.mrb[0].mxu0 %v5780
      %v5869 = vpop.f32.mrb[0].mxu0
      %v5870 = vadd.f32 0.0, %v5869
      %v5871 = vpop.f32.mrb[0].mxu0
      %v5872 = vpop.f32.mrb[0].mxu0
      %v5873 = vadd.f32 0.0, %v5872
      %v5874 = vpop.f32.mrb[0].mxu0
      %5875 = vmatprep.mubr.bf16.mxu0 0
      %5876 = vmatmul.mubr.bf16.gmra.mrb[0].mxu0 %v5783
      %v5877 = vpop.f32.mrb[0].mxu0
      %v5878 = vadd.f32 0.0, %v5877
      %v5879 = vpop.f32.mrb[0].mxu0
      %v5880 = vpop.f32.mrb[0].mxu0
      %v5881 = vadd.f32 0.0, %v5880
      %v5882 = vpop.f32.mrb[0].mxu0
      %5883 = vmatprep.mubr.bf16.mxu0 0
      %5884 = vmatmul.mubr.bf16.gmra.mrb[0].mxu0 %v5786
      %v5885 = vpop.f32.mrb[0].mxu0
      %v5886 = vadd.f32 0.0, %v5885
      %v5887 = vpop.f32.mrb[0].mxu0
      %v5888 = vpop.f32.mrb[0].mxu0
      %v5889 = vadd.f32 0.0, %v5888
      %v5890 = vpop.f32.mrb[0].mxu0
      %5891 = vmatprep.mubr.bf16.mxu0 0
      %5892 = vmatmul.mubr.bf16.gmra.mrb[0].mxu0 %v5789
      %v5893 = vpop.f32.mrb[0].mxu0
      %v5894 = vadd.f32 0.0, %v5893
      %v5895 = vpop.f32.mrb[0].mxu0
      %v5896 = vpop.f32.mrb[0].mxu0
      %v5897 = vadd.f32 0.0, %v5896
      %v5898 = vpop.f32.mrb[0].mxu0
      %5899 = vmatprep.mubr.bf16.mxu0 0
      %5900 = vmatmul.mubr.bf16.gmra.mrb[0].mxu0 %v5792
      %v5901 = vpop.f32.mrb[0].mxu0
      %v5902 = vadd.f32 0.0, %v5901
      %v5903 = vpop.f32.mrb[0].mxu0
      %v5904 = vpop.f32.mrb[0].mxu0
      %v5905 = vadd.f32 0.0, %v5904
      %v5906 = vpop.f32.mrb[0].mxu0
      %5907 = vmatprep.mubr.bf16.mxu0 0
      %5908 = vmatmul.mubr.bf16.gmra.mrb[0].mxu0 %v5795
      %v5909 = vpop.f32.mrb[0].mxu0
      %v5910 = vadd.f32 0.0, %v5909
      %v5911 = vpop.f32.mrb[0].mxu0
      %v5912 = vpop.f32.mrb[0].mxu0
      %v5913 = vadd.f32 0.0, %v5912
      %v5914 = vpop.f32.mrb[0].mxu0
      %5915 = vmatprep.mubr.bf16.mxu0 0
      %5916 = vmatmul.mubr.bf16.gmra.mrb[0].mxu0 %v5798
      %v5917 = vpop.f32.mrb[0].mxu0
      %v5918 = vadd.f32 0.0, %v5917
      %v5919 = vpop.f32.mrb[0].mxu0
      %v5920 = vpop.f32.mrb[0].mxu0
      %v5921 = vadd.f32 0.0, %v5920
      %v5922 = vpop.f32.mrb[0].mxu0
      %5923 = vmatprep.mubr.bf16.mxu0 0
      %5924 = vmatmul.mubr.bf16.gmra.mrb[0].mxu0 %v5801
      %v5925 = vpop.f32.mrb[0].mxu0
      %v5926 = vadd.f32 0.0, %v5925
      %v5927 = vpop.f32.mrb[0].mxu0
      %v5928 = vpop.f32.mrb[0].mxu0
      %v5929 = vadd.f32 0.0, %v5928
      %v5930 = vpop.f32.mrb[0].mxu0
      %5931 = vdwg.mxu0
      %v5932 = vpack.c.bf16 %v5841, %v5838
      %v5933 = vpack.c.bf16 %v5849, %v5846
      %v5934 = vpack.c.bf16 %v5857, %v5854
      %v5935 = vpack.c.bf16 %v5865, %v5862
      %v5936 = vpack.c.bf16 %v5873, %v5870
      %v5937 = vpack.c.bf16 %v5881, %v5878
      %v5938 = vpack.c.bf16 %v5889, %v5886
      %v5939 = vpack.c.bf16 %v5897, %v5894
      %v5940 = vpack.c.bf16 %v5905, %v5902
      %v5941 = vpack.c.bf16 %v5913, %v5910
      %v5942 = vpack.c.bf16 %v5921, %v5918
      %v5943 = vpack.c.bf16 %v5929, %v5926
      %5956 = vrot.lane.b32.xlu0 %v5932, 96
      %v5957 = vpop.permute.xlu0 %5956
      %5958 = vrot.lane.b32.xlu0 %v5933, 96
      %v5959 = vpop.permute.xlu0 %5958
      %5960 = vrot.lane.b32.xlu0 %v5934, 96
      %v5961 = vpop.permute.xlu0 %5960
      %5962 = vrot.lane.b32.xlu0 %v5935, 96
      %v5963 = vpop.permute.xlu0 %5962
      %5964 = vrot.lane.b32.xlu0 %v5936, 96
      %v5965 = vpop.permute.xlu0 %5964
      %5966 = vrot.lane.b32.xlu0 %v5937, 96
      %v5967 = vpop.permute.xlu0 %5966
      %5968 = vrot.lane.b32.xlu0 %v5938, 96
      %v5969 = vpop.permute.xlu0 %5968
      %5970 = vrot.lane.b32.xlu0 %v5939, 96
      %v5971 = vpop.permute.xlu0 %5970
      %5972 = vrot.lane.b32.xlu0 %v5940, 96
      %v5973 = vpop.permute.xlu0 %5972
      %5974 = vrot.lane.b32.xlu0 %v5941, 96
      %v5975 = vpop.permute.xlu0 %5974
      %5976 = vrot.lane.b32.xlu0 %v5942, 96
      %v5977 = vpop.permute.xlu0 %5976
      %5978 = vrot.lane.b32.xlu0 %v5943, 96
      %v5979 = vpop.permute.xlu0 %5978
      %v5981 = vsel %vm2072, %v5932, 0
      %v5984 = vsel %vm2072, %v5933, 0
      %v5987 = vsel %vm2072, %v5934, 0
      %v5990 = vsel %vm2072, %v5935, 0
      %v5993 = vsel %vm2072, %v5936, 0
      %v5996 = vsel %vm2072, %v5937, 0
      %v5999 = vsel %vm2072, %v5938, 0
      %v6002 = vsel %vm2072, %v5939, 0
      %v6005 = vsel %vm2072, %v5940, 0
      %v6008 = vsel %vm2072, %v5941, 0
      %v6011 = vsel %vm2072, %v5942, 0
      %v6014 = vsel %vm2072, %v5943, 0
      %v6017 = vsel %vm2072, %v5957, 0
      %v6020 = vsel %vm2072, %v5959, 0
      %v6023 = vsel %vm2072, %v5961, 0
      %v6026 = vsel %vm2072, %v5963, 0
      %v6029 = vsel %vm2072, %v5965, 0
      %v6032 = vsel %vm2072, %v5967, 0
      %v6035 = vsel %vm2072, %v5969, 0
      %v6038 = vsel %vm2072, %v5971, 0
      %v6041 = vsel %vm2072, %v5973, 0
      %v6044 = vsel %vm2072, %v5975, 0
      %v6047 = vsel %vm2072, %v5977, 0
      %v6050 = vsel %vm2072, %v5979, 0
      %6052 = vmatprep.subr.bf16.mxu0 0
      %6053 = vmatpush1.bf16.xpose.msra.mxu0 %v6017
      %6054 = vmatprep.subr.bf16.mxu0 0
      %6055 = vmatpush1.bf16.xpose.msra.mxu0 %v6020
      %6056 = vmatprep.subr.bf16.mxu0 0
      %6057 = vmatpush1.bf16.xpose.msra.mxu0 %v6023
      %6058 = vmatprep.subr.bf16.mxu0 0
      %6059 = vmatpush1.bf16.xpose.msra.mxu0 %v6026
      %6060 = vmatprep.subr.bf16.mxu0 0
      %6061 = vmatpush1.bf16.xpose.msra.mxu0 %v6029
      %6062 = vmatprep.subr.bf16.mxu0 0
      %6063 = vmatpush1.bf16.xpose.msra.mxu0 %v6032
      %6064 = vmatprep.subr.bf16.mxu0 0
      %6065 = vmatpush1.bf16.xpose.msra.mxu0 %v6035
      %6066 = vmatprep.subr.bf16.mxu0 0
      %6067 = vmatpush1.bf16.xpose.msra.mxu0 %v6038
      %6068 = vmatprep.subr.bf16.mxu0 0
      %6069 = vmatpush1.bf16.xpose.msra.mxu0 %v6041
      %6070 = vmatprep.subr.bf16.mxu0 0
      %6071 = vmatpush1.bf16.xpose.msra.mxu0 %v6044
      %6072 = vmatprep.subr.bf16.mxu0 0
      %6073 = vmatpush1.bf16.xpose.msra.mxu0 %v6047
      %6074 = vmatprep.subr.bf16.mxu0 0
      %6075 = vmatpush1.bf16.xpose.msra.mxu0 %v6050
      %6076 = vmatprep.subr.bf16.mxu0 0
      %6077 = vmatpush1.bf16.xpose.msra.mxu0 0
      %6078 = vmatprep.subr.bf16.mxu0 0
      %6079 = vmatpush1.bf16.xpose.msra.mxu0 0
      %6080 = vmatprep.subr.bf16.mxu0 0
      %6081 = vmatpush1.bf16.xpose.msra.mxu0 0
      %6082 = vmatprep.subr.bf16.mxu0 0
      %6083 = vmatpush1.bf16.xpose.msra.mxu0 0
      %6084 = vmatprep.mubr.bf16.mxu0 0
      %6085 = vmatmul.mubr.bf16.gmra.mrb[0].mxu0 %v5981
      %v6086 = vpop.f32.mrb[0].mxu0
      %v6087 = vadd.f32 %v1413, %v6086
      %v6088 = vpop.f32.mrb[0].mxu0
      %v6089 = vadd.f32 %v1414, %v6088
      %v6090 = vpop.f32.mrb[0].mxu0
      %v6091 = vadd.f32 %v1415, %v6090
      %v6092 = vpop.f32.mrb[0].mxu0
      %v6093 = vadd.f32 %v1416, %v6092
      %6094 = vmatprep.mubr.bf16.mxu0 0
      %6095 = vmatmul.mubr.bf16.gmra.mrb[0].mxu0 %v5984
      %v6096 = vpop.f32.mrb[0].mxu0
      %v6097 = vadd.f32 %v1417, %v6096
      %v6098 = vpop.f32.mrb[0].mxu0
      %v6099 = vadd.f32 %v1418, %v6098
      %v6100 = vpop.f32.mrb[0].mxu0
      %v6101 = vadd.f32 %v1419, %v6100
      %v6102 = vpop.f32.mrb[0].mxu0
      %v6103 = vadd.f32 %v1420, %v6102
      %6104 = vmatprep.mubr.bf16.mxu0 0
      %6105 = vmatmul.mubr.bf16.gmra.mrb[0].mxu0 %v5987
      %v6106 = vpop.f32.mrb[0].mxu0
      %v6107 = vadd.f32 %v1421, %v6106
      %v6108 = vpop.f32.mrb[0].mxu0
      %v6109 = vadd.f32 %v1422, %v6108
      %v6110 = vpop.f32.mrb[0].mxu0
      %v6111 = vadd.f32 %v1423, %v6110
      %v6112 = vpop.f32.mrb[0].mxu0
      %v6113 = vadd.f32 %v1424, %v6112
      %6114 = vmatprep.mubr.bf16.mxu0 0
      %6115 = vmatmul.mubr.bf16.gmra.mrb[0].mxu0 %v5990
      %v6116 = vpop.f32.mrb[0].mxu0
      %v6117 = vadd.f32 %v1425, %v6116
      %v6118 = vpop.f32.mrb[0].mxu0
      %v6119 = vadd.f32 %v1426, %v6118
      %v6120 = vpop.f32.mrb[0].mxu0
      %v6121 = vadd.f32 %v1427, %v6120
      %v6122 = vpop.f32.mrb[0].mxu0
      %v6123 = vadd.f32 %v1428, %v6122
      %6124 = vmatprep.mubr.bf16.mxu0 0
      %6125 = vmatmul.mubr.bf16.gmra.mrb[0].mxu0 %v5993
      %v6126 = vpop.f32.mrb[0].mxu0
      %v6127 = vadd.f32 %v1429, %v6126
      %v6128 = vpop.f32.mrb[0].mxu0
      %v6129 = vadd.f32 %v1430, %v6128
      %v6130 = vpop.f32.mrb[0].mxu0
      %v6131 = vadd.f32 %v1431, %v6130
      %v6132 = vpop.f32.mrb[0].mxu0
      %v6133 = vadd.f32 %v1432, %v6132
      %6134 = vmatprep.mubr.bf16.mxu0 0
      %6135 = vmatmul.mubr.bf16.gmra.mrb[0].mxu0 %v5996
      %v6136 = vpop.f32.mrb[0].mxu0
      %v6137 = vadd.f32 %v1433, %v6136
      %v6138 = vpop.f32.mrb[0].mxu0
      %v6139 = vadd.f32 %v1434, %v6138
      %v6140 = vpop.f32.mrb[0].mxu0
      %v6141 = vadd.f32 %v1435, %v6140
      %v6142 = vpop.f32.mrb[0].mxu0
      %v6143 = vadd.f32 %v1436, %v6142
      %6144 = vmatprep.mubr.bf16.mxu0 0
      %6145 = vmatmul.mubr.bf16.gmra.mrb[0].mxu0 %v5999
      %v6146 = vpop.f32.mrb[0].mxu0
      %v6147 = vadd.f32 %v1437, %v6146
      %v6148 = vpop.f32.mrb[0].mxu0
      %v6149 = vadd.f32 %v1438, %v6148
      %v6150 = vpop.f32.mrb[0].mxu0
      %v6151 = vadd.f32 %v1439, %v6150
      %v6152 = vpop.f32.mrb[0].mxu0
      %v6153 = vadd.f32 %v1440, %v6152
      %6154 = vmatprep.mubr.bf16.mxu0 0
      %6155 = vmatmul.mubr.bf16.gmra.mrb[0].mxu0 %v6002
      %v6156 = vpop.f32.mrb[0].mxu0
      %v6157 = vadd.f32 %v1441, %v6156
      %v6158 = vpop.f32.mrb[0].mxu0
      %v6159 = vadd.f32 %v1442, %v6158
      %v6160 = vpop.f32.mrb[0].mxu0
      %v6161 = vadd.f32 %v1443, %v6160
      %v6162 = vpop.f32.mrb[0].mxu0
      %v6163 = vadd.f32 %v1444, %v6162
      %6164 = vmatprep.mubr.bf16.mxu0 0
      %6165 = vmatmul.mubr.bf16.gmra.mrb[0].mxu0 %v6005
      %v6166 = vpop.f32.mrb[0].mxu0
      %v6167 = vadd.f32 %v1445, %v6166
      %v6168 = vpop.f32.mrb[0].mxu0
      %v6169 = vadd.f32 %v1446, %v6168
      %v6170 = vpop.f32.mrb[0].mxu0
      %v6171 = vadd.f32 %v1447, %v6170
      %v6172 = vpop.f32.mrb[0].mxu0
      %v6173 = vadd.f32 %v1448, %v6172
      %6174 = vmatprep.mubr.bf16.mxu0 0
      %6175 = vmatmul.mubr.bf16.gmra.mrb[0].mxu0 %v6008
      %v6176 = vpop.f32.mrb[0].mxu0
      %v6177 = vadd.f32 %v1449, %v6176
      %v6178 = vpop.f32.mrb[0].mxu0
      %v6179 = vadd.f32 %v1450, %v6178
      %v6180 = vpop.f32.mrb[0].mxu0
      %v6181 = vadd.f32 %v1451, %v6180
      %v6182 = vpop.f32.mrb[0].mxu0
      %v6183 = vadd.f32 %v1452, %v6182
      %6184 = vmatprep.mubr.bf16.mxu0 0
      %6185 = vmatmul.mubr.bf16.gmra.mrb[0].mxu0 %v6011
      %v6186 = vpop.f32.mrb[0].mxu0
      %v6187 = vadd.f32 %v1453, %v6186
      %v6188 = vpop.f32.mrb[0].mxu0
      %v6189 = vadd.f32 %v1454, %v6188
      %v6190 = vpop.f32.mrb[0].mxu0
      %v6191 = vadd.f32 %v1455, %v6190
      %v6192 = vpop.f32.mrb[0].mxu0
      %v6193 = vadd.f32 %v1456, %v6192
      %6194 = vmatprep.mubr.bf16.mxu0 0
      %6195 = vmatmul.mubr.bf16.gmra.mrb[0].mxu0 %v6014
      %v6196 = vpop.f32.mrb[0].mxu0
      %v6197 = vadd.f32 %v1457, %v6196
      %v6198 = vpop.f32.mrb[0].mxu0
      %v6199 = vadd.f32 %v1458, %v6198
      %v6200 = vpop.f32.mrb[0].mxu0
      %v6201 = vadd.f32 %v1459, %v6200
      %v6202 = vpop.f32.mrb[0].mxu0
      %v6203 = vadd.f32 %v1460, %v6202
      %6204 = vdwg.mxu0
      %v6205 = vsel %vm360, %v6089, -inf
      %v6206 = vmax.f32 %v6087, %v6205
      %6207 = vmax.xlane.f32.xlu0 %v6206
      %v6208 = vpop.xlane.xlu0 %6207
      %v6209 = vsel %vm360, %v6093, -inf
      %v6210 = vmax.f32 %v6091, %v6209
      %6211 = vmax.xlane.f32.xlu0 %v6210
      %v6212 = vpop.xlane.xlu0 %6211
      %v6213 = vsel %vm360, %v6099, -inf
      %v6214 = vmax.f32 %v6097, %v6213
      %6215 = vmax.xlane.f32.xlu0 %v6214
      %v6216 = vpop.xlane.xlu0 %6215
      %v6217 = vsel %vm360, %v6103, -inf
      %v6218 = vmax.f32 %v6101, %v6217
      %6219 = vmax.xlane.f32.xlu0 %v6218
      %v6220 = vpop.xlane.xlu0 %6219
      %v6221 = vsel %vm360, %v6109, -inf
      %v6222 = vmax.f32 %v6107, %v6221
      %6223 = vmax.xlane.f32.xlu0 %v6222
      %v6224 = vpop.xlane.xlu0 %6223
      %v6225 = vsel %vm360, %v6113, -inf
      %v6226 = vmax.f32 %v6111, %v6225
      %6227 = vmax.xlane.f32.xlu0 %v6226
      %v6228 = vpop.xlane.xlu0 %6227
      %v6229 = vsel %vm360, %v6119, -inf
      %v6230 = vmax.f32 %v6117, %v6229
      %6231 = vmax.xlane.f32.xlu0 %v6230
      %v6232 = vpop.xlane.xlu0 %6231
      %v6233 = vsel %vm360, %v6123, -inf
      %v6234 = vmax.f32 %v6121, %v6233
      %6235 = vmax.xlane.f32.xlu0 %v6234
      %v6236 = vpop.xlane.xlu0 %6235
      %v6237 = vsel %vm360, %v6129, -inf
      %v6238 = vmax.f32 %v6127, %v6237
      %6239 = vmax.xlane.f32.xlu0 %v6238
      %v6240 = vpop.xlane.xlu0 %6239
      %v6241 = vsel %vm360, %v6133, -inf
      %v6242 = vmax.f32 %v6131, %v6241
      %6243 = vmax.xlane.f32.xlu0 %v6242
      %v6244 = vpop.xlane.xlu0 %6243
      %v6245 = vsel %vm360, %v6139, -inf
      %v6246 = vmax.f32 %v6137, %v6245
      %6247 = vmax.xlane.f32.xlu0 %v6246
      %v6248 = vpop.xlane.xlu0 %6247
      %v6249 = vsel %vm360, %v6143, -inf
      %v6250 = vmax.f32 %v6141, %v6249
      %6251 = vmax.xlane.f32.xlu0 %v6250
      %v6252 = vpop.xlane.xlu0 %6251
      %v6253 = vsel %vm360, %v6149, -inf
      %v6254 = vmax.f32 %v6147, %v6253
      %6255 = vmax.xlane.f32.xlu0 %v6254
      %v6256 = vpop.xlane.xlu0 %6255
      %v6257 = vsel %vm360, %v6153, -inf
      %v6258 = vmax.f32 %v6151, %v6257
      %6259 = vmax.xlane.f32.xlu0 %v6258
      %v6260 = vpop.xlane.xlu0 %6259
      %v6261 = vsel %vm360, %v6159, -inf
      %v6262 = vmax.f32 %v6157, %v6261
      %6263 = vmax.xlane.f32.xlu0 %v6262
      %v6264 = vpop.xlane.xlu0 %6263
      %v6265 = vsel %vm360, %v6163, -inf
      %v6266 = vmax.f32 %v6161, %v6265
      %6267 = vmax.xlane.f32.xlu0 %v6266
      %v6268 = vpop.xlane.xlu0 %6267
      %v6269 = vsel %vm360, %v6169, -inf
      %v6270 = vmax.f32 %v6167, %v6269
      %6271 = vmax.xlane.f32.xlu0 %v6270
      %v6272 = vpop.xlane.xlu0 %6271
      %v6273 = vsel %vm360, %v6173, -inf
      %v6274 = vmax.f32 %v6171, %v6273
      %6275 = vmax.xlane.f32.xlu0 %v6274
      %v6276 = vpop.xlane.xlu0 %6275
      %v6277 = vsel %vm360, %v6179, -inf
      %v6278 = vmax.f32 %v6177, %v6277
      %6279 = vmax.xlane.f32.xlu0 %v6278
      %v6280 = vpop.xlane.xlu0 %6279
      %v6281 = vsel %vm360, %v6183, -inf
      %v6282 = vmax.f32 %v6181, %v6281
      %6283 = vmax.xlane.f32.xlu0 %v6282
      %v6284 = vpop.xlane.xlu0 %6283
      %v6285 = vsel %vm360, %v6189, -inf
      %v6286 = vmax.f32 %v6187, %v6285
      %6287 = vmax.xlane.f32.xlu0 %v6286
      %v6288 = vpop.xlane.xlu0 %6287
      %v6289 = vsel %vm360, %v6193, -inf
      %v6290 = vmax.f32 %v6191, %v6289
      %6291 = vmax.xlane.f32.xlu0 %v6290
      %v6292 = vpop.xlane.xlu0 %6291
      %v6293 = vsel %vm360, %v6199, -inf
      %v6294 = vmax.f32 %v6197, %v6293
      %6295 = vmax.xlane.f32.xlu0 %v6294
      %v6296 = vpop.xlane.xlu0 %6295
      %v6297 = vsel %vm360, %v6203, -inf
      %v6298 = vmax.f32 %v6201, %v6297
      %6299 = vmax.xlane.f32.xlu0 %v6298
      %v6300 = vpop.xlane.xlu0 %6299
      %v6301 = vsub.f32 %v6087, %v6208
      %v6302 = vsub.f32 %v6089, %v6208
      %v6303 = vsub.f32 %v6091, %v6212
      %v6304 = vsub.f32 %v6093, %v6212
      %v6305 = vsub.f32 %v6097, %v6216
      %v6306 = vsub.f32 %v6099, %v6216
      %v6307 = vsub.f32 %v6101, %v6220
      %v6308 = vsub.f32 %v6103, %v6220
      %v6309 = vsub.f32 %v6107, %v6224
      %v6310 = vsub.f32 %v6109, %v6224
      %v6311 = vsub.f32 %v6111, %v6228
      %v6312 = vsub.f32 %v6113, %v6228
      %v6313 = vsub.f32 %v6117, %v6232
      %v6314 = vsub.f32 %v6119, %v6232
      %v6315 = vsub.f32 %v6121, %v6236
      %v6316 = vsub.f32 %v6123, %v6236
      %v6317 = vsub.f32 %v6127, %v6240
      %v6318 = vsub.f32 %v6129, %v6240
      %v6319 = vsub.f32 %v6131, %v6244
      %v6320 = vsub.f32 %v6133, %v6244
      %v6321 = vsub.f32 %v6137, %v6248
      %v6322 = vsub.f32 %v6139, %v6248
      %v6323 = vsub.f32 %v6141, %v6252
      %v6324 = vsub.f32 %v6143, %v6252
      %v6325 = vsub.f32 %v6147, %v6256
      %v6326 = vsub.f32 %v6149, %v6256
      %v6327 = vsub.f32 %v6151, %v6260
      %v6328 = vsub.f32 %v6153, %v6260
      %v6329 = vsub.f32 %v6157, %v6264
      %v6330 = vsub.f32 %v6159, %v6264
      %v6331 = vsub.f32 %v6161, %v6268
      %v6332 = vsub.f32 %v6163, %v6268
      %v6333 = vsub.f32 %v6167, %v6272
      %v6334 = vsub.f32 %v6169, %v6272
      %v6335 = vsub.f32 %v6171, %v6276
      %v6336 = vsub.f32 %v6173, %v6276
      %v6337 = vsub.f32 %v6177, %v6280
      %v6338 = vsub.f32 %v6179, %v6280
      %v6339 = vsub.f32 %v6181, %v6284
      %v6340 = vsub.f32 %v6183, %v6284
      %v6341 = vsub.f32 %v6187, %v6288
      %v6342 = vsub.f32 %v6189, %v6288
      %v6343 = vsub.f32 %v6191, %v6292
      %v6344 = vsub.f32 %v6193, %v6292
      %v6345 = vsub.f32 %v6197, %v6296
      %v6346 = vsub.f32 %v6199, %v6296
      %v6347 = vsub.f32 %v6201, %v6300
      %v6348 = vsub.f32 %v6203, %v6300
      %v6349 = vmul.f32 %v6301, 1.442695
      %v6350 = vpow.pop %v6349
      %v6351 = vmul.f32 %v6302, 1.442695
      %v6352 = vpow.pop %v6351
      %v6353 = vmul.f32 %v6303, 1.442695
      %v6354 = vpow.pop %v6353
      %v6355 = vmul.f32 %v6304, 1.442695
      %v6356 = vpow.pop %v6355
      %v6357 = vmul.f32 %v6305, 1.442695
      %v6358 = vpow.pop %v6357
      %v6359 = vmul.f32 %v6306, 1.442695
      %v6360 = vpow.pop %v6359
      %v6361 = vmul.f32 %v6307, 1.442695
      %v6362 = vpow.pop %v6361
      %v6363 = vmul.f32 %v6308, 1.442695
      %v6364 = vpow.pop %v6363
      %v6365 = vmul.f32 %v6309, 1.442695
      %v6366 = vpow.pop %v6365
      %v6367 = vmul.f32 %v6310, 1.442695
      %v6368 = vpow.pop %v6367
      %v6369 = vmul.f32 %v6311, 1.442695
      %v6370 = vpow.pop %v6369
      %v6371 = vmul.f32 %v6312, 1.442695
      %v6372 = vpow.pop %v6371
      %v6373 = vmul.f32 %v6313, 1.442695
      %v6374 = vpow.pop %v6373
      %v6375 = vmul.f32 %v6314, 1.442695
      %v6376 = vpow.pop %v6375
      %v6377 = vmul.f32 %v6315, 1.442695
      %v6378 = vpow.pop %v6377
      %v6379 = vmul.f32 %v6316, 1.442695
      %v6380 = vpow.pop %v6379
      %v6381 = vmul.f32 %v6317, 1.442695
      %v6382 = vpow.pop %v6381
      %v6383 = vmul.f32 %v6318, 1.442695
      %v6384 = vpow.pop %v6383
      %v6385 = vmul.f32 %v6319, 1.442695
      %v6386 = vpow.pop %v6385
      %v6387 = vmul.f32 %v6320, 1.442695
      %v6388 = vpow.pop %v6387
      %v6389 = vmul.f32 %v6321, 1.442695
      %v6390 = vpow.pop %v6389
      %v6391 = vmul.f32 %v6322, 1.442695
      %v6392 = vpow.pop %v6391
      %v6393 = vmul.f32 %v6323, 1.442695
      %v6394 = vpow.pop %v6393
      %v6395 = vmul.f32 %v6324, 1.442695
      %v6396 = vpow.pop %v6395
      %v6397 = vmul.f32 %v6325, 1.442695
      %v6398 = vpow.pop %v6397
      %v6399 = vmul.f32 %v6326, 1.442695
      %v6400 = vpow.pop %v6399
      %v6401 = vmul.f32 %v6327, 1.442695
      %v6402 = vpow.pop %v6401
      %v6403 = vmul.f32 %v6328, 1.442695
      %v6404 = vpow.pop %v6403
      %v6405 = vmul.f32 %v6329, 1.442695
      %v6406 = vpow.pop %v6405
      %v6407 = vmul.f32 %v6330, 1.442695
      %v6408 = vpow.pop %v6407
      %v6409 = vmul.f32 %v6331, 1.442695
      %v6410 = vpow.pop %v6409
      %v6411 = vmul.f32 %v6332, 1.442695
      %v6412 = vpow.pop %v6411
      %v6413 = vmul.f32 %v6333, 1.442695
      %v6414 = vpow.pop %v6413
      %v6415 = vmul.f32 %v6334, 1.442695
      %v6416 = vpow.pop %v6415
      %v6417 = vmul.f32 %v6335, 1.442695
      %v6418 = vpow.pop %v6417
      %v6419 = vmul.f32 %v6336, 1.442695
      %v6420 = vpow.pop %v6419
      %v6421 = vmul.f32 %v6337, 1.442695
      %v6422 = vpow.pop %v6421
      %v6423 = vmul.f32 %v6338, 1.442695
      %v6424 = vpow.pop %v6423
      %v6425 = vmul.f32 %v6339, 1.442695
      %v6426 = vpow.pop %v6425
      %v6427 = vmul.f32 %v6340, 1.442695
      %v6428 = vpow.pop %v6427
      %v6429 = vmul.f32 %v6341, 1.442695
      %v6430 = vpow.pop %v6429
      %v6431 = vmul.f32 %v6342, 1.442695
      %v6432 = vpow.pop %v6431
      %v6433 = vmul.f32 %v6343, 1.442695
      %v6434 = vpow.pop %v6433
      %v6435 = vmul.f32 %v6344, 1.442695
      %v6436 = vpow.pop %v6435
      %v6437 = vmul.f32 %v6345, 1.442695
      %v6438 = vpow.pop %v6437
      %v6439 = vmul.f32 %v6346, 1.442695
      %v6440 = vpow.pop %v6439
      %v6441 = vmul.f32 %v6347, 1.442695
      %v6442 = vpow.pop %v6441
      %v6443 = vmul.f32 %v6348, 1.442695
      %v6444 = vpow.pop %v6443
      %v6445 = vsel %vm360, %v6352, 0.0
      %v6446 = vadd.f32 %v6350, %v6445
      %6447 = vadd.xlane.f32.xlu0 %v6446
      %v6448 = vpop.xlane.xlu0 %6447
      %v6449 = vsel %vm360, %v6356, 0.0
      %v6450 = vadd.f32 %v6354, %v6449
      %6451 = vadd.xlane.f32.xlu0 %v6450
      %v6452 = vpop.xlane.xlu0 %6451
      %v6453 = vsel %vm360, %v6360, 0.0
      %v6454 = vadd.f32 %v6358, %v6453
      %6455 = vadd.xlane.f32.xlu0 %v6454
      %v6456 = vpop.xlane.xlu0 %6455
      %v6457 = vsel %vm360, %v6364, 0.0
      %v6458 = vadd.f32 %v6362, %v6457
      %6459 = vadd.xlane.f32.xlu0 %v6458
      %v6460 = vpop.xlane.xlu0 %6459
      %v6461 = vsel %vm360, %v6368, 0.0
      %v6462 = vadd.f32 %v6366, %v6461
      %6463 = vadd.xlane.f32.xlu0 %v6462
      %v6464 = vpop.xlane.xlu0 %6463
      %v6465 = vsel %vm360, %v6372, 0.0
      %v6466 = vadd.f32 %v6370, %v6465
      %6467 = vadd.xlane.f32.xlu0 %v6466
      %v6468 = vpop.xlane.xlu0 %6467
      %v6469 = vsel %vm360, %v6376, 0.0
      %v6470 = vadd.f32 %v6374, %v6469
      %6471 = vadd.xlane.f32.xlu0 %v6470
      %v6472 = vpop.xlane.xlu0 %6471
      %v6473 = vsel %vm360, %v6380, 0.0
      %v6474 = vadd.f32 %v6378, %v6473
      %6475 = vadd.xlane.f32.xlu0 %v6474
      %v6476 = vpop.xlane.xlu0 %6475
      %v6477 = vsel %vm360, %v6384, 0.0
      %v6478 = vadd.f32 %v6382, %v6477
      %6479 = vadd.xlane.f32.xlu0 %v6478
      %v6480 = vpop.xlane.xlu0 %6479
      %v6481 = vsel %vm360, %v6388, 0.0
      %v6482 = vadd.f32 %v6386, %v6481
      %6483 = vadd.xlane.f32.xlu0 %v6482
      %v6484 = vpop.xlane.xlu0 %6483
      %v6485 = vsel %vm360, %v6392, 0.0
      %v6486 = vadd.f32 %v6390, %v6485
      %6487 = vadd.xlane.f32.xlu0 %v6486
      %v6488 = vpop.xlane.xlu0 %6487
      %v6489 = vsel %vm360, %v6396, 0.0
      %v6490 = vadd.f32 %v6394, %v6489
      %6491 = vadd.xlane.f32.xlu0 %v6490
      %v6492 = vpop.xlane.xlu0 %6491
      %v6493 = vsel %vm360, %v6400, 0.0
      %v6494 = vadd.f32 %v6398, %v6493
      %6495 = vadd.xlane.f32.xlu0 %v6494
      %v6496 = vpop.xlane.xlu0 %6495
      %v6497 = vsel %vm360, %v6404, 0.0
      %v6498 = vadd.f32 %v6402, %v6497
      %6499 = vadd.xlane.f32.xlu0 %v6498
      %v6500 = vpop.xlane.xlu0 %6499
      %v6501 = vsel %vm360, %v6408, 0.0
      %v6502 = vadd.f32 %v6406, %v6501
      %6503 = vadd.xlane.f32.xlu0 %v6502
      %v6504 = vpop.xlane.xlu0 %6503
      %v6505 = vsel %vm360, %v6412, 0.0
      %v6506 = vadd.f32 %v6410, %v6505
      %6507 = vadd.xlane.f32.xlu0 %v6506
      %v6508 = vpop.xlane.xlu0 %6507
      %v6509 = vsel %vm360, %v6416, 0.0
      %v6510 = vadd.f32 %v6414, %v6509
      %6511 = vadd.xlane.f32.xlu0 %v6510
      %v6512 = vpop.xlane.xlu0 %6511
      %v6513 = vsel %vm360, %v6420, 0.0
      %v6514 = vadd.f32 %v6418, %v6513
      %6515 = vadd.xlane.f32.xlu0 %v6514
      %v6516 = vpop.xlane.xlu0 %6515
      %v6517 = vsel %vm360, %v6424, 0.0
      %v6518 = vadd.f32 %v6422, %v6517
      %6519 = vadd.xlane.f32.xlu0 %v6518
      %v6520 = vpop.xlane.xlu0 %6519
      %v6521 = vsel %vm360, %v6428, 0.0
      %v6522 = vadd.f32 %v6426, %v6521
      %6523 = vadd.xlane.f32.xlu0 %v6522
      %v6524 = vpop.xlane.xlu0 %6523
      %v6525 = vsel %vm360, %v6432, 0.0
      %v6526 = vadd.f32 %v6430, %v6525
      %6527 = vadd.xlane.f32.xlu0 %v6526
      %v6528 = vpop.xlane.xlu0 %6527
      %v6529 = vsel %vm360, %v6436, 0.0
      %v6530 = vadd.f32 %v6434, %v6529
      %6531 = vadd.xlane.f32.xlu0 %v6530
      %v6532 = vpop.xlane.xlu0 %6531
      %v6533 = vsel %vm360, %v6440, 0.0
      %v6534 = vadd.f32 %v6438, %v6533
      %6535 = vadd.xlane.f32.xlu0 %v6534
      %v6536 = vpop.xlane.xlu0 %6535
      %v6537 = vsel %vm360, %v6444, 0.0
      %v6538 = vadd.f32 %v6442, %v6537
      %6539 = vadd.xlane.f32.xlu0 %v6538
      %v6540 = vpop.xlane.xlu0 %6539
      %v6541 = vrcp.pop %v6448
      %v6542 = vrcp.pop %v6452
      %v6543 = vrcp.pop %v6456
      %v6544 = vrcp.pop %v6460
      %v6545 = vrcp.pop %v6464
      %v6546 = vrcp.pop %v6468
      %v6547 = vrcp.pop %v6472
      %v6548 = vrcp.pop %v6476
      %v6549 = vrcp.pop %v6480
      %v6550 = vrcp.pop %v6484
      %v6551 = vrcp.pop %v6488
      %v6552 = vrcp.pop %v6492
      %v6553 = vrcp.pop %v6496
      %v6554 = vrcp.pop %v6500
      %v6555 = vrcp.pop %v6504
      %v6556 = vrcp.pop %v6508
      %v6557 = vrcp.pop %v6512
      %v6558 = vrcp.pop %v6516
      %v6559 = vrcp.pop %v6520
      %v6560 = vrcp.pop %v6524
      %v6561 = vrcp.pop %v6528
      %v6562 = vrcp.pop %v6532
      %v6563 = vrcp.pop %v6536
      %v6564 = vrcp.pop %v6540
      %v6565 = vmul.f32 %v6350, %v6541
      %v6566 = vmul.f32 %v6352, %v6541
      %v6567 = vmul.f32 %v6354, %v6542
      %v6568 = vmul.f32 %v6356, %v6542
      %v6569 = vmul.f32 %v6358, %v6543
      %v6570 = vmul.f32 %v6360, %v6543
      %v6571 = vmul.f32 %v6362, %v6544
      %v6572 = vmul.f32 %v6364, %v6544
      %v6573 = vmul.f32 %v6366, %v6545
      %v6574 = vmul.f32 %v6368, %v6545
      %v6575 = vmul.f32 %v6370, %v6546
      %v6576 = vmul.f32 %v6372, %v6546
      %v6577 = vmul.f32 %v6374, %v6547
      %v6578 = vmul.f32 %v6376, %v6547
      %v6579 = vmul.f32 %v6378, %v6548
      %v6580 = vmul.f32 %v6380, %v6548
      %v6581 = vmul.f32 %v6382, %v6549
      %v6582 = vmul.f32 %v6384, %v6549
      %v6583 = vmul.f32 %v6386, %v6550
      %v6584 = vmul.f32 %v6388, %v6550
      %v6585 = vmul.f32 %v6390, %v6551
      %v6586 = vmul.f32 %v6392, %v6551
      %v6587 = vmul.f32 %v6394, %v6552
      %v6588 = vmul.f32 %v6396, %v6552
      %v6589 = vmul.f32 %v6398, %v6553
      %v6590 = vmul.f32 %v6400, %v6553
      %v6591 = vmul.f32 %v6402, %v6554
      %v6592 = vmul.f32 %v6404, %v6554
      %v6593 = vmul.f32 %v6406, %v6555
      %v6594 = vmul.f32 %v6408, %v6555
      %v6595 = vmul.f32 %v6410, %v6556
      %v6596 = vmul.f32 %v6412, %v6556
      %v6597 = vmul.f32 %v6414, %v6557
      %v6598 = vmul.f32 %v6416, %v6557
      %v6599 = vmul.f32 %v6418, %v6558
      %v6600 = vmul.f32 %v6420, %v6558
      %v6601 = vmul.f32 %v6422, %v6559
      %v6602 = vmul.f32 %v6424, %v6559
      %v6603 = vmul.f32 %v6426, %v6560
      %v6604 = vmul.f32 %v6428, %v6560
      %v6605 = vmul.f32 %v6430, %v6561
      %v6606 = vmul.f32 %v6432, %v6561
      %v6607 = vmul.f32 %v6434, %v6562
      %v6608 = vmul.f32 %v6436, %v6562
      %v6609 = vmul.f32 %v6438, %v6563
      %v6610 = vmul.f32 %v6440, %v6563
      %v6611 = vmul.f32 %v6442, %v6564
      %v6612 = vmul.f32 %v6444, %v6564
      %v6613 = vpack.c.bf16 %v6567, %v6565
      %v6614 = vpack.c.bf16 %v6568, %v6566
      %v6615 = vpack.c.bf16 %v6571, %v6569
      %v6616 = vpack.c.bf16 %v6572, %v6570
      %v6617 = vpack.c.bf16 %v6575, %v6573
      %v6618 = vpack.c.bf16 %v6576, %v6574
      %v6619 = vpack.c.bf16 %v6579, %v6577
      %v6620 = vpack.c.bf16 %v6580, %v6578
      %v6621 = vpack.c.bf16 %v6583, %v6581
      %v6622 = vpack.c.bf16 %v6584, %v6582
      %v6623 = vpack.c.bf16 %v6587, %v6585
      %v6624 = vpack.c.bf16 %v6588, %v6586
      %v6625 = vpack.c.bf16 %v6591, %v6589
      %v6626 = vpack.c.bf16 %v6592, %v6590
      %v6627 = vpack.c.bf16 %v6595, %v6593
      %v6628 = vpack.c.bf16 %v6596, %v6594
      %v6629 = vpack.c.bf16 %v6599, %v6597
      %v6630 = vpack.c.bf16 %v6600, %v6598
      %v6631 = vpack.c.bf16 %v6603, %v6601
      %v6632 = vpack.c.bf16 %v6604, %v6602
      %v6633 = vpack.c.bf16 %v6607, %v6605
      %v6634 = vpack.c.bf16 %v6608, %v6606
      %v6635 = vpack.c.bf16 %v6611, %v6609
      %v6636 = vpack.c.bf16 %v6612, %v6610
      %6637 = vrot.lane.b32.xlu0 %v5932, 112
      %v6638 = vpop.permute.xlu0 %6637
      %6639 = vrot.lane.b32.xlu0 %v5933, 112
      %v6640 = vpop.permute.xlu0 %6639
      %6641 = vrot.lane.b32.xlu0 %v5934, 112
      %v6642 = vpop.permute.xlu0 %6641
      %6643 = vrot.lane.b32.xlu0 %v5935, 112
      %v6644 = vpop.permute.xlu0 %6643
      %6645 = vrot.lane.b32.xlu0 %v5936, 112
      %v6646 = vpop.permute.xlu0 %6645
      %6647 = vrot.lane.b32.xlu0 %v5937, 112
      %v6648 = vpop.permute.xlu0 %6647
      %6649 = vrot.lane.b32.xlu0 %v5938, 112
      %v6650 = vpop.permute.xlu0 %6649
      %6651 = vrot.lane.b32.xlu0 %v5939, 112
      %v6652 = vpop.permute.xlu0 %6651
      %6653 = vrot.lane.b32.xlu0 %v5940, 112
      %v6654 = vpop.permute.xlu0 %6653
      %6655 = vrot.lane.b32.xlu0 %v5941, 112
      %v6656 = vpop.permute.xlu0 %6655
      %6657 = vrot.lane.b32.xlu0 %v5942, 112
      %v6658 = vpop.permute.xlu0 %6657
      %6659 = vrot.lane.b32.xlu0 %v5943, 112
      %v6660 = vpop.permute.xlu0 %6659
      %6661 = vrot.lane.b32.xlu0 %v5932, 80
      %v6662 = vpop.permute.xlu0 %6661
      %6663 = vrot.lane.b32.xlu0 %v5933, 80
      %v6664 = vpop.permute.xlu0 %6663
      %6665 = vrot.lane.b32.xlu0 %v5934, 80
      %v6666 = vpop.permute.xlu0 %6665
      %6667 = vrot.lane.b32.xlu0 %v5935, 80
      %v6668 = vpop.permute.xlu0 %6667
      %6669 = vrot.lane.b32.xlu0 %v5936, 80
      %v6670 = vpop.permute.xlu0 %6669
      %6671 = vrot.lane.b32.xlu0 %v5937, 80
      %v6672 = vpop.permute.xlu0 %6671
      %6673 = vrot.lane.b32.xlu0 %v5938, 80
      %v6674 = vpop.permute.xlu0 %6673
      %6675 = vrot.lane.b32.xlu0 %v5939, 80
      %v6676 = vpop.permute.xlu0 %6675
      %6677 = vrot.lane.b32.xlu0 %v5940, 80
      %v6678 = vpop.permute.xlu0 %6677
      %6679 = vrot.lane.b32.xlu0 %v5941, 80
      %v6680 = vpop.permute.xlu0 %6679
      %6681 = vrot.lane.b32.xlu0 %v5942, 80
      %v6682 = vpop.permute.xlu0 %6681
      %6683 = vrot.lane.b32.xlu0 %v5943, 80
      %v6684 = vpop.permute.xlu0 %6683
      %v6686 = vsel %vm2072, %v6638, 0
      %v6689 = vsel %vm2072, %v6640, 0
      %v6692 = vsel %vm2072, %v6642, 0
      %v6695 = vsel %vm2072, %v6644, 0
      %v6698 = vsel %vm2072, %v6646, 0
      %v6701 = vsel %vm2072, %v6648, 0
      %v6704 = vsel %vm2072, %v6650, 0
      %v6707 = vsel %vm2072, %v6652, 0
      %v6710 = vsel %vm2072, %v6654, 0
      %v6713 = vsel %vm2072, %v6656, 0
      %v6716 = vsel %vm2072, %v6658, 0
      %v6719 = vsel %vm2072, %v6660, 0
      %v6722 = vsel %vm2072, %v6662, 0
      %v6725 = vsel %vm2072, %v6664, 0
      %v6728 = vsel %vm2072, %v6666, 0
      %v6731 = vsel %vm2072, %v6668, 0
      %v6734 = vsel %vm2072, %v6670, 0
      %v6737 = vsel %vm2072, %v6672, 0
      %v6740 = vsel %vm2072, %v6674, 0
      %v6743 = vsel %vm2072, %v6676, 0
      %v6746 = vsel %vm2072, %v6678, 0
      %v6749 = vsel %vm2072, %v6680, 0
      %v6752 = vsel %vm2072, %v6682, 0
      %v6755 = vsel %vm2072, %v6684, 0
      %6757 = vmatprep.subr.bf16.mxu0 0
      %6758 = vmatpush1.bf16.xpose.msra.mxu0 %v6722
      %6759 = vmatprep.subr.bf16.mxu0 0
      %6760 = vmatpush1.bf16.xpose.msra.mxu0 %v6725
      %6761 = vmatprep.subr.bf16.mxu0 0
      %6762 = vmatpush1.bf16.xpose.msra.mxu0 %v6728
      %6763 = vmatprep.subr.bf16.mxu0 0
      %6764 = vmatpush1.bf16.xpose.msra.mxu0 %v6731
      %6765 = vmatprep.subr.bf16.mxu0 0
      %6766 = vmatpush1.bf16.xpose.msra.mxu0 %v6734
      %6767 = vmatprep.subr.bf16.mxu0 0
      %6768 = vmatpush1.bf16.xpose.msra.mxu0 %v6737
      %6769 = vmatprep.subr.bf16.mxu0 0
      %6770 = vmatpush1.bf16.xpose.msra.mxu0 %v6740
      %6771 = vmatprep.subr.bf16.mxu0 0
      %6772 = vmatpush1.bf16.xpose.msra.mxu0 %v6743
      %6773 = vmatprep.subr.bf16.mxu0 0
      %6774 = vmatpush1.bf16.xpose.msra.mxu0 %v6746
      %6775 = vmatprep.subr.bf16.mxu0 0
      %6776 = vmatpush1.bf16.xpose.msra.mxu0 %v6749
      %6777 = vmatprep.subr.bf16.mxu0 0
      %6778 = vmatpush1.bf16.xpose.msra.mxu0 %v6752
      %6779 = vmatprep.subr.bf16.mxu0 0
      %6780 = vmatpush1.bf16.xpose.msra.mxu0 %v6755
      %6781 = vmatprep.subr.bf16.mxu0 0
      %6782 = vmatpush1.bf16.xpose.msra.mxu0 0
      %6783 = vmatprep.subr.bf16.mxu0 0
      %6784 = vmatpush1.bf16.xpose.msra.mxu0 0
      %6785 = vmatprep.subr.bf16.mxu0 0
      %6786 = vmatpush1.bf16.xpose.msra.mxu0 0
      %6787 = vmatprep.subr.bf16.mxu0 0
      %6788 = vmatpush1.bf16.xpose.msra.mxu0 0
      %6789 = vmatprep.mubr.bf16.mxu0 0
      %6790 = vmatmul.mubr.bf16.gmra.mrb[0].mxu0 %v6686
      %v6791 = vpop.f32.mrb[0].mxu0
      %v6792 = vadd.f32 %v1413, %v6791
      %v6793 = vpop.f32.mrb[0].mxu0
      %v6794 = vadd.f32 %v1414, %v6793
      %v6795 = vpop.f32.mrb[0].mxu0
      %v6796 = vadd.f32 %v1415, %v6795
      %v6797 = vpop.f32.mrb[0].mxu0
      %v6798 = vadd.f32 %v1416, %v6797
      %6799 = vmatprep.mubr.bf16.mxu0 0
      %6800 = vmatmul.mubr.bf16.gmra.mrb[0].mxu0 %v6689
      %v6801 = vpop.f32.mrb[0].mxu0
      %v6802 = vadd.f32 %v1417, %v6801
      %v6803 = vpop.f32.mrb[0].mxu0
      %v6804 = vadd.f32 %v1418, %v6803
      %v6805 = vpop.f32.mrb[0].mxu0
      %v6806 = vadd.f32 %v1419, %v6805
      %v6807 = vpop.f32.mrb[0].mxu0
      %v6808 = vadd.f32 %v1420, %v6807
      %6809 = vmatprep.mubr.bf16.mxu0 0
      %6810 = vmatmul.mubr.bf16.gmra.mrb[0].mxu0 %v6692
      %v6811 = vpop.f32.mrb[0].mxu0
      %v6812 = vadd.f32 %v1421, %v6811
      %v6813 = vpop.f32.mrb[0].mxu0
      %v6814 = vadd.f32 %v1422, %v6813
      %v6815 = vpop.f32.mrb[0].mxu0
      %v6816 = vadd.f32 %v1423, %v6815
      %v6817 = vpop.f32.mrb[0].mxu0
      %v6818 = vadd.f32 %v1424, %v6817
      %6819 = vmatprep.mubr.bf16.mxu0 0
      %6820 = vmatmul.mubr.bf16.gmra.mrb[0].mxu0 %v6695
      %v6821 = vpop.f32.mrb[0].mxu0
      %v6822 = vadd.f32 %v1425, %v6821
      %v6823 = vpop.f32.mrb[0].mxu0
      %v6824 = vadd.f32 %v1426, %v6823
      %v6825 = vpop.f32.mrb[0].mxu0
      %v6826 = vadd.f32 %v1427, %v6825
      %v6827 = vpop.f32.mrb[0].mxu0
      %v6828 = vadd.f32 %v1428, %v6827
      %6829 = vmatprep.mubr.bf16.mxu0 0
      %6830 = vmatmul.mubr.bf16.gmra.mrb[0].mxu0 %v6698
      %v6831 = vpop.f32.mrb[0].mxu0
      %v6832 = vadd.f32 %v1429, %v6831
      %v6833 = vpop.f32.mrb[0].mxu0
      %v6834 = vadd.f32 %v1430, %v6833
      %v6835 = vpop.f32.mrb[0].mxu0
      %v6836 = vadd.f32 %v1431, %v6835
      %v6837 = vpop.f32.mrb[0].mxu0
      %v6838 = vadd.f32 %v1432, %v6837
      %6839 = vmatprep.mubr.bf16.mxu0 0
      %6840 = vmatmul.mubr.bf16.gmra.mrb[0].mxu0 %v6701
      %v6841 = vpop.f32.mrb[0].mxu0
      %v6842 = vadd.f32 %v1433, %v6841
      %v6843 = vpop.f32.mrb[0].mxu0
      %v6844 = vadd.f32 %v1434, %v6843
      %v6845 = vpop.f32.mrb[0].mxu0
      %v6846 = vadd.f32 %v1435, %v6845
      %v6847 = vpop.f32.mrb[0].mxu0
      %v6848 = vadd.f32 %v1436, %v6847
      %6849 = vmatprep.mubr.bf16.mxu0 0
      %6850 = vmatmul.mubr.bf16.gmra.mrb[0].mxu0 %v6704
      %v6851 = vpop.f32.mrb[0].mxu0
      %v6852 = vadd.f32 %v1437, %v6851
      %v6853 = vpop.f32.mrb[0].mxu0
      %v6854 = vadd.f32 %v1438, %v6853
      %v6855 = vpop.f32.mrb[0].mxu0
      %v6856 = vadd.f32 %v1439, %v6855
      %v6857 = vpop.f32.mrb[0].mxu0
      %v6858 = vadd.f32 %v1440, %v6857
      %6859 = vmatprep.mubr.bf16.mxu0 0
      %6860 = vmatmul.mubr.bf16.gmra.mrb[0].mxu0 %v6707
      %v6861 = vpop.f32.mrb[0].mxu0
      %v6862 = vadd.f32 %v1441, %v6861
      %v6863 = vpop.f32.mrb[0].mxu0
      %v6864 = vadd.f32 %v1442, %v6863
      %v6865 = vpop.f32.mrb[0].mxu0
      %v6866 = vadd.f32 %v1443, %v6865
      %v6867 = vpop.f32.mrb[0].mxu0
      %v6868 = vadd.f32 %v1444, %v6867
      %6869 = vmatprep.mubr.bf16.mxu0 0
      %6870 = vmatmul.mubr.bf16.gmra.mrb[0].mxu0 %v6710
      %v6871 = vpop.f32.mrb[0].mxu0
      %v6872 = vadd.f32 %v1445, %v6871
      %v6873 = vpop.f32.mrb[0].mxu0
      %v6874 = vadd.f32 %v1446, %v6873
      %v6875 = vpop.f32.mrb[0].mxu0
      %v6876 = vadd.f32 %v1447, %v6875
      %v6877 = vpop.f32.mrb[0].mxu0
      %v6878 = vadd.f32 %v1448, %v6877
      %6879 = vmatprep.mubr.bf16.mxu0 0
      %6880 = vmatmul.mubr.bf16.gmra.mrb[0].mxu0 %v6713
      %v6881 = vpop.f32.mrb[0].mxu0
      %v6882 = vadd.f32 %v1449, %v6881
      %v6883 = vpop.f32.mrb[0].mxu0
      %v6884 = vadd.f32 %v1450, %v6883
      %v6885 = vpop.f32.mrb[0].mxu0
      %v6886 = vadd.f32 %v1451, %v6885
      %v6887 = vpop.f32.mrb[0].mxu0
      %v6888 = vadd.f32 %v1452, %v6887
      %6889 = vmatprep.mubr.bf16.mxu0 0
      %6890 = vmatmul.mubr.bf16.gmra.mrb[0].mxu0 %v6716
      %v6891 = vpop.f32.mrb[0].mxu0
      %v6892 = vadd.f32 %v1453, %v6891
      %v6893 = vpop.f32.mrb[0].mxu0
      %v6894 = vadd.f32 %v1454, %v6893
      %v6895 = vpop.f32.mrb[0].mxu0
      %v6896 = vadd.f32 %v1455, %v6895
      %v6897 = vpop.f32.mrb[0].mxu0
      %v6898 = vadd.f32 %v1456, %v6897
      %6899 = vmatprep.mubr.bf16.mxu0 0
      %6900 = vmatmul.mubr.bf16.gmra.mrb[0].mxu0 %v6719
      %v6901 = vpop.f32.mrb[0].mxu0
      %v6902 = vadd.f32 %v1457, %v6901
      %v6903 = vpop.f32.mrb[0].mxu0
      %v6904 = vadd.f32 %v1458, %v6903
      %v6905 = vpop.f32.mrb[0].mxu0
      %v6906 = vadd.f32 %v1459, %v6905
      %v6907 = vpop.f32.mrb[0].mxu0
      %v6908 = vadd.f32 %v1460, %v6907
      %6909 = vdwg.mxu0
      %v6910 = vsel %vm360, %v6794, -inf
      %v6911 = vmax.f32 %v6792, %v6910
      %6912 = vmax.xlane.f32.xlu0 %v6911
      %v6913 = vpop.xlane.xlu0 %6912
      %v6914 = vsel %vm360, %v6798, -inf
      %v6915 = vmax.f32 %v6796, %v6914
      %6916 = vmax.xlane.f32.xlu0 %v6915
      %v6917 = vpop.xlane.xlu0 %6916
      %v6918 = vsel %vm360, %v6804, -inf
      %v6919 = vmax.f32 %v6802, %v6918
      %6920 = vmax.xlane.f32.xlu0 %v6919
      %v6921 = vpop.xlane.xlu0 %6920
      %v6922 = vsel %vm360, %v6808, -inf
      %v6923 = vmax.f32 %v6806, %v6922
      %6924 = vmax.xlane.f32.xlu0 %v6923
      %v6925 = vpop.xlane.xlu0 %6924
      %v6926 = vsel %vm360, %v6814, -inf
      %v6927 = vmax.f32 %v6812, %v6926
      %6928 = vmax.xlane.f32.xlu0 %v6927
      %v6929 = vpop.xlane.xlu0 %6928
      %v6930 = vsel %vm360, %v6818, -inf
      %v6931 = vmax.f32 %v6816, %v6930
      %6932 = vmax.xlane.f32.xlu0 %v6931
      %v6933 = vpop.xlane.xlu0 %6932
      %v6934 = vsel %vm360, %v6824, -inf
      %v6935 = vmax.f32 %v6822, %v6934
      %6936 = vmax.xlane.f32.xlu0 %v6935
      %v6937 = vpop.xlane.xlu0 %6936
      %v6938 = vsel %vm360, %v6828, -inf
      %v6939 = vmax.f32 %v6826, %v6938
      %6940 = vmax.xlane.f32.xlu0 %v6939
      %v6941 = vpop.xlane.xlu0 %6940
      %v6942 = vsel %vm360, %v6834, -inf
      %v6943 = vmax.f32 %v6832, %v6942
      %6944 = vmax.xlane.f32.xlu0 %v6943
      %v6945 = vpop.xlane.xlu0 %6944
      %v6946 = vsel %vm360, %v6838, -inf
      %v6947 = vmax.f32 %v6836, %v6946
      %6948 = vmax.xlane.f32.xlu0 %v6947
      %v6949 = vpop.xlane.xlu0 %6948
      %v6950 = vsel %vm360, %v6844, -inf
      %v6951 = vmax.f32 %v6842, %v6950
      %6952 = vmax.xlane.f32.xlu0 %v6951
      %v6953 = vpop.xlane.xlu0 %6952
      %v6954 = vsel %vm360, %v6848, -inf
      %v6955 = vmax.f32 %v6846, %v6954
      %6956 = vmax.xlane.f32.xlu0 %v6955
      %v6957 = vpop.xlane.xlu0 %6956
      %v6958 = vsel %vm360, %v6854, -inf
      %v6959 = vmax.f32 %v6852, %v6958
      %6960 = vmax.xlane.f32.xlu0 %v6959
      %v6961 = vpop.xlane.xlu0 %6960
      %v6962 = vsel %vm360, %v6858, -inf
      %v6963 = vmax.f32 %v6856, %v6962
      %6964 = vmax.xlane.f32.xlu0 %v6963
      %v6965 = vpop.xlane.xlu0 %6964
      %v6966 = vsel %vm360, %v6864, -inf
      %v6967 = vmax.f32 %v6862, %v6966
      %6968 = vmax.xlane.f32.xlu0 %v6967
      %v6969 = vpop.xlane.xlu0 %6968
      %v6970 = vsel %vm360, %v6868, -inf
      %v6971 = vmax.f32 %v6866, %v6970
      %6972 = vmax.xlane.f32.xlu0 %v6971
      %v6973 = vpop.xlane.xlu0 %6972
      %v6974 = vsel %vm360, %v6874, -inf
      %v6975 = vmax.f32 %v6872, %v6974
      %6976 = vmax.xlane.f32.xlu0 %v6975
      %v6977 = vpop.xlane.xlu0 %6976
      %v6978 = vsel %vm360, %v6878, -inf
      %v6979 = vmax.f32 %v6876, %v6978
      %6980 = vmax.xlane.f32.xlu0 %v6979
      %v6981 = vpop.xlane.xlu0 %6980
      %v6982 = vsel %vm360, %v6884, -inf
      %v6983 = vmax.f32 %v6882, %v6982
      %6984 = vmax.xlane.f32.xlu0 %v6983
      %v6985 = vpop.xlane.xlu0 %6984
      %v6986 = vsel %vm360, %v6888, -inf
      %v6987 = vmax.f32 %v6886, %v6986
      %6988 = vmax.xlane.f32.xlu0 %v6987
      %v6989 = vpop.xlane.xlu0 %6988
      %v6990 = vsel %vm360, %v6894, -inf
      %v6991 = vmax.f32 %v6892, %v6990
      %6992 = vmax.xlane.f32.xlu0 %v6991
      %v6993 = vpop.xlane.xlu0 %6992
      %v6994 = vsel %vm360, %v6898, -inf
      %v6995 = vmax.f32 %v6896, %v6994
      %6996 = vmax.xlane.f32.xlu0 %v6995
      %v6997 = vpop.xlane.xlu0 %6996
      %v6998 = vsel %vm360, %v6904, -inf
      %v6999 = vmax.f32 %v6902, %v6998
      %7000 = vmax.xlane.f32.xlu0 %v6999
      %v7001 = vpop.xlane.xlu0 %7000
      %v7002 = vsel %vm360, %v6908, -inf
      %v7003 = vmax.f32 %v6906, %v7002
      %7004 = vmax.xlane.f32.xlu0 %v7003
      %v7005 = vpop.xlane.xlu0 %7004
      %v7006 = vsub.f32 %v6792, %v6913
      %v7007 = vsub.f32 %v6794, %v6913
      %v7008 = vsub.f32 %v6796, %v6917
      %v7009 = vsub.f32 %v6798, %v6917
      %v7010 = vsub.f32 %v6802, %v6921
      %v7011 = vsub.f32 %v6804, %v6921
      %v7012 = vsub.f32 %v6806, %v6925
      %v7013 = vsub.f32 %v6808, %v6925
      %v7014 = vsub.f32 %v6812, %v6929
      %v7015 = vsub.f32 %v6814, %v6929
      %v7016 = vsub.f32 %v6816, %v6933
      %v7017 = vsub.f32 %v6818, %v6933
      %v7018 = vsub.f32 %v6822, %v6937
      %v7019 = vsub.f32 %v6824, %v6937
      %v7020 = vsub.f32 %v6826, %v6941
      %v7021 = vsub.f32 %v6828, %v6941
      %v7022 = vsub.f32 %v6832, %v6945
      %v7023 = vsub.f32 %v6834, %v6945
      %v7024 = vsub.f32 %v6836, %v6949
      %v7025 = vsub.f32 %v6838, %v6949
      %v7026 = vsub.f32 %v6842, %v6953
      %v7027 = vsub.f32 %v6844, %v6953
      %v7028 = vsub.f32 %v6846, %v6957
      %v7029 = vsub.f32 %v6848, %v6957
      %v7030 = vsub.f32 %v6852, %v6961
      %v7031 = vsub.f32 %v6854, %v6961
      %v7032 = vsub.f32 %v6856, %v6965
      %v7033 = vsub.f32 %v6858, %v6965
      %v7034 = vsub.f32 %v6862, %v6969
      %v7035 = vsub.f32 %v6864, %v6969
      %v7036 = vsub.f32 %v6866, %v6973
      %v7037 = vsub.f32 %v6868, %v6973
      %v7038 = vsub.f32 %v6872, %v6977
      %v7039 = vsub.f32 %v6874, %v6977
      %v7040 = vsub.f32 %v6876, %v6981
      %v7041 = vsub.f32 %v6878, %v6981
      %v7042 = vsub.f32 %v6882, %v6985
      %v7043 = vsub.f32 %v6884, %v6985
      %v7044 = vsub.f32 %v6886, %v6989
      %v7045 = vsub.f32 %v6888, %v6989
      %v7046 = vsub.f32 %v6892, %v6993
      %v7047 = vsub.f32 %v6894, %v6993
      %v7048 = vsub.f32 %v6896, %v6997
      %v7049 = vsub.f32 %v6898, %v6997
      %v7050 = vsub.f32 %v6902, %v7001
      %v7051 = vsub.f32 %v6904, %v7001
      %v7052 = vsub.f32 %v6906, %v7005
      %v7053 = vsub.f32 %v6908, %v7005
      %v7054 = vmul.f32 %v7006, 1.442695
      %v7055 = vpow.pop %v7054
      %v7056 = vmul.f32 %v7007, 1.442695
      %v7057 = vpow.pop %v7056
      %v7058 = vmul.f32 %v7008, 1.442695
      %v7059 = vpow.pop %v7058
      %v7060 = vmul.f32 %v7009, 1.442695
      %v7061 = vpow.pop %v7060
      %v7062 = vmul.f32 %v7010, 1.442695
      %v7063 = vpow.pop %v7062
      %v7064 = vmul.f32 %v7011, 1.442695
      %v7065 = vpow.pop %v7064
      %v7066 = vmul.f32 %v7012, 1.442695
      %v7067 = vpow.pop %v7066
      %v7068 = vmul.f32 %v7013, 1.442695
      %v7069 = vpow.pop %v7068
      %v7070 = vmul.f32 %v7014, 1.442695
      %v7071 = vpow.pop %v7070
      %v7072 = vmul.f32 %v7015, 1.442695
      %v7073 = vpow.pop %v7072
      %v7074 = vmul.f32 %v7016, 1.442695
      %v7075 = vpow.pop %v7074
      %v7076 = vmul.f32 %v7017, 1.442695
      %v7077 = vpow.pop %v7076
      %v7078 = vmul.f32 %v7018, 1.442695
      %v7079 = vpow.pop %v7078
      %v7080 = vmul.f32 %v7019, 1.442695
      %v7081 = vpow.pop %v7080
      %v7082 = vmul.f32 %v7020, 1.442695
      %v7083 = vpow.pop %v7082
      %v7084 = vmul.f32 %v7021, 1.442695
      %v7085 = vpow.pop %v7084
      %v7086 = vmul.f32 %v7022, 1.442695
      %v7087 = vpow.pop %v7086
      %v7088 = vmul.f32 %v7023, 1.442695
      %v7089 = vpow.pop %v7088
      %v7090 = vmul.f32 %v7024, 1.442695
      %v7091 = vpow.pop %v7090
      %v7092 = vmul.f32 %v7025, 1.442695
      %v7093 = vpow.pop %v7092
      %v7094 = vmul.f32 %v7026, 1.442695
      %v7095 = vpow.pop %v7094
      %v7096 = vmul.f32 %v7027, 1.442695
      %v7097 = vpow.pop %v7096
      %v7098 = vmul.f32 %v7028, 1.442695
      %v7099 = vpow.pop %v7098
      %v7100 = vmul.f32 %v7029, 1.442695
      %v7101 = vpow.pop %v7100
      %v7102 = vmul.f32 %v7030, 1.442695
      %v7103 = vpow.pop %v7102
      %v7104 = vmul.f32 %v7031, 1.442695
      %v7105 = vpow.pop %v7104
      %v7106 = vmul.f32 %v7032, 1.442695
      %v7107 = vpow.pop %v7106
      %v7108 = vmul.f32 %v7033, 1.442695
      %v7109 = vpow.pop %v7108
      %v7110 = vmul.f32 %v7034, 1.442695
      %v7111 = vpow.pop %v7110
      %v7112 = vmul.f32 %v7035, 1.442695
      %v7113 = vpow.pop %v7112
      %v7114 = vmul.f32 %v7036, 1.442695
      %v7115 = vpow.pop %v7114
      %v7116 = vmul.f32 %v7037, 1.442695
      %v7117 = vpow.pop %v7116
      %v7118 = vmul.f32 %v7038, 1.442695
      %v7119 = vpow.pop %v7118
      %v7120 = vmul.f32 %v7039, 1.442695
      %v7121 = vpow.pop %v7120
      %v7122 = vmul.f32 %v7040, 1.442695
      %v7123 = vpow.pop %v7122
      %v7124 = vmul.f32 %v7041, 1.442695
      %v7125 = vpow.pop %v7124
      %v7126 = vmul.f32 %v7042, 1.442695
      %v7127 = vpow.pop %v7126
      %v7128 = vmul.f32 %v7043, 1.442695
      %v7129 = vpow.pop %v7128
      %v7130 = vmul.f32 %v7044, 1.442695
      %v7131 = vpow.pop %v7130
      %v7132 = vmul.f32 %v7045, 1.442695
      %v7133 = vpow.pop %v7132
      %v7134 = vmul.f32 %v7046, 1.442695
      %v7135 = vpow.pop %v7134
      %v7136 = vmul.f32 %v7047, 1.442695
      %v7137 = vpow.pop %v7136
      %v7138 = vmul.f32 %v7048, 1.442695
      %v7139 = vpow.pop %v7138
      %v7140 = vmul.f32 %v7049, 1.442695
      %v7141 = vpow.pop %v7140
      %v7142 = vmul.f32 %v7050, 1.442695
      %v7143 = vpow.pop %v7142
      %v7144 = vmul.f32 %v7051, 1.442695
      %v7145 = vpow.pop %v7144
      %v7146 = vmul.f32 %v7052, 1.442695
      %v7147 = vpow.pop %v7146
      %v7148 = vmul.f32 %v7053, 1.442695
      %v7149 = vpow.pop %v7148
      %v7150 = vsel %vm360, %v7057, 0.0
      %v7151 = vadd.f32 %v7055, %v7150
      %7152 = vadd.xlane.f32.xlu0 %v7151
      %v7153 = vpop.xlane.xlu0 %7152
      %v7154 = vsel %vm360, %v7061, 0.0
      %v7155 = vadd.f32 %v7059, %v7154
      %7156 = vadd.xlane.f32.xlu0 %v7155
      %v7157 = vpop.xlane.xlu0 %7156
      %v7158 = vsel %vm360, %v7065, 0.0
      %v7159 = vadd.f32 %v7063, %v7158
      %7160 = vadd.xlane.f32.xlu0 %v7159
      %v7161 = vpop.xlane.xlu0 %7160
      %v7162 = vsel %vm360, %v7069, 0.0
      %v7163 = vadd.f32 %v7067, %v7162
      %7164 = vadd.xlane.f32.xlu0 %v7163
      %v7165 = vpop.xlane.xlu0 %7164
      %v7166 = vsel %vm360, %v7073, 0.0
      %v7167 = vadd.f32 %v7071, %v7166
      %7168 = vadd.xlane.f32.xlu0 %v7167
      %v7169 = vpop.xlane.xlu0 %7168
      %v7170 = vsel %vm360, %v7077, 0.0
      %v7171 = vadd.f32 %v7075, %v7170
      %7172 = vadd.xlane.f32.xlu0 %v7171
      %v7173 = vpop.xlane.xlu0 %7172
      %v7174 = vsel %vm360, %v7081, 0.0
      %v7175 = vadd.f32 %v7079, %v7174
      %7176 = vadd.xlane.f32.xlu0 %v7175
      %v7177 = vpop.xlane.xlu0 %7176
      %v7178 = vsel %vm360, %v7085, 0.0
      %v7179 = vadd.f32 %v7083, %v7178
      %7180 = vadd.xlane.f32.xlu0 %v7179
      %v7181 = vpop.xlane.xlu0 %7180
      %v7182 = vsel %vm360, %v7089, 0.0
      %v7183 = vadd.f32 %v7087, %v7182
      %7184 = vadd.xlane.f32.xlu0 %v7183
      %v7185 = vpop.xlane.xlu0 %7184
      %v7186 = vsel %vm360, %v7093, 0.0
      %v7187 = vadd.f32 %v7091, %v7186
      %7188 = vadd.xlane.f32.xlu0 %v7187
      %v7189 = vpop.xlane.xlu0 %7188
      %v7190 = vsel %vm360, %v7097, 0.0
      %v7191 = vadd.f32 %v7095, %v7190
      %7192 = vadd.xlane.f32.xlu0 %v7191
      %v7193 = vpop.xlane.xlu0 %7192
      %v7194 = vsel %vm360, %v7101, 0.0
      %v7195 = vadd.f32 %v7099, %v7194
      %7196 = vadd.xlane.f32.xlu0 %v7195
      %v7197 = vpop.xlane.xlu0 %7196
      %v7198 = vsel %vm360, %v7105, 0.0
      %v7199 = vadd.f32 %v7103, %v7198
      %7200 = vadd.xlane.f32.xlu0 %v7199
      %v7201 = vpop.xlane.xlu0 %7200
      %v7202 = vsel %vm360, %v7109, 0.0
      %v7203 = vadd.f32 %v7107, %v7202
      %7204 = vadd.xlane.f32.xlu0 %v7203
      %v7205 = vpop.xlane.xlu0 %7204
      %v7206 = vsel %vm360, %v7113, 0.0
      %v7207 = vadd.f32 %v7111, %v7206
      %7208 = vadd.xlane.f32.xlu0 %v7207
      %v7209 = vpop.xlane.xlu0 %7208
      %v7210 = vsel %vm360, %v7117, 0.0
      %v7211 = vadd.f32 %v7115, %v7210
      %7212 = vadd.xlane.f32.xlu0 %v7211
      %v7213 = vpop.xlane.xlu0 %7212
      %v7214 = vsel %vm360, %v7121, 0.0
      %v7215 = vadd.f32 %v7119, %v7214
      %7216 = vadd.xlane.f32.xlu0 %v7215
      %v7217 = vpop.xlane.xlu0 %7216
      %v7218 = vsel %vm360, %v7125, 0.0
      %v7219 = vadd.f32 %v7123, %v7218
      %7220 = vadd.xlane.f32.xlu0 %v7219
      %v7221 = vpop.xlane.xlu0 %7220
      %v7222 = vsel %vm360, %v7129, 0.0
      %v7223 = vadd.f32 %v7127, %v7222
      %7224 = vadd.xlane.f32.xlu0 %v7223
      %v7225 = vpop.xlane.xlu0 %7224
      %v7226 = vsel %vm360, %v7133, 0.0
      %v7227 = vadd.f32 %v7131, %v7226
      %7228 = vadd.xlane.f32.xlu0 %v7227
      %v7229 = vpop.xlane.xlu0 %7228
      %v7230 = vsel %vm360, %v7137, 0.0
      %v7231 = vadd.f32 %v7135, %v7230
      %7232 = vadd.xlane.f32.xlu0 %v7231
      %v7233 = vpop.xlane.xlu0 %7232
      %v7234 = vsel %vm360, %v7141, 0.0
      %v7235 = vadd.f32 %v7139, %v7234
      %7236 = vadd.xlane.f32.xlu0 %v7235
      %v7237 = vpop.xlane.xlu0 %7236
      %v7238 = vsel %vm360, %v7145, 0.0
      %v7239 = vadd.f32 %v7143, %v7238
      %7240 = vadd.xlane.f32.xlu0 %v7239
      %v7241 = vpop.xlane.xlu0 %7240
      %v7242 = vsel %vm360, %v7149, 0.0
      %v7243 = vadd.f32 %v7147, %v7242
      %7244 = vadd.xlane.f32.xlu0 %v7243
      %v7245 = vpop.xlane.xlu0 %7244
      %v7246 = vrcp.pop %v7153
      %v7247 = vrcp.pop %v7157
      %v7248 = vrcp.pop %v7161
      %v7249 = vrcp.pop %v7165
      %v7250 = vrcp.pop %v7169
      %v7251 = vrcp.pop %v7173
      %v7252 = vrcp.pop %v7177
      %v7253 = vrcp.pop %v7181
      %v7254 = vrcp.pop %v7185
      %v7255 = vrcp.pop %v7189
      %v7256 = vrcp.pop %v7193
      %v7257 = vrcp.pop %v7197
      %v7258 = vrcp.pop %v7201
      %v7259 = vrcp.pop %v7205
      %v7260 = vrcp.pop %v7209
      %v7261 = vrcp.pop %v7213
      %v7262 = vrcp.pop %v7217
      %v7263 = vrcp.pop %v7221
      %v7264 = vrcp.pop %v7225
      %v7265 = vrcp.pop %v7229
      %v7266 = vrcp.pop %v7233
      %v7267 = vrcp.pop %v7237
      %v7268 = vrcp.pop %v7241
      %v7269 = vrcp.pop %v7245
      %v7270 = vmul.f32 %v7055, %v7246
      %v7271 = vmul.f32 %v7057, %v7246
      %v7272 = vmul.f32 %v7059, %v7247
      %v7273 = vmul.f32 %v7061, %v7247
      %v7274 = vmul.f32 %v7063, %v7248
      %v7275 = vmul.f32 %v7065, %v7248
      %v7276 = vmul.f32 %v7067, %v7249
      %v7277 = vmul.f32 %v7069, %v7249
      %v7278 = vmul.f32 %v7071, %v7250
      %v7279 = vmul.f32 %v7073, %v7250
      %v7280 = vmul.f32 %v7075, %v7251
      %v7281 = vmul.f32 %v7077, %v7251
      %v7282 = vmul.f32 %v7079, %v7252
      %v7283 = vmul.f32 %v7081, %v7252
      %v7284 = vmul.f32 %v7083, %v7253
      %v7285 = vmul.f32 %v7085, %v7253
      %v7286 = vmul.f32 %v7087, %v7254
      %v7287 = vmul.f32 %v7089, %v7254
      %v7288 = vmul.f32 %v7091, %v7255
      %v7289 = vmul.f32 %v7093, %v7255
      %v7290 = vmul.f32 %v7095, %v7256
      %v7291 = vmul.f32 %v7097, %v7256
      %v7292 = vmul.f32 %v7099, %v7257
      %v7293 = vmul.f32 %v7101, %v7257
      %v7294 = vmul.f32 %v7103, %v7258
      %v7295 = vmul.f32 %v7105, %v7258
      %v7296 = vmul.f32 %v7107, %v7259
      %v7297 = vmul.f32 %v7109, %v7259
      %v7298 = vmul.f32 %v7111, %v7260
      %v7299 = vmul.f32 %v7113, %v7260
      %v7300 = vmul.f32 %v7115, %v7261
      %v7301 = vmul.f32 %v7117, %v7261
      %v7302 = vmul.f32 %v7119, %v7262
      %v7303 = vmul.f32 %v7121, %v7262
      %v7304 = vmul.f32 %v7123, %v7263
      %v7305 = vmul.f32 %v7125, %v7263
      %v7306 = vmul.f32 %v7127, %v7264
      %v7307 = vmul.f32 %v7129, %v7264
      %v7308 = vmul.f32 %v7131, %v7265
      %v7309 = vmul.f32 %v7133, %v7265
      %v7310 = vmul.f32 %v7135, %v7266
      %v7311 = vmul.f32 %v7137, %v7266
      %v7312 = vmul.f32 %v7139, %v7267
      %v7313 = vmul.f32 %v7141, %v7267
      %v7314 = vmul.f32 %v7143, %v7268
      %v7315 = vmul.f32 %v7145, %v7268
      %v7316 = vmul.f32 %v7147, %v7269
      %v7317 = vmul.f32 %v7149, %v7269
      %v7318 = vpack.c.bf16 %v7272, %v7270
      %v7319 = vpack.c.bf16 %v7273, %v7271
      %v7320 = vpack.c.bf16 %v7276, %v7274
      %v7321 = vpack.c.bf16 %v7277, %v7275
      %v7322 = vpack.c.bf16 %v7280, %v7278
      %v7323 = vpack.c.bf16 %v7281, %v7279
      %v7324 = vpack.c.bf16 %v7284, %v7282
      %v7325 = vpack.c.bf16 %v7285, %v7283
      %v7326 = vpack.c.bf16 %v7288, %v7286
      %v7327 = vpack.c.bf16 %v7289, %v7287
      %v7328 = vpack.c.bf16 %v7292, %v7290
      %v7329 = vpack.c.bf16 %v7293, %v7291
      %v7330 = vpack.c.bf16 %v7296, %v7294
      %v7331 = vpack.c.bf16 %v7297, %v7295
      %v7332 = vpack.c.bf16 %v7300, %v7298
      %v7333 = vpack.c.bf16 %v7301, %v7299
      %v7334 = vpack.c.bf16 %v7304, %v7302
      %v7335 = vpack.c.bf16 %v7305, %v7303
      %v7336 = vpack.c.bf16 %v7308, %v7306
      %v7337 = vpack.c.bf16 %v7309, %v7307
      %v7338 = vpack.c.bf16 %v7312, %v7310
      %v7339 = vpack.c.bf16 %v7313, %v7311
      %v7340 = vpack.c.bf16 %v7316, %v7314
      %v7341 = vpack.c.bf16 %v7317, %v7315
      %7342 = vrot.lane.b32.xlu0 %v5932, 32
      %v7343 = vpop.permute.xlu0 %7342
      %7344 = vrot.lane.b32.xlu0 %v5933, 32
      %v7345 = vpop.permute.xlu0 %7344
      %7346 = vrot.lane.b32.xlu0 %v5934, 32
      %v7347 = vpop.permute.xlu0 %7346
      %7348 = vrot.lane.b32.xlu0 %v5935, 32
      %v7349 = vpop.permute.xlu0 %7348
      %7350 = vrot.lane.b32.xlu0 %v5936, 32
      %v7351 = vpop.permute.xlu0 %7350
      %7352 = vrot.lane.b32.xlu0 %v5937, 32
      %v7353 = vpop.permute.xlu0 %7352
      %7354 = vrot.lane.b32.xlu0 %v5938, 32
      %v7355 = vpop.permute.xlu0 %7354
      %7356 = vrot.lane.b32.xlu0 %v5939, 32
      %v7357 = vpop.permute.xlu0 %7356
      %7358 = vrot.lane.b32.xlu0 %v5940, 32
      %v7359 = vpop.permute.xlu0 %7358
      %7360 = vrot.lane.b32.xlu0 %v5941, 32
      %v7361 = vpop.permute.xlu0 %7360
      %7362 = vrot.lane.b32.xlu0 %v5942, 32
      %v7363 = vpop.permute.xlu0 %7362
      %7364 = vrot.lane.b32.xlu0 %v5943, 32
      %v7365 = vpop.permute.xlu0 %7364
      %v7379 = vsel %vm360, %v7319, 0
      %v7382 = vsel %vm360, %v7321, 0
      %v7385 = vsel %vm360, %v7323, 0
      %v7388 = vsel %vm360, %v7325, 0
      %v7391 = vsel %vm360, %v7327, 0
      %v7394 = vsel %vm360, %v7329, 0
      %v7397 = vsel %vm360, %v7331, 0
      %v7400 = vsel %vm360, %v7333, 0
      %v7403 = vsel %vm360, %v7335, 0
      %v7406 = vsel %vm360, %v7337, 0
      %v7409 = vsel %vm360, %v7339, 0
      %v7412 = vsel %vm360, %v7341, 0
      %7414 = vmatprep.subr.bf16.mxu0 0
      %7415 = vmatpush1.bf16.msra.mxu0 %v7343
      %7416 = vmatprep.subr.bf16.mxu0 0
      %7417 = vmatpush1.bf16.msra.mxu0 %v7345
      %7418 = vmatprep.subr.bf16.mxu0 0
      %7419 = vmatpush1.bf16.msra.mxu0 %v7347
      %7420 = vmatprep.subr.bf16.mxu0 0
      %7421 = vmatpush1.bf16.msra.mxu0 %v7349
      %7422 = vmatprep.subr.bf16.mxu0 0
      %7423 = vmatpush1.bf16.msra.mxu0 %v7351
      %7424 = vmatprep.subr.bf16.mxu0 0
      %7425 = vmatpush1.bf16.msra.mxu0 %v7353
      %7426 = vmatprep.subr.bf16.mxu0 0
      %7427 = vmatpush1.bf16.msra.mxu0 %v7355
      %7428 = vmatprep.subr.bf16.mxu0 0
      %7429 = vmatpush1.bf16.msra.mxu0 %v7357
      %7430 = vmatprep.subr.bf16.mxu0 0
      %7431 = vmatpush1.bf16.msra.mxu0 %v7359
      %7432 = vmatprep.subr.bf16.mxu0 0
      %7433 = vmatpush1.bf16.msra.mxu0 %v7361
      %7434 = vmatprep.subr.bf16.mxu0 0
      %7435 = vmatpush1.bf16.msra.mxu0 %v7363
      %7436 = vmatprep.subr.bf16.mxu0 0
      %7437 = vmatpush1.bf16.msra.mxu0 %v7365
      %7438 = vmatprep.subr.bf16.mxu0 0
      %7439 = vmatpush1.bf16.msra.mxu0 0
      %7440 = vmatprep.subr.bf16.mxu0 0
      %7441 = vmatpush1.bf16.msra.mxu0 0
      %7442 = vmatprep.subr.bf16.mxu0 0
      %7443 = vmatpush1.bf16.msra.mxu0 0
      %7444 = vmatprep.subr.bf16.mxu0 0
      %7445 = vmatpush1.bf16.msra.mxu0 0
      %7446 = vmatprep.mubr.bf16.mxu0 %v7379
      %7447 = vmatmul.mubr.bf16.gmra.mrb[0].mxu0 %v7318
      %v7448 = vpop.f32.mrb[0].mxu0
      %v7449 = vadd.f32 0.0, %v7448
      %v7450 = vpop.f32.mrb[0].mxu0
      %v7451 = vpop.f32.mrb[0].mxu0
      %v7452 = vadd.f32 0.0, %v7451
      %v7453 = vpop.f32.mrb[0].mxu0
      %7454 = vmatprep.mubr.bf16.mxu0 %v7382
      %7455 = vmatmul.mubr.bf16.gmra.mrb[0].mxu0 %v7320
      %v7456 = vpop.f32.mrb[0].mxu0
      %v7457 = vadd.f32 0.0, %v7456
      %v7458 = vpop.f32.mrb[0].mxu0
      %v7459 = vpop.f32.mrb[0].mxu0
      %v7460 = vadd.f32 0.0, %v7459
      %v7461 = vpop.f32.mrb[0].mxu0
      %7462 = vmatprep.mubr.bf16.mxu0 %v7385
      %7463 = vmatmul.mubr.bf16.gmra.mrb[0].mxu0 %v7322
      %v7464 = vpop.f32.mrb[0].mxu0
      %v7465 = vadd.f32 0.0, %v7464
      %v7466 = vpop.f32.mrb[0].mxu0
      %v7467 = vpop.f32.mrb[0].mxu0
      %v7468 = vadd.f32 0.0, %v7467
      %v7469 = vpop.f32.mrb[0].mxu0
      %7470 = vmatprep.mubr.bf16.mxu0 %v7388
      %7471 = vmatmul.mubr.bf16.gmra.mrb[0].mxu0 %v7324
      %v7472 = vpop.f32.mrb[0].mxu0
      %v7473 = vadd.f32 0.0, %v7472
      %v7474 = vpop.f32.mrb[0].mxu0
      %v7475 = vpop.f32.mrb[0].mxu0
      %v7476 = vadd.f32 0.0, %v7475
      %v7477 = vpop.f32.mrb[0].mxu0
      %7478 = vmatprep.mubr.bf16.mxu0 %v7391
      %7479 = vmatmul.mubr.bf16.gmra.mrb[0].mxu0 %v7326
      %v7480 = vpop.f32.mrb[0].mxu0
      %v7481 = vadd.f32 0.0, %v7480
      %v7482 = vpop.f32.mrb[0].mxu0
      %v7483 = vpop.f32.mrb[0].mxu0
      %v7484 = vadd.f32 0.0, %v7483
      %v7485 = vpop.f32.mrb[0].mxu0
      %7486 = vmatprep.mubr.bf16.mxu0 %v7394
      %7487 = vmatmul.mubr.bf16.gmra.mrb[0].mxu0 %v7328
      %v7488 = vpop.f32.mrb[0].mxu0
      %v7489 = vadd.f32 0.0, %v7488
      %v7490 = vpop.f32.mrb[0].mxu0
      %v7491 = vpop.f32.mrb[0].mxu0
      %v7492 = vadd.f32 0.0, %v7491
      %v7493 = vpop.f32.mrb[0].mxu0
      %7494 = vmatprep.mubr.bf16.mxu0 %v7397
      %7495 = vmatmul.mubr.bf16.gmra.mrb[0].mxu0 %v7330
      %v7496 = vpop.f32.mrb[0].mxu0
      %v7497 = vadd.f32 0.0, %v7496
      %v7498 = vpop.f32.mrb[0].mxu0
      %v7499 = vpop.f32.mrb[0].mxu0
      %v7500 = vadd.f32 0.0, %v7499
      %v7501 = vpop.f32.mrb[0].mxu0
      %7502 = vmatprep.mubr.bf16.mxu0 %v7400
      %7503 = vmatmul.mubr.bf16.gmra.mrb[0].mxu0 %v7332
      %v7504 = vpop.f32.mrb[0].mxu0
      %v7505 = vadd.f32 0.0, %v7504
      %v7506 = vpop.f32.mrb[0].mxu0
      %v7507 = vpop.f32.mrb[0].mxu0
      %v7508 = vadd.f32 0.0, %v7507
      %v7509 = vpop.f32.mrb[0].mxu0
      %7510 = vmatprep.mubr.bf16.mxu0 %v7403
      %7511 = vmatmul.mubr.bf16.gmra.mrb[0].mxu0 %v7334
      %v7512 = vpop.f32.mrb[0].mxu0
      %v7513 = vadd.f32 0.0, %v7512
      %v7514 = vpop.f32.mrb[0].mxu0
      %v7515 = vpop.f32.mrb[0].mxu0
      %v7516 = vadd.f32 0.0, %v7515
      %v7517 = vpop.f32.mrb[0].mxu0
      %7518 = vmatprep.mubr.bf16.mxu0 %v7406
      %7519 = vmatmul.mubr.bf16.gmra.mrb[0].mxu0 %v7336
      %v7520 = vpop.f32.mrb[0].mxu0
      %v7521 = vadd.f32 0.0, %v7520
      %v7522 = vpop.f32.mrb[0].mxu0
      %v7523 = vpop.f32.mrb[0].mxu0
      %v7524 = vadd.f32 0.0, %v7523
      %v7525 = vpop.f32.mrb[0].mxu0
      %7526 = vmatprep.mubr.bf16.mxu0 %v7409
      %7527 = vmatmul.mubr.bf16.gmra.mrb[0].mxu0 %v7338
      %v7528 = vpop.f32.mrb[0].mxu0
      %v7529 = vadd.f32 0.0, %v7528
      %v7530 = vpop.f32.mrb[0].mxu0
      %v7531 = vpop.f32.mrb[0].mxu0
      %v7532 = vadd.f32 0.0, %v7531
      %v7533 = vpop.f32.mrb[0].mxu0
      %7534 = vmatprep.mubr.bf16.mxu0 %v7412
      %7535 = vmatmul.mubr.bf16.gmra.mrb[0].mxu0 %v7340
      %v7536 = vpop.f32.mrb[0].mxu0
      %v7537 = vadd.f32 0.0, %v7536
      %v7538 = vpop.f32.mrb[0].mxu0
      %v7539 = vpop.f32.mrb[0].mxu0
      %v7540 = vadd.f32 0.0, %v7539
      %v7541 = vpop.f32.mrb[0].mxu0
      %7542 = vdwg.mxu0
      %7543 = vrot.lane.b32.xlu0 %v5932, 64
      %v7544 = vpop.permute.xlu0 %7543
      %7545 = vrot.lane.b32.xlu0 %v5933, 64
      %v7546 = vpop.permute.xlu0 %7545
      %7547 = vrot.lane.b32.xlu0 %v5934, 64
      %v7548 = vpop.permute.xlu0 %7547
      %7549 = vrot.lane.b32.xlu0 %v5935, 64
      %v7550 = vpop.permute.xlu0 %7549
      %7551 = vrot.lane.b32.xlu0 %v5936, 64
      %v7552 = vpop.permute.xlu0 %7551
      %7553 = vrot.lane.b32.xlu0 %v5937, 64
      %v7554 = vpop.permute.xlu0 %7553
      %7555 = vrot.lane.b32.xlu0 %v5938, 64
      %v7556 = vpop.permute.xlu0 %7555
      %7557 = vrot.lane.b32.xlu0 %v5939, 64
      %v7558 = vpop.permute.xlu0 %7557
      %7559 = vrot.lane.b32.xlu0 %v5940, 64
      %v7560 = vpop.permute.xlu0 %7559
      %7561 = vrot.lane.b32.xlu0 %v5941, 64
      %v7562 = vpop.permute.xlu0 %7561
      %7563 = vrot.lane.b32.xlu0 %v5942, 64
      %v7564 = vpop.permute.xlu0 %7563
      %7565 = vrot.lane.b32.xlu0 %v5943, 64
      %v7566 = vpop.permute.xlu0 %7565
      %v7580 = vsel %vm360, %v6614, 0
      %v7583 = vsel %vm360, %v6616, 0
      %v7586 = vsel %vm360, %v6618, 0
      %v7589 = vsel %vm360, %v6620, 0
      %v7592 = vsel %vm360, %v6622, 0
      %v7595 = vsel %vm360, %v6624, 0
      %v7598 = vsel %vm360, %v6626, 0
      %v7601 = vsel %vm360, %v6628, 0
      %v7604 = vsel %vm360, %v6630, 0
      %v7607 = vsel %vm360, %v6632, 0
      %v7610 = vsel %vm360, %v6634, 0
      %v7613 = vsel %vm360, %v6636, 0
      %7615 = vmatprep.subr.bf16.mxu0 0
      %7616 = vmatpush1.bf16.msra.mxu0 %v7544
      %7617 = vmatprep.subr.bf16.mxu0 0
      %7618 = vmatpush1.bf16.msra.mxu0 %v7546
      %7619 = vmatprep.subr.bf16.mxu0 0
      %7620 = vmatpush1.bf16.msra.mxu0 %v7548
      %7621 = vmatprep.subr.bf16.mxu0 0
      %7622 = vmatpush1.bf16.msra.mxu0 %v7550
      %7623 = vmatprep.subr.bf16.mxu0 0
      %7624 = vmatpush1.bf16.msra.mxu0 %v7552
      %7625 = vmatprep.subr.bf16.mxu0 0
      %7626 = vmatpush1.bf16.msra.mxu0 %v7554
      %7627 = vmatprep.subr.bf16.mxu0 0
      %7628 = vmatpush1.bf16.msra.mxu0 %v7556
      %7629 = vmatprep.subr.bf16.mxu0 0
      %7630 = vmatpush1.bf16.msra.mxu0 %v7558
      %7631 = vmatprep.subr.bf16.mxu0 0
      %7632 = vmatpush1.bf16.msra.mxu0 %v7560
      %7633 = vmatprep.subr.bf16.mxu0 0
      %7634 = vmatpush1.bf16.msra.mxu0 %v7562
      %7635 = vmatprep.subr.bf16.mxu0 0
      %7636 = vmatpush1.bf16.msra.mxu0 %v7564
      %7637 = vmatprep.subr.bf16.mxu0 0
      %7638 = vmatpush1.bf16.msra.mxu0 %v7566
      %7639 = vmatprep.subr.bf16.mxu0 0
      %7640 = vmatpush1.bf16.msra.mxu0 0
      %7641 = vmatprep.subr.bf16.mxu0 0
      %7642 = vmatpush1.bf16.msra.mxu0 0
      %7643 = vmatprep.subr.bf16.mxu0 0
      %7644 = vmatpush1.bf16.msra.mxu0 0
      %7645 = vmatprep.subr.bf16.mxu0 0
      %7646 = vmatpush1.bf16.msra.mxu0 0
      %7647 = vmatprep.mubr.bf16.mxu0 %v7580
      %7648 = vmatmul.mubr.bf16.gmra.mrb[0].mxu0 %v6613
      %v7649 = vpop.f32.mrb[0].mxu0
      %v7650 = vadd.f32 %v7449, %v7649
      %v7651 = vpop.f32.mrb[0].mxu0
      %v7652 = vpop.f32.mrb[0].mxu0
      %v7653 = vadd.f32 %v7452, %v7652
      %v7654 = vpop.f32.mrb[0].mxu0
      %7655 = vmatprep.mubr.bf16.mxu0 %v7583
      %7656 = vmatmul.mubr.bf16.gmra.mrb[0].mxu0 %v6615
      %v7657 = vpop.f32.mrb[0].mxu0
      %v7658 = vadd.f32 %v7457, %v7657
      %v7659 = vpop.f32.mrb[0].mxu0
      %v7660 = vpop.f32.mrb[0].mxu0
      %v7661 = vadd.f32 %v7460, %v7660
      %v7662 = vpop.f32.mrb[0].mxu0
      %7663 = vmatprep.mubr.bf16.mxu0 %v7586
      %7664 = vmatmul.mubr.bf16.gmra.mrb[0].mxu0 %v6617
      %v7665 = vpop.f32.mrb[0].mxu0
      %v7666 = vadd.f32 %v7465, %v7665
      %v7667 = vpop.f32.mrb[0].mxu0
      %v7668 = vpop.f32.mrb[0].mxu0
      %v7669 = vadd.f32 %v7468, %v7668
      %v7670 = vpop.f32.mrb[0].mxu0
      %7671 = vmatprep.mubr.bf16.mxu0 %v7589
      %7672 = vmatmul.mubr.bf16.gmra.mrb[0].mxu0 %v6619
      %v7673 = vpop.f32.mrb[0].mxu0
      %v7674 = vadd.f32 %v7473, %v7673
      %v7675 = vpop.f32.mrb[0].mxu0
      %v7676 = vpop.f32.mrb[0].mxu0
      %v7677 = vadd.f32 %v7476, %v7676
      %v7678 = vpop.f32.mrb[0].mxu0
      %7679 = vmatprep.mubr.bf16.mxu0 %v7592
      %7680 = vmatmul.mubr.bf16.gmra.mrb[0].mxu0 %v6621
      %v7681 = vpop.f32.mrb[0].mxu0
      %v7682 = vadd.f32 %v7481, %v7681
      %v7683 = vpop.f32.mrb[0].mxu0
      %v7684 = vpop.f32.mrb[0].mxu0
      %v7685 = vadd.f32 %v7484, %v7684
      %v7686 = vpop.f32.mrb[0].mxu0
      %7687 = vmatprep.mubr.bf16.mxu0 %v7595
      %7688 = vmatmul.mubr.bf16.gmra.mrb[0].mxu0 %v6623
      %v7689 = vpop.f32.mrb[0].mxu0
      %v7690 = vadd.f32 %v7489, %v7689
      %v7691 = vpop.f32.mrb[0].mxu0
      %v7692 = vpop.f32.mrb[0].mxu0
      %v7693 = vadd.f32 %v7492, %v7692
      %v7694 = vpop.f32.mrb[0].mxu0
      %7695 = vmatprep.mubr.bf16.mxu0 %v7598
      %7696 = vmatmul.mubr.bf16.gmra.mrb[0].mxu0 %v6625
      %v7697 = vpop.f32.mrb[0].mxu0
      %v7698 = vadd.f32 %v7497, %v7697
      %v7699 = vpop.f32.mrb[0].mxu0
      %v7700 = vpop.f32.mrb[0].mxu0
      %v7701 = vadd.f32 %v7500, %v7700
      %v7702 = vpop.f32.mrb[0].mxu0
      %7703 = vmatprep.mubr.bf16.mxu0 %v7601
      %7704 = vmatmul.mubr.bf16.gmra.mrb[0].mxu0 %v6627
      %v7705 = vpop.f32.mrb[0].mxu0
      %v7706 = vadd.f32 %v7505, %v7705
      %v7707 = vpop.f32.mrb[0].mxu0
      %v7708 = vpop.f32.mrb[0].mxu0
      %v7709 = vadd.f32 %v7508, %v7708
      %v7710 = vpop.f32.mrb[0].mxu0
      %7711 = vmatprep.mubr.bf16.mxu0 %v7604
      %7712 = vmatmul.mubr.bf16.gmra.mrb[0].mxu0 %v6629
      %v7713 = vpop.f32.mrb[0].mxu0
      %v7714 = vadd.f32 %v7513, %v7713
      %v7715 = vpop.f32.mrb[0].mxu0
      %v7716 = vpop.f32.mrb[0].mxu0
      %v7717 = vadd.f32 %v7516, %v7716
      %v7718 = vpop.f32.mrb[0].mxu0
      %7719 = vmatprep.mubr.bf16.mxu0 %v7607
      %7720 = vmatmul.mubr.bf16.gmra.mrb[0].mxu0 %v6631
      %v7721 = vpop.f32.mrb[0].mxu0
      %v7722 = vadd.f32 %v7521, %v7721
      %v7723 = vpop.f32.mrb[0].mxu0
      %v7724 = vpop.f32.mrb[0].mxu0
      %v7725 = vadd.f32 %v7524, %v7724
      %v7726 = vpop.f32.mrb[0].mxu0
      %7727 = vmatprep.mubr.bf16.mxu0 %v7610
      %7728 = vmatmul.mubr.bf16.gmra.mrb[0].mxu0 %v6633
      %v7729 = vpop.f32.mrb[0].mxu0
      %v7730 = vadd.f32 %v7529, %v7729
      %v7731 = vpop.f32.mrb[0].mxu0
      %v7732 = vpop.f32.mrb[0].mxu0
      %v7733 = vadd.f32 %v7532, %v7732
      %v7734 = vpop.f32.mrb[0].mxu0
      %7735 = vmatprep.mubr.bf16.mxu0 %v7613
      %7736 = vmatmul.mubr.bf16.gmra.mrb[0].mxu0 %v6635
      %v7737 = vpop.f32.mrb[0].mxu0
      %v7738 = vadd.f32 %v7537, %v7737
      %v7739 = vpop.f32.mrb[0].mxu0
      %v7740 = vpop.f32.mrb[0].mxu0
      %v7741 = vadd.f32 %v7540, %v7740
      %v7742 = vpop.f32.mrb[0].mxu0
      %7743 = vdwg.mxu0
      %v7744 = vadd.f32 %v5344, %v7650
      %v7745 = vadd.f32 %v5345, %v7653
      %v7746 = vadd.f32 %v5346, %v7658
      %v7747 = vadd.f32 %v5347, %v7661
      %v7748 = vadd.f32 %v5348, %v7666
      %v7749 = vadd.f32 %v5349, %v7669
      %v7750 = vadd.f32 %v5350, %v7674
      %v7751 = vadd.f32 %v5351, %v7677
      %v7752 = vadd.f32 %v5352, %v7682
      %v7753 = vadd.f32 %v5353, %v7685
      %v7754 = vadd.f32 %v5354, %v7690
      %v7755 = vadd.f32 %v5355, %v7693
      %v7756 = vadd.f32 %v5356, %v7698
      %v7757 = vadd.f32 %v5357, %v7701
      %v7758 = vadd.f32 %v5358, %v7706
      %v7759 = vadd.f32 %v5359, %v7709
      %v7760 = vadd.f32 %v5360, %v7714
      %v7761 = vadd.f32 %v5361, %v7717
      %v7762 = vadd.f32 %v5362, %v7722
      %v7763 = vadd.f32 %v5363, %v7725
      %v7764 = vadd.f32 %v5364, %v7730
      %v7765 = vadd.f32 %v5365, %v7733
      %v7766 = vadd.f32 %v5366, %v7738
      %v7767 = vadd.f32 %v5367, %v7741
      %v7768 = vld [vmem:[%s3 + $0xe] sm:$0x1]
      %v7769 = vlaneseq
      %v7770 = vshrl.u32 %v7769, 7
      %v7771 = vsub.s32 0, %v7770
      %v7772 = vrot.slane %v7768, %v7771
      %v7773 = vadd.f32 %v7744, %v7772
      %v7774 = vadd.f32 %v7745, %v7772
      %v7775 = vadd.f32 %v7746, %v7772
      %v7776 = vadd.f32 %v7747, %v7772
      %v7777 = vadd.f32 %v7748, %v7772
      %v7778 = vadd.f32 %v7749, %v7772
      %v7779 = vadd.f32 %v7750, %v7772
      %v7780 = vadd.f32 %v7751, %v7772
      %v7781 = vadd.f32 %v7752, %v7772
      %v7782 = vadd.f32 %v7753, %v7772
      %v7783 = vadd.f32 %v7754, %v7772
      %v7784 = vadd.f32 %v7755, %v7772
      %v7785 = vadd.f32 %v7756, %v7772
      %v7786 = vadd.f32 %v7757, %v7772
      %v7787 = vadd.f32 %v7758, %v7772
      %v7788 = vadd.f32 %v7759, %v7772
      %v7789 = vadd.f32 %v7760, %v7772
      %v7790 = vadd.f32 %v7761, %v7772
      %v7791 = vadd.f32 %v7762, %v7772
      %v7792 = vadd.f32 %v7763, %v7772
      %v7793 = vadd.f32 %v7764, %v7772
      %v7794 = vadd.f32 %v7765, %v7772
      %v7795 = vadd.f32 %v7766, %v7772
      %v7796 = vadd.f32 %v7767, %v7772
      %v7797 = vld [vmem:[%s3 + $0xf] sm:$0x1]
      %v7798 = vld [vmem:[%s3 + $0x10] sm:$0x1]
      %v7799 = vsel %vm946, %v7773, 0.0
      %7800 = vadd.xlane.f32.xlu0 %v7799
      %v7801 = vpop.xlane.xlu0 %7800
      %v7802 = vsel %vm946, %v7774, 0.0
      %7803 = vadd.xlane.f32.xlu0 %v7802
      %v7804 = vpop.xlane.xlu0 %7803
      %v7805 = vsel %vm946, %v7775, 0.0
      %7806 = vadd.xlane.f32.xlu0 %v7805
      %v7807 = vpop.xlane.xlu0 %7806
      %v7808 = vsel %vm946, %v7776, 0.0
      %7809 = vadd.xlane.f32.xlu0 %v7808
      %v7810 = vpop.xlane.xlu0 %7809
      %v7811 = vsel %vm946, %v7777, 0.0
      %7812 = vadd.xlane.f32.xlu0 %v7811
      %v7813 = vpop.xlane.xlu0 %7812
      %v7814 = vsel %vm946, %v7778, 0.0
      %7815 = vadd.xlane.f32.xlu0 %v7814
      %v7816 = vpop.xlane.xlu0 %7815
      %v7817 = vsel %vm946, %v7779, 0.0
      %7818 = vadd.xlane.f32.xlu0 %v7817
      %v7819 = vpop.xlane.xlu0 %7818
      %v7820 = vsel %vm946, %v7780, 0.0
      %7821 = vadd.xlane.f32.xlu0 %v7820
      %v7822 = vpop.xlane.xlu0 %7821
      %v7823 = vsel %vm946, %v7781, 0.0
      %7824 = vadd.xlane.f32.xlu0 %v7823
      %v7825 = vpop.xlane.xlu0 %7824
      %v7826 = vsel %vm946, %v7782, 0.0
      %7827 = vadd.xlane.f32.xlu0 %v7826
      %v7828 = vpop.xlane.xlu0 %7827
      %v7829 = vsel %vm946, %v7783, 0.0
      %7830 = vadd.xlane.f32.xlu0 %v7829
      %v7831 = vpop.xlane.xlu0 %7830
      %v7832 = vsel %vm946, %v7784, 0.0
      %7833 = vadd.xlane.f32.xlu0 %v7832
      %v7834 = vpop.xlane.xlu0 %7833
      %v7835 = vsel %vm946, %v7785, 0.0
      %7836 = vadd.xlane.f32.xlu0 %v7835
      %v7837 = vpop.xlane.xlu0 %7836
      %v7838 = vsel %vm946, %v7786, 0.0
      %7839 = vadd.xlane.f32.xlu0 %v7838
      %v7840 = vpop.xlane.xlu0 %7839
      %v7841 = vsel %vm946, %v7787, 0.0
      %7842 = vadd.xlane.f32.xlu0 %v7841
      %v7843 = vpop.xlane.xlu0 %7842
      %v7844 = vsel %vm946, %v7788, 0.0
      %7845 = vadd.xlane.f32.xlu0 %v7844
      %v7846 = vpop.xlane.xlu0 %7845
      %v7847 = vsel %vm946, %v7789, 0.0
      %7848 = vadd.xlane.f32.xlu0 %v7847
      %v7849 = vpop.xlane.xlu0 %7848
      %v7850 = vsel %vm946, %v7790, 0.0
      %7851 = vadd.xlane.f32.xlu0 %v7850
      %v7852 = vpop.xlane.xlu0 %7851
      %v7853 = vsel %vm946, %v7791, 0.0
      %7854 = vadd.xlane.f32.xlu0 %v7853
      %v7855 = vpop.xlane.xlu0 %7854
      %v7856 = vsel %vm946, %v7792, 0.0
      %7857 = vadd.xlane.f32.xlu0 %v7856
      %v7858 = vpop.xlane.xlu0 %7857
      %v7859 = vsel %vm946, %v7793, 0.0
      %7860 = vadd.xlane.f32.xlu0 %v7859
      %v7861 = vpop.xlane.xlu0 %7860
      %v7862 = vsel %vm946, %v7794, 0.0
      %7863 = vadd.xlane.f32.xlu0 %v7862
      %v7864 = vpop.xlane.xlu0 %7863
      %v7865 = vsel %vm946, %v7795, 0.0
      %7866 = vadd.xlane.f32.xlu0 %v7865
      %v7867 = vpop.xlane.xlu0 %7866
      %v7868 = vsel %vm946, %v7796, 0.0
      %7869 = vadd.xlane.f32.xlu0 %v7868
      %v7870 = vpop.xlane.xlu0 %7869
      %v7871 = vmul.f32 %v7801, %v1019
      %v7872 = vmul.f32 %v7804, %v1019
      %v7873 = vmul.f32 %v7807, %v1019
      %v7874 = vmul.f32 %v7810, %v1019
      %v7875 = vmul.f32 %v7813, %v1019
      %v7876 = vmul.f32 %v7816, %v1019
      %v7877 = vmul.f32 %v7819, %v1019
      %v7878 = vmul.f32 %v7822, %v1019
      %v7879 = vmul.f32 %v7825, %v1019
      %v7880 = vmul.f32 %v7828, %v1019
      %v7881 = vmul.f32 %v7831, %v1019
      %v7882 = vmul.f32 %v7834, %v1019
      %v7883 = vmul.f32 %v7837, %v1019
      %v7884 = vmul.f32 %v7840, %v1019
      %v7885 = vmul.f32 %v7843, %v1019
      %v7886 = vmul.f32 %v7846, %v1019
      %v7887 = vmul.f32 %v7849, %v1019
      %v7888 = vmul.f32 %v7852, %v1019
      %v7889 = vmul.f32 %v7855, %v1019
      %v7890 = vmul.f32 %v7858, %v1019
      %v7891 = vmul.f32 %v7861, %v1019
      %v7892 = vmul.f32 %v7864, %v1019
      %v7893 = vmul.f32 %v7867, %v1019
      %v7894 = vmul.f32 %v7870, %v1019
      %v7895 = vsub.f32 %v7773, %v7871
      %v7896 = vsub.f32 %v7774, %v7872
      %v7897 = vsub.f32 %v7775, %v7873
      %v7898 = vsub.f32 %v7776, %v7874
      %v7899 = vsub.f32 %v7777, %v7875
      %v7900 = vsub.f32 %v7778, %v7876
      %v7901 = vsub.f32 %v7779, %v7877
      %v7902 = vsub.f32 %v7780, %v7878
      %v7903 = vsub.f32 %v7781, %v7879
      %v7904 = vsub.f32 %v7782, %v7880
      %v7905 = vsub.f32 %v7783, %v7881
      %v7906 = vsub.f32 %v7784, %v7882
      %v7907 = vsub.f32 %v7785, %v7883
      %v7908 = vsub.f32 %v7786, %v7884
      %v7909 = vsub.f32 %v7787, %v7885
      %v7910 = vsub.f32 %v7788, %v7886
      %v7911 = vsub.f32 %v7789, %v7887
      %v7912 = vsub.f32 %v7790, %v7888
      %v7913 = vsub.f32 %v7791, %v7889
      %v7914 = vsub.f32 %v7792, %v7890
      %v7915 = vsub.f32 %v7793, %v7891
      %v7916 = vsub.f32 %v7794, %v7892
      %v7917 = vsub.f32 %v7795, %v7893
      %v7918 = vsub.f32 %v7796, %v7894
      %v7919 = vmul.f32 %v7895, %v7895
      %v7920 = vmul.f32 %v7896, %v7896
      %v7921 = vmul.f32 %v7897, %v7897
      %v7922 = vmul.f32 %v7898, %v7898
      %v7923 = vmul.f32 %v7899, %v7899
      %v7924 = vmul.f32 %v7900, %v7900
      %v7925 = vmul.f32 %v7901, %v7901
      %v7926 = vmul.f32 %v7902, %v7902
      %v7927 = vmul.f32 %v7903, %v7903
      %v7928 = vmul.f32 %v7904, %v7904
      %v7929 = vmul.f32 %v7905, %v7905
      %v7930 = vmul.f32 %v7906, %v7906
      %v7931 = vmul.f32 %v7907, %v7907
      %v7932 = vmul.f32 %v7908, %v7908
      %v7933 = vmul.f32 %v7909, %v7909
      %v7934 = vmul.f32 %v7910, %v7910
      %v7935 = vmul.f32 %v7911, %v7911
      %v7936 = vmul.f32 %v7912, %v7912
      %v7937 = vmul.f32 %v7913, %v7913
      %v7938 = vmul.f32 %v7914, %v7914
      %v7939 = vmul.f32 %v7915, %v7915
      %v7940 = vmul.f32 %v7916, %v7916
      %v7941 = vmul.f32 %v7917, %v7917
      %v7942 = vmul.f32 %v7918, %v7918
      %v7943 = vsel %vm946, %v7919, 0.0
      %7944 = vadd.xlane.f32.xlu0 %v7943
      %v7945 = vpop.xlane.xlu0 %7944
      %v7946 = vsel %vm946, %v7920, 0.0
      %7947 = vadd.xlane.f32.xlu0 %v7946
      %v7948 = vpop.xlane.xlu0 %7947
      %v7949 = vsel %vm946, %v7921, 0.0
      %7950 = vadd.xlane.f32.xlu0 %v7949
      %v7951 = vpop.xlane.xlu0 %7950
      %v7952 = vsel %vm946, %v7922, 0.0
      %7953 = vadd.xlane.f32.xlu0 %v7952
      %v7954 = vpop.xlane.xlu0 %7953
      %v7955 = vsel %vm946, %v7923, 0.0
      %7956 = vadd.xlane.f32.xlu0 %v7955
      %v7957 = vpop.xlane.xlu0 %7956
      %v7958 = vsel %vm946, %v7924, 0.0
      %7959 = vadd.xlane.f32.xlu0 %v7958
      %v7960 = vpop.xlane.xlu0 %7959
      %v7961 = vsel %vm946, %v7925, 0.0
      %7962 = vadd.xlane.f32.xlu0 %v7961
      %v7963 = vpop.xlane.xlu0 %7962
      %v7964 = vsel %vm946, %v7926, 0.0
      %7965 = vadd.xlane.f32.xlu0 %v7964
      %v7966 = vpop.xlane.xlu0 %7965
      %v7967 = vsel %vm946, %v7927, 0.0
      %7968 = vadd.xlane.f32.xlu0 %v7967
      %v7969 = vpop.xlane.xlu0 %7968
      %v7970 = vsel %vm946, %v7928, 0.0
      %7971 = vadd.xlane.f32.xlu0 %v7970
      %v7972 = vpop.xlane.xlu0 %7971
      %v7973 = vsel %vm946, %v7929, 0.0
      %7974 = vadd.xlane.f32.xlu0 %v7973
      %v7975 = vpop.xlane.xlu0 %7974
      %v7976 = vsel %vm946, %v7930, 0.0
      %7977 = vadd.xlane.f32.xlu0 %v7976
      %v7978 = vpop.xlane.xlu0 %7977
      %v7979 = vsel %vm946, %v7931, 0.0
      %7980 = vadd.xlane.f32.xlu0 %v7979
      %v7981 = vpop.xlane.xlu0 %7980
      %v7982 = vsel %vm946, %v7932, 0.0
      %7983 = vadd.xlane.f32.xlu0 %v7982
      %v7984 = vpop.xlane.xlu0 %7983
      %v7985 = vsel %vm946, %v7933, 0.0
      %7986 = vadd.xlane.f32.xlu0 %v7985
      %v7987 = vpop.xlane.xlu0 %7986
      %v7988 = vsel %vm946, %v7934, 0.0
      %7989 = vadd.xlane.f32.xlu0 %v7988
      %v7990 = vpop.xlane.xlu0 %7989
      %v7991 = vsel %vm946, %v7935, 0.0
      %7992 = vadd.xlane.f32.xlu0 %v7991
      %v7993 = vpop.xlane.xlu0 %7992
      %v7994 = vsel %vm946, %v7936, 0.0
      %7995 = vadd.xlane.f32.xlu0 %v7994
      %v7996 = vpop.xlane.xlu0 %7995
      %v7997 = vsel %vm946, %v7937, 0.0
      %7998 = vadd.xlane.f32.xlu0 %v7997
      %v7999 = vpop.xlane.xlu0 %7998
      %v8000 = vsel %vm946, %v7938, 0.0
      %8001 = vadd.xlane.f32.xlu0 %v8000
      %v8002 = vpop.xlane.xlu0 %8001
      %v8003 = vsel %vm946, %v7939, 0.0
      %8004 = vadd.xlane.f32.xlu0 %v8003
      %v8005 = vpop.xlane.xlu0 %8004
      %v8006 = vsel %vm946, %v7940, 0.0
      %8007 = vadd.xlane.f32.xlu0 %v8006
      %v8008 = vpop.xlane.xlu0 %8007
      %v8009 = vsel %vm946, %v7941, 0.0
      %8010 = vadd.xlane.f32.xlu0 %v8009
      %v8011 = vpop.xlane.xlu0 %8010
      %v8012 = vsel %vm946, %v7942, 0.0
      %8013 = vadd.xlane.f32.xlu0 %v8012
      %v8014 = vpop.xlane.xlu0 %8013
      %v8015 = vmul.f32 %v7945, %v1019
      %v8016 = vmul.f32 %v7948, %v1019
      %v8017 = vmul.f32 %v7951, %v1019
      %v8018 = vmul.f32 %v7954, %v1019
      %v8019 = vmul.f32 %v7957, %v1019
      %v8020 = vmul.f32 %v7960, %v1019
      %v8021 = vmul.f32 %v7963, %v1019
      %v8022 = vmul.f32 %v7966, %v1019
      %v8023 = vmul.f32 %v7969, %v1019
      %v8024 = vmul.f32 %v7972, %v1019
      %v8025 = vmul.f32 %v7975, %v1019
      %v8026 = vmul.f32 %v7978, %v1019
      %v8027 = vmul.f32 %v7981, %v1019
      %v8028 = vmul.f32 %v7984, %v1019
      %v8029 = vmul.f32 %v7987, %v1019
      %v8030 = vmul.f32 %v7990, %v1019
      %v8031 = vmul.f32 %v7993, %v1019
      %v8032 = vmul.f32 %v7996, %v1019
      %v8033 = vmul.f32 %v7999, %v1019
      %v8034 = vmul.f32 %v8002, %v1019
      %v8035 = vmul.f32 %v8005, %v1019
      %v8036 = vmul.f32 %v8008, %v1019
      %v8037 = vmul.f32 %v8011, %v1019
      %v8038 = vmul.f32 %v8014, %v1019
      %v8039 = vadd.f32 %v8015, 1e-05
      %v8040 = vadd.f32 %v8016, 1e-05
      %v8041 = vadd.f32 %v8017, 1e-05
      %v8042 = vadd.f32 %v8018, 1e-05
      %v8043 = vadd.f32 %v8019, 1e-05
      %v8044 = vadd.f32 %v8020, 1e-05
      %v8045 = vadd.f32 %v8021, 1e-05
      %v8046 = vadd.f32 %v8022, 1e-05
      %v8047 = vadd.f32 %v8023, 1e-05
      %v8048 = vadd.f32 %v8024, 1e-05
      %v8049 = vadd.f32 %v8025, 1e-05
      %v8050 = vadd.f32 %v8026, 1e-05
      %v8051 = vadd.f32 %v8027, 1e-05
      %v8052 = vadd.f32 %v8028, 1e-05
      %v8053 = vadd.f32 %v8029, 1e-05
      %v8054 = vadd.f32 %v8030, 1e-05
      %v8055 = vadd.f32 %v8031, 1e-05
      %v8056 = vadd.f32 %v8032, 1e-05
      %v8057 = vadd.f32 %v8033, 1e-05
      %v8058 = vadd.f32 %v8034, 1e-05
      %v8059 = vadd.f32 %v8035, 1e-05
      %v8060 = vadd.f32 %v8036, 1e-05
      %v8061 = vadd.f32 %v8037, 1e-05
      %v8062 = vadd.f32 %v8038, 1e-05
      %v8063 = vrsqrt.pop %v8039
      %v8064 = vrsqrt.pop %v8040
      %v8065 = vrsqrt.pop %v8041
      %v8066 = vrsqrt.pop %v8042
      %v8067 = vrsqrt.pop %v8043
      %v8068 = vrsqrt.pop %v8044
      %v8069 = vrsqrt.pop %v8045
      %v8070 = vrsqrt.pop %v8046
      %v8071 = vrsqrt.pop %v8047
      %v8072 = vrsqrt.pop %v8048
      %v8073 = vrsqrt.pop %v8049
      %v8074 = vrsqrt.pop %v8050
      %v8075 = vrsqrt.pop %v8051
      %v8076 = vrsqrt.pop %v8052
      %v8077 = vrsqrt.pop %v8053
      %v8078 = vrsqrt.pop %v8054
      %v8079 = vrsqrt.pop %v8055
      %v8080 = vrsqrt.pop %v8056
      %v8081 = vrsqrt.pop %v8057
      %v8082 = vrsqrt.pop %v8058
      %v8083 = vrsqrt.pop %v8059
      %v8084 = vrsqrt.pop %v8060
      %v8085 = vrsqrt.pop %v8061
      %v8086 = vrsqrt.pop %v8062
      %v8087 = vmul.f32 %v7895, %v8063
      %v8088 = vmul.f32 %v7896, %v8064
      %v8089 = vmul.f32 %v7897, %v8065
      %v8090 = vmul.f32 %v7898, %v8066
      %v8091 = vmul.f32 %v7899, %v8067
      %v8092 = vmul.f32 %v7900, %v8068
      %v8093 = vmul.f32 %v7901, %v8069
      %v8094 = vmul.f32 %v7902, %v8070
      %v8095 = vmul.f32 %v7903, %v8071
      %v8096 = vmul.f32 %v7904, %v8072
      %v8097 = vmul.f32 %v7905, %v8073
      %v8098 = vmul.f32 %v7906, %v8074
      %v8099 = vmul.f32 %v7907, %v8075
      %v8100 = vmul.f32 %v7908, %v8076
      %v8101 = vmul.f32 %v7909, %v8077
      %v8102 = vmul.f32 %v7910, %v8078
      %v8103 = vmul.f32 %v7911, %v8079
      %v8104 = vmul.f32 %v7912, %v8080
      %v8105 = vmul.f32 %v7913, %v8081
      %v8106 = vmul.f32 %v7914, %v8082
      %v8107 = vmul.f32 %v7915, %v8083
      %v8108 = vmul.f32 %v7916, %v8084
      %v8109 = vmul.f32 %v7917, %v8085
      %v8110 = vmul.f32 %v7918, %v8086
      %v8111 = vlaneseq
      %v8112 = vshrl.u32 %v8111, 7
      %v8113 = vsub.s32 0, %v8112
      %v8114 = vrot.slane %v7797, %v8113
      %v8115 = vmul.f32 %v8087, %v8114
      %v8116 = vmul.f32 %v8088, %v8114
      %v8117 = vmul.f32 %v8089, %v8114
      %v8118 = vmul.f32 %v8090, %v8114
      %v8119 = vmul.f32 %v8091, %v8114
      %v8120 = vmul.f32 %v8092, %v8114
      %v8121 = vmul.f32 %v8093, %v8114
      %v8122 = vmul.f32 %v8094, %v8114
      %v8123 = vmul.f32 %v8095, %v8114
      %v8124 = vmul.f32 %v8096, %v8114
      %v8125 = vmul.f32 %v8097, %v8114
      %v8126 = vmul.f32 %v8098, %v8114
      %v8127 = vmul.f32 %v8099, %v8114
      %v8128 = vmul.f32 %v8100, %v8114
      %v8129 = vmul.f32 %v8101, %v8114
      %v8130 = vmul.f32 %v8102, %v8114
      %v8131 = vmul.f32 %v8103, %v8114
      %v8132 = vmul.f32 %v8104, %v8114
      %v8133 = vmul.f32 %v8105, %v8114
      %v8134 = vmul.f32 %v8106, %v8114
      %v8135 = vmul.f32 %v8107, %v8114
      %v8136 = vmul.f32 %v8108, %v8114
      %v8137 = vmul.f32 %v8109, %v8114
      %v8138 = vmul.f32 %v8110, %v8114
      %v8139 = vlaneseq
      %v8140 = vshrl.u32 %v8139, 7
      %v8141 = vsub.s32 0, %v8140
      %v8142 = vrot.slane %v7798, %v8141
      %v8143 = vadd.f32 %v8115, %v8142
      %v8144 = vadd.f32 %v8116, %v8142
      %v8145 = vadd.f32 %v8117, %v8142
      %v8146 = vadd.f32 %v8118, %v8142
      %v8147 = vadd.f32 %v8119, %v8142
      %v8148 = vadd.f32 %v8120, %v8142
      %v8149 = vadd.f32 %v8121, %v8142
      %v8150 = vadd.f32 %v8122, %v8142
      %v8151 = vadd.f32 %v8123, %v8142
      %v8152 = vadd.f32 %v8124, %v8142
      %v8153 = vadd.f32 %v8125, %v8142
      %v8154 = vadd.f32 %v8126, %v8142
      %v8155 = vadd.f32 %v8127, %v8142
      %v8156 = vadd.f32 %v8128, %v8142
      %v8157 = vadd.f32 %v8129, %v8142
      %v8158 = vadd.f32 %v8130, %v8142
      %v8159 = vadd.f32 %v8131, %v8142
      %v8160 = vadd.f32 %v8132, %v8142
      %v8161 = vadd.f32 %v8133, %v8142
      %v8162 = vadd.f32 %v8134, %v8142
      %v8163 = vadd.f32 %v8135, %v8142
      %v8164 = vadd.f32 %v8136, %v8142
      %v8165 = vadd.f32 %v8137, %v8142
      %v8166 = vadd.f32 %v8138, %v8142
      %s8167 = scalar_lea.vmem %s6, 16
      %v8168 = vld [vmem:[%s8167] sm:$0xf]
      %v8169 = vld [vmem:[%s8167 + $0x4] sm:$0xf]
      %v8170 = vld [vmem:[%s8167 + $0x8] sm:$0xf]
      %v8171 = vld [vmem:[%s8167 + $0xc] sm:$0xf]
      %v8172 = vpack.c.bf16 %v8144, %v8143
      %v8173 = vpack.c.bf16 %v8146, %v8145
      %v8174 = vpack.c.bf16 %v8148, %v8147
      %v8175 = vpack.c.bf16 %v8150, %v8149
      %v8176 = vpack.c.bf16 %v8152, %v8151
      %v8177 = vpack.c.bf16 %v8154, %v8153
      %v8178 = vpack.c.bf16 %v8156, %v8155
      %v8179 = vpack.c.bf16 %v8158, %v8157
      %v8180 = vpack.c.bf16 %v8160, %v8159
      %v8181 = vpack.c.bf16 %v8162, %v8161
      %v8182 = vpack.c.bf16 %v8164, %v8163
      %v8183 = vpack.c.bf16 %v8166, %v8165
      %v8184 = vld [vmem:[%s3 + $0x11] sm:$0x1]
      %v8185 = vlaneseq
      %v8186 = vshrl.u32 %v8185, 7
      %v8187 = vsub.s32 0, %v8186
      %v8188 = vrot.slane %v8184, %v8187
      %v8193 = vunpack.c.l.b16 %v8168
      %v8194 = vunpack.c.l.b16 %v8169
      %v8195 = vunpack.c.l.b16 %v8170
      %v8196 = vunpack.c.l.b16 %v8171
      %v8197 = vpack.c.b16 %v8194, %v8193
      %v8198 = vpack.c.b16 %v8196, %v8195
      %v8202 = vsel %vm946, %v8172, 0
      %v8205 = vsel %vm946, %v8173, 0
      %v8208 = vsel %vm946, %v8174, 0
      %v8211 = vsel %vm946, %v8175, 0
      %v8214 = vsel %vm946, %v8176, 0
      %v8217 = vsel %vm946, %v8177, 0
      %v8220 = vsel %vm946, %v8178, 0
      %v8223 = vsel %vm946, %v8179, 0
      %v8226 = vsel %vm946, %v8180, 0
      %v8229 = vsel %vm946, %v8181, 0
      %v8232 = vsel %vm946, %v8182, 0
      %v8235 = vsel %vm946, %v8183, 0
      %8237 = vmatprep.subr.bf16.mxu0 0
      %8238 = vmatpush1.bf16.msra.mxu0 %v8197
      %8239 = vmatprep.subr.bf16.mxu0 0
      %8240 = vmatpush1.bf16.msra.mxu0 %v8198
      %8241 = vmatprep.subr.bf16.mxu0 0
      %8242 = vmatpush1.bf16.msra.mxu0 0
      %8243 = vmatprep.subr.bf16.mxu0 0
      %8244 = vmatpush1.bf16.msra.mxu0 0
      %8245 = vmatprep.subr.bf16.mxu0 0
      %8246 = vmatpush1.bf16.msra.mxu0 0
      %8247 = vmatprep.subr.bf16.mxu0 0
      %8248 = vmatpush1.bf16.msra.mxu0 0
      %8249 = vmatprep.subr.bf16.mxu0 0
      %8250 = vmatpush1.bf16.msra.mxu0 0
      %8251 = vmatprep.subr.bf16.mxu0 0
      %8252 = vmatpush1.bf16.msra.mxu0 0
      %8253 = vmatprep.subr.bf16.mxu0 0
      %8254 = vmatpush1.bf16.msra.mxu0 0
      %8255 = vmatprep.subr.bf16.mxu0 0
      %8256 = vmatpush1.bf16.msra.mxu0 0
      %8257 = vmatprep.subr.bf16.mxu0 0
      %8258 = vmatpush1.bf16.msra.mxu0 0
      %8259 = vmatprep.subr.bf16.mxu0 0
      %8260 = vmatpush1.bf16.msra.mxu0 0
      %8261 = vmatprep.subr.bf16.mxu0 0
      %8262 = vmatpush1.bf16.msra.mxu0 0
      %8263 = vmatprep.subr.bf16.mxu0 0
      %8264 = vmatpush1.bf16.msra.mxu0 0
      %8265 = vmatprep.subr.bf16.mxu0 0
      %8266 = vmatpush1.bf16.msra.mxu0 0
      %8267 = vmatprep.subr.bf16.mxu0 0
      %8268 = vmatpush1.bf16.msra.mxu0 0
      %8269 = vmatprep.mubr.bf16.mxu0 0
      %8270 = vmatmul.mubr.bf16.gmra.mrb[0].mxu0 %v8202
      %v8271 = vpop.f32.mrb[0].mxu0
      %v8272 = vadd.f32 %v8188, %v8271
      %v8273 = vpop.f32.mrb[0].mxu0
      %v8274 = vpop.f32.mrb[0].mxu0
      %v8275 = vadd.f32 %v8188, %v8274
      %v8276 = vpop.f32.mrb[0].mxu0
      %8277 = vmatprep.mubr.bf16.mxu0 0
      %8278 = vmatmul.mubr.bf16.gmra.mrb[0].mxu0 %v8205
      %v8279 = vpop.f32.mrb[0].mxu0
      %v8280 = vadd.f32 %v8188, %v8279
      %v8281 = vpop.f32.mrb[0].mxu0
      %v8282 = vpop.f32.mrb[0].mxu0
      %v8283 = vadd.f32 %v8188, %v8282
      %v8284 = vpop.f32.mrb[0].mxu0
      %8285 = vmatprep.mubr.bf16.mxu0 0
      %8286 = vmatmul.mubr.bf16.gmra.mrb[0].mxu0 %v8208
      %v8287 = vpop.f32.mrb[0].mxu0
      %v8288 = vadd.f32 %v8188, %v8287
      %v8289 = vpop.f32.mrb[0].mxu0
      %v8290 = vpop.f32.mrb[0].mxu0
      %v8291 = vadd.f32 %v8188, %v8290
      %v8292 = vpop.f32.mrb[0].mxu0
      %8293 = vmatprep.mubr.bf16.mxu0 0
      %8294 = vmatmul.mubr.bf16.gmra.mrb[0].mxu0 %v8211
      %v8295 = vpop.f32.mrb[0].mxu0
      %v8296 = vadd.f32 %v8188, %v8295
      %v8297 = vpop.f32.mrb[0].mxu0
      %v8298 = vpop.f32.mrb[0].mxu0
      %v8299 = vadd.f32 %v8188, %v8298
      %v8300 = vpop.f32.mrb[0].mxu0
      %8301 = vmatprep.mubr.bf16.mxu0 0
      %8302 = vmatmul.mubr.bf16.gmra.mrb[0].mxu0 %v8214
      %v8303 = vpop.f32.mrb[0].mxu0
      %v8304 = vadd.f32 %v8188, %v8303
      %v8305 = vpop.f32.mrb[0].mxu0
      %v8306 = vpop.f32.mrb[0].mxu0
      %v8307 = vadd.f32 %v8188, %v8306
      %v8308 = vpop.f32.mrb[0].mxu0
      %8309 = vmatprep.mubr.bf16.mxu0 0
      %8310 = vmatmul.mubr.bf16.gmra.mrb[0].mxu0 %v8217
      %v8311 = vpop.f32.mrb[0].mxu0
      %v8312 = vadd.f32 %v8188, %v8311
      %v8313 = vpop.f32.mrb[0].mxu0
      %v8314 = vpop.f32.mrb[0].mxu0
      %v8315 = vadd.f32 %v8188, %v8314
      %v8316 = vpop.f32.mrb[0].mxu0
      %8317 = vmatprep.mubr.bf16.mxu0 0
      %8318 = vmatmul.mubr.bf16.gmra.mrb[0].mxu0 %v8220
      %v8319 = vpop.f32.mrb[0].mxu0
      %v8320 = vadd.f32 %v8188, %v8319
      %v8321 = vpop.f32.mrb[0].mxu0
      %v8322 = vpop.f32.mrb[0].mxu0
      %v8323 = vadd.f32 %v8188, %v8322
      %v8324 = vpop.f32.mrb[0].mxu0
      %8325 = vmatprep.mubr.bf16.mxu0 0
      %8326 = vmatmul.mubr.bf16.gmra.mrb[0].mxu0 %v8223
      %v8327 = vpop.f32.mrb[0].mxu0
      %v8328 = vadd.f32 %v8188, %v8327
      %v8329 = vpop.f32.mrb[0].mxu0
      %v8330 = vpop.f32.mrb[0].mxu0
      %v8331 = vadd.f32 %v8188, %v8330
      %v8332 = vpop.f32.mrb[0].mxu0
      %8333 = vmatprep.mubr.bf16.mxu0 0
      %8334 = vmatmul.mubr.bf16.gmra.mrb[0].mxu0 %v8226
      %v8335 = vpop.f32.mrb[0].mxu0
      %v8336 = vadd.f32 %v8188, %v8335
      %v8337 = vpop.f32.mrb[0].mxu0
      %v8338 = vpop.f32.mrb[0].mxu0
      %v8339 = vadd.f32 %v8188, %v8338
      %v8340 = vpop.f32.mrb[0].mxu0
      %8341 = vmatprep.mubr.bf16.mxu0 0
      %8342 = vmatmul.mubr.bf16.gmra.mrb[0].mxu0 %v8229
      %v8343 = vpop.f32.mrb[0].mxu0
      %v8344 = vadd.f32 %v8188, %v8343
      %v8345 = vpop.f32.mrb[0].mxu0
      %v8346 = vpop.f32.mrb[0].mxu0
      %v8347 = vadd.f32 %v8188, %v8346
      %v8348 = vpop.f32.mrb[0].mxu0
      %8349 = vmatprep.mubr.bf16.mxu0 0
      %8350 = vmatmul.mubr.bf16.gmra.mrb[0].mxu0 %v8232
      %v8351 = vpop.f32.mrb[0].mxu0
      %v8352 = vadd.f32 %v8188, %v8351
      %v8353 = vpop.f32.mrb[0].mxu0
      %v8354 = vpop.f32.mrb[0].mxu0
      %v8355 = vadd.f32 %v8188, %v8354
      %v8356 = vpop.f32.mrb[0].mxu0
      %8357 = vmatprep.mubr.bf16.mxu0 0
      %8358 = vmatmul.mubr.bf16.gmra.mrb[0].mxu0 %v8235
      %v8359 = vpop.f32.mrb[0].mxu0
      %v8360 = vadd.f32 %v8188, %v8359
      %v8361 = vpop.f32.mrb[0].mxu0
      %v8362 = vpop.f32.mrb[0].mxu0
      %v8363 = vadd.f32 %v8188, %v8362
      %v8364 = vpop.f32.mrb[0].mxu0
      %8365 = vdwg.mxu0
      %v8366 = vmul.f32 %v8272, 0.5
      %v8367 = vmul.f32 %v8275, 0.5
      %v8368 = vmul.f32 %v8280, 0.5
      %v8369 = vmul.f32 %v8283, 0.5
      %v8370 = vmul.f32 %v8288, 0.5
      %v8371 = vmul.f32 %v8291, 0.5
      %v8372 = vmul.f32 %v8296, 0.5
      %v8373 = vmul.f32 %v8299, 0.5
      %v8374 = vmul.f32 %v8304, 0.5
      %v8375 = vmul.f32 %v8307, 0.5
      %v8376 = vmul.f32 %v8312, 0.5
      %v8377 = vmul.f32 %v8315, 0.5
      %v8378 = vmul.f32 %v8320, 0.5
      %v8379 = vmul.f32 %v8323, 0.5
      %v8380 = vmul.f32 %v8328, 0.5
      %v8381 = vmul.f32 %v8331, 0.5
      %v8382 = vmul.f32 %v8336, 0.5
      %v8383 = vmul.f32 %v8339, 0.5
      %v8384 = vmul.f32 %v8344, 0.5
      %v8385 = vmul.f32 %v8347, 0.5
      %v8386 = vmul.f32 %v8352, 0.5
      %v8387 = vmul.f32 %v8355, 0.5
      %v8388 = vmul.f32 %v8360, 0.5
      %v8389 = vmul.f32 %v8363, 0.5
      %v8390 = vmul.f32 %v8272, 0.70710677
      %v8391 = vmul.f32 %v8275, 0.70710677
      %v8392 = vmul.f32 %v8280, 0.70710677
      %v8393 = vmul.f32 %v8283, 0.70710677
      %v8394 = vmul.f32 %v8288, 0.70710677
      %v8395 = vmul.f32 %v8291, 0.70710677
      %v8396 = vmul.f32 %v8296, 0.70710677
      %v8397 = vmul.f32 %v8299, 0.70710677
      %v8398 = vmul.f32 %v8304, 0.70710677
      %v8399 = vmul.f32 %v8307, 0.70710677
      %v8400 = vmul.f32 %v8312, 0.70710677
      %v8401 = vmul.f32 %v8315, 0.70710677
      %v8402 = vmul.f32 %v8320, 0.70710677
      %v8403 = vmul.f32 %v8323, 0.70710677
      %v8404 = vmul.f32 %v8328, 0.70710677
      %v8405 = vmul.f32 %v8331, 0.70710677
      %v8406 = vmul.f32 %v8336, 0.70710677
      %v8407 = vmul.f32 %v8339, 0.70710677
      %v8408 = vmul.f32 %v8344, 0.70710677
      %v8409 = vmul.f32 %v8347, 0.70710677
      %v8410 = vmul.f32 %v8352, 0.70710677
      %v8411 = vmul.f32 %v8355, 0.70710677
      %v8412 = vmul.f32 %v8360, 0.70710677
      %v8413 = vmul.f32 %v8363, 0.70710677
      %v8414 = vand.u32 2147483647, %v8390
      %v8415 = vand.u32 2147483647, %v8391
      %v8416 = vand.u32 2147483647, %v8392
      %v8417 = vand.u32 2147483647, %v8393
      %v8418 = vand.u32 2147483647, %v8394
      %v8419 = vand.u32 2147483647, %v8395
      %v8420 = vand.u32 2147483647, %v8396
      %v8421 = vand.u32 2147483647, %v8397
      %v8422 = vand.u32 2147483647, %v8398
      %v8423 = vand.u32 2147483647, %v8399
      %v8424 = vand.u32 2147483647, %v8400
      %v8425 = vand.u32 2147483647, %v8401
      %v8426 = vand.u32 2147483647, %v8402
      %v8427 = vand.u32 2147483647, %v8403
      %v8428 = vand.u32 2147483647, %v8404
      %v8429 = vand.u32 2147483647, %v8405
      %v8430 = vand.u32 2147483647, %v8406
      %v8431 = vand.u32 2147483647, %v8407
      %v8432 = vand.u32 2147483647, %v8408
      %v8433 = vand.u32 2147483647, %v8409
      %v8434 = vand.u32 2147483647, %v8410
      %v8435 = vand.u32 2147483647, %v8411
      %v8436 = vand.u32 2147483647, %v8412
      %v8437 = vand.u32 2147483647, %v8413
      %v8438 = vmul.f32 %v8414, 0.3275911
      %v8439 = vmul.f32 %v8415, 0.3275911
      %v8440 = vmul.f32 %v8416, 0.3275911
      %v8441 = vmul.f32 %v8417, 0.3275911
      %v8442 = vmul.f32 %v8418, 0.3275911
      %v8443 = vmul.f32 %v8419, 0.3275911
      %v8444 = vmul.f32 %v8420, 0.3275911
      %v8445 = vmul.f32 %v8421, 0.3275911
      %v8446 = vmul.f32 %v8422, 0.3275911
      %v8447 = vmul.f32 %v8423, 0.3275911
      %v8448 = vmul.f32 %v8424, 0.3275911
      %v8449 = vmul.f32 %v8425, 0.3275911
      %v8450 = vmul.f32 %v8426, 0.3275911
      %v8451 = vmul.f32 %v8427, 0.3275911
      %v8452 = vmul.f32 %v8428, 0.3275911
      %v8453 = vmul.f32 %v8429, 0.3275911
      %v8454 = vmul.f32 %v8430, 0.3275911
      %v8455 = vmul.f32 %v8431, 0.3275911
      %v8456 = vmul.f32 %v8432, 0.3275911
      %v8457 = vmul.f32 %v8433, 0.3275911
      %v8458 = vmul.f32 %v8434, 0.3275911
      %v8459 = vmul.f32 %v8435, 0.3275911
      %v8460 = vmul.f32 %v8436, 0.3275911
      %v8461 = vmul.f32 %v8437, 0.3275911
      %v8462 = vadd.f32 %v8438, 1.0
      %v8463 = vadd.f32 %v8439, 1.0
      %v8464 = vadd.f32 %v8440, 1.0
      %v8465 = vadd.f32 %v8441, 1.0
      %v8466 = vadd.f32 %v8442, 1.0
      %v8467 = vadd.f32 %v8443, 1.0
      %v8468 = vadd.f32 %v8444, 1.0
      %v8469 = vadd.f32 %v8445, 1.0
      %v8470 = vadd.f32 %v8446, 1.0
      %v8471 = vadd.f32 %v8447, 1.0
      %v8472 = vadd.f32 %v8448, 1.0
      %v8473 = vadd.f32 %v8449, 1.0
      %v8474 = vadd.f32 %v8450, 1.0
      %v8475 = vadd.f32 %v8451, 1.0
      %v8476 = vadd.f32 %v8452, 1.0
      %v8477 = vadd.f32 %v8453, 1.0
      %v8478 = vadd.f32 %v8454, 1.0
      %v8479 = vadd.f32 %v8455, 1.0
      %v8480 = vadd.f32 %v8456, 1.0
      %v8481 = vadd.f32 %v8457, 1.0
      %v8482 = vadd.f32 %v8458, 1.0
      %v8483 = vadd.f32 %v8459, 1.0
      %v8484 = vadd.f32 %v8460, 1.0
      %v8485 = vadd.f32 %v8461, 1.0
      %v8486 = vrcp.pop %v8462
      %v8487 = vmul.f32 1.0, %v8486
      %v8488 = vrcp.pop %v8463
      %v8489 = vmul.f32 1.0, %v8488
      %v8490 = vrcp.pop %v8464
      %v8491 = vmul.f32 1.0, %v8490
      %v8492 = vrcp.pop %v8465
      %v8493 = vmul.f32 1.0, %v8492
      %v8494 = vrcp.pop %v8466
      %v8495 = vmul.f32 1.0, %v8494
      %v8496 = vrcp.pop %v8467
      %v8497 = vmul.f32 1.0, %v8496
      %v8498 = vrcp.pop %v8468
      %v8499 = vmul.f32 1.0, %v8498
      %v8500 = vrcp.pop %v8469
      %v8501 = vmul.f32 1.0, %v8500
      %v8502 = vrcp.pop %v8470
      %v8503 = vmul.f32 1.0, %v8502
      %v8504 = vrcp.pop %v8471
      %v8505 = vmul.f32 1.0, %v8504
      %v8506 = vrcp.pop %v8472
      %v8507 = vmul.f32 1.0, %v8506
      %v8508 = vrcp.pop %v8473
      %v8509 = vmul.f32 1.0, %v8508
      %v8510 = vrcp.pop %v8474
      %v8511 = vmul.f32 1.0, %v8510
      %v8512 = vrcp.pop %v8475
      %v8513 = vmul.f32 1.0, %v8512
      %v8514 = vrcp.pop %v8476
      %v8515 = vmul.f32 1.0, %v8514
      %v8516 = vrcp.pop %v8477
      %v8517 = vmul.f32 1.0, %v8516
      %v8518 = vrcp.pop %v8478
      %v8519 = vmul.f32 1.0, %v8518
      %v8520 = vrcp.pop %v8479
      %v8521 = vmul.f32 1.0, %v8520
      %v8522 = vrcp.pop %v8480
      %v8523 = vmul.f32 1.0, %v8522
      %v8524 = vrcp.pop %v8481
      %v8525 = vmul.f32 1.0, %v8524
      %v8526 = vrcp.pop %v8482
      %v8527 = vmul.f32 1.0, %v8526
      %v8528 = vrcp.pop %v8483
      %v8529 = vmul.f32 1.0, %v8528
      %v8530 = vrcp.pop %v8484
      %v8531 = vmul.f32 1.0, %v8530
      %v8532 = vrcp.pop %v8485
      %v8533 = vmul.f32 1.0, %v8532
      %v8534 = vmul.f32 %v8487, 1.0614054
      %v8535 = vmul.f32 %v8489, 1.0614054
      %v8536 = vmul.f32 %v8491, 1.0614054
      %v8537 = vmul.f32 %v8493, 1.0614054
      %v8538 = vmul.f32 %v8495, 1.0614054
      %v8539 = vmul.f32 %v8497, 1.0614054
      %v8540 = vmul.f32 %v8499, 1.0614054
      %v8541 = vmul.f32 %v8501, 1.0614054
      %v8542 = vmul.f32 %v8503, 1.0614054
      %v8543 = vmul.f32 %v8505, 1.0614054
      %v8544 = vmul.f32 %v8507, 1.0614054
      %v8545 = vmul.f32 %v8509, 1.0614054
      %v8546 = vmul.f32 %v8511, 1.0614054
      %v8547 = vmul.f32 %v8513, 1.0614054
      %v8548 = vmul.f32 %v8515, 1.0614054
      %v8549 = vmul.f32 %v8517, 1.0614054
      %v8550 = vmul.f32 %v8519, 1.0614054
      %v8551 = vmul.f32 %v8521, 1.0614054
      %v8552 = vmul.f32 %v8523, 1.0614054
      %v8553 = vmul.f32 %v8525, 1.0614054
      %v8554 = vmul.f32 %v8527, 1.0614054
      %v8555 = vmul.f32 %v8529, 1.0614054
      %v8556 = vmul.f32 %v8531, 1.0614054
      %v8557 = vmul.f32 %v8533, 1.0614054
      %v8558 = vadd.f32 %v8534, -1.4531521
      %v8559 = vadd.f32 %v8535, -1.4531521
      %v8560 = vadd.f32 %v8536, -1.4531521
      %v8561 = vadd.f32 %v8537, -1.4531521
      %v8562 = vadd.f32 %v8538, -1.4531521
      %v8563 = vadd.f32 %v8539, -1.4531521
      %v8564 = vadd.f32 %v8540, -1.4531521
      %v8565 = vadd.f32 %v8541, -1.4531521
      %v8566 = vadd.f32 %v8542, -1.4531521
      %v8567 = vadd.f32 %v8543, -1.4531521
      %v8568 = vadd.f32 %v8544, -1.4531521
      %v8569 = vadd.f32 %v8545, -1.4531521
      %v8570 = vadd.f32 %v8546, -1.4531521
      %v8571 = vadd.f32 %v8547, -1.4531521
      %v8572 = vadd.f32 %v8548, -1.4531521
      %v8573 = vadd.f32 %v8549, -1.4531521
      %v8574 = vadd.f32 %v8550, -1.4531521
      %v8575 = vadd.f32 %v8551, -1.4531521
      %v8576 = vadd.f32 %v8552, -1.4531521
      %v8577 = vadd.f32 %v8553, -1.4531521
      %v8578 = vadd.f32 %v8554, -1.4531521
      %v8579 = vadd.f32 %v8555, -1.4531521
      %v8580 = vadd.f32 %v8556, -1.4531521
      %v8581 = vadd.f32 %v8557, -1.4531521
      %v8582 = vmul.f32 %v8558, %v8487
      %v8583 = vmul.f32 %v8559, %v8489
      %v8584 = vmul.f32 %v8560, %v8491
      %v8585 = vmul.f32 %v8561, %v8493
      %v8586 = vmul.f32 %v8562, %v8495
      %v8587 = vmul.f32 %v8563, %v8497
      %v8588 = vmul.f32 %v8564, %v8499
      %v8589 = vmul.f32 %v8565, %v8501
      %v8590 = vmul.f32 %v8566, %v8503
      %v8591 = vmul.f32 %v8567, %v8505
      %v8592 = vmul.f32 %v8568, %v8507
      %v8593 = vmul.f32 %v8569, %v8509
      %v8594 = vmul.f32 %v8570, %v8511
      %v8595 = vmul.f32 %v8571, %v8513
      %v8596 = vmul.f32 %v8572, %v8515
      %v8597 = vmul.f32 %v8573, %v8517
      %v8598 = vmul.f32 %v8574, %v8519
      %v8599 = vmul.f32 %v8575, %v8521
      %v8600 = vmul.f32 %v8576, %v8523
      %v8601 = vmul.f32 %v8577, %v8525
      %v8602 = vmul.f32 %v8578, %v8527
      %v8603 = vmul.f32 %v8579, %v8529
      %v8604 = vmul.f32 %v8580, %v8531
      %v8605 = vmul.f32 %v8581, %v8533
      %v8606 = vadd.f32 %v8582, 1.4214138
      %v8607 = vadd.f32 %v8583, 1.4214138
      %v8608 = vadd.f32 %v8584, 1.4214138
      %v8609 = vadd.f32 %v8585, 1.4214138
      %v8610 = vadd.f32 %v8586, 1.4214138
      %v8611 = vadd.f32 %v8587, 1.4214138
      %v8612 = vadd.f32 %v8588, 1.4214138
      %v8613 = vadd.f32 %v8589, 1.4214138
      %v8614 = vadd.f32 %v8590, 1.4214138
      %v8615 = vadd.f32 %v8591, 1.4214138
      %v8616 = vadd.f32 %v8592, 1.4214138
      %v8617 = vadd.f32 %v8593, 1.4214138
      %v8618 = vadd.f32 %v8594, 1.4214138
      %v8619 = vadd.f32 %v8595, 1.4214138
      %v8620 = vadd.f32 %v8596, 1.4214138
      %v8621 = vadd.f32 %v8597, 1.4214138
      %v8622 = vadd.f32 %v8598, 1.4214138
      %v8623 = vadd.f32 %v8599, 1.4214138
      %v8624 = vadd.f32 %v8600, 1.4214138
      %v8625 = vadd.f32 %v8601, 1.4214138
      %v8626 = vadd.f32 %v8602, 1.4214138
      %v8627 = vadd.f32 %v8603, 1.4214138
      %v8628 = vadd.f32 %v8604, 1.4214138
      %v8629 = vadd.f32 %v8605, 1.4214138
      %v8630 = vmul.f32 %v8606, %v8487
      %v8631 = vmul.f32 %v8607, %v8489
      %v8632 = vmul.f32 %v8608, %v8491
      %v8633 = vmul.f32 %v8609, %v8493
      %v8634 = vmul.f32 %v8610, %v8495
      %v8635 = vmul.f32 %v8611, %v8497
      %v8636 = vmul.f32 %v8612, %v8499
      %v8637 = vmul.f32 %v8613, %v8501
      %v8638 = vmul.f32 %v8614, %v8503
      %v8639 = vmul.f32 %v8615, %v8505
      %v8640 = vmul.f32 %v8616, %v8507
      %v8641 = vmul.f32 %v8617, %v8509
      %v8642 = vmul.f32 %v8618, %v8511
      %v8643 = vmul.f32 %v8619, %v8513
      %v8644 = vmul.f32 %v8620, %v8515
      %v8645 = vmul.f32 %v8621, %v8517
      %v8646 = vmul.f32 %v8622, %v8519
      %v8647 = vmul.f32 %v8623, %v8521
      %v8648 = vmul.f32 %v8624, %v8523
      %v8649 = vmul.f32 %v8625, %v8525
      %v8650 = vmul.f32 %v8626, %v8527
      %v8651 = vmul.f32 %v8627, %v8529
      %v8652 = vmul.f32 %v8628, %v8531
      %v8653 = vmul.f32 %v8629, %v8533
      %v8654 = vadd.f32 %v8630, -0.28449672
      %v8655 = vadd.f32 %v8631, -0.28449672
      %v8656 = vadd.f32 %v8632, -0.28449672
      %v8657 = vadd.f32 %v8633, -0.28449672
      %v8658 = vadd.f32 %v8634, -0.28449672
      %v8659 = vadd.f32 %v8635, -0.28449672
      %v8660 = vadd.f32 %v8636, -0.28449672
      %v8661 = vadd.f32 %v8637, -0.28449672
      %v8662 = vadd.f32 %v8638, -0.28449672
      %v8663 = vadd.f32 %v8639, -0.28449672
      %v8664 = vadd.f32 %v8640, -0.28449672
      %v8665 = vadd.f32 %v8641, -0.28449672
      %v8666 = vadd.f32 %v8642, -0.28449672
      %v8667 = vadd.f32 %v8643, -0.28449672
      %v8668 = vadd.f32 %v8644, -0.28449672
      %v8669 = vadd.f32 %v8645, -0.28449672
      %v8670 = vadd.f32 %v8646, -0.28449672
      %v8671 = vadd.f32 %v8647, -0.28449672
      %v8672 = vadd.f32 %v8648, -0.28449672
      %v8673 = vadd.f32 %v8649, -0.28449672
      %v8674 = vadd.f32 %v8650, -0.28449672
      %v8675 = vadd.f32 %v8651, -0.28449672
      %v8676 = vadd.f32 %v8652, -0.28449672
      %v8677 = vadd.f32 %v8653, -0.28449672
      %v8678 = vmul.f32 %v8654, %v8487
      %v8679 = vmul.f32 %v8655, %v8489
      %v8680 = vmul.f32 %v8656, %v8491
      %v8681 = vmul.f32 %v8657, %v8493
      %v8682 = vmul.f32 %v8658, %v8495
      %v8683 = vmul.f32 %v8659, %v8497
      %v8684 = vmul.f32 %v8660, %v8499
      %v8685 = vmul.f32 %v8661, %v8501
      %v8686 = vmul.f32 %v8662, %v8503
      %v8687 = vmul.f32 %v8663, %v8505
      %v8688 = vmul.f32 %v8664, %v8507
      %v8689 = vmul.f32 %v8665, %v8509
      %v8690 = vmul.f32 %v8666, %v8511
      %v8691 = vmul.f32 %v8667, %v8513
      %v8692 = vmul.f32 %v8668, %v8515
      %v8693 = vmul.f32 %v8669, %v8517
      %v8694 = vmul.f32 %v8670, %v8519
      %v8695 = vmul.f32 %v8671, %v8521
      %v8696 = vmul.f32 %v8672, %v8523
      %v8697 = vmul.f32 %v8673, %v8525
      %v8698 = vmul.f32 %v8674, %v8527
      %v8699 = vmul.f32 %v8675, %v8529
      %v8700 = vmul.f32 %v8676, %v8531
      %v8701 = vmul.f32 %v8677, %v8533
      %v8702 = vadd.f32 %v8678, 0.2548296
      %v8703 = vadd.f32 %v8679, 0.2548296
      %v8704 = vadd.f32 %v8680, 0.2548296
      %v8705 = vadd.f32 %v8681, 0.2548296
      %v8706 = vadd.f32 %v8682, 0.2548296
      %v8707 = vadd.f32 %v8683, 0.2548296
      %v8708 = vadd.f32 %v8684, 0.2548296
      %v8709 = vadd.f32 %v8685, 0.2548296
      %v8710 = vadd.f32 %v8686, 0.2548296
      %v8711 = vadd.f32 %v8687, 0.2548296
      %v8712 = vadd.f32 %v8688, 0.2548296
      %v8713 = vadd.f32 %v8689, 0.2548296
      %v8714 = vadd.f32 %v8690, 0.2548296
      %v8715 = vadd.f32 %v8691, 0.2548296
      %v8716 = vadd.f32 %v8692, 0.2548296
      %v8717 = vadd.f32 %v8693, 0.2548296
      %v8718 = vadd.f32 %v8694, 0.2548296
      %v8719 = vadd.f32 %v8695, 0.2548296
      %v8720 = vadd.f32 %v8696, 0.2548296
      %v8721 = vadd.f32 %v8697, 0.2548296
      %v8722 = vadd.f32 %v8698, 0.2548296
      %v8723 = vadd.f32 %v8699, 0.2548296
      %v8724 = vadd.f32 %v8700, 0.2548296
      %v8725 = vadd.f32 %v8701, 0.2548296
      %v8726 = vmul.f32 %v8702, %v8487
      %v8727 = vmul.f32 %v8703, %v8489
      %v8728 = vmul.f32 %v8704, %v8491
      %v8729 = vmul.f32 %v8705, %v8493
      %v8730 = vmul.f32 %v8706, %v8495
      %v8731 = vmul.f32 %v8707, %v8497
      %v8732 = vmul.f32 %v8708, %v8499
      %v8733 = vmul.f32 %v8709, %v8501
      %v8734 = vmul.f32 %v8710, %v8503
      %v8735 = vmul.f32 %v8711, %v8505
      %v8736 = vmul.f32 %v8712, %v8507
      %v8737 = vmul.f32 %v8713, %v8509
      %v8738 = vmul.f32 %v8714, %v8511
      %v8739 = vmul.f32 %v8715, %v8513
      %v8740 = vmul.f32 %v8716, %v8515
      %v8741 = vmul.f32 %v8717, %v8517
      %v8742 = vmul.f32 %v8718, %v8519
      %v8743 = vmul.f32 %v8719, %v8521
      %v8744 = vmul.f32 %v8720, %v8523
      %v8745 = vmul.f32 %v8721, %v8525
      %v8746 = vmul.f32 %v8722, %v8527
      %v8747 = vmul.f32 %v8723, %v8529
      %v8748 = vmul.f32 %v8724, %v8531
      %v8749 = vmul.f32 %v8725, %v8533
      %v8750 = vsub.f32 0.0, %v8414
      %v8751 = vsub.f32 0.0, %v8415
      %v8752 = vsub.f32 0.0, %v8416
      %v8753 = vsub.f32 0.0, %v8417
      %v8754 = vsub.f32 0.0, %v8418
      %v8755 = vsub.f32 0.0, %v8419
      %v8756 = vsub.f32 0.0, %v8420
      %v8757 = vsub.f32 0.0, %v8421
      %v8758 = vsub.f32 0.0, %v8422
      %v8759 = vsub.f32 0.0, %v8423
      %v8760 = vsub.f32 0.0, %v8424
      %v8761 = vsub.f32 0.0, %v8425
      %v8762 = vsub.f32 0.0, %v8426
      %v8763 = vsub.f32 0.0, %v8427
      %v8764 = vsub.f32 0.0, %v8428
      %v8765 = vsub.f32 0.0, %v8429
      %v8766 = vsub.f32 0.0, %v8430
      %v8767 = vsub.f32 0.0, %v8431
      %v8768 = vsub.f32 0.0, %v8432
      %v8769 = vsub.f32 0.0, %v8433
      %v8770 = vsub.f32 0.0, %v8434
      %v8771 = vsub.f32 0.0, %v8435
      %v8772 = vsub.f32 0.0, %v8436
      %v8773 = vsub.f32 0.0, %v8437
      %v8774 = vmul.f32 %v8750, %v8414
      %v8775 = vmul.f32 %v8751, %v8415
      %v8776 = vmul.f32 %v8752, %v8416
      %v8777 = vmul.f32 %v8753, %v8417
      %v8778 = vmul.f32 %v8754, %v8418
      %v8779 = vmul.f32 %v8755, %v8419
      %v8780 = vmul.f32 %v8756, %v8420
      %v8781 = vmul.f32 %v8757, %v8421
      %v8782 = vmul.f32 %v8758, %v8422
      %v8783 = vmul.f32 %v8759, %v8423
      %v8784 = vmul.f32 %v8760, %v8424
      %v8785 = vmul.f32 %v8761, %v8425
      %v8786 = vmul.f32 %v8762, %v8426
      %v8787 = vmul.f32 %v8763, %v8427
      %v8788 = vmul.f32 %v8764, %v8428
      %v8789 = vmul.f32 %v8765, %v8429
      %v8790 = vmul.f32 %v8766, %v8430
      %v8791 = vmul.f32 %v8767, %v8431
      %v8792 = vmul.f32 %v8768, %v8432
      %v8793 = vmul.f32 %v8769, %v8433
      %v8794 = vmul.f32 %v8770, %v8434
      %v8795 = vmul.f32 %v8771, %v8435
      %v8796 = vmul.f32 %v8772, %v8436
      %v8797 = vmul.f32 %v8773, %v8437
      %v8798 = vmul.f32 %v8774, 1.442695
      %v8799 = vpow.pop %v8798
      %v8800 = vmul.f32 %v8775, 1.442695
      %v8801 = vpow.pop %v8800
      %v8802 = vmul.f32 %v8776, 1.442695
      %v8803 = vpow.pop %v8802
      %v8804 = vmul.f32 %v8777, 1.442695
      %v8805 = vpow.pop %v8804
      %v8806 = vmul.f32 %v8778, 1.442695
      %v8807 = vpow.pop %v8806
      %v8808 = vmul.f32 %v8779, 1.442695
      %v8809 = vpow.pop %v8808
      %v8810 = vmul.f32 %v8780, 1.442695
      %v8811 = vpow.pop %v8810
      %v8812 = vmul.f32 %v8781, 1.442695
      %v8813 = vpow.pop %v8812
      %v8814 = vmul.f32 %v8782, 1.442695
      %v8815 = vpow.pop %v8814
      %v8816 = vmul.f32 %v8783, 1.442695
      %v8817 = vpow.pop %v8816
      %v8818 = vmul.f32 %v8784, 1.442695
      %v8819 = vpow.pop %v8818
      %v8820 = vmul.f32 %v8785, 1.442695
      %v8821 = vpow.pop %v8820
      %v8822 = vmul.f32 %v8786, 1.442695
      %v8823 = vpow.pop %v8822
      %v8824 = vmul.f32 %v8787, 1.442695
      %v8825 = vpow.pop %v8824
      %v8826 = vmul.f32 %v8788, 1.442695
      %v8827 = vpow.pop %v8826
      %v8828 = vmul.f32 %v8789, 1.442695
      %v8829 = vpow.pop %v8828
      %v8830 = vmul.f32 %v8790, 1.442695
      %v8831 = vpow.pop %v8830
      %v8832 = vmul.f32 %v8791, 1.442695
      %v8833 = vpow.pop %v8832
      %v8834 = vmul.f32 %v8792, 1.442695
      %v8835 = vpow.pop %v8834
      %v8836 = vmul.f32 %v8793, 1.442695
      %v8837 = vpow.pop %v8836
      %v8838 = vmul.f32 %v8794, 1.442695
      %v8839 = vpow.pop %v8838
      %v8840 = vmul.f32 %v8795, 1.442695
      %v8841 = vpow.pop %v8840
      %v8842 = vmul.f32 %v8796, 1.442695
      %v8843 = vpow.pop %v8842
      %v8844 = vmul.f32 %v8797, 1.442695
      %v8845 = vpow.pop %v8844
      %v8846 = vmul.f32 %v8726, %v8799
      %v8847 = vmul.f32 %v8727, %v8801
      %v8848 = vmul.f32 %v8728, %v8803
      %v8849 = vmul.f32 %v8729, %v8805
      %v8850 = vmul.f32 %v8730, %v8807
      %v8851 = vmul.f32 %v8731, %v8809
      %v8852 = vmul.f32 %v8732, %v8811
      %v8853 = vmul.f32 %v8733, %v8813
      %v8854 = vmul.f32 %v8734, %v8815
      %v8855 = vmul.f32 %v8735, %v8817
      %v8856 = vmul.f32 %v8736, %v8819
      %v8857 = vmul.f32 %v8737, %v8821
      %v8858 = vmul.f32 %v8738, %v8823
      %v8859 = vmul.f32 %v8739, %v8825
      %v8860 = vmul.f32 %v8740, %v8827
      %v8861 = vmul.f32 %v8741, %v8829
      %v8862 = vmul.f32 %v8742, %v8831
      %v8863 = vmul.f32 %v8743, %v8833
      %v8864 = vmul.f32 %v8744, %v8835
      %v8865 = vmul.f32 %v8745, %v8837
      %v8866 = vmul.f32 %v8746, %v8839
      %v8867 = vmul.f32 %v8747, %v8841
      %v8868 = vmul.f32 %v8748, %v8843
      %v8869 = vmul.f32 %v8749, %v8845
      %v8870 = vsub.f32 1.0, %v8846
      %v8871 = vsub.f32 1.0, %v8847
      %v8872 = vsub.f32 1.0, %v8848
      %v8873 = vsub.f32 1.0, %v8849
      %v8874 = vsub.f32 1.0, %v8850
      %v8875 = vsub.f32 1.0, %v8851
      %v8876 = vsub.f32 1.0, %v8852
      %v8877 = vsub.f32 1.0, %v8853
      %v8878 = vsub.f32 1.0, %v8854
      %v8879 = vsub.f32 1.0, %v8855
      %v8880 = vsub.f32 1.0, %v8856
      %v8881 = vsub.f32 1.0, %v8857
      %v8882 = vsub.f32 1.0, %v8858
      %v8883 = vsub.f32 1.0, %v8859
      %v8884 = vsub.f32 1.0, %v8860
      %v8885 = vsub.f32 1.0, %v8861
      %v8886 = vsub.f32 1.0, %v8862
      %v8887 = vsub.f32 1.0, %v8863
      %v8888 = vsub.f32 1.0, %v8864
      %v8889 = vsub.f32 1.0, %v8865
      %v8890 = vsub.f32 1.0, %v8866
      %v8891 = vsub.f32 1.0, %v8867
      %v8892 = vsub.f32 1.0, %v8868
      %v8893 = vsub.f32 1.0, %v8869
      %vm8894 = vcmp.ge.f32.partialorder %v8390, 0.0
      %vm8895 = vcmp.ge.f32.partialorder %v8391, 0.0
      %vm8896 = vcmp.ge.f32.partialorder %v8392, 0.0
      %vm8897 = vcmp.ge.f32.partialorder %v8393, 0.0
      %vm8898 = vcmp.ge.f32.partialorder %v8394, 0.0
      %vm8899 = vcmp.ge.f32.partialorder %v8395, 0.0
      %vm8900 = vcmp.ge.f32.partialorder %v8396, 0.0
      %vm8901 = vcmp.ge.f32.partialorder %v8397, 0.0
      %vm8902 = vcmp.ge.f32.partialorder %v8398, 0.0
      %vm8903 = vcmp.ge.f32.partialorder %v8399, 0.0
      %vm8904 = vcmp.ge.f32.partialorder %v8400, 0.0
      %vm8905 = vcmp.ge.f32.partialorder %v8401, 0.0
      %vm8906 = vcmp.ge.f32.partialorder %v8402, 0.0
      %vm8907 = vcmp.ge.f32.partialorder %v8403, 0.0
      %vm8908 = vcmp.ge.f32.partialorder %v8404, 0.0
      %vm8909 = vcmp.ge.f32.partialorder %v8405, 0.0
      %vm8910 = vcmp.ge.f32.partialorder %v8406, 0.0
      %vm8911 = vcmp.ge.f32.partialorder %v8407, 0.0
      %vm8912 = vcmp.ge.f32.partialorder %v8408, 0.0
      %vm8913 = vcmp.ge.f32.partialorder %v8409, 0.0
      %vm8914 = vcmp.ge.f32.partialorder %v8410, 0.0
      %vm8915 = vcmp.ge.f32.partialorder %v8411, 0.0
      %vm8916 = vcmp.ge.f32.partialorder %v8412, 0.0
      %vm8917 = vcmp.ge.f32.partialorder %v8413, 0.0
      %v8918 = vsub.f32 0.0, %v8870
      %v8919 = vsub.f32 0.0, %v8871
      %v8920 = vsub.f32 0.0, %v8872
      %v8921 = vsub.f32 0.0, %v8873
      %v8922 = vsub.f32 0.0, %v8874
      %v8923 = vsub.f32 0.0, %v8875
      %v8924 = vsub.f32 0.0, %v8876
      %v8925 = vsub.f32 0.0, %v8877
      %v8926 = vsub.f32 0.0, %v8878
      %v8927 = vsub.f32 0.0, %v8879
      %v8928 = vsub.f32 0.0, %v8880
      %v8929 = vsub.f32 0.0, %v8881
      %v8930 = vsub.f32 0.0, %v8882
      %v8931 = vsub.f32 0.0, %v8883
      %v8932 = vsub.f32 0.0, %v8884
      %v8933 = vsub.f32 0.0, %v8885
      %v8934 = vsub.f32 0.0, %v8886
      %v8935 = vsub.f32 0.0, %v8887
      %v8936 = vsub.f32 0.0, %v8888
      %v8937 = vsub.f32 0.0, %v8889
      %v8938 = vsub.f32 0.0, %v8890
      %v8939 = vsub.f32 0.0, %v8891
      %v8940 = vsub.f32 0.0, %v8892
      %v8941 = vsub.f32 0.0, %v8893
      %v8942 = vsel %vm8894, %v8870, %v8918
      %v8943 = vsel %vm8895, %v8871, %v8919
      %v8944 = vsel %vm8896, %v8872, %v8920
      %v8945 = vsel %vm8897, %v8873, %v8921
      %v8946 = vsel %vm8898, %v8874, %v8922
      %v8947 = vsel %vm8899, %v8875, %v8923
      %v8948 = vsel %vm8900, %v8876, %v8924
      %v8949 = vsel %vm8901, %v8877, %v8925
      %v8950 = vsel %vm8902, %v8878, %v8926
      %v8951 = vsel %vm8903, %v8879, %v8927
      %v8952 = vsel %vm8904, %v8880, %v8928
      %v8953 = vsel %vm8905, %v8881, %v8929
      %v8954 = vsel %vm8906, %v8882, %v8930
      %v8955 = vsel %vm8907, %v8883, %v8931
      %v8956 = vsel %vm8908, %v8884, %v8932
      %v8957 = vsel %vm8909, %v8885, %v8933
      %v8958 = vsel %vm8910, %v8886, %v8934
      %v8959 = vsel %vm8911, %v8887, %v8935
      %v8960 = vsel %vm8912, %v8888, %v8936
      %v8961 = vsel %vm8913, %v8889, %v8937
      %v8962 = vsel %vm8914, %v8890, %v8938
      %v8963 = vsel %vm8915, %v8891, %v8939
      %v8964 = vsel %vm8916, %v8892, %v8940
      %v8965 = vsel %vm8917, %v8893, %v8941
      %v8966 = vadd.f32 %v8942, 1.0
      %v8967 = vadd.f32 %v8943, 1.0
      %v8968 = vadd.f32 %v8944, 1.0
      %v8969 = vadd.f32 %v8945, 1.0
      %v8970 = vadd.f32 %v8946, 1.0
      %v8971 = vadd.f32 %v8947, 1.0
      %v8972 = vadd.f32 %v8948, 1.0
      %v8973 = vadd.f32 %v8949, 1.0
      %v8974 = vadd.f32 %v8950, 1.0
      %v8975 = vadd.f32 %v8951, 1.0
      %v8976 = vadd.f32 %v8952, 1.0
      %v8977 = vadd.f32 %v8953, 1.0
      %v8978 = vadd.f32 %v8954, 1.0
      %v8979 = vadd.f32 %v8955, 1.0
      %v8980 = vadd.f32 %v8956, 1.0
      %v8981 = vadd.f32 %v8957, 1.0
      %v8982 = vadd.f32 %v8958, 1.0
      %v8983 = vadd.f32 %v8959, 1.0
      %v8984 = vadd.f32 %v8960, 1.0
      %v8985 = vadd.f32 %v8961, 1.0
      %v8986 = vadd.f32 %v8962, 1.0
      %v8987 = vadd.f32 %v8963, 1.0
      %v8988 = vadd.f32 %v8964, 1.0
      %v8989 = vadd.f32 %v8965, 1.0
      %v8990 = vmul.f32 %v8366, %v8966
      %v8991 = vmul.f32 %v8367, %v8967
      %v8992 = vmul.f32 %v8368, %v8968
      %v8993 = vmul.f32 %v8369, %v8969
      %v8994 = vmul.f32 %v8370, %v8970
      %v8995 = vmul.f32 %v8371, %v8971
      %v8996 = vmul.f32 %v8372, %v8972
      %v8997 = vmul.f32 %v8373, %v8973
      %v8998 = vmul.f32 %v8374, %v8974
      %v8999 = vmul.f32 %v8375, %v8975
      %v9000 = vmul.f32 %v8376, %v8976
      %v9001 = vmul.f32 %v8377, %v8977
      %v9002 = vmul.f32 %v8378, %v8978
      %v9003 = vmul.f32 %v8379, %v8979
      %v9004 = vmul.f32 %v8380, %v8980
      %v9005 = vmul.f32 %v8381, %v8981
      %v9006 = vmul.f32 %v8382, %v8982
      %v9007 = vmul.f32 %v8383, %v8983
      %v9008 = vmul.f32 %v8384, %v8984
      %v9009 = vmul.f32 %v8385, %v8985
      %v9010 = vmul.f32 %v8386, %v8986
      %v9011 = vmul.f32 %v8387, %v8987
      %v9012 = vmul.f32 %v8388, %v8988
      %v9013 = vmul.f32 %v8389, %v8989
      %s9014 = scalar_lea.vmem %s7, 32
      %v9015 = vld [vmem:[%s9014] sm:$0xf]
      %v9016 = vld [vmem:[%s9014 + $0x4] sm:$0xf]
      %v9017 = vld [vmem:[%s9014 + $0x8] sm:$0xf]
      %v9018 = vld [vmem:[%s9014 + $0xc] sm:$0xf]
      %v9019 = vld [vmem:[%s9014 + $0x10] sm:$0xf]
      %v9020 = vld [vmem:[%s9014 + $0x14] sm:$0xf]
      %v9021 = vld [vmem:[%s9014 + $0x18] sm:$0xf]
      %v9022 = vld [vmem:[%s9014 + $0x1c] sm:$0xf]
      %v9023 = vpack.c.bf16 %v8991, %v8990
      %v9024 = vpack.c.bf16 %v8993, %v8992
      %v9025 = vpack.c.bf16 %v8995, %v8994
      %v9026 = vpack.c.bf16 %v8997, %v8996
      %v9027 = vpack.c.bf16 %v8999, %v8998
      %v9028 = vpack.c.bf16 %v9001, %v9000
      %v9029 = vpack.c.bf16 %v9003, %v9002
      %v9030 = vpack.c.bf16 %v9005, %v9004
      %v9031 = vpack.c.bf16 %v9007, %v9006
      %v9032 = vpack.c.bf16 %v9009, %v9008
      %v9033 = vpack.c.bf16 %v9011, %v9010
      %v9034 = vpack.c.bf16 %v9013, %v9012
      %v9043 = vunpack.c.l.b16 %v9015
      %v9044 = vunpack.c.l.b16 %v9016
      %v9045 = vunpack.c.l.b16 %v9017
      %v9046 = vunpack.c.l.b16 %v9018
      %v9047 = vunpack.c.l.b16 %v9019
      %v9048 = vunpack.c.l.b16 %v9020
      %v9049 = vunpack.c.l.b16 %v9021
      %v9050 = vunpack.c.l.b16 %v9022
      %v9051 = vpack.c.b16 %v9044, %v9043
      %v9052 = vpack.c.b16 %v9046, %v9045
      %v9053 = vpack.c.b16 %v9048, %v9047
      %v9054 = vpack.c.b16 %v9050, %v9049
      %v9060 = vsel %vm360, %v9023, 0
      %v9063 = vsel %vm360, %v9024, 0
      %v9066 = vsel %vm360, %v9025, 0
      %v9069 = vsel %vm360, %v9026, 0
      %v9072 = vsel %vm360, %v9027, 0
      %v9075 = vsel %vm360, %v9028, 0
      %v9078 = vsel %vm360, %v9029, 0
      %v9081 = vsel %vm360, %v9030, 0
      %v9084 = vsel %vm360, %v9031, 0
      %v9087 = vsel %vm360, %v9032, 0
      %v9090 = vsel %vm360, %v9033, 0
      %v9093 = vsel %vm360, %v9034, 0
      %9095 = vmatprep.subr.bf16.mxu0 0
      %9096 = vmatpush1.bf16.msra.mxu0 %v9051
      %9097 = vmatprep.subr.bf16.mxu0 0
      %9098 = vmatpush1.bf16.msra.mxu0 %v9052
      %9099 = vmatprep.subr.bf16.mxu0 0
      %9100 = vmatpush1.bf16.msra.mxu0 %v9053
      %9101 = vmatprep.subr.bf16.mxu0 0
      %9102 = vmatpush1.bf16.msra.mxu0 %v9054
      %9103 = vmatprep.subr.bf16.mxu0 0
      %9104 = vmatpush1.bf16.msra.mxu0 0
      %9105 = vmatprep.subr.bf16.mxu0 0
      %9106 = vmatpush1.bf16.msra.mxu0 0
      %9107 = vmatprep.subr.bf16.mxu0 0
      %9108 = vmatpush1.bf16.msra.mxu0 0
      %9109 = vmatprep.subr.bf16.mxu0 0
      %9110 = vmatpush1.bf16.msra.mxu0 0
      %9111 = vmatprep.subr.bf16.mxu0 0
      %9112 = vmatpush1.bf16.msra.mxu0 0
      %9113 = vmatprep.subr.bf16.mxu0 0
      %9114 = vmatpush1.bf16.msra.mxu0 0
      %9115 = vmatprep.subr.bf16.mxu0 0
      %9116 = vmatpush1.bf16.msra.mxu0 0
      %9117 = vmatprep.subr.bf16.mxu0 0
      %9118 = vmatpush1.bf16.msra.mxu0 0
      %9119 = vmatprep.subr.bf16.mxu0 0
      %9120 = vmatpush1.bf16.msra.mxu0 0
      %9121 = vmatprep.subr.bf16.mxu0 0
      %9122 = vmatpush1.bf16.msra.mxu0 0
      %9123 = vmatprep.subr.bf16.mxu0 0
      %9124 = vmatpush1.bf16.msra.mxu0 0
      %9125 = vmatprep.subr.bf16.mxu0 0
      %9126 = vmatpush1.bf16.msra.mxu0 0
      %9127 = vmatprep.mubr.bf16.mxu0 0
      %9128 = vmatmul.mubr.bf16.gmra.mrb[0].mxu0 %v9060
      %v9129 = vpop.f32.mrb[0].mxu0
      %v9130 = vadd.f32 0.0, %v9129
      %v9131 = vpop.f32.mrb[0].mxu0
      %v9132 = vpop.f32.mrb[0].mxu0
      %v9133 = vpop.f32.mrb[0].mxu0
      %9134 = vmatprep.mubr.bf16.mxu0 0
      %9135 = vmatmul.mubr.bf16.gmra.mrb[0].mxu0 %v9063
      %v9136 = vpop.f32.mrb[0].mxu0
      %v9137 = vpop.f32.mrb[0].mxu0
      %v9138 = vpop.f32.mrb[0].mxu0
      %v9139 = vadd.f32 0.0, %v9138
      %v9140 = vpop.f32.mrb[0].mxu0
      %9141 = vmatprep.mubr.bf16.mxu0 0
      %9142 = vmatmul.mubr.bf16.gmra.mrb[0].mxu0 %v9066
      %v9143 = vpop.f32.mrb[0].mxu0
      %v9144 = vpop.f32.mrb[0].mxu0
      %v9145 = vpop.f32.mrb[0].mxu0
      %v9146 = vpop.f32.mrb[0].mxu0
      %9147 = vmatprep.mubr.bf16.mxu0 0
      %9148 = vmatmul.mubr.bf16.gmra.mrb[0].mxu0 %v9069
      %v9149 = vpop.f32.mrb[0].mxu0
      %v9150 = vadd.f32 0.0, %v9149
      %v9151 = vpop.f32.mrb[0].mxu0
      %v9152 = vpop.f32.mrb[0].mxu0
      %v9153 = vpop.f32.mrb[0].mxu0
      %9154 = vmatprep.mubr.bf16.mxu0 0
      %9155 = vmatmul.mubr.bf16.gmra.mrb[0].mxu0 %v9072
      %v9156 = vpop.f32.mrb[0].mxu0
      %v9157 = vpop.f32.mrb[0].mxu0
      %v9158 = vpop.f32.mrb[0].mxu0
      %v9159 = vadd.f32 0.0, %v9158
      %v9160 = vpop.f32.mrb[0].mxu0
      %9161 = vmatprep.mubr.bf16.mxu0 0
      %9162 = vmatmul.mubr.bf16.gmra.mrb[0].mxu0 %v9075
      %v9163 = vpop.f32.mrb[0].mxu0
      %v9164 = vpop.f32.mrb[0].mxu0
      %v9165 = vpop.f32.mrb[0].mxu0
      %v9166 = vpop.f32.mrb[0].mxu0
      %9167 = vmatprep.mubr.bf16.mxu0 0
      %9168 = vmatmul.mubr.bf16.gmra.mrb[0].mxu0 %v9078
      %v9169 = vpop.f32.mrb[0].mxu0
      %v9170 = vadd.f32 0.0, %v9169
      %v9171 = vpop.f32.mrb[0].mxu0
      %v9172 = vpop.f32.mrb[0].mxu0
      %v9173 = vpop.f32.mrb[0].mxu0
      %9174 = vmatprep.mubr.bf16.mxu0 0
      %9175 = vmatmul.mubr.bf16.gmra.mrb[0].mxu0 %v9081
      %v9176 = vpop.f32.mrb[0].mxu0
      %v9177 = vpop.f32.mrb[0].mxu0
      %v9178 = vpop.f32.mrb[0].mxu0
      %v9179 = vadd.f32 0.0, %v9178
      %v9180 = vpop.f32.mrb[0].mxu0
      %9181 = vmatprep.mubr.bf16.mxu0 0
      %9182 = vmatmul.mubr.bf16.gmra.mrb[0].mxu0 %v9084
      %v9183 = vpop.f32.mrb[0].mxu0
      %v9184 = vpop.f32.mrb[0].mxu0
      %v9185 = vpop.f32.mrb[0].mxu0
      %v9186 = vpop.f32.mrb[0].mxu0
      %9187 = vmatprep.mubr.bf16.mxu0 0
      %9188 = vmatmul.mubr.bf16.gmra.mrb[0].mxu0 %v9087
      %v9189 = vpop.f32.mrb[0].mxu0
      %v9190 = vadd.f32 0.0, %v9189
      %v9191 = vpop.f32.mrb[0].mxu0
      %v9192 = vpop.f32.mrb[0].mxu0
      %v9193 = vpop.f32.mrb[0].mxu0
      %9194 = vmatprep.mubr.bf16.mxu0 0
      %9195 = vmatmul.mubr.bf16.gmra.mrb[0].mxu0 %v9090
      %v9196 = vpop.f32.mrb[0].mxu0
      %v9197 = vpop.f32.mrb[0].mxu0
      %v9198 = vpop.f32.mrb[0].mxu0
      %v9199 = vadd.f32 0.0, %v9198
      %v9200 = vpop.f32.mrb[0].mxu0
      %9201 = vmatprep.mubr.bf16.mxu0 0
      %9202 = vmatmul.mubr.bf16.gmra.mrb[0].mxu0 %v9093
      %v9203 = vpop.f32.mrb[0].mxu0
      %v9204 = vpop.f32.mrb[0].mxu0
      %v9205 = vpop.f32.mrb[0].mxu0
      %v9206 = vpop.f32.mrb[0].mxu0
      %9207 = vdwg.mxu0
      %v9208 = vadd.f32 %v7773, %v9130
      %v9209 = vadd.f32 %v7776, %v9139
      %v9210 = vadd.f32 %v7779, %v9150
      %v9211 = vadd.f32 %v7782, %v9159
      %v9212 = vadd.f32 %v7785, %v9170
      %v9213 = vadd.f32 %v7788, %v9179
      %v9214 = vadd.f32 %v7791, %v9190
      %v9215 = vadd.f32 %v7794, %v9199
      %v9216 = vld [vmem:[%s3 + $0x12] sm:$0x1]
      %v9217 = vlaneseq
      %v9218 = vshrl.u32 %v9217, 7
      %v9219 = vsub.s32 0, %v9218
      %v9220 = vrot.slane %v9216, %v9219
      %v9221 = vadd.f32 %v9208, %v9220
      %v9222 = vadd.f32 %v9209, %v9220
      %v9223 = vadd.f32 %v9210, %v9220
      %v9224 = vadd.f32 %v9211, %v9220
      %v9225 = vadd.f32 %v9212, %v9220
      %v9226 = vadd.f32 %v9213, %v9220
      %v9227 = vadd.f32 %v9214, %v9220
      %v9228 = vadd.f32 %v9215, %v9220
      %v9230 = vrot.slane %v9222, 7
      %v9233 = vrot.slane %v9223, 6
      %v9236 = vrot.slane %v9224, 5
      %v9239 = vrot.slane %v9225, 4
      %v9242 = vrot.slane %v9226, 3
      %v9245 = vrot.slane %v9227, 2
      %v9248 = vrot.slane %v9228, 1
      %v9251 = vrot.slane %v9221, 1
      %v9253 = vrot.slane %v9223, 7
      %v9255 = vrot.slane %v9224, 6
      %v9257 = vrot.slane %v9225, 5
      %v9259 = vrot.slane %v9226, 4
      %v9261 = vrot.slane %v9227, 3
      %v9263 = vrot.slane %v9228, 2
      %vm9265 = vcmask 1040384
      %v9266 = vsel %vm9265, %v9221, %v9230
      %vm9267 = vcmask 1041408
      %v9268 = vsel %vm9267, %v9266, %v9233
      %vm9269 = vcmask 1042432
      %v9270 = vsel %vm9269, %v9268, %v9236
      %vm9271 = vcmask 1043456
      %v9272 = vsel %vm9271, %v9270, %v9239
      %vm9273 = vcmask 1044480
      %v9274 = vsel %vm9273, %v9272, %v9242
      %vm9275 = vcmask 1045504
      %v9276 = vsel %vm9275, %v9274, %v9245
      %vm9277 = vcmask 1046528
      %v9278 = vsel %vm9277, %v9276, %v9248
      %v9279 = vsel %vm9265, %v9251, %v9222
      %v9280 = vsel %vm9267, %v9279, %v9253
      %v9281 = vsel %vm9269, %v9280, %v9255
      %v9282 = vsel %vm9271, %v9281, %v9257
      %v9283 = vsel %vm9273, %v9282, %v9259
      %v9284 = vsel %vm9275, %v9283, %v9261
      %v9285 = vsel %vm9277, %v9284, %v9263
      %v9286 = vld [vmem:[%s3 + $0x13] sm:$0x1]
      %v9287 = vld [vmem:[%s3 + $0x14] sm:$0x1]
      %v9288 = vsel %vm946, %v9278, 0.0
      %9289 = vadd.xlane.f32.xlu0 %v9288
      %v9290 = vpop.xlane.xlu0 %9289
      %v9291 = vsel %vm946, %v9285, 0.0
      %9292 = vadd.xlane.f32.xlu0 %v9291
      %v9293 = vpop.xlane.xlu0 %9292
      %v9294 = vmul.f32 %v9290, %v1019
      %v9295 = vmul.f32 %v9293, %v1019
      %v9296 = vsub.f32 %v9278, %v9294
      %v9297 = vsub.f32 %v9285, %v9295
      %v9298 = vmul.f32 %v9296, %v9296
      %v9299 = vmul.f32 %v9297, %v9297
      %v9300 = vsel %vm946, %v9298, 0.0
      %9301 = vadd.xlane.f32.xlu0 %v9300
      %v9302 = vpop.xlane.xlu0 %9301
      %v9303 = vsel %vm946, %v9299, 0.0
      %9304 = vadd.xlane.f32.xlu0 %v9303
      %v9305 = vpop.xlane.xlu0 %9304
      %v9306 = vmul.f32 %v9302, %v1019
      %v9307 = vmul.f32 %v9305, %v1019
      %v9308 = vadd.f32 %v9306, 1e-05
      %v9309 = vadd.f32 %v9307, 1e-05
      %v9310 = vrsqrt.pop %v9308
      %v9311 = vrsqrt.pop %v9309
      %v9312 = vmul.f32 %v9296, %v9310
      %v9313 = vmul.f32 %v9297, %v9311
      %v9314 = vlaneseq
      %v9315 = vshrl.u32 %v9314, 7
      %v9316 = vsub.s32 0, %v9315
      %v9317 = vrot.slane %v9286, %v9316
      %v9318 = vmul.f32 %v9312, %v9317
      %v9319 = vmul.f32 %v9313, %v9317
      %v9320 = vlaneseq
      %v9321 = vshrl.u32 %v9320, 7
      %v9322 = vsub.s32 0, %v9321
      %v9323 = vrot.slane %v9287, %v9322
      %v9324 = vadd.f32 %v9318, %v9323
      %v9325 = vadd.f32 %v9319, %v9323
      %v9326 = vld [vmem:[%s8] sm:$0xf]
      %v9327 = vld [vmem:[%s8 + $0x4] sm:$0xf]
      %v9328 = vld [vmem:[%s8 + $0x8] sm:$0xf]
      %v9329 = vld [vmem:[%s8 + $0xc] sm:$0xf]
      %v9330 = vpack.c.bf16 %v9325, %v9324
      %v9331 = vld [vmem:[%s3 + $0x15] sm:$0x1]
      %v9332 = vlaneseq
      %v9333 = vshrl.u32 %v9332, 7
      %v9334 = vsub.s32 0, %v9333
      %v9335 = vrot.slane %v9331, %v9334
      %v9340 = vunpack.c.l.b16 %v9326
      %v9341 = vunpack.c.l.b16 %v9327
      %v9342 = vunpack.c.l.b16 %v9328
      %v9343 = vunpack.c.l.b16 %v9329
      %v9344 = vpack.c.b16 %v9341, %v9340
      %v9345 = vpack.c.b16 %v9343, %v9342
      %v9349 = vsel %vm946, %v9330, 0
      %9351 = vmatprep.subr.bf16.mxu0 0
      %9352 = vmatpush1.bf16.msra.mxu0 %v9344
      %9353 = vmatprep.subr.bf16.mxu0 0
      %9354 = vmatpush1.bf16.msra.mxu0 %v9345
      %9355 = vmatprep.subr.bf16.mxu0 0
      %9356 = vmatpush1.bf16.msra.mxu0 0
      %9357 = vmatprep.subr.bf16.mxu0 0
      %9358 = vmatpush1.bf16.msra.mxu0 0
      %9359 = vmatprep.subr.bf16.mxu0 0
      %9360 = vmatpush1.bf16.msra.mxu0 0
      %9361 = vmatprep.subr.bf16.mxu0 0
      %9362 = vmatpush1.bf16.msra.mxu0 0
      %9363 = vmatprep.subr.bf16.mxu0 0
      %9364 = vmatpush1.bf16.msra.mxu0 0
      %9365 = vmatprep.subr.bf16.mxu0 0
      %9366 = vmatpush1.bf16.msra.mxu0 0
      %9367 = vmatprep.subr.bf16.mxu0 0
      %9368 = vmatpush1.bf16.msra.mxu0 0
      %9369 = vmatprep.subr.bf16.mxu0 0
      %9370 = vmatpush1.bf16.msra.mxu0 0
      %9371 = vmatprep.subr.bf16.mxu0 0
      %9372 = vmatpush1.bf16.msra.mxu0 0
      %9373 = vmatprep.subr.bf16.mxu0 0
      %9374 = vmatpush1.bf16.msra.mxu0 0
      %9375 = vmatprep.subr.bf16.mxu0 0
      %9376 = vmatpush1.bf16.msra.mxu0 0
      %9377 = vmatprep.subr.bf16.mxu0 0
      %9378 = vmatpush1.bf16.msra.mxu0 0
      %9379 = vmatprep.subr.bf16.mxu0 0
      %9380 = vmatpush1.bf16.msra.mxu0 0
      %9381 = vmatprep.subr.bf16.mxu0 0
      %9382 = vmatpush1.bf16.msra.mxu0 0
      %9383 = vmatprep.mubr.bf16.mxu0 0
      %9384 = vmatmul.mubr.bf16.gmra.mrb[0].mxu0 %v9349
      %v9385 = vpop.f32.mrb[0].mxu0
      %v9386 = vadd.f32 %v9335, %v9385
      %v9387 = vpop.f32.mrb[0].mxu0
      %v9388 = vpop.f32.mrb[0].mxu0
      %v9389 = vadd.f32 %v9335, %v9388
      %v9390 = vpop.f32.mrb[0].mxu0
      %9391 = vdwg.mxu0
      %v9392 = vand.u32 2147483647, %v9389
      %v9393 = vsub.f32 0.0, %v9392
      %v9394 = vmul.f32 %v9393, 1.442695
      %v9395 = vpow.pop %v9394
      %vm9396 = vcmp.ge.f32.partialorder %v9389, 0.0
      %v9397 = vadd.f32 %v9395, 1.0
      %v9398 = vrcp.pop %v9397
      %v9399 = vmul.f32 1.0, %v9398
      %v9400 = vmul.f32 %v9395, %v9398
      %v9401 = vsel %vm9396, %v9399, %v9400
      %v9402 = vlaneseq
      %v9403 = vand.u32 %v9402, 127
      %vm9404 = vcmp.lt.s32.totalorder %v9403, 8
      %v9405 = vsel %vm9404, %v9386, 0.0
      %vm9406 = vcmp.ge.s32.totalorder %v9403, 8
      %vm9407 = vcmp.lt.s32.totalorder %v9403, 12
      %vm9408 = vmand %vm9406, %vm9407
      %v9409 = vsel %vm9408, %v9401, 0.0
      %v9410 = vadd.f32 %v9405, %v9409
      %9411 = vst [vmem:[%s332] sm:$0xff] %v9410
      %p9412 = scmp.lt.s32.totalorder %s20, 1
      %s9413 = scalar_select %p9412, %s20, 1
      %s9414 = smul.addr %s9413, 8
      %s9415 = scalar_lea.vmem %s9, %s9414
      // Predicated region
      $region57: #{vit_detection_forward.1} parent=55 // pred_check
        %p9416 = pneg %p232
      $region58: #{vit_detection_forward.1} parent=55 // pred_check_branch
        %9418 = sbr.rel (%p9416) target = $region60
      $region59: #{vit_detection_forward.1} parent=55 // pred_region
        _
      $region60: #{vit_detection_forward.1} parent=55 // pred_fallthru
        _
    $region56: #{vit_detection_forward.1} parent=5 // pred_fallthru
      _
    %p9419 = scmp.le.s32.totalorder 2, %s15
    // Predicated region
    $region61: #{vit_detection_forward.1} parent=5 // pred_check
      %p9420 = pneg %p9419
    $region62: #{vit_detection_forward.1} parent=5 // pred_check_branch
      %9422 = sbr.rel (%p9420) target = $region64
    $region63: #{vit_detection_forward.1} parent=5 // pred_region
      %s9423 = ssub.s32 %s15, 2
      // Predicated region
      $region65: #{vit_detection_forward.1} parent=63 // pred_check
        %p9424 = pneg %p238
      $region66: #{vit_detection_forward.1} parent=63 // pred_check_branch
        %9426 = sbr.rel (%p9424) target = $region68
      $region67: #{vit_detection_forward.1} parent=63 // pred_region
        %p9427 = scmp.lt.s32.totalorder %s21, 1
        %s9428 = scalar_select %p9427, %s21, 1
        %s9429 = smul.addr %s9428, 8
        %s9430 = scalar_lea.vmem %s9, %s9429
      $region68: #{vit_detection_forward.1} parent=63 // pred_fallthru
        _
    $region64: #{vit_detection_forward.1} parent=5 // pred_fallthru
      _
  $region6: #{vit_detection_forward.1} parent=0 // loop_footer
    %s19 = sadd.s32 1, %s15
  $region7: #{vit_detection_forward.1} parent=0 // loop_footer_branch
    %14 = sbr.rel target = $region3
  $region8: #{vit_detection_forward.1} parent=0 // loop_exit
    _

</llo_original>
